<compile_context>
chip_gen: v5e
topology: v5e:2x2
jax: 0.10.0
libtpu: 0.0.40
codegen_flags: <defaults>
</compile_context>

<pallas_src>
import math
from functools import partial

import jax
import jax.numpy as jnp
from jax.experimental import pallas as pl
from jax.experimental.pallas import tpu as pltpu

_VMEM_LIMIT = 32 * 1024 * 1024


# ---------------------------------------------------------------------------
# Projection kernels
# ---------------------------------------------------------------------------
def _seg_linear_kernel(x_ref, w_ref, b_ref, o_ref):
    x = x_ref[0].astype(jnp.bfloat16)
    w = w_ref[0].astype(jnp.bfloat16)
    o_ref[0] = jnp.dot(x, w, preferred_element_type=jnp.float32) + b_ref[0]


def pallas_segmented_linear(xs, ws, bs, *, tile_m=2048):
    """xs: (S, M, K), ws: (S, K, N), bs: (S, 1, N) -> (S, M, N) float32.

    Each segment is multiplied only by its own weight slice (nothing is
    computed and then discarded); the (segment, m-tile) grid is fully parallel.
    """
    Sg, M, K = xs.shape
    N = ws.shape[2]
    if M > tile_m:
        bm = tile_m
    elif M >= 16 and M % 16 == 0:
        bm = M // 2            # >= 2 m-steps -> both v7x TensorCores get work
    else:
        bm = M
    grid = (Sg, pl.cdiv(M, bm))
    return pl.pallas_call(
        _seg_linear_kernel,
        out_shape=jax.ShapeDtypeStruct((Sg, M, N), jnp.float32),
        grid=grid,
        in_specs=[pl.BlockSpec((1, bm, K), lambda s, i: (s, i, 0)),
                  pl.BlockSpec((1, K, N), lambda s, i: (s, 0, 0)),
                  pl.BlockSpec((1, 1, N), lambda s, i: (s, 0, 0))],
        out_specs=pl.BlockSpec((1, bm, N), lambda s, i: (s, i, 0)),
        compiler_params=pltpu.CompilerParams(
            dimension_semantics=("parallel", "parallel"),
            vmem_limit_bytes=_VMEM_LIMIT),
    )(xs, ws, bs)


def _linear_bias_kernel(x_ref, w_ref, b_ref, o_ref):
    o_ref[...] = (jnp.dot(x_ref[...].astype(jnp.bfloat16),
                          w_ref[...].astype(jnp.bfloat16),
                          preferred_element_type=jnp.float32) + b_ref[...])


def pallas_linear(x, w, b, *, tile_m=2048):
    """x: (M, K) @ w: (K, N) + b: (N,) -> (M, N).  bf16 casts happen inside the
    kernel (no extra XLA pass), M tiled with a parallel grid, no pad/slice."""
    M, K = x.shape
    N = w.shape[1]
    if M > tile_m:
        bm = tile_m
    elif M >= 16 and M % 16 == 0:
        bm = M // 2
    else:
        bm = M
    return pl.pallas_call(
        _linear_bias_kernel,
        out_shape=jax.ShapeDtypeStruct((M, N), jnp.float32),
        grid=(pl.cdiv(M, bm),),
        in_specs=[pl.BlockSpec((bm, K), lambda i: (i, 0)),
                  pl.BlockSpec((K, N), lambda i: (0, 0)),
                  pl.BlockSpec((1, N), lambda i: (0, 0))],
        out_specs=pl.BlockSpec((bm, N), lambda i: (i, 0)),
        compiler_params=pltpu.CompilerParams(
            dimension_semantics=("parallel",),
            vmem_limit_bytes=_VMEM_LIMIT),
    )(x, w, b.reshape(1, N).astype(jnp.float32))


# ---------------------------------------------------------------------------
# Spectral-cross kernels (the two complex einsums of SpectralCross1d)
# ---------------------------------------------------------------------------
def _spec_qk_kernel(qr_ref, qi_ref, kr_ref, ki_ref, s_ref):
    # S = Q^T K (complex).  Real/imag of K are stacked on the lane axis inside
    # the kernel (no doubled XLA temporaries); output block is [S_r | S_i].
    qr = qr_ref[...].astype(jnp.bfloat16)                    # (g, Mq, E)
    qi = qi_ref[...].astype(jnp.bfloat16)
    kr = kr_ref[...]
    ki = ki_ref[...]
    kb_r = jnp.concatenate([kr, ki], axis=-1).astype(jnp.bfloat16)   # (g, E, 2Mkv)
    kb_i = jnp.concatenate([-ki, kr], axis=-1).astype(jnp.bfloat16)
    s_ref[...] = (
        jnp.einsum('gme,gen->gmn', qr, kb_r, preferred_element_type=jnp.float32)
        + jnp.einsum('gme,gen->gmn', qi, kb_i, preferred_element_type=jnp.float32))


def _spec_av_kernel(kr_ref, ki_ref, ar_ref, ai_ref, o_ref, *, scale):
    # O = K A^T (complex); the sign/stacking of A and the 1/(ich*ich) scale are
    # fused into the kernel (VPU work under the MXU).
    kr = kr_ref[...]
    ki = ki_ref[...]
    ar = ar_ref[...]
    ai = ai_ref[...]
    k2 = jnp.concatenate([kr, ki], axis=-1).astype(jnp.bfloat16)      # (g, E, 2Mkv)
    ab_r = jnp.concatenate([ar, -ai], axis=-1).astype(jnp.bfloat16)   # (g, Mq, 2Mkv)
    ab_i = jnp.concatenate([ai, ar], axis=-1).astype(jnp.bfloat16)
    o_r = jnp.einsum('gey,gxy->gex', k2, ab_r, preferred_element_type=jnp.float32)
    o_i = jnp.einsum('gey,gxy->gex', k2, ab_i, preferred_element_type=jnp.float32)
    o_ref[...] = jnp.concatenate([o_r, o_i], axis=-1) * scale


def _g_block(G):
    return G // 2 if (G >= 2 and G % 2 == 0) else G


def pallas_spec_qk(qr_t, qi_t, kr, ki):
    G, Mq, E = qr_t.shape
    Mkv = kr.shape[2]
    gb = _g_block(G)
    spec_q = pl.BlockSpec((gb, Mq, E), lambda g: (g, 0, 0))
    spec_k = pl.BlockSpec((gb, E, Mkv), lambda g: (g, 0, 0))
    return pl.pallas_call(
        _spec_qk_kernel,
        out_shape=jax.ShapeDtypeStruct((G, Mq, 2 * Mkv), jnp.float32),
        grid=(G // gb,),
        in_specs=[spec_q, spec_q, spec_k, spec_k],
        out_specs=pl.BlockSpec((gb, Mq, 2 * Mkv), lambda g: (g, 0, 0)),
        compiler_params=pltpu.CompilerParams(
            dimension_semantics=("parallel",),
            vmem_limit_bytes=_VMEM_LIMIT),
    )(qr_t, qi_t, kr, ki)


def pallas_spec_av(kr, ki, a_r, a_i, *, scale):
    G, E, Mkv = kr.shape
    Mq = a_r.shape[1]
    gb = _g_block(G)
    spec_k = pl.BlockSpec((gb, E, Mkv), lambda g: (g, 0, 0))
    spec_a = pl.BlockSpec((gb, Mq, Mkv), lambda g: (g, 0, 0))
    return pl.pallas_call(
        partial(_spec_av_kernel, scale=scale),
        out_shape=jax.ShapeDtypeStruct((G, E, 2 * Mq), jnp.float32),
        grid=(G // gb,),
        in_specs=[spec_k, spec_k, spec_a, spec_a],
        out_specs=pl.BlockSpec((gb, E, 2 * Mq), lambda g: (g, 0, 0)),
        compiler_params=pltpu.CompilerParams(
            dimension_semantics=("parallel",),
            vmem_limit_bytes=_VMEM_LIMIT),
    )(kr, ki, a_r, a_i)


# ---------------------------------------------------------------------------
# Fused multi-level wavelet decomposition / reconstruction kernels
# ---------------------------------------------------------------------------
def _decomp_kernel(x_ref, w_ref, *rest, nlev, ck, nl):
    d_refs = rest[:nlev]
    s_refs = rest[nlev:2 * nlev]
    s_buf = rest[2 * nlev]
    w = w_ref[...]                 # (2ck, 2ck) f32, rows = [even-row | odd-row]
    w_even = w[:ck]
    w_odd = w[ck:]
    s_buf[...] = x_ref[0]          # level-0 rows
    n = nl
    for lev in range(nlev):        # levels are static -> Python-unrolled
        half = n // 2
        ev = s_buf[pl.ds(0, half, 2), :]       # x[2n]   (strided VMEM load)
        od = s_buf[pl.ds(1, half, 2), :]       # x[2n+1]
        out = (jnp.dot(ev, w_even, preferred_element_type=jnp.float32)
               + jnp.dot(od, w_odd, preferred_element_type=jnp.float32))  # [d | s]
        d_refs[lev][0] = out[:, :ck]
        s_refs[lev][0] = out[:, ck:]
        if lev + 1 < nlev:
            s_buf[pl.ds(0, half), :] = out[:, ck:]   # next level's input rows
        n = half


def pallas_wavelet_decompose(x, w_dec, *, nlev):
    B2, nl, ck = x.shape
    lens = [nl >> (lev + 1) for lev in range(nlev)]
    shapes = [jax.ShapeDtypeStruct((B2, n, ck), jnp.float32) for n in lens]
    out_specs = tuple(pl.BlockSpec((1, n, ck), lambda b: (b, 0, 0))
                      for n in lens + lens)
    outs = pl.pallas_call(
        partial(_decomp_kernel, nlev=nlev, ck=ck, nl=nl),
        out_shape=tuple(shapes + shapes),
        grid=(B2,),
        in_specs=[pl.BlockSpec((1, nl, ck), lambda b: (b, 0, 0)),
                  pl.BlockSpec((2 * ck, 2 * ck), lambda b: (0, 0))],
        out_specs=out_specs,
        scratch_shapes=[pltpu.VMEM((nl, ck), jnp.float32)],
        compiler_params=pltpu.CompilerParams(
            dimension_semantics=("parallel",),
            vmem_limit_bytes=_VMEM_LIMIT),
    )(x, w_dec)
    return list(outs[:nlev]), list(outs[nlev:])


def _recon_kernel(*refs, nlev, ck):
    ad_refs = refs[:nlev]                 # attn(d_q, d_k) per level  (== Us[i])
    as_refs = refs[nlev:2 * nlev]         # attn(s_q, s_k) per level  (coarsest == attn4)
    w_ref = refs[2 * nlev]
    out_ref = refs[2 * nlev + 1]
    v_buf = refs[2 * nlev + 2]
    w = w_ref[...]                        # (2ck, 2ck), rows = [v-half | Ud-half]
    w_v = w[:ck]
    w_u = w[ck:]
    v = as_refs[nlev - 1][0]              # attn4(q, k, v) reuse (coarsest s-branch)
    for i in range(nlev - 1, -1, -1):
        ad = ad_refs[i][0]
        v = v + ad                                        # v + Us[i]
        ud = ad + as_refs[i][0]                           # Ud[i] = attn1(d) + attn2(s)
        out = (jnp.dot(v, w_v, preferred_element_type=jnp.float32)
               + jnp.dot(ud, w_u, preferred_element_type=jnp.float32))  # [even | odd]
        n_i = out.shape[0]
        v_buf[pl.ds(0, n_i, 2), :] = out[:, :ck]          # evenOdd interleave in VMEM
        v_buf[pl.ds(1, n_i, 2), :] = out[:, ck:]
        v = v_buf[pl.ds(0, 2 * n_i), :]
    out_ref[0] = v


def pallas_wavelet_reconstruct(att_d, att_s, w_rec, *, nlev, nl, ck):
    B = att_d[0].shape[0]
    in_specs = [pl.BlockSpec((1, a.shape[1], ck), lambda b: (b, 0, 0))
                for a in att_d + att_s]
    in_specs.append(pl.BlockSpec((2 * ck, 2 * ck), lambda b: (0, 0)))
    return pl.pallas_call(
        partial(_recon_kernel, nlev=nlev, ck=ck),
        out_shape=jax.ShapeDtypeStruct((B, nl, ck), jnp.float32),
        grid=(B,),
        in_specs=in_specs,
        out_specs=pl.BlockSpec((1, nl, ck), lambda b: (b, 0, 0)),
        scratch_shapes=[pltpu.VMEM((nl, ck), jnp.float32)],
        compiler_params=pltpu.CompilerParams(
            dimension_semantics=("parallel",),
            vmem_limit_bytes=_VMEM_LIMIT),
    )(*att_d, *att_s, w_rec)


# ---------------------------------------------------------------------------
# Model pieces (JAX glue around the Pallas kernels)
# ---------------------------------------------------------------------------
def complex_tanh(zr, zi):
    # tanh(x+iy) = (sinh 2x + i sin 2y) / (cosh 2x + cos 2y), clamped/stable.
    tr = jnp.clip(2.0 * zr, -30.0, 30.0)
    ti = 2.0 * zi
    denom = jnp.maximum(jnp.cosh(tr) + jnp.cos(ti), 1e-6)
    return jnp.sinh(tr) / denom, jnp.sin(ti) / denom


def spectral_cross_1d(q, k, *, modes1, scale):
    """SpectralCross1d.forward with activation='tanh' (v is never read)."""
    Bb, L, E, H = q.shape
    Lk = k.shape[1]
    Mq = min(L // 2, modes1)
    Mkv = min(Lk // 2, modes1)
    xq = jnp.transpose(q, (0, 3, 2, 1))            # (Bb, H, E, L)
    xk = jnp.transpose(k, (0, 3, 2, 1))
    # TODO(synk): rfft/irfft have no Pallas equivalent; XLA FFT is used.
    xq_ft = jnp.fft.rfft(xq, axis=-1)[..., :Mq]
    xk_ft = jnp.fft.rfft(xk, axis=-1)[..., :Mkv]
    G = Bb * H
    qr_t = jnp.swapaxes(jnp.real(xq_ft), -1, -2).reshape(G, Mq, E)
    qi_t = jnp.swapaxes(jnp.imag(xq_ft), -1, -2).reshape(G, Mq, E)
    kr = jnp.real(xk_ft).reshape(G, E, Mkv)
    ki = jnp.imag(xk_ft).reshape(G, E, Mkv)
    s = pallas_spec_qk(qr_t, qi_t, kr, ki)                   # (G, Mq, 2Mkv)
    # TODO(synk): complex tanh needs sin/cos; kept in XLA (tiny tensor) between
    # the two fused Pallas matmul kernels.
    a_r, a_i = complex_tanh(s[..., :Mkv], s[..., Mkv:])
    o = pallas_spec_av(kr, ki, a_r, a_i, scale=scale)        # (G, E, 2Mq)
    o_r = o[..., :Mq].reshape(Bb, H, E, Mq)
    o_i = o[..., Mq:].reshape(Bb, H, E, Mq)
    out_ft = jnp.zeros((Bb, H, E, L // 2 + 1), jnp.complex64)
    out_ft = out_ft.at[..., :Mq].set(jax.lax.complex(o_r, o_i))
    out = jnp.fft.irfft(out_ft, n=L, axis=-1)
    return jnp.transpose(out, (0, 3, 2, 1)).astype(jnp.float32)


def mwt_cz1d_cross_forward(q, k, v, p, *, c, kk, L_level, modes1, ich):
    # With activation='tanh' the reference SpectralCross1d never reads v's
    # values (v only determines Mkv and len(v)==len(k) at every level), so the
    # Lv projection and the v wavelet branch are dead compute and are skipped.
    del v
    B, N, H, E = q.shape
    S = k.shape[1]
    ck = c * kk
    Smin = min(N, S)

    # ---- fused Q|K projection: segmented grid, only needed blocks computed --
    xq = q.reshape(B * N, ich)
    xk = k[:, :Smin].reshape(B * Smin, ich)    # row-truncation commutes w/ proj
    Mrow = max(B * N, B * Smin)

    def _pad_rows(m):
        if m.shape[0] < Mrow:
            m = jnp.concatenate(
                [m, jnp.zeros((Mrow - m.shape[0], ich), m.dtype)], axis=0)
        return m

    xs = jnp.stack([_pad_rows(xq), _pad_rows(xk)], axis=0)    # (2, Mrow, ich)
    proj = pallas_segmented_linear(xs, p["Wqk"], p["bqk"])    # (2, Mrow, ck)
    q2 = proj[0, :B * N].reshape(B, N, ck)
    k2 = proj[1, :B * Smin].reshape(B, Smin, ck)
    if N > Smin:   # reference appends literal zeros (not projected zeros)
        k2 = jnp.concatenate(
            [k2, jnp.zeros((B, N - Smin, ck), jnp.float32)], axis=1)

    ns = int(math.floor(math.log2(N)))
    nl = int(2 ** math.ceil(math.log2(N)))
    if nl > N:
        q2 = jnp.concatenate([q2, q2[:, :nl - N]], axis=1)
        k2 = jnp.concatenate([k2, k2[:, :nl - N]], axis=1)

    nlev = ns - L_level
    # TODO(synk): the reference builds SpectralCross1d with broken ctor args
    # (string modes1 etc.); FEDformer-style scale 1/(in_ch*out_ch)=1/(ich*ich).
    scale = 1.0 / (ich * ich)

    if nlev <= 0:
        v2 = spectral_cross_1d(q2.reshape(B, nl, c, kk),
                               k2.reshape(B, nl, c, kk),
                               modes1=modes1, scale=scale).reshape(B, nl, ck)
    else:
        # ---- one fused multi-level wavelet decomposition (q & k batched) ----
        x = jnp.concatenate([q2, k2], axis=0)                  # (2B, nl, ck)
        d_levels, s_levels = pallas_wavelet_decompose(x, p["W_dec"], nlev=nlev)

        # ---- one batched spectral-cross call per level (d & s branches).
        # attn1..attn4 are parameter-free, so the d-branch doubles as Us[i] and
        # the coarsest s-branch doubles as attn4(q, k, v).
        att_d, att_s = [], []
        for i in range(nlev):
            d = d_levels[i].reshape(2 * B, -1, c, kk)
            s = s_levels[i].reshape(2 * B, -1, c, kk)
            q_side = jnp.concatenate([d[:B], s[:B]], axis=0)   # (2B, Li, c, kk)
            k_side = jnp.concatenate([d[B:], s[B:]], axis=0)
            att = spectral_cross_1d(q_side, k_side, modes1=modes1, scale=scale)
            Li = att.shape[1]
            att_d.append(att[:B].reshape(B, Li, ck))
            att_s.append(att[B:].reshape(B, Li, ck))

        # ---- one fused multi-level reconstruction (adds + evenOdd in VMEM) --
        v2 = pallas_wavelet_reconstruct(att_d, att_s, p["W_rec"],
                                        nlev=nlev, nl=nl, ck=ck)

    out = pallas_linear(v2[:, :N].reshape(B * N, ck), p["Wout"], p["bout"])
    return out.reshape(B, N, ich)


def mwt_transform_cross_forward(q, k, v, params, attn_mask=None, *,
                                c, kk, L_level, modes1, nCZ):
    # layout: q, k, v are (B, L, H, E) float32; output is (B, L, H, E).
    del attn_mask
    B, L_seq, H, E = q.shape
    D = v.shape[-1]
    ich = H * E
    out = v
    for i in range(nCZ):
        out = mwt_cz1d_cross_forward(
            q, k, out.reshape(B, -1, H, D), params,
            c=c, kk=kk, L_level=L_level, modes1=modes1, ich=ich)
        if i < nCZ - 1:
            out = jax.nn.relu(out)
    # TODO(synk): the reference outer forward applies self.Lk1 (Linear(c*k,ich))
    # to an undefined variable `V` with mismatched dims; skipped here.
    V = out.reshape(B, L_seq, -1, D)
    return V, None


# ---------------------------------------------------------------------------
# Deterministic parameter init (fused / block-diagonal weights built once)
# ---------------------------------------------------------------------------
def build_decomp_weight(ec_d, ec_s, c):
    """Block-diag (over c) fusion of [ec_d | ec_s] for the flattened-channel
    pair rows [even(c,k) | odd(c,k)] -> [d(c,k) | s(c,k)]."""
    kk = ec_d.shape[1]
    ck = c * kk
    W = jnp.zeros((2 * ck, 2 * ck), jnp.float32)
    for parity in range(2):                       # 0 = even row, 1 = odd row
        rd = ec_d[parity * kk:(parity + 1) * kk]
        rs = ec_s[parity * kk:(parity + 1) * kk]
        for ci in range(c):
            r0 = parity * ck + ci * kk
            W = W.at[r0:r0 + kk, ci * kk:(ci + 1) * kk].set(rd)
            W = W.at[r0:r0 + kk, ck + ci * kk:ck + (ci + 1) * kk].set(rs)
    return W


def build_recon_weight(rc_e, rc_o, c):
    """Block-diag (over c) fusion of [rc_e | rc_o]; columns laid out
    [even(c,k) | odd(c,k)] so the interleave is two strided VMEM stores."""
    kk = rc_e.shape[1]
    ck = c * kk
    W = jnp.zeros((2 * ck, 2 * ck), jnp.float32)
    for part in range(2):                         # 0 = v/s half, 1 = Ud half
        re_ = rc_e[part * kk:(part + 1) * kk]
        ro_ = rc_o[part * kk:(part + 1) * kk]
        for ci in range(c):
            r0 = part * ck + ci * kk
            W = W.at[r0:r0 + kk, ci * kk:(ci + 1) * kk].set(re_)
            W = W.at[r0:r0 + kk, ck + ci * kk:ck + (ci + 1) * kk].set(ro_)
    return W


def init_params(key, *, ich, c, kk):
    ck = c * kk
    keys = jax.random.split(key, 8)

    def xavier(k_, shape):
        std = math.sqrt(2.0 / (shape[0] + shape[1]))
        return std * jax.random.normal(k_, shape, jnp.float32)

    Wq = xavier(keys[0], (ich, ck))
    Wk = xavier(keys[1], (ich, ck))
    Wout = xavier(keys[3], (ck, ich))
    # TODO(synk): get_filter('legendre', k) multiwavelet filter banks are not
    # reproduced; deterministic random buffers of the same (2k, k) shape.
    ec_s = 0.3 * jax.random.normal(keys[4], (2 * kk, kk), jnp.float32)
    ec_d = 0.3 * jax.random.normal(keys[5], (2 * kk, kk), jnp.float32)
    rc_e = 0.3 * jax.random.normal(keys[6], (2 * kk, kk), jnp.float32)
    rc_o = 0.3 * jax.random.normal(keys[7], (2 * kk, kk), jnp.float32)
    return {
        "Wqk": jnp.stack([Wq, Wk], axis=0),            # (2, ich, ck)
        "bqk": jnp.zeros((2, 1, ck), jnp.float32),
        "Wout": Wout,
        "bout": jnp.zeros((ich,), jnp.float32),
        "W_dec": build_decomp_weight(ec_d, ec_s, c),   # (2ck, 2ck)
        "W_rec": build_recon_weight(rc_e, rc_o, c),    # (2ck, 2ck)
    }


# ---------------------------------------------------------------------------
# Demo
# ---------------------------------------------------------------------------
if __name__ == "__main__":
    key = jax.random.PRNGKey(0)
    B, L_seq, S_seq, H, E = 2, 16, 16, 4, 8          # ich = H*E = 32
    c, kk, modes1, L_level, nCZ = 4, 8, 16, 2, 1     # c*k = 32

    key_q, key_k, key_v, key_p = jax.random.split(key, 4)
    q = jax.random.normal(key_q, (B, L_seq, H, E), jnp.float32)
    k = jax.random.normal(key_k, (B, S_seq, H, E), jnp.float32)
    v = jax.random.normal(key_v, (B, S_seq, H, E), jnp.float32)
    params = init_params(key_p, ich=H * E, c=c, kk=kk)

    fwd = jax.jit(partial(mwt_transform_cross_forward,
                          c=c, kk=kk, L_level=L_level, modes1=modes1, nCZ=nCZ))
    out, _ = fwd(q, k, v, params)
    out = jax.block_until_ready(out)

    assert out.shape == (B, L_seq, H, E), out.shape
    assert bool(jnp.all(jnp.isfinite(out)))
    print("KERNEL_OK")
</pallas_src>

<mosaic_0001>
module attributes {stable_mosaic.version = 11 : i64} {
  func.func @_seg_linear_kernel(%arg0: i32, %arg1: i32, %arg2: memref<1x16x32xf32, #tpu.memory_space<vmem>>, %arg3: memref<1x32x32xf32, #tpu.memory_space<vmem>>, %arg4: memref<1x1x32xf32, #tpu.memory_space<vmem>>, %arg5: memref<1x16x32xf32, #tpu.memory_space<vmem>>) attributes {dimension_semantics = [#tpu.dimension_semantics<parallel>, #tpu.dimension_semantics<parallel>], iteration_bounds = array<i64: 2, 2>, scalar_prefetch = 0 : i64, scratch_operands = 0 : i64, tpu.core_type = #tpu.core_type<tc>, window_params = [{transform_indices = @transform_0, window_bounds = array<i64: 1, 16, 32>}, {transform_indices = @transform_1, window_bounds = array<i64: 1, 32, 32>}, {transform_indices = @transform_2, window_bounds = array<i64: 1, 1, 32>}, {transform_indices = @transform_3, window_bounds = array<i64: 1, 16, 32>}]} {
    %c0 = arith.constant 0 : index
    %c0_0 = arith.constant 0 : index
    %c0_1 = arith.constant 0 : index
    %0 = vector.load %arg2[%c0, %c0_0, %c0_1] : memref<1x16x32xf32, #tpu.memory_space<vmem>>, vector<1x16x32xf32>
    %1 = vector.shape_cast %0 : vector<1x16x32xf32> to vector<16x32xf32>
    %2 = arith.truncf %1 : vector<16x32xf32> to vector<16x32xbf16>
    %c0_2 = arith.constant 0 : index
    %c0_3 = arith.constant 0 : index
    %c0_4 = arith.constant 0 : index
    %3 = vector.load %arg3[%c0_2, %c0_3, %c0_4] : memref<1x32x32xf32, #tpu.memory_space<vmem>>, vector<1x32x32xf32>
    %4 = vector.shape_cast %3 : vector<1x32x32xf32> to vector<32x32xf32>
    %5 = arith.truncf %4 : vector<32x32xf32> to vector<32x32xbf16>
    %cst = arith.constant dense<0.000000e+00> : vector<16x32xf32>
    %6 = tpu.matmul %2, %5, %cst {dimension_numbers = #tpu.dot_dimension_numbers<[1], [0], [0], [1], [0, 0, 1, 1], [], []>} : vector<16x32xbf16>, vector<32x32xbf16>, vector<16x32xf32> -> vector<16x32xf32>
    %c0_5 = arith.constant 0 : index
    %c0_6 = arith.constant 0 : index
    %c0_7 = arith.constant 0 : index
    %7 = vector.load %arg4[%c0_5, %c0_6, %c0_7] : memref<1x1x32xf32, #tpu.memory_space<vmem>>, vector<1x1x32xf32>
    %8 = vector.shape_cast %7 : vector<1x1x32xf32> to vector<1x32xf32>
    %9 = vector.broadcast %8 : vector<1x32xf32> to vector<16x32xf32>
    %10 = arith.addf %6, %9 : vector<16x32xf32>
    %c0_8 = arith.constant 0 : index
    %c0_9 = arith.constant 0 : index
    %c0_10 = arith.constant 0 : index
    %11 = vector.load %arg5[%c0_8, %c0_9, %c0_10] : memref<1x16x32xf32, #tpu.memory_space<vmem>>, vector<1x16x32xf32>
    %12 = vector.shape_cast %11 : vector<1x16x32xf32> to vector<16x32xf32>
    %13 = vector.shape_cast %10 : vector<16x32xf32> to vector<1x16x32xf32>
    tpu.vector_store %arg5[%c0_8, %c0_9, %c0_10], %13 {strides = array<i32>} : memref<1x16x32xf32, #tpu.memory_space<vmem>>, vector<1x16x32xf32>,
    return
  }
  func.func @transform_0(%arg0: i32, %arg1: i32) -> (i32, i32, i32) {
    %c0_i32 = arith.constant 0 : i32
    %c0_i32_0 = arith.constant 0 : i32
    return %arg0, %arg1, %c0_i32 : i32, i32, i32
  }
  func.func @transform_1(%arg0: i32, %arg1: i32) -> (i32, i32, i32) {
    %c0_i32 = arith.constant 0 : i32
    %c0_i32_0 = arith.constant 0 : i32
    %c0_i32_1 = arith.constant 0 : i32
    return %arg0, %c0_i32, %c0_i32_0 : i32, i32, i32
  }
  func.func @transform_2(%arg0: i32, %arg1: i32) -> (i32, i32, i32) {
    %c0_i32 = arith.constant 0 : i32
    %c0_i32_0 = arith.constant 0 : i32
    %c0_i32_1 = arith.constant 0 : i32
    return %arg0, %c0_i32, %c0_i32_0 : i32, i32, i32
  }
  func.func @transform_3(%arg0: i32, %arg1: i32) -> (i32, i32, i32) {
    %c0_i32 = arith.constant 0 : i32
    %c0_i32_0 = arith.constant 0 : i32
    return %arg0, %arg1, %c0_i32 : i32, i32, i32
  }
}

module attributes {stable_mosaic.version = 11 : i64} {
  func.func @_decomp_kernel(%arg0: i32, %arg1: memref<1x16x32xf32, #tpu.memory_space<vmem>>, %arg2: memref<64x64xf32, #tpu.memory_space<vmem>>, %arg3: memref<1x8x32xf32, #tpu.memory_space<vmem>>, %arg4: memref<1x4x32xf32, #tpu.memory_space<vmem>>, %arg5: memref<1x8x32xf32, #tpu.memory_space<vmem>>, %arg6: memref<1x4x32xf32, #tpu.memory_space<vmem>>, %arg7: memref<16x32xf32, #tpu.memory_space<vmem>>) attributes {dimension_semantics = [#tpu.dimension_semantics<parallel>], iteration_bounds = array<i64: 4>, scalar_prefetch = 0 : i64, scratch_operands = 1 : i64, tpu.core_type = #tpu.core_type<tc>, window_params = [{transform_indices = @transform_0, window_bounds = array<i64: 1, 16, 32>}, {pipeline_mode = #tpu.pipeline_mode<synchronous>, transform_indices = @transform_1, window_bounds = array<i64: 64, 64>}, {transform_indices = @transform_2, window_bounds = array<i64: 1, 8, 32>}, {transform_indices = @transform_3, window_bounds = array<i64: 1, 4, 32>}, {transform_indices = @transform_4, window_bounds = array<i64: 1, 8, 32>}, {transform_indices = @transform_5, window_bounds = array<i64: 1, 4, 32>}]} {
    %c0 = arith.constant 0 : index
    %c0_0 = arith.constant 0 : index
    %0 = vector.load %arg2[%c0, %c0_0] : memref<64x64xf32, #tpu.memory_space<vmem>>, vector<64x64xf32>
    %1 = vector.extract_strided_slice %0 {offsets = [0, 0], sizes = [32, 64], strides = [1, 1]} : vector<64x64xf32> to vector<32x64xf32>
    %2 = vector.extract_strided_slice %0 {offsets = [32, 0], sizes = [32, 64], strides = [1, 1]} : vector<64x64xf32> to vector<32x64xf32>
    %c0_1 = arith.constant 0 : index
    %c0_2 = arith.constant 0 : index
    %c0_3 = arith.constant 0 : index
    %3 = vector.load %arg1[%c0_1, %c0_2, %c0_3] : memref<1x16x32xf32, #tpu.memory_space<vmem>>, vector<1x16x32xf32>
    %4 = vector.shape_cast %3 : vector<1x16x32xf32> to vector<16x32xf32>
    %c0_4 = arith.constant 0 : index
    %c0_5 = arith.constant 0 : index
    %5 = vector.load %arg7[%c0_4, %c0_5] : memref<16x32xf32, #tpu.memory_space<vmem>>, vector<16x32xf32>
    tpu.vector_store %arg7[%c0_4, %c0_5], %4 {strides = array<i32>} : memref<16x32xf32, #tpu.memory_space<vmem>>, vector<16x32xf32>,
    %c0_6 = arith.constant 0 : index
    %c0_7 = arith.constant 0 : index
    %6 = tpu.strided_load %arg7[%c0_6, %c0_7] {strides = array<i32: 2, 1>} : memref<16x32xf32, #tpu.memory_space<vmem>>, vector<8x32xf32>
    %c1 = arith.constant 1 : index
    %c0_8 = arith.constant 0 : index
    %7 = tpu.strided_load %arg7[%c1, %c0_8] {strides = array<i32: 2, 1>} : memref<16x32xf32, #tpu.memory_space<vmem>>, vector<8x32xf32>
    %cst = arith.constant dense<0.000000e+00> : vector<8x64xf32>
    %8 = tpu.matmul %6, %1, %cst {dimension_numbers = #tpu.dot_dimension_numbers<[1], [0], [0], [1], [0, 0, 1, 1], [], []>} : vector<8x32xf32>, vector<32x64xf32>, vector<8x64xf32> -> vector<8x64xf32>
    %cst_9 = arith.constant dense<0.000000e+00> : vector<8x64xf32>
    %9 = tpu.matmul %7, %2, %cst_9 {dimension_numbers = #tpu.dot_dimension_numbers<[1], [0], [0], [1], [0, 0, 1, 1], [], []>} : vector<8x32xf32>, vector<32x64xf32>, vector<8x64xf32> -> vector<8x64xf32>
    %10 = arith.addf %8, %9 : vector<8x64xf32>
    %11 = vector.extract_strided_slice %10 {offsets = [0, 0], sizes = [8, 32], strides = [1, 1]} : vector<8x64xf32> to vector<8x32xf32>
    %c0_10 = arith.constant 0 : index
    %c0_11 = arith.constant 0 : index
    %c0_12 = arith.constant 0 : index
    %12 = vector.load %arg3[%c0_10, %c0_11, %c0_12] : memref<1x8x32xf32, #tpu.memory_space<vmem>>, vector<1x8x32xf32>
    %13 = vector.shape_cast %12 : vector<1x8x32xf32> to vector<8x32xf32>
    %14 = vector.shape_cast %11 : vector<8x32xf32> to vector<1x8x32xf32>
    tpu.vector_store %arg3[%c0_10, %c0_11, %c0_12], %14 {strides = array<i32>} : memref<1x8x32xf32, #tpu.memory_space<vmem>>, vector<1x8x32xf32>,
    %15 = vector.extract_strided_slice %10 {offsets = [0, 32], sizes = [8, 32], strides = [1, 1]} : vector<8x64xf32> to vector<8x32xf32>
    %c0_13 = arith.constant 0 : index
    %c0_14 = arith.constant 0 : index
    %c0_15 = arith.constant 0 : index
    %16 = vector.load %arg5[%c0_13, %c0_14, %c0_15] : memref<1x8x32xf32, #tpu.memory_space<vmem>>, vector<1x8x32xf32>
    %17 = vector.shape_cast %16 : vector<1x8x32xf32> to vector<8x32xf32>
    %18 = vector.shape_cast %15 : vector<8x32xf32> to vector<1x8x32xf32>
    tpu.vector_store %arg5[%c0_13, %c0_14, %c0_15], %18 {strides = array<i32>} : memref<1x8x32xf32, #tpu.memory_space<vmem>>, vector<1x8x32xf32>,
    %19 = vector.extract_strided_slice %10 {offsets = [0, 32], sizes = [8, 32], strides = [1, 1]} : vector<8x64xf32> to vector<8x32xf32>
    %c0_16 = arith.constant 0 : index
    %c0_17 = arith.constant 0 : index
    %20 = vector.load %arg7[%c0_16, %c0_17] : memref<16x32xf32, #tpu.memory_space<vmem>>, vector<8x32xf32>
    tpu.vector_store %arg7[%c0_16, %c0_17], %19 {strides = array<i32>} : memref<16x32xf32, #tpu.memory_space<vmem>>, vector<8x32xf32>,
    %c0_18 = arith.constant 0 : index
    %c0_19 = arith.constant 0 : index
    %21 = tpu.strided_load %arg7[%c0_18, %c0_19] {strides = array<i32: 2, 1>} : memref<16x32xf32, #tpu.memory_space<vmem>>, vector<4x32xf32>
    %c1_20 = arith.constant 1 : index
    %c0_21 = arith.constant 0 : index
    %22 = tpu.strided_load %arg7[%c1_20, %c0_21] {strides = array<i32: 2, 1>} : memref<16x32xf32, #tpu.memory_space<vmem>>, vector<4x32xf32>
    %cst_22 = arith.constant dense<0.000000e+00> : vector<4x64xf32>
    %23 = tpu.matmul %21, %1, %cst_22 {dimension_numbers = #tpu.dot_dimension_numbers<[1], [0], [0], [1], [0, 0, 1, 1], [], []>} : vector<4x32xf32>, vector<32x64xf32>, vector<4x64xf32> -> vector<4x64xf32>
    %cst_23 = arith.constant dense<0.000000e+00> : vector<4x64xf32>
    %24 = tpu.matmul %22, %2, %cst_23 {dimension_numbers = #tpu.dot_dimension_numbers<[1], [0], [0], [1], [0, 0, 1, 1], [], []>} : vector<4x32xf32>, vector<32x64xf32>, vector<4x64xf32> -> vector<4x64xf32>
    %25 = arith.addf %23, %24 : vector<4x64xf32>
    %26 = vector.extract_strided_slice %25 {offsets = [0, 0], sizes = [4, 32], strides = [1, 1]} : vector<4x64xf32> to vector<4x32xf32>
    %c0_24 = arith.constant 0 : index
    %c0_25 = arith.constant 0 : index
    %c0_26 = arith.constant 0 : index
    %27 = vector.load %arg4[%c0_24, %c0_25, %c0_26] : memref<1x4x32xf32, #tpu.memory_space<vmem>>, vector<1x4x32xf32>
    %28 = vector.shape_cast %27 : vector<1x4x32xf32> to vector<4x32xf32>
    %29 = vector.shape_cast %26 : vector<4x32xf32> to vector<1x4x32xf32>
    tpu.vector_store %arg4[%c0_24, %c0_25, %c0_26], %29 {strides = array<i32>} : memref<1x4x32xf32, #tpu.memory_space<vmem>>, vector<1x4x32xf32>,
    %30 = vector.extract_strided_slice %25 {offsets = [0, 32], sizes = [4, 32], strides = [1, 1]} : vector<4x64xf32> to vector<4x32xf32>
    %c0_27 = arith.constant 0 : index
    %c0_28 = arith.constant 0 : index
    %c0_29 = arith.constant 0 : index
    %31 = vector.load %arg6[%c0_27, %c0_28, %c0_29] : memref<1x4x32xf32, #tpu.memory_space<vmem>>, vector<1x4x32xf32>
    %32 = vector.shape_cast %31 : vector<1x4x32xf32> to vector<4x32xf32>
    %33 = vector.shape_cast %30 : vector<4x32xf32> to vector<1x4x32xf32>
    tpu.vector_store %arg6[%c0_27, %c0_28, %c0_29], %33 {strides = array<i32>} : memref<1x4x32xf32, #tpu.memory_space<vmem>>, vector<1x4x32xf32>,
    return
  }
  func.func @transform_0(%arg0: i32) -> (i32, i32, i32) {
    %c0_i32 = arith.constant 0 : i32
    %c0_i32_0 = arith.constant 0 : i32
    %c0_i32_1 = arith.constant 0 : i32
    return %arg0, %c0_i32, %c0_i32_0 : i32, i32, i32
  }
  func.func @transform_1(%arg0: i32) -> (i32, i32) {
    %c0_i32 = arith.constant 0 : i32
    %c0_i32_0 = arith.constant 0 : i32
    %c0_i32_1 = arith.constant 0 : i32
    return %c0_i32, %c0_i32_0 : i32, i32
  }
  func.func @transform_2(%arg0: i32) -> (i32, i32, i32) {
    %c0_i32 = arith.constant 0 : i32
    %c0_i32_0 = arith.constant 0 : i32
    %c0_i32_1 = arith.constant 0 : i32
    return %arg0, %c0_i32, %c0_i32_0 : i32, i32, i32
  }
  func.func @transform_3(%arg0: i32) -> (i32, i32, i32) {
    %c0_i32 = arith.constant 0 : i32
    %c0_i32_0 = arith.constant 0 : i32
    %c0_i32_1 = arith.constant 0 : i32
    return %arg0, %c0_i32, %c0_i32_0 : i32, i32, i32
  }
  func.func @transform_4(%arg0: i32) -> (i32, i32, i32) {
    %c0_i32 = arith.constant 0 : i32
    %c0_i32_0 = arith.constant 0 : i32
    %c0_i32_1 = arith.constant 0 : i32
    return %arg0, %c0_i32, %c0_i32_0 : i32, i32, i32
  }
  func.func @transform_5(%arg0: i32) -> (i32, i32, i32) {
    %c0_i32 = arith.constant 0 : i32
    %c0_i32_0 = arith.constant 0 : i32
    %c0_i32_1 = arith.constant 0 : i32
    return %arg0, %c0_i32, %c0_i32_0 : i32, i32, i32
  }
}

module attributes {stable_mosaic.version = 11 : i64} {
  func.func @_spec_qk_kernel(%arg0: i32, %arg1: memref<16x2x4xf32, #tpu.memory_space<vmem>>, %arg2: memref<16x2x4xf32, #tpu.memory_space<vmem>>, %arg3: memref<16x4x2xf32, #tpu.memory_space<vmem>>, %arg4: memref<16x4x2xf32, #tpu.memory_space<vmem>>, %arg5: memref<16x2x4xf32, #tpu.memory_space<vmem>>) attributes {dimension_semantics = [#tpu.dimension_semantics<parallel>], iteration_bounds = array<i64: 2>, scalar_prefetch = 0 : i64, scratch_operands = 0 : i64, tpu.core_type = #tpu.core_type<tc>, window_params = [{transform_indices = @transform_0, window_bounds = array<i64: 16, 2, 4>}, {transform_indices = @transform_1, window_bounds = array<i64: 16, 2, 4>}, {transform_indices = @transform_2, window_bounds = array<i64: 16, 4, 2>}, {transform_indices = @transform_3, window_bounds = array<i64: 16, 4, 2>}, {transform_indices = @transform_4, window_bounds = array<i64: 16, 2, 4>}]} {
    %c0 = arith.constant 0 : index
    %c0_0 = arith.constant 0 : index
    %c0_1 = arith.constant 0 : index
    %0 = vector.load %arg1[%c0, %c0_0, %c0_1] : memref<16x2x4xf32, #tpu.memory_space<vmem>>, vector<16x2x4xf32>
    %1 = arith.truncf %0 : vector<16x2x4xf32> to vector<16x2x4xbf16>
    %c0_2 = arith.constant 0 : index
    %c0_3 = arith.constant 0 : index
    %c0_4 = arith.constant 0 : index
    %2 = vector.load %arg2[%c0_2, %c0_3, %c0_4] : memref<16x2x4xf32, #tpu.memory_space<vmem>>, vector<16x2x4xf32>
    %3 = arith.truncf %2 : vector<16x2x4xf32> to vector<16x2x4xbf16>
    %c0_5 = arith.constant 0 : index
    %c0_6 = arith.constant 0 : index
    %c0_7 = arith.constant 0 : index
    %4 = vector.load %arg3[%c0_5, %c0_6, %c0_7] : memref<16x4x2xf32, #tpu.memory_space<vmem>>, vector<16x4x2xf32>
    %c0_8 = arith.constant 0 : index
    %c0_9 = arith.constant 0 : index
    %c0_10 = arith.constant 0 : index
    %5 = vector.load %arg4[%c0_8, %c0_9, %c0_10] : memref<16x4x2xf32, #tpu.memory_space<vmem>>, vector<16x4x2xf32>
    %6 = tpu.concatenate %4, %5 in 2 : vector<16x4x2xf32>, vector<16x4x2xf32> -> vector<16x4x4xf32>
    %7 = arith.truncf %6 : vector<16x4x4xf32> to vector<16x4x4xbf16>
    %cst = arith.constant 0.000000e+00 : f32
    %8 = vector.broadcast %cst : f32 to vector<16x4x2xf32>
    %9 = arith.subf %8, %5 : vector<16x4x2xf32>
    %10 = tpu.concatenate %9, %4 in 2 : vector<16x4x2xf32>, vector<16x4x2xf32> -> vector<16x4x4xf32>
    %11 = arith.truncf %10 : vector<16x4x4xf32> to vector<16x4x4xbf16>
    "tpu.trace_start"() <{level = 10 : i32, message = "gme,gen->gmn"}> : () -> ()
    %cst_11 = arith.constant dense<0.000000e+00> : vector<16x2x4xf32>
    %12 = tpu.matmul %1, %7, %cst_11 {dimension_numbers = #tpu.dot_dimension_numbers<[2], [1], [1], [2], [0, 0, 0, 1, 1, 2], [0], [0]>} : vector<16x2x4xbf16>, vector<16x4x4xbf16>, vector<16x2x4xf32> -> vector<16x2x4xf32>
    %cst_12 = arith.constant dense<0.000000e+00> : vector<16x2x4xf32>
    %13 = tpu.matmul %3, %11, %cst_12 {dimension_numbers = #tpu.dot_dimension_numbers<[2], [1], [1], [2], [0, 0, 0, 1, 1, 2], [0], [0]>} : vector<16x2x4xbf16>, vector<16x4x4xbf16>, vector<16x2x4xf32> -> vector<16x2x4xf32>
    "tpu.trace_stop"() : () -> ()
    %14 = arith.addf %12, %13 : vector<16x2x4xf32>
    %c0_13 = arith.constant 0 : index
    %c0_14 = arith.constant 0 : index
    %c0_15 = arith.constant 0 : index
    %15 = vector.load %arg5[%c0_13, %c0_14, %c0_15] : memref<16x2x4xf32, #tpu.memory_space<vmem>>, vector<16x2x4xf32>
    tpu.vector_store %arg5[%c0_13, %c0_14, %c0_15], %14 {strides = array<i32>} : memref<16x2x4xf32, #tpu.memory_space<vmem>>, vector<16x2x4xf32>,
    return
  }
  func.func @transform_0(%arg0: i32) -> (i32, i32, i32) {
    %c0_i32 = arith.constant 0 : i32
    %c0_i32_0 = arith.constant 0 : i32
    %c0_i32_1 = arith.constant 0 : i32
    return %arg0, %c0_i32, %c0_i32_0 : i32, i32, i32
  }
  func.func @transform_1(%arg0: i32) -> (i32, i32, i32) {
    %c0_i32 = arith.constant 0 : i32
    %c0_i32_0 = arith.constant 0 : i32
    %c0_i32_1 = arith.constant 0 : i32
    return %arg0, %c0_i32, %c0_i32_0 : i32, i32, i32
  }
  func.func @transform_2(%arg0: i32) -> (i32, i32, i32) {
    %c0_i32 = arith.constant 0 : i32
    %c0_i32_0 = arith.constant 0 : i32
    %c0_i32_1 = arith.constant 0 : i32
    return %arg0, %c0_i32, %c0_i32_0 : i32, i32, i32
  }
  func.func @transform_3(%arg0: i32) -> (i32, i32, i32) {
    %c0_i32 = arith.constant 0 : i32
    %c0_i32_0 = arith.constant 0 : i32
    %c0_i32_1 = arith.constant 0 : i32
    return %arg0, %c0_i32, %c0_i32_0 : i32, i32, i32
  }
  func.func @transform_4(%arg0: i32) -> (i32, i32, i32) {
    %c0_i32 = arith.constant 0 : i32
    %c0_i32_0 = arith.constant 0 : i32
    %c0_i32_1 = arith.constant 0 : i32
    return %arg0, %c0_i32, %c0_i32_0 : i32, i32, i32
  }
}

module attributes {stable_mosaic.version = 11 : i64} {
  func.func @_spec_av_kernel(%arg0: i32, %arg1: memref<16x4x2xf32, #tpu.memory_space<vmem>>, %arg2: memref<16x4x2xf32, #tpu.memory_space<vmem>>, %arg3: memref<16x2x2xf32, #tpu.memory_space<vmem>>, %arg4: memref<16x2x2xf32, #tpu.memory_space<vmem>>, %arg5: memref<16x4x4xf32, #tpu.memory_space<vmem>>) attributes {dimension_semantics = [#tpu.dimension_semantics<parallel>], iteration_bounds = array<i64: 2>, scalar_prefetch = 0 : i64, scratch_operands = 0 : i64, tpu.core_type = #tpu.core_type<tc>, window_params = [{transform_indices = @transform_0, window_bounds = array<i64: 16, 4, 2>}, {transform_indices = @transform_1, window_bounds = array<i64: 16, 4, 2>}, {transform_indices = @transform_2, window_bounds = array<i64: 16, 2, 2>}, {transform_indices = @transform_3, window_bounds = array<i64: 16, 2, 2>}, {transform_indices = @transform_4, window_bounds = array<i64: 16, 4, 4>}]} {
    %c0 = arith.constant 0 : index
    %c0_0 = arith.constant 0 : index
    %c0_1 = arith.constant 0 : index
    %0 = vector.load %arg1[%c0, %c0_0, %c0_1] : memref<16x4x2xf32, #tpu.memory_space<vmem>>, vector<16x4x2xf32>
    %c0_2 = arith.constant 0 : index
    %c0_3 = arith.constant 0 : index
    %c0_4 = arith.constant 0 : index
    %1 = vector.load %arg2[%c0_2, %c0_3, %c0_4] : memref<16x4x2xf32, #tpu.memory_space<vmem>>, vector<16x4x2xf32>
    %c0_5 = arith.constant 0 : index
    %c0_6 = arith.constant 0 : index
    %c0_7 = arith.constant 0 : index
    %2 = vector.load %arg3[%c0_5, %c0_6, %c0_7] : memref<16x2x2xf32, #tpu.memory_space<vmem>>, vector<16x2x2xf32>
    %c0_8 = arith.constant 0 : index
    %c0_9 = arith.constant 0 : index
    %c0_10 = arith.constant 0 : index
    %3 = vector.load %arg4[%c0_8, %c0_9, %c0_10] : memref<16x2x2xf32, #tpu.memory_space<vmem>>, vector<16x2x2xf32>
    %4 = tpu.concatenate %0, %1 in 2 : vector<16x4x2xf32>, vector<16x4x2xf32> -> vector<16x4x4xf32>
    %5 = arith.truncf %4 : vector<16x4x4xf32> to vector<16x4x4xbf16>
    %cst = arith.constant 0.000000e+00 : f32
    %6 = vector.broadcast %cst : f32 to vector<16x2x2xf32>
    %7 = arith.subf %6, %3 : vector<16x2x2xf32>
    %8 = tpu.concatenate %2, %7 in 2 : vector<16x2x2xf32>, vector<16x2x2xf32> -> vector<16x2x4xf32>
    %9 = arith.truncf %8 : vector<16x2x4xf32> to vector<16x2x4xbf16>
    %10 = tpu.concatenate %3, %2 in 2 : vector<16x2x2xf32>, vector<16x2x2xf32> -> vector<16x2x4xf32>
    %11 = arith.truncf %10 : vector<16x2x4xf32> to vector<16x2x4xbf16>
    "tpu.trace_start"() <{level = 10 : i32, message = "gey,gxy->gex"}> : () -> ()
    %cst_11 = arith.constant dense<0.000000e+00> : vector<16x4x2xf32>
    %12 = tpu.matmul %5, %9, %cst_11 {dimension_numbers = #tpu.dot_dimension_numbers<[2], [2], [1], [1], [0, 0, 0, 1, 1, 1], [0], [0]>} : vector<16x4x4xbf16>, vector<16x2x4xbf16>, vector<16x4x2xf32> -> vector<16x4x2xf32>
    %cst_12 = arith.constant dense<0.000000e+00> : vector<16x4x2xf32>
    %13 = tpu.matmul %5, %11, %cst_12 {dimension_numbers = #tpu.dot_dimension_numbers<[2], [2], [1], [1], [0, 0, 0, 1, 1, 1], [0], [0]>} : vector<16x4x4xbf16>, vector<16x2x4xbf16>, vector<16x4x2xf32> -> vector<16x4x2xf32>
    "tpu.trace_stop"() : () -> ()
    %14 = tpu.concatenate %12, %13 in 2 : vector<16x4x2xf32>, vector<16x4x2xf32> -> vector<16x4x4xf32>
    %cst_13 = arith.constant 9.765625E-4 : f32
    %15 = vector.broadcast %cst_13 : f32 to vector<16x4x4xf32>
    %16 = arith.mulf %14, %15 : vector<16x4x4xf32>
    %c0_14 = arith.constant 0 : index
    %c0_15 = arith.constant 0 : index
    %c0_16 = arith.constant 0 : index
    %17 = vector.load %arg5[%c0_14, %c0_15, %c0_16] : memref<16x4x4xf32, #tpu.memory_space<vmem>>, vector<16x4x4xf32>
    tpu.vector_store %arg5[%c0_14, %c0_15, %c0_16], %16 {strides = array<i32>} : memref<16x4x4xf32, #tpu.memory_space<vmem>>, vector<16x4x4xf32>,
    return
  }
  func.func @transform_0(%arg0: i32) -> (i32, i32, i32) {
    %c0_i32 = arith.constant 0 : i32
    %c0_i32_0 = arith.constant 0 : i32
    %c0_i32_1 = arith.constant 0 : i32
    return %arg0, %c0_i32, %c0_i32_0 : i32, i32, i32
  }
  func.func @transform_1(%arg0: i32) -> (i32, i32, i32) {
    %c0_i32 = arith.constant 0 : i32
    %c0_i32_0 = arith.constant 0 : i32
    %c0_i32_1 = arith.constant 0 : i32
    return %arg0, %c0_i32, %c0_i32_0 : i32, i32, i32
  }
  func.func @transform_2(%arg0: i32) -> (i32, i32, i32) {
    %c0_i32 = arith.constant 0 : i32
    %c0_i32_0 = arith.constant 0 : i32
    %c0_i32_1 = arith.constant 0 : i32
    return %arg0, %c0_i32, %c0_i32_0 : i32, i32, i32
  }
  func.func @transform_3(%arg0: i32) -> (i32, i32, i32) {
    %c0_i32 = arith.constant 0 : i32
    %c0_i32_0 = arith.constant 0 : i32
    %c0_i32_1 = arith.constant 0 : i32
    return %arg0, %c0_i32, %c0_i32_0 : i32, i32, i32
  }
  func.func @transform_4(%arg0: i32) -> (i32, i32, i32) {
    %c0_i32 = arith.constant 0 : i32
    %c0_i32_0 = arith.constant 0 : i32
    %c0_i32_1 = arith.constant 0 : i32
    return %arg0, %c0_i32, %c0_i32_0 : i32, i32, i32
  }
}

module attributes {stable_mosaic.version = 11 : i64} {
  func.func @_spec_qk_kernel(%arg0: i32, %arg1: memref<16x4x4xf32, #tpu.memory_space<vmem>>, %arg2: memref<16x4x4xf32, #tpu.memory_space<vmem>>, %arg3: memref<16x4x4xf32, #tpu.memory_space<vmem>>, %arg4: memref<16x4x4xf32, #tpu.memory_space<vmem>>, %arg5: memref<16x4x8xf32, #tpu.memory_space<vmem>>) attributes {dimension_semantics = [#tpu.dimension_semantics<parallel>], iteration_bounds = array<i64: 2>, scalar_prefetch = 0 : i64, scratch_operands = 0 : i64, tpu.core_type = #tpu.core_type<tc>, window_params = [{transform_indices = @transform_0, window_bounds = array<i64: 16, 4, 4>}, {transform_indices = @transform_1, window_bounds = array<i64: 16, 4, 4>}, {transform_indices = @transform_2, window_bounds = array<i64: 16, 4, 4>}, {transform_indices = @transform_3, window_bounds = array<i64: 16, 4, 4>}, {transform_indices = @transform_4, window_bounds = array<i64: 16, 4, 8>}]} {
    %c0 = arith.constant 0 : index
    %c0_0 = arith.constant 0 : index
    %c0_1 = arith.constant 0 : index
    %0 = vector.load %arg1[%c0, %c0_0, %c0_1] : memref<16x4x4xf32, #tpu.memory_space<vmem>>, vector<16x4x4xf32>
    %1 = arith.truncf %0 : vector<16x4x4xf32> to vector<16x4x4xbf16>
    %c0_2 = arith.constant 0 : index
    %c0_3 = arith.constant 0 : index
    %c0_4 = arith.constant 0 : index
    %2 = vector.load %arg2[%c0_2, %c0_3, %c0_4] : memref<16x4x4xf32, #tpu.memory_space<vmem>>, vector<16x4x4xf32>
    %3 = arith.truncf %2 : vector<16x4x4xf32> to vector<16x4x4xbf16>
    %c0_5 = arith.constant 0 : index
    %c0_6 = arith.constant 0 : index
    %c0_7 = arith.constant 0 : index
    %4 = vector.load %arg3[%c0_5, %c0_6, %c0_7] : memref<16x4x4xf32, #tpu.memory_space<vmem>>, vector<16x4x4xf32>
    %c0_8 = arith.constant 0 : index
    %c0_9 = arith.constant 0 : index
    %c0_10 = arith.constant 0 : index
    %5 = vector.load %arg4[%c0_8, %c0_9, %c0_10] : memref<16x4x4xf32, #tpu.memory_space<vmem>>, vector<16x4x4xf32>
    %6 = tpu.concatenate %4, %5 in 2 : vector<16x4x4xf32>, vector<16x4x4xf32> -> vector<16x4x8xf32>
    %7 = arith.truncf %6 : vector<16x4x8xf32> to vector<16x4x8xbf16>
    %cst = arith.constant 0.000000e+00 : f32
    %8 = vector.broadcast %cst : f32 to vector<16x4x4xf32>
    %9 = arith.subf %8, %5 : vector<16x4x4xf32>
    %10 = tpu.concatenate %9, %4 in 2 : vector<16x4x4xf32>, vector<16x4x4xf32> -> vector<16x4x8xf32>
    %11 = arith.truncf %10 : vector<16x4x8xf32> to vector<16x4x8xbf16>
    "tpu.trace_start"() <{level = 10 : i32, message = "gme,gen->gmn"}> : () -> ()
    %cst_11 = arith.constant dense<0.000000e+00> : vector<16x4x8xf32>
    %12 = tpu.matmul %1, %7, %cst_11 {dimension_numbers = #tpu.dot_dimension_numbers<[2], [1], [1], [2], [0, 0, 0, 1, 1, 2], [0], [0]>} : vector<16x4x4xbf16>, vector<16x4x8xbf16>, vector<16x4x8xf32> -> vector<16x4x8xf32>
    %cst_12 = arith.constant dense<0.000000e+00> : vector<16x4x8xf32>
    %13 = tpu.matmul %3, %11, %cst_12 {dimension_numbers = #tpu.dot_dimension_numbers<[2], [1], [1], [2], [0, 0, 0, 1, 1, 2], [0], [0]>} : vector<16x4x4xbf16>, vector<16x4x8xbf16>, vector<16x4x8xf32> -> vector<16x4x8xf32>
    "tpu.trace_stop"() : () -> ()
    %14 = arith.addf %12, %13 : vector<16x4x8xf32>
    %c0_13 = arith.constant 0 : index
    %c0_14 = arith.constant 0 : index
    %c0_15 = arith.constant 0 : index
    %15 = vector.load %arg5[%c0_13, %c0_14, %c0_15] : memref<16x4x8xf32, #tpu.memory_space<vmem>>, vector<16x4x8xf32>
    tpu.vector_store %arg5[%c0_13, %c0_14, %c0_15], %14 {strides = array<i32>} : memref<16x4x8xf32, #tpu.memory_space<vmem>>, vector<16x4x8xf32>,
    return
  }
  func.func @transform_0(%arg0: i32) -> (i32, i32, i32) {
    %c0_i32 = arith.constant 0 : i32
    %c0_i32_0 = arith.constant 0 : i32
    %c0_i32_1 = arith.constant 0 : i32
    return %arg0, %c0_i32, %c0_i32_0 : i32, i32, i32
  }
  func.func @transform_1(%arg0: i32) -> (i32, i32, i32) {
    %c0_i32 = arith.constant 0 : i32
    %c0_i32_0 = arith.constant 0 : i32
    %c0_i32_1 = arith.constant 0 : i32
    return %arg0, %c0_i32, %c0_i32_0 : i32, i32, i32
  }
  func.func @transform_2(%arg0: i32) -> (i32, i32, i32) {
    %c0_i32 = arith.constant 0 : i32
    %c0_i32_0 = arith.constant 0 : i32
    %c0_i32_1 = arith.constant 0 : i32
    return %arg0, %c0_i32, %c0_i32_0 : i32, i32, i32
  }
  func.func @transform_3(%arg0: i32) -> (i32, i32, i32) {
    %c0_i32 = arith.constant 0 : i32
    %c0_i32_0 = arith.constant 0 : i32
    %c0_i32_1 = arith.constant 0 : i32
    return %arg0, %c0_i32, %c0_i32_0 : i32, i32, i32
  }
  func.func @transform_4(%arg0: i32) -> (i32, i32, i32) {
    %c0_i32 = arith.constant 0 : i32
    %c0_i32_0 = arith.constant 0 : i32
    %c0_i32_1 = arith.constant 0 : i32
    return %arg0, %c0_i32, %c0_i32_0 : i32, i32, i32
  }
}

module attributes {stable_mosaic.version = 11 : i64} {
  func.func @_spec_av_kernel(%arg0: i32, %arg1: memref<16x4x4xf32, #tpu.memory_space<vmem>>, %arg2: memref<16x4x4xf32, #tpu.memory_space<vmem>>, %arg3: memref<16x4x4xf32, #tpu.memory_space<vmem>>, %arg4: memref<16x4x4xf32, #tpu.memory_space<vmem>>, %arg5: memref<16x4x8xf32, #tpu.memory_space<vmem>>) attributes {dimension_semantics = [#tpu.dimension_semantics<parallel>], iteration_bounds = array<i64: 2>, scalar_prefetch = 0 : i64, scratch_operands = 0 : i64, tpu.core_type = #tpu.core_type<tc>, window_params = [{transform_indices = @transform_0, window_bounds = array<i64: 16, 4, 4>}, {transform_indices = @transform_1, window_bounds = array<i64: 16, 4, 4>}, {transform_indices = @transform_2, window_bounds = array<i64: 16, 4, 4>}, {transform_indices = @transform_3, window_bounds = array<i64: 16, 4, 4>}, {transform_indices = @transform_4, window_bounds = array<i64: 16, 4, 8>}]} {
    %c0 = arith.constant 0 : index
    %c0_0 = arith.constant 0 : index
    %c0_1 = arith.constant 0 : index
    %0 = vector.load %arg1[%c0, %c0_0, %c0_1] : memref<16x4x4xf32, #tpu.memory_space<vmem>>, vector<16x4x4xf32>
    %c0_2 = arith.constant 0 : index
    %c0_3 = arith.constant 0 : index
    %c0_4 = arith.constant 0 : index
    %1 = vector.load %arg2[%c0_2, %c0_3, %c0_4] : memref<16x4x4xf32, #tpu.memory_space<vmem>>, vector<16x4x4xf32>
    %c0_5 = arith.constant 0 : index
    %c0_6 = arith.constant 0 : index
    %c0_7 = arith.constant 0 : index
    %2 = vector.load %arg3[%c0_5, %c0_6, %c0_7] : memref<16x4x4xf32, #tpu.memory_space<vmem>>, vector<16x4x4xf32>
    %c0_8 = arith.constant 0 : index
    %c0_9 = arith.constant 0 : index
    %c0_10 = arith.constant 0 : index
    %3 = vector.load %arg4[%c0_8, %c0_9, %c0_10] : memref<16x4x4xf32, #tpu.memory_space<vmem>>, vector<16x4x4xf32>
    %4 = tpu.concatenate %0, %1 in 2 : vector<16x4x4xf32>, vector<16x4x4xf32> -> vector<16x4x8xf32>
    %5 = arith.truncf %4 : vector<16x4x8xf32> to vector<16x4x8xbf16>
    %cst = arith.constant 0.000000e+00 : f32
    %6 = vector.broadcast %cst : f32 to vector<16x4x4xf32>
    %7 = arith.subf %6, %3 : vector<16x4x4xf32>
    %8 = tpu.concatenate %2, %7 in 2 : vector<16x4x4xf32>, vector<16x4x4xf32> -> vector<16x4x8xf32>
    %9 = arith.truncf %8 : vector<16x4x8xf32> to vector<16x4x8xbf16>
    %10 = tpu.concatenate %3, %2 in 2 : vector<16x4x4xf32>, vector<16x4x4xf32> -> vector<16x4x8xf32>
    %11 = arith.truncf %10 : vector<16x4x8xf32> to vector<16x4x8xbf16>
    "tpu.trace_start"() <{level = 10 : i32, message = "gey,gxy->gex"}> : () -> ()
    %cst_11 = arith.constant dense<0.000000e+00> : vector<16x4x4xf32>
    %12 = tpu.matmul %5, %9, %cst_11 {dimension_numbers = #tpu.dot_dimension_numbers<[2], [2], [1], [1], [0, 0, 0, 1, 1, 1], [0], [0]>} : vector<16x4x8xbf16>, vector<16x4x8xbf16>, vector<16x4x4xf32> -> vector<16x4x4xf32>
    %cst_12 = arith.constant dense<0.000000e+00> : vector<16x4x4xf32>
    %13 = tpu.matmul %5, %11, %cst_12 {dimension_numbers = #tpu.dot_dimension_numbers<[2], [2], [1], [1], [0, 0, 0, 1, 1, 1], [0], [0]>} : vector<16x4x8xbf16>, vector<16x4x8xbf16>, vector<16x4x4xf32> -> vector<16x4x4xf32>
    "tpu.trace_stop"() : () -> ()
    %14 = tpu.concatenate %12, %13 in 2 : vector<16x4x4xf32>, vector<16x4x4xf32> -> vector<16x4x8xf32>
    %cst_13 = arith.constant 9.765625E-4 : f32
    %15 = vector.broadcast %cst_13 : f32 to vector<16x4x8xf32>
    %16 = arith.mulf %14, %15 : vector<16x4x8xf32>
    %c0_14 = arith.constant 0 : index
    %c0_15 = arith.constant 0 : index
    %c0_16 = arith.constant 0 : index
    %17 = vector.load %arg5[%c0_14, %c0_15, %c0_16] : memref<16x4x8xf32, #tpu.memory_space<vmem>>, vector<16x4x8xf32>
    tpu.vector_store %arg5[%c0_14, %c0_15, %c0_16], %16 {strides = array<i32>} : memref<16x4x8xf32, #tpu.memory_space<vmem>>, vector<16x4x8xf32>,
    return
  }
  func.func @transform_0(%arg0: i32) -> (i32, i32, i32) {
    %c0_i32 = arith.constant 0 : i32
    %c0_i32_0 = arith.constant 0 : i32
    %c0_i32_1 = arith.constant 0 : i32
    return %arg0, %c0_i32, %c0_i32_0 : i32, i32, i32
  }
  func.func @transform_1(%arg0: i32) -> (i32, i32, i32) {
    %c0_i32 = arith.constant 0 : i32
    %c0_i32_0 = arith.constant 0 : i32
    %c0_i32_1 = arith.constant 0 : i32
    return %arg0, %c0_i32, %c0_i32_0 : i32, i32, i32
  }
  func.func @transform_2(%arg0: i32) -> (i32, i32, i32) {
    %c0_i32 = arith.constant 0 : i32
    %c0_i32_0 = arith.constant 0 : i32
    %c0_i32_1 = arith.constant 0 : i32
    return %arg0, %c0_i32, %c0_i32_0 : i32, i32, i32
  }
  func.func @transform_3(%arg0: i32) -> (i32, i32, i32) {
    %c0_i32 = arith.constant 0 : i32
    %c0_i32_0 = arith.constant 0 : i32
    %c0_i32_1 = arith.constant 0 : i32
    return %arg0, %c0_i32, %c0_i32_0 : i32, i32, i32
  }
  func.func @transform_4(%arg0: i32) -> (i32, i32, i32) {
    %c0_i32 = arith.constant 0 : i32
    %c0_i32_0 = arith.constant 0 : i32
    %c0_i32_1 = arith.constant 0 : i32
    return %arg0, %c0_i32, %c0_i32_0 : i32, i32, i32
  }
}

module attributes {stable_mosaic.version = 11 : i64} {
  func.func @_recon_kernel(%arg0: i32, %arg1: memref<1x8x32xf32, #tpu.memory_space<vmem>>, %arg2: memref<1x4x32xf32, #tpu.memory_space<vmem>>, %arg3: memref<1x8x32xf32, #tpu.memory_space<vmem>>, %arg4: memref<1x4x32xf32, #tpu.memory_space<vmem>>, %arg5: memref<64x64xf32, #tpu.memory_space<vmem>>, %arg6: memref<1x16x32xf32, #tpu.memory_space<vmem>>, %arg7: memref<16x32xf32, #tpu.memory_space<vmem>>) attributes {dimension_semantics = [#tpu.dimension_semantics<parallel>], iteration_bounds = array<i64: 2>, scalar_prefetch = 0 : i64, scratch_operands = 1 : i64, tpu.core_type = #tpu.core_type<tc>, window_params = [{transform_indices = @transform_0, window_bounds = array<i64: 1, 8, 32>}, {transform_indices = @transform_1, window_bounds = array<i64: 1, 4, 32>}, {transform_indices = @transform_2, window_bounds = array<i64: 1, 8, 32>}, {transform_indices = @transform_3, window_bounds = array<i64: 1, 4, 32>}, {pipeline_mode = #tpu.pipeline_mode<synchronous>, transform_indices = @transform_4, window_bounds = array<i64: 64, 64>}, {transform_indices = @transform_5, window_bounds = array<i64: 1, 16, 32>}]} {
    %c0 = arith.constant 0 : index
    %c0_0 = arith.constant 0 : index
    %0 = vector.load %arg5[%c0, %c0_0] : memref<64x64xf32, #tpu.memory_space<vmem>>, vector<64x64xf32>
    %1 = vector.extract_strided_slice %0 {offsets = [0, 0], sizes = [32, 64], strides = [1, 1]} : vector<64x64xf32> to vector<32x64xf32>
    %2 = vector.extract_strided_slice %0 {offsets = [32, 0], sizes = [32, 64], strides = [1, 1]} : vector<64x64xf32> to vector<32x64xf32>
    %c0_1 = arith.constant 0 : index
    %c0_2 = arith.constant 0 : index
    %c0_3 = arith.constant 0 : index
    %3 = vector.load %arg4[%c0_1, %c0_2, %c0_3] : memref<1x4x32xf32, #tpu.memory_space<vmem>>, vector<1x4x32xf32>
    %4 = vector.shape_cast %3 : vector<1x4x32xf32> to vector<4x32xf32>
    %c0_4 = arith.constant 0 : index
    %c0_5 = arith.constant 0 : index
    %c0_6 = arith.constant 0 : index
    %5 = vector.load %arg2[%c0_4, %c0_5, %c0_6] : memref<1x4x32xf32, #tpu.memory_space<vmem>>, vector<1x4x32xf32>
    %6 = vector.shape_cast %5 : vector<1x4x32xf32> to vector<4x32xf32>
    %7 = arith.addf %4, %6 : vector<4x32xf32>
    %c0_7 = arith.constant 0 : index
    %c0_8 = arith.constant 0 : index
    %c0_9 = arith.constant 0 : index
    %8 = vector.load %arg4[%c0_7, %c0_8, %c0_9] : memref<1x4x32xf32, #tpu.memory_space<vmem>>, vector<1x4x32xf32>
    %9 = vector.shape_cast %8 : vector<1x4x32xf32> to vector<4x32xf32>
    %10 = arith.addf %6, %9 : vector<4x32xf32>
    %cst = arith.constant dense<0.000000e+00> : vector<4x64xf32>
    %11 = tpu.matmul %7, %1, %cst {dimension_numbers = #tpu.dot_dimension_numbers<[1], [0], [0], [1], [0, 0, 1, 1], [], []>} : vector<4x32xf32>, vector<32x64xf32>, vector<4x64xf32> -> vector<4x64xf32>
    %cst_10 = arith.constant dense<0.000000e+00> : vector<4x64xf32>
    %12 = tpu.matmul %10, %2, %cst_10 {dimension_numbers = #tpu.dot_dimension_numbers<[1], [0], [0], [1], [0, 0, 1, 1], [], []>} : vector<4x32xf32>, vector<32x64xf32>, vector<4x64xf32> -> vector<4x64xf32>
    %13 = arith.addf %11, %12 : vector<4x64xf32>
    %14 = vector.extract_strided_slice %13 {offsets = [0, 0], sizes = [4, 32], strides = [1, 1]} : vector<4x64xf32> to vector<4x32xf32>
    %c0_11 = arith.constant 0 : index
    %c0_12 = arith.constant 0 : index
    %15 = tpu.strided_load %arg7[%c0_11, %c0_12] {strides = array<i32: 2, 1>} : memref<16x32xf32, #tpu.memory_space<vmem>>, vector<4x32xf32>
    tpu.strided_store %arg7[%c0_11, %c0_12], %14 {strides = array<i32: 2, 1>} : memref<16x32xf32, #tpu.memory_space<vmem>>, vector<4x32xf32>
    %16 = vector.extract_strided_slice %13 {offsets = [0, 32], sizes = [4, 32], strides = [1, 1]} : vector<4x64xf32> to vector<4x32xf32>
    %c1 = arith.constant 1 : index
    %c0_13 = arith.constant 0 : index
    %17 = tpu.strided_load %arg7[%c1, %c0_13] {strides = array<i32: 2, 1>} : memref<16x32xf32, #tpu.memory_space<vmem>>, vector<4x32xf32>
    tpu.strided_store %arg7[%c1, %c0_13], %16 {strides = array<i32: 2, 1>} : memref<16x32xf32, #tpu.memory_space<vmem>>, vector<4x32xf32>
    %c0_14 = arith.constant 0 : index
    %c0_15 = arith.constant 0 : index
    %18 = vector.load %arg7[%c0_14, %c0_15] : memref<16x32xf32, #tpu.memory_space<vmem>>, vector<8x32xf32>
    %c0_16 = arith.constant 0 : index
    %c0_17 = arith.constant 0 : index
    %c0_18 = arith.constant 0 : index
    %19 = vector.load %arg1[%c0_16, %c0_17, %c0_18] : memref<1x8x32xf32, #tpu.memory_space<vmem>>, vector<1x8x32xf32>
    %20 = vector.shape_cast %19 : vector<1x8x32xf32> to vector<8x32xf32>
    %21 = arith.addf %18, %20 : vector<8x32xf32>
    %c0_19 = arith.constant 0 : index
    %c0_20 = arith.constant 0 : index
    %c0_21 = arith.constant 0 : index
    %22 = vector.load %arg3[%c0_19, %c0_20, %c0_21] : memref<1x8x32xf32, #tpu.memory_space<vmem>>, vector<1x8x32xf32>
    %23 = vector.shape_cast %22 : vector<1x8x32xf32> to vector<8x32xf32>
    %24 = arith.addf %20, %23 : vector<8x32xf32>
    %cst_22 = arith.constant dense<0.000000e+00> : vector<8x64xf32>
    %25 = tpu.matmul %21, %1, %cst_22 {dimension_numbers = #tpu.dot_dimension_numbers<[1], [0], [0], [1], [0, 0, 1, 1], [], []>} : vector<8x32xf32>, vector<32x64xf32>, vector<8x64xf32> -> vector<8x64xf32>
    %cst_23 = arith.constant dense<0.000000e+00> : vector<8x64xf32>
    %26 = tpu.matmul %24, %2, %cst_23 {dimension_numbers = #tpu.dot_dimension_numbers<[1], [0], [0], [1], [0, 0, 1, 1], [], []>} : vector<8x32xf32>, vector<32x64xf32>, vector<8x64xf32> -> vector<8x64xf32>
    %27 = arith.addf %25, %26 : vector<8x64xf32>
    %28 = vector.extract_strided_slice %27 {offsets = [0, 0], sizes = [8, 32], strides = [1, 1]} : vector<8x64xf32> to vector<8x32xf32>
    %c0_24 = arith.constant 0 : index
    %c0_25 = arith.constant 0 : index
    %29 = tpu.strided_load %arg7[%c0_24, %c0_25] {strides = array<i32: 2, 1>} : memref<16x32xf32, #tpu.memory_space<vmem>>, vector<8x32xf32>
    tpu.strided_store %arg7[%c0_24, %c0_25], %28 {strides = array<i32: 2, 1>} : memref<16x32xf32, #tpu.memory_space<vmem>>, vector<8x32xf32>
    %30 = vector.extract_strided_slice %27 {offsets = [0, 32], sizes = [8, 32], strides = [1, 1]} : vector<8x64xf32> to vector<8x32xf32>
    %c1_26 = arith.constant 1 : index
    %c0_27 = arith.constant 0 : index
    %31 = tpu.strided_load %arg7[%c1_26, %c0_27] {strides = array<i32: 2, 1>} : memref<16x32xf32, #tpu.memory_space<vmem>>, vector<8x32xf32>
    tpu.strided_store %arg7[%c1_26, %c0_27], %30 {strides = array<i32: 2, 1>} : memref<16x32xf32, #tpu.memory_space<vmem>>, vector<8x32xf32>
    %c0_28 = arith.constant 0 : index
    %c0_29 = arith.constant 0 : index
    %32 = vector.load %arg7[%c0_28, %c0_29] : memref<16x32xf32, #tpu.memory_space<vmem>>, vector<16x32xf32>
    %c0_30 = arith.constant 0 : index
    %c0_31 = arith.constant 0 : index
    %c0_32 = arith.constant 0 : index
    %33 = vector.load %arg6[%c0_30, %c0_31, %c0_32] : memref<1x16x32xf32, #tpu.memory_space<vmem>>, vector<1x16x32xf32>
    %34 = vector.shape_cast %33 : vector<1x16x32xf32> to vector<16x32xf32>
    %35 = vector.shape_cast %32 : vector<16x32xf32> to vector<1x16x32xf32>
    tpu.vector_store %arg6[%c0_30, %c0_31, %c0_32], %35 {strides = array<i32>} : memref<1x16x32xf32, #tpu.memory_space<vmem>>, vector<1x16x32xf32>,
    return
  }
  func.func @transform_0(%arg0: i32) -> (i32, i32, i32) {
    %c0_i32 = arith.constant 0 : i32
    %c0_i32_0 = arith.constant 0 : i32
    %c0_i32_1 = arith.constant 0 : i32
    return %arg0, %c0_i32, %c0_i32_0 : i32, i32, i32
  }
  func.func @transform_1(%arg0: i32) -> (i32, i32, i32) {
    %c0_i32 = arith.constant 0 : i32
    %c0_i32_0 = arith.constant 0 : i32
    %c0_i32_1 = arith.constant 0 : i32
    return %arg0, %c0_i32, %c0_i32_0 : i32, i32, i32
  }
  func.func @transform_2(%arg0: i32) -> (i32, i32, i32) {
    %c0_i32 = arith.constant 0 : i32
    %c0_i32_0 = arith.constant 0 : i32
    %c0_i32_1 = arith.constant 0 : i32
    return %arg0, %c0_i32, %c0_i32_0 : i32, i32, i32
  }
  func.func @transform_3(%arg0: i32) -> (i32, i32, i32) {
    %c0_i32 = arith.constant 0 : i32
    %c0_i32_0 = arith.constant 0 : i32
    %c0_i32_1 = arith.constant 0 : i32
    return %arg0, %c0_i32, %c0_i32_0 : i32, i32, i32
  }
  func.func @transform_4(%arg0: i32) -> (i32, i32) {
    %c0_i32 = arith.constant 0 : i32
    %c0_i32_0 = arith.constant 0 : i32
    %c0_i32_1 = arith.constant 0 : i32
    return %c0_i32, %c0_i32_0 : i32, i32
  }
  func.func @transform_5(%arg0: i32) -> (i32, i32, i32) {
    %c0_i32 = arith.constant 0 : i32
    %c0_i32_0 = arith.constant 0 : i32
    %c0_i32_1 = arith.constant 0 : i32
    return %arg0, %c0_i32, %c0_i32_0 : i32, i32, i32
  }
}

module attributes {stable_mosaic.version = 11 : i64} {
  func.func @_linear_bias_kernel(%arg0: i32, %arg1: memref<16x32xf32, #tpu.memory_space<vmem>>, %arg2: memref<32x32xf32, #tpu.memory_space<vmem>>, %arg3: memref<1x32xf32, #tpu.memory_space<vmem>>, %arg4: memref<16x32xf32, #tpu.memory_space<vmem>>) attributes {dimension_semantics = [#tpu.dimension_semantics<parallel>], iteration_bounds = array<i64: 2>, scalar_prefetch = 0 : i64, scratch_operands = 0 : i64, tpu.core_type = #tpu.core_type<tc>, window_params = [{transform_indices = @transform_0, window_bounds = array<i64: 16, 32>}, {pipeline_mode = #tpu.pipeline_mode<synchronous>, transform_indices = @transform_1, window_bounds = array<i64: 32, 32>}, {pipeline_mode = #tpu.pipeline_mode<synchronous>, transform_indices = @transform_2, window_bounds = array<i64: 1, 32>}, {transform_indices = @transform_3, window_bounds = array<i64: 16, 32>}]} {
    %c0 = arith.constant 0 : index
    %c0_0 = arith.constant 0 : index
    %0 = vector.load %arg1[%c0, %c0_0] : memref<16x32xf32, #tpu.memory_space<vmem>>, vector<16x32xf32>
    %1 = arith.truncf %0 : vector<16x32xf32> to vector<16x32xbf16>
    %c0_1 = arith.constant 0 : index
    %c0_2 = arith.constant 0 : index
    %2 = vector.load %arg2[%c0_1, %c0_2] : memref<32x32xf32, #tpu.memory_space<vmem>>, vector<32x32xf32>
    %3 = arith.truncf %2 : vector<32x32xf32> to vector<32x32xbf16>
    %cst = arith.constant dense<0.000000e+00> : vector<16x32xf32>
    %4 = tpu.matmul %1, %3, %cst {dimension_numbers = #tpu.dot_dimension_numbers<[1], [0], [0], [1], [0, 0, 1, 1], [], []>} : vector<16x32xbf16>, vector<32x32xbf16>, vector<16x32xf32> -> vector<16x32xf32>
    %c0_3 = arith.constant 0 : index
    %c0_4 = arith.constant 0 : index
    %5 = vector.load %arg3[%c0_3, %c0_4] : memref<1x32xf32, #tpu.memory_space<vmem>>, vector<1x32xf32>
    %6 = vector.broadcast %5 : vector<1x32xf32> to vector<16x32xf32>
    %7 = arith.addf %4, %6 : vector<16x32xf32>
    %c0_5 = arith.constant 0 : index
    %c0_6 = arith.constant 0 : index
    %8 = vector.load %arg4[%c0_5, %c0_6] : memref<16x32xf32, #tpu.memory_space<vmem>>, vector<16x32xf32>
    tpu.vector_store %arg4[%c0_5, %c0_6], %7 {strides = array<i32>} : memref<16x32xf32, #tpu.memory_space<vmem>>, vector<16x32xf32>,
    return
  }
  func.func @transform_0(%arg0: i32) -> (i32, i32) {
    %c0_i32 = arith.constant 0 : i32
    %c0_i32_0 = arith.constant 0 : i32
    return %arg0, %c0_i32 : i32, i32
  }
  func.func @transform_1(%arg0: i32) -> (i32, i32) {
    %c0_i32 = arith.constant 0 : i32
    %c0_i32_0 = arith.constant 0 : i32
    %c0_i32_1 = arith.constant 0 : i32
    return %c0_i32, %c0_i32_0 : i32, i32
  }
  func.func @transform_2(%arg0: i32) -> (i32, i32) {
    %c0_i32 = arith.constant 0 : i32
    %c0_i32_0 = arith.constant 0 : i32
    %c0_i32_1 = arith.constant 0 : i32
    return %c0_i32, %c0_i32_0 : i32, i32
  }
  func.func @transform_3(%arg0: i32) -> (i32, i32) {
    %c0_i32 = arith.constant 0 : i32
    %c0_i32_0 = arith.constant 0 : i32
    return %arg0, %c0_i32 : i32, i32
  }
}

</mosaic_0001>

<llo_original>
// kernel: mwt_transform_cross_forward.9
$region0: #{mwt_transform_cross_forward.9}
  #allocation0 [shape = 'u32[]', space=smem, size = 0x4, offset = 0x4, fixed_abs, tag = 'smem constant byte address 0x4 - core index']
  #allocation1 [shape = 'u32[72,128]{1,0:T(1,128)}', space=vmem, size = 0x9000, scoped, tag = 'internal scratch']
  #allocation2 [shape = 'f32[16,32]{1,0:T(8,128)}', space=vmem, size = 0x2000, scoped, tag = 'scratch operand']
  %s0 = inlined_call_operand.vmem [shape: f32[4,16,32], index: 0, kind: input, shape index: {}]
  %s1 = inlined_call_operand.vmem [shape: f32[64,64], index: 1, kind: input, shape index: {}]
  %s2 = inlined_call_operand.vmem [shape: f32[4,8,32], index: 2, kind: output, shape index: {0}]
  %s3 = inlined_call_operand.vmem [shape: f32[4,4,32], index: 3, kind: output, shape index: {1}]
  %s4 = inlined_call_operand.vmem [shape: f32[4,8,32], index: 4, kind: output, shape index: {2}]
  %s5 = inlined_call_operand.vmem [shape: f32[4,4,32], index: 5, kind: output, shape index: {3}]
  %6 = xla_tuple %s2, %s3, %s4, %s5
  %s7 = sld [smem:[#allocation0]]
  $region65: #{mwt_transform_cross_forward.9} parent=0
    _
  %s9 = ssub.s32 1, %s7
  %s10 = scalar_select 0, %s9, %s7
  loop: start=0, step=1, limit=6
  $region2: #{mwt_transform_cross_forward.9} parent=0 // loop_pre_header
    _
  $region3: #{mwt_transform_cross_forward.9} parent=0 // loop_header
    %s12 = sphi 0, %s16
    %p13 = scmp.ge.s32.totalorder %s12, 6
    %s22 = sphi 0, %s24
    %s25 = sphi 0, %s22
    %s26 = sphi 0, %s25
    %s42 = sphi 0, %s26
    %s46 = sphi 0, %s46
    %s48 = sphi 0, %s46
    %s49 = sphi 0, %s48
    %s63 = sphi 0, %s49
    %s69 = sphi 0, %s71
    %s72 = sphi 0, %s69
    %s73 = sphi 0, %s72
    %s89 = sphi 0, %s73
    %s95 = sphi 0, %s97
    %s98 = sphi 0, %s95
    %s99 = sphi 0, %s98
    %s115 = sphi 0, %s99
    %s121 = sphi 0, %s123
    %s124 = sphi 0, %s121
    %s125 = sphi 0, %s124
    %s141 = sphi 0, %s125
    %s147 = sphi 0, %s149
    %s150 = sphi 0, %s147
    %s151 = sphi 0, %s150
    %s167 = sphi 0, %s151
  $region4: #{mwt_transform_cross_forward.9} parent=0 // loop_header_branch
    %15 = sbr.rel (%p13) target = $region8
  $region5: #{mwt_transform_cross_forward.9} parent=0 // loop_body
    %s17 = ssub.s32 %s12, 1
    %s18 = ssub.s32 %s12, 2
    %s19 = sadd.s32 %s12, 1
    %s20 = ssub.s32 %s12, %s19
    %p21 = scmp.eq.s32.totalorder %s20, 0
    %s23 = sadd.s32 %s22, 1
    %s24 = scalar_select %p21, %s22, %s23
    %p27 = pneg %p21
    %p28 = scmp.eq.s32.totalorder %s12, 3
    %p29 = por %p27, %p28
    %p30 = scmp.ne.s32.totalorder %s22, %s25
    %p31 = scmp.eq.s32.totalorder %s12, 0
    %p32 = por %p30, %p31
    %p33 = scmp.ne.s32.totalorder %s22, %s25
    %p34 = scmp.eq.s32.totalorder %s17, 3
    %p35 = por %p33, %p34
    %p36 = scmp.ne.s32.totalorder %s25, %s26
    %p37 = scmp.eq.s32.totalorder %s17, 0
    %p38 = por %p36, %p37
    %p39 = scmp.ne.s32.totalorder %s25, %s26
    %p40 = scmp.eq.s32.totalorder %s18, 3
    %p41 = por %p39, %p40
    %p43 = scmp.ne.s32.totalorder %s26, %s42
    %p44 = scmp.eq.s32.totalorder %s18, 0
    %p45 = por %p43, %p44
    %s47 = sadd.s32 %s46, 1
    %p50 = scmp.eq.s32.totalorder %s12, 3
    %p51 = scmp.ne.s32.totalorder %s46, %s48
    %p52 = scmp.eq.s32.totalorder %s12, 0
    %p53 = por %p51, %p52
    %p54 = scmp.ne.s32.totalorder %s46, %s48
    %p55 = scmp.eq.s32.totalorder %s17, 3
    %p56 = por %p54, %p55
    %p57 = scmp.ne.s32.totalorder %s48, %s49
    %p58 = scmp.eq.s32.totalorder %s17, 0
    %p59 = por %p57, %p58
    %p60 = scmp.ne.s32.totalorder %s48, %s49
    %p61 = scmp.eq.s32.totalorder %s18, 3
    %p62 = por %p60, %p61
    %p64 = scmp.ne.s32.totalorder %s49, %s63
    %p65 = scmp.eq.s32.totalorder %s18, 0
    %p66 = por %p64, %p65
    %s67 = ssub.s32 %s12, %s19
    %p68 = scmp.eq.s32.totalorder %s67, 0
    %s70 = sadd.s32 %s69, 1
    %s71 = scalar_select %p68, %s69, %s70
    %p74 = pneg %p68
    %p75 = scmp.eq.s32.totalorder %s12, 3
    %p76 = por %p74, %p75
    %p77 = scmp.ne.s32.totalorder %s69, %s72
    %p78 = scmp.eq.s32.totalorder %s12, 0
    %p79 = por %p77, %p78
    %p80 = scmp.ne.s32.totalorder %s69, %s72
    %p81 = scmp.eq.s32.totalorder %s17, 3
    %p82 = por %p80, %p81
    %p83 = scmp.ne.s32.totalorder %s72, %s73
    %p84 = scmp.eq.s32.totalorder %s17, 0
    %p85 = por %p83, %p84
    %p86 = scmp.ne.s32.totalorder %s72, %s73
    %p87 = scmp.eq.s32.totalorder %s18, 3
    %p88 = por %p86, %p87
    %p90 = scmp.ne.s32.totalorder %s73, %s89
    %p91 = scmp.eq.s32.totalorder %s18, 0
    %p92 = por %p90, %p91
    %s93 = ssub.s32 %s12, %s19
    %p94 = scmp.eq.s32.totalorder %s93, 0
    %s96 = sadd.s32 %s95, 1
    %s97 = scalar_select %p94, %s95, %s96
    %p100 = pneg %p94
    %p101 = scmp.eq.s32.totalorder %s12, 3
    %p102 = por %p100, %p101
    %p103 = scmp.ne.s32.totalorder %s95, %s98
    %p104 = scmp.eq.s32.totalorder %s12, 0
    %p105 = por %p103, %p104
    %p106 = scmp.ne.s32.totalorder %s95, %s98
    %p107 = scmp.eq.s32.totalorder %s17, 3
    %p108 = por %p106, %p107
    %p109 = scmp.ne.s32.totalorder %s98, %s99
    %p110 = scmp.eq.s32.totalorder %s17, 0
    %p111 = por %p109, %p110
    %p112 = scmp.ne.s32.totalorder %s98, %s99
    %p113 = scmp.eq.s32.totalorder %s18, 3
    %p114 = por %p112, %p113
    %p116 = scmp.ne.s32.totalorder %s99, %s115
    %p117 = scmp.eq.s32.totalorder %s18, 0
    %p118 = por %p116, %p117
    %s119 = ssub.s32 %s12, %s19
    %p120 = scmp.eq.s32.totalorder %s119, 0
    %s122 = sadd.s32 %s121, 1
    %s123 = scalar_select %p120, %s121, %s122
    %p126 = pneg %p120
    %p127 = scmp.eq.s32.totalorder %s12, 3
    %p128 = por %p126, %p127
    %p129 = scmp.ne.s32.totalorder %s121, %s124
    %p130 = scmp.eq.s32.totalorder %s12, 0
    %p131 = por %p129, %p130
    %p132 = scmp.ne.s32.totalorder %s121, %s124
    %p133 = scmp.eq.s32.totalorder %s17, 3
    %p134 = por %p132, %p133
    %p135 = scmp.ne.s32.totalorder %s124, %s125
    %p136 = scmp.eq.s32.totalorder %s17, 0
    %p137 = por %p135, %p136
    %p138 = scmp.ne.s32.totalorder %s124, %s125
    %p139 = scmp.eq.s32.totalorder %s18, 3
    %p140 = por %p138, %p139
    %p142 = scmp.ne.s32.totalorder %s125, %s141
    %p143 = scmp.eq.s32.totalorder %s18, 0
    %p144 = por %p142, %p143
    %s145 = ssub.s32 %s12, %s19
    %p146 = scmp.eq.s32.totalorder %s145, 0
    %s148 = sadd.s32 %s147, 1
    %s149 = scalar_select %p146, %s147, %s148
    %p152 = pneg %p146
    %p153 = scmp.eq.s32.totalorder %s12, 3
    %p154 = por %p152, %p153
    %p155 = scmp.ne.s32.totalorder %s147, %s150
    %p156 = scmp.eq.s32.totalorder %s12, 0
    %p157 = por %p155, %p156
    %p158 = scmp.ne.s32.totalorder %s147, %s150
    %p159 = scmp.eq.s32.totalorder %s17, 3
    %p160 = por %p158, %p159
    %p161 = scmp.ne.s32.totalorder %s150, %s151
    %p162 = scmp.eq.s32.totalorder %s17, 0
    %p163 = por %p161, %p162
    %p164 = scmp.ne.s32.totalorder %s150, %s151
    %p165 = scmp.eq.s32.totalorder %s18, 3
    %p166 = por %p164, %p165
    %p168 = scmp.ne.s32.totalorder %s151, %s167
    %p169 = scmp.eq.s32.totalorder %s18, 0
    %p170 = por %p168, %p169
    %p171 = scmp.le.s32.totalorder 1, %s12
    %p172 = scmp.lt.s32.totalorder %s12, 5
    %p173 = pnand %p171, %p172
    %p174 = pneg %p173
    // Predicated region
    $region9: #{mwt_transform_cross_forward.9} parent=5 // pred_check
      _
    $region10: #{mwt_transform_cross_forward.9} parent=5 // pred_check_branch
      %176 = sbr.rel (%p173) target = $region12
    $region11: #{mwt_transform_cross_forward.9} parent=5 // pred_region
      %s177 = ssub.s32 %s12, 1
      // Predicated region
      $region13: #{mwt_transform_cross_forward.9} parent=11 // pred_check
        %p178 = pneg %p59
      $region14: #{mwt_transform_cross_forward.9} parent=11 // pred_check_branch
        %180 = sbr.rel (%p178) target = $region16
      $region15: #{mwt_transform_cross_forward.9} parent=11 // pred_region
        _
      $region16: #{mwt_transform_cross_forward.9} parent=11 // pred_fallthru
        _
    $region12: #{mwt_transform_cross_forward.9} parent=5 // pred_fallthru
      _
    %p181 = scmp.lt.s32.totalorder %s12, 4
    // Predicated region
    $region17: #{mwt_transform_cross_forward.9} parent=5 // pred_check
      %p182 = pneg %p181
    $region18: #{mwt_transform_cross_forward.9} parent=5 // pred_check_branch
      %184 = sbr.rel (%p182) target = $region20
    $region19: #{mwt_transform_cross_forward.9} parent=5 // pred_region
      // Predicated region
      $region21: #{mwt_transform_cross_forward.9} parent=19 // pred_check
        %p185 = pneg %p32
      $region22: #{mwt_transform_cross_forward.9} parent=19 // pred_check_branch
        %187 = sbr.rel (%p185) target = $region24
      $region23: #{mwt_transform_cross_forward.9} parent=19 // pred_region
        %p188 = scmp.lt.s32.totalorder %s12, 3
        %s189 = scalar_select %p188, %s12, 3
        %s190 = smul.addr %s189, 2
        %s191 = smul.addr %s190, 8
        %s192 = scalar_lea.vmem %s0, %s191
      $region24: #{mwt_transform_cross_forward.9} parent=19 // pred_fallthru
        _
    $region20: #{mwt_transform_cross_forward.9} parent=5 // pred_fallthru
      _
    %p193 = scmp.le.s32.totalorder 1, %s12
    %p194 = scmp.lt.s32.totalorder %s12, 5
    %p195 = pnand %p193, %p194
    %p196 = pneg %p195
    // Predicated region
    $region25: #{mwt_transform_cross_forward.9} parent=5 // pred_check
      _
    $region26: #{mwt_transform_cross_forward.9} parent=5 // pred_check_branch
      %198 = sbr.rel (%p195) target = $region28
    $region27: #{mwt_transform_cross_forward.9} parent=5 // pred_region
      %s199 = ssub.s32 %s12, 1
      %p200 = scmp.lt.s32.totalorder %s17, 3
      %s201 = scalar_select %p200, %s17, 3
      %s202 = smul.addr %s201, 2
      %s203 = smul.addr %s202, 8
      %s204 = scalar_lea.vmem %s0, %s203
      %p205 = pneg %p38
      %p206 = pneg %p35
      %p207 = pneg %p59
      %p208 = pneg %p56
      %p209 = pneg %p85
      %p210 = pneg %p82
      %p211 = scmp.lt.s32.totalorder %s17, 3
      %s212 = scalar_select %p211, %s17, 3
      %s213 = smul.addr %s212, 8
      %s214 = scalar_lea.vmem %s2, %s213
      %p215 = pneg %p111
      %p216 = pneg %p108
      %p217 = scmp.lt.s32.totalorder %s17, 3
      %s218 = scalar_select %p217, %s17, 3
      %s219 = smul.addr %s218, 4
      %s220 = scalar_lea.vmem %s3, %s219
      %p221 = pneg %p137
      %p222 = pneg %p134
      %p223 = scmp.lt.s32.totalorder %s17, 3
      %s224 = scalar_select %p223, %s17, 3
      %s225 = smul.addr %s224, 8
      %s226 = scalar_lea.vmem %s4, %s225
      %p227 = pneg %p163
      %p228 = pneg %p160
      %p229 = scmp.lt.s32.totalorder %s17, 3
      %s230 = scalar_select %p229, %s17, 3
      %s231 = smul.addr %s230, 4
      %s232 = scalar_lea.vmem %s5, %s231
      %p233 = scmp.lt.s32.totalorder %s17, 3
      %s234 = scalar_select %p233, %s17, 3
      %s235 = smul.addr %s234, 2
      %s236 = smul.addr %s235, 8
      %s237 = scalar_lea.vmem %s0, %s236
      %p238 = scmp.lt.s32.totalorder %s17, 3
      %s239 = scalar_select %p238, %s17, 3
      %s240 = smul.addr %s239, 8
      %s241 = scalar_lea.vmem %s2, %s240
      %p242 = scmp.lt.s32.totalorder %s17, 3
      %s243 = scalar_select %p242, %s17, 3
      %s244 = smul.addr %s243, 4
      %s245 = scalar_lea.vmem %s3, %s244
      %p246 = scmp.lt.s32.totalorder %s17, 3
      %s247 = scalar_select %p246, %s17, 3
      %s248 = smul.addr %s247, 8
      %s249 = scalar_lea.vmem %s4, %s248
      %p250 = scmp.lt.s32.totalorder %s17, 3
      %s251 = scalar_select %p250, %s17, 3
      %s252 = smul.addr %s251, 4
      %s253 = scalar_lea.vmem %s5, %s252
      %v254 = vld [vmem:[%s1] sm:$0xff]
      %v255 = vld [vmem:[%s1 + $0x8] sm:$0xff]
      %v256 = vld [vmem:[%s1 + $0x10] sm:$0xff]
      %v257 = vld [vmem:[%s1 + $0x18] sm:$0xff]
      %v258 = vld [vmem:[%s1 + $0x20] sm:$0xff]
      %v259 = vld [vmem:[%s1 + $0x28] sm:$0xff]
      %v260 = vld [vmem:[%s1 + $0x30] sm:$0xff]
      %v261 = vld [vmem:[%s1 + $0x38] sm:$0xff]
      %v262 = vld [vmem:[%s237] sm:$0xff]
      %v263 = vld [vmem:[%s237 + $0x8] sm:$0xff]
      %vm264 = vcmask 261120
      %265 = vst.msk [vmem:[#allocation2] sm:$0xff] %vm264, %v262
      %266 = vst.msk [vmem:[#allocation2 + $0x8] sm:$0xff] %vm264, %v263
      %v267 = vld [vmem:[#allocation2] ss:$2 sm:$0xff]
      %s268 = scalar_lea.vmem [#allocation2], 1
      %v269 = vld [vmem:[%s268] ss:$2 sm:$0xff]
      %v271 = vsel %vm264, %v269, 0
      %273 = vmatpush.msra.mxu0 0.0
      %274 = vmatpush.msra.mxu0 0.0
      %275 = vmatpush.msra.mxu0 0.0
      %276 = vmatpush.msra.mxu0 0.0
      %277 = vmatpush.msra.mxu0 0.0
      %278 = vmatpush.msra.mxu0 0.0
      %279 = vmatpush.msra.mxu0 0.0
      %280 = vmatpush.msra.mxu0 0.0
      %281 = vmatpush.msra.mxu0 0.0
      %282 = vmatpush.msra.mxu0 0.0
      %283 = vmatpush.msra.mxu0 0.0
      %284 = vmatpush.msra.mxu0 0.0
      %285 = vmatpush.msra.mxu0 %v261
      %286 = vmatpush.msra.mxu0 %v260
      %287 = vmatpush.msra.mxu0 %v259
      %288 = vmatpush.msra.mxu0 %v258
      %289 = vmatmul.f32.gmra.mxu0 %v271
      %v290 = vpop.f32.mrf.mxu0
      %v291 = vadd.f32 0.0, %v290
      %292 = vdwg.mxu0
      %v294 = vsel %vm264, %v267, 0
      %296 = vmatpush.msra.mxu0 0.0
      %297 = vmatpush.msra.mxu0 0.0
      %298 = vmatpush.msra.mxu0 0.0
      %299 = vmatpush.msra.mxu0 0.0
      %300 = vmatpush.msra.mxu0 0.0
      %301 = vmatpush.msra.mxu0 0.0
      %302 = vmatpush.msra.mxu0 0.0
      %303 = vmatpush.msra.mxu0 0.0
      %304 = vmatpush.msra.mxu0 0.0
      %305 = vmatpush.msra.mxu0 0.0
      %306 = vmatpush.msra.mxu0 0.0
      %307 = vmatpush.msra.mxu0 0.0
      %308 = vmatpush.msra.mxu0 %v257
      %309 = vmatpush.msra.mxu0 %v256
      %310 = vmatpush.msra.mxu0 %v255
      %311 = vmatpush.msra.mxu0 %v254
      %312 = vmatmul.f32.gmra.mxu0 %v294
      %v313 = vpop.f32.mrf.mxu0
      %v314 = vadd.f32 %v291, %v313
      %315 = vdwg.mxu0
      %316 = vst.msk [vmem:[%s241] sm:$0xff] %vm264, %v314
      %318 = vrot.lane.b32.xlu0 %v314, 96
      %v319 = vpop.permute.xlu0 %318
      %321 = vst.msk [vmem:[%s249] sm:$0xff] %vm264, %v319
      %322 = vst.msk [vmem:[#allocation2] sm:$0xff] %vm264, %v319
      %v323 = vld [vmem:[#allocation2] ss:$2 sm:$0xf]
      %v324 = vld [vmem:[%s268] ss:$2 sm:$0xf]
      %v326 = vsel %vm264, %v324, 0
      %328 = vmatpush.msra.mxu0 0.0
      %329 = vmatpush.msra.mxu0 0.0
      %330 = vmatpush.msra.mxu0 0.0
      %331 = vmatpush.msra.mxu0 0.0
      %332 = vmatpush.msra.mxu0 0.0
      %333 = vmatpush.msra.mxu0 0.0
      %334 = vmatpush.msra.mxu0 0.0
      %335 = vmatpush.msra.mxu0 0.0
      %336 = vmatpush.msra.mxu0 0.0
      %337 = vmatpush.msra.mxu0 0.0
      %338 = vmatpush.msra.mxu0 0.0
      %339 = vmatpush.msra.mxu0 0.0
      %340 = vmatpush.msra.mxu0 %v261
      %341 = vmatpush.msra.mxu0 %v260
      %342 = vmatpush.msra.mxu0 %v259
      %343 = vmatpush.msra.mxu0 %v258
      %344 = vmatmul.f32.gmra.mxu0 %v326
      %v345 = vpop.f32.mrf.mxu0
      %v346 = vadd.f32 0.0, %v345
      %347 = vdwg.mxu0
      %v349 = vsel %vm264, %v323, 0
      %351 = vmatpush.msra.mxu0 0.0
      %352 = vmatpush.msra.mxu0 0.0
      %353 = vmatpush.msra.mxu0 0.0
      %354 = vmatpush.msra.mxu0 0.0
      %355 = vmatpush.msra.mxu0 0.0
      %356 = vmatpush.msra.mxu0 0.0
      %357 = vmatpush.msra.mxu0 0.0
      %358 = vmatpush.msra.mxu0 0.0
      %359 = vmatpush.msra.mxu0 0.0
      %360 = vmatpush.msra.mxu0 0.0
      %361 = vmatpush.msra.mxu0 0.0
      %362 = vmatpush.msra.mxu0 0.0
      %363 = vmatpush.msra.mxu0 %v257
      %364 = vmatpush.msra.mxu0 %v256
      %365 = vmatpush.msra.mxu0 %v255
      %366 = vmatpush.msra.mxu0 %v254
      %367 = vmatmul.f32.gmra.mxu0 %v349
      %v368 = vpop.f32.mrf.mxu0
      %v369 = vadd.f32 %v346, %v368
      %370 = vdwg.mxu0
      %vm371 = vcmask 257024
      %372 = vst.msk [vmem:[%s245] sm:$0xf] %vm371, %v369
      %374 = vrot.lane.b32.xlu0 %v369, 96
      %v375 = vpop.permute.xlu0 %374
      %377 = vst.msk [vmem:[%s253] sm:$0xf] %vm371, %v375
      %p378 = scmp.lt.s32.totalorder %s17, 3
      %s379 = scalar_select %p378, %s17, 3
      %s380 = smul.addr %s379, 8
      %s381 = scalar_lea.vmem %s2, %s380
      %p382 = scmp.lt.s32.totalorder %s17, 3
      %s383 = scalar_select %p382, %s17, 3
      %s384 = smul.addr %s383, 4
      %s385 = scalar_lea.vmem %s3, %s384
      %p386 = scmp.lt.s32.totalorder %s17, 3
      %s387 = scalar_select %p386, %s17, 3
      %s388 = smul.addr %s387, 8
      %s389 = scalar_lea.vmem %s4, %s388
      %p390 = scmp.lt.s32.totalorder %s17, 3
      %s391 = scalar_select %p390, %s17, 3
      %s392 = smul.addr %s391, 4
      %s393 = scalar_lea.vmem %s5, %s392
      // Predicated region
      $region29: #{mwt_transform_cross_forward.9} parent=27 // pred_check
        %p394 = pneg %p82
      $region30: #{mwt_transform_cross_forward.9} parent=27 // pred_check_branch
        %396 = sbr.rel (%p394) target = $region32
      $region31: #{mwt_transform_cross_forward.9} parent=27 // pred_region
        _
      $region32: #{mwt_transform_cross_forward.9} parent=27 // pred_fallthru
        _
      // Predicated region
      $region33: #{mwt_transform_cross_forward.9} parent=27 // pred_check
        %p397 = pneg %p108
      $region34: #{mwt_transform_cross_forward.9} parent=27 // pred_check_branch
        %399 = sbr.rel (%p397) target = $region36
      $region35: #{mwt_transform_cross_forward.9} parent=27 // pred_region
        _
      $region36: #{mwt_transform_cross_forward.9} parent=27 // pred_fallthru
        _
      // Predicated region
      $region37: #{mwt_transform_cross_forward.9} parent=27 // pred_check
        %p400 = pneg %p134
      $region38: #{mwt_transform_cross_forward.9} parent=27 // pred_check_branch
        %402 = sbr.rel (%p400) target = $region40
      $region39: #{mwt_transform_cross_forward.9} parent=27 // pred_region
        _
      $region40: #{mwt_transform_cross_forward.9} parent=27 // pred_fallthru
        _
      // Predicated region
      $region41: #{mwt_transform_cross_forward.9} parent=27 // pred_check
        %p403 = pneg %p160
      $region42: #{mwt_transform_cross_forward.9} parent=27 // pred_check_branch
        %405 = sbr.rel (%p403) target = $region44
      $region43: #{mwt_transform_cross_forward.9} parent=27 // pred_region
        _
      $region44: #{mwt_transform_cross_forward.9} parent=27 // pred_fallthru
        _
    $region28: #{mwt_transform_cross_forward.9} parent=5 // pred_fallthru
      _
    %p406 = scmp.le.s32.totalorder 2, %s12
    // Predicated region
    $region45: #{mwt_transform_cross_forward.9} parent=5 // pred_check
      %p407 = pneg %p406
    $region46: #{mwt_transform_cross_forward.9} parent=5 // pred_check_branch
      %409 = sbr.rel (%p407) target = $region48
    $region47: #{mwt_transform_cross_forward.9} parent=5 // pred_region
      %s410 = ssub.s32 %s12, 2
      // Predicated region
      $region49: #{mwt_transform_cross_forward.9} parent=47 // pred_check
        %p411 = pneg %p88
      $region50: #{mwt_transform_cross_forward.9} parent=47 // pred_check_branch
        %413 = sbr.rel (%p411) target = $region52
      $region51: #{mwt_transform_cross_forward.9} parent=47 // pred_region
        %p414 = scmp.lt.s32.totalorder %s18, 3
        %s415 = scalar_select %p414, %s18, 3
        %s416 = smul.addr %s415, 8
        %s417 = scalar_lea.vmem %s2, %s416
      $region52: #{mwt_transform_cross_forward.9} parent=47 // pred_fallthru
        _
      // Predicated region
      $region53: #{mwt_transform_cross_forward.9} parent=47 // pred_check
        %p418 = pneg %p114
      $region54: #{mwt_transform_cross_forward.9} parent=47 // pred_check_branch
        %420 = sbr.rel (%p418) target = $region56
      $region55: #{mwt_transform_cross_forward.9} parent=47 // pred_region
        %p421 = scmp.lt.s32.totalorder %s18, 3
        %s422 = scalar_select %p421, %s18, 3
        %s423 = smul.addr %s422, 4
        %s424 = scalar_lea.vmem %s3, %s423
      $region56: #{mwt_transform_cross_forward.9} parent=47 // pred_fallthru
        _
      // Predicated region
      $region57: #{mwt_transform_cross_forward.9} parent=47 // pred_check
        %p425 = pneg %p140
      $region58: #{mwt_transform_cross_forward.9} parent=47 // pred_check_branch
        %427 = sbr.rel (%p425) target = $region60
      $region59: #{mwt_transform_cross_forward.9} parent=47 // pred_region
        %p428 = scmp.lt.s32.totalorder %s18, 3
        %s429 = scalar_select %p428, %s18, 3
        %s430 = smul.addr %s429, 8
        %s431 = scalar_lea.vmem %s4, %s430
      $region60: #{mwt_transform_cross_forward.9} parent=47 // pred_fallthru
        _
      // Predicated region
      $region61: #{mwt_transform_cross_forward.9} parent=47 // pred_check
        %p432 = pneg %p166
      $region62: #{mwt_transform_cross_forward.9} parent=47 // pred_check_branch
        %434 = sbr.rel (%p432) target = $region64
      $region63: #{mwt_transform_cross_forward.9} parent=47 // pred_region
        %p435 = scmp.lt.s32.totalorder %s18, 3
        %s436 = scalar_select %p435, %s18, 3
        %s437 = smul.addr %s436, 4
        %s438 = scalar_lea.vmem %s5, %s437
      $region64: #{mwt_transform_cross_forward.9} parent=47 // pred_fallthru
        _
    $region48: #{mwt_transform_cross_forward.9} parent=5 // pred_fallthru
      _
  $region6: #{mwt_transform_cross_forward.9} parent=0 // loop_footer
    %s16 = sadd.s32 1, %s12
  $region7: #{mwt_transform_cross_forward.9} parent=0 // loop_footer_branch
    %11 = sbr.rel target = $region3
  $region8: #{mwt_transform_cross_forward.9} parent=0 // loop_exit
    _

// kernel: mwt_transform_cross_forward.8
$region0: #{mwt_transform_cross_forward.8}
  #allocation0 [shape = 'u32[]', space=smem, size = 0x4, offset = 0x4, fixed_abs, tag = 'smem constant byte address 0x4 - core index']
  #allocation1 [shape = 'u32[72,128]{1,0:T(1,128)}', space=vmem, size = 0x9000, scoped, tag = 'internal scratch']
  %s0 = inlined_call_operand.vmem [shape: f32[2,32,32], index: 0, kind: input, shape index: {}]
  %s1 = inlined_call_operand.vmem [shape: f32[2,32,32], index: 1, kind: input, shape index: {}]
  %s2 = inlined_call_operand.vmem [shape: f32[2,1,32], index: 2, kind: input, shape index: {}]
  %s3 = inlined_call_operand.vmem [shape: f32[2,32,32], index: 3, kind: output, shape index: {}]
  %s4 = sld [smem:[#allocation0]]
  $region45: #{mwt_transform_cross_forward.8} parent=0
    _
  %s6 = ssub.s32 1, %s4
  %s7 = scalar_select 0, %s6, %s4
  loop: start=0, step=1, limit=6
  $region2: #{mwt_transform_cross_forward.8} parent=0 // loop_pre_header
    _
  $region3: #{mwt_transform_cross_forward.8} parent=0 // loop_header
    %s9 = sphi 0, %s13
    %p10 = scmp.ge.s32.totalorder %s9, 6
    %s16 = sphi 0, %s28
    %s17 = sphi 0, %s24
    %s18 = sphi 0, %s16
    %s19 = sphi 0, %s17
    %s20 = sphi 0, %s18
    %s21 = sphi 0, %s19
    %s33 = sphi 0, %s35
    %s36 = sphi 0, %s33
    %s37 = sphi 0, %s36
    %s53 = sphi 0, %s37
    %s59 = sphi 0, %s61
    %s62 = sphi 0, %s59
    %s63 = sphi 0, %s62
    %s79 = sphi 0, %s63
    %s85 = sphi 0, %s87
    %s88 = sphi 0, %s85
    %s89 = sphi 0, %s88
    %s105 = sphi 0, %s89
    %s113 = sphi 0, %s115
    %s116 = sphi 0, %s113
    %s117 = sphi 0, %s116
    %s133 = sphi 0, %s117
  $region4: #{mwt_transform_cross_forward.8} parent=0 // loop_header_branch
    %12 = sbr.rel (%p10) target = $region8
  $region5: #{mwt_transform_cross_forward.8} parent=0 // loop_body
    %s14 = ssub.s32 %s9, 1
    %s15 = ssub.s32 %s9, 2
    %s22 = sadd.s32 1, %s17
    %p23 = scmp.ge.s32.totalorder %s22, 2
    %s24 = scalar_select %p23, 0, %s22
    %s25 = sadd.s32 1, %s16
    %s26 = scalar_select %p23, %s25, %s16
    %p27 = scmp.ge.s32.totalorder %s26, 2
    %s28 = scalar_select %p27, 0, %s26
    %s29 = ssub.s32 %s16, %s28
    %s30 = ssub.s32 %s17, %s24
    %s31 = sor.u32 %s29, %s30
    %p32 = scmp.eq.s32.totalorder %s31, 0
    %s34 = sadd.s32 %s33, 1
    %s35 = scalar_select %p32, %s33, %s34
    %p38 = pneg %p32
    %p39 = scmp.eq.s32.totalorder %s9, 3
    %p40 = por %p38, %p39
    %p41 = scmp.ne.s32.totalorder %s33, %s36
    %p42 = scmp.eq.s32.totalorder %s9, 0
    %p43 = por %p41, %p42
    %p44 = scmp.ne.s32.totalorder %s33, %s36
    %p45 = scmp.eq.s32.totalorder %s14, 3
    %p46 = por %p44, %p45
    %p47 = scmp.ne.s32.totalorder %s36, %s37
    %p48 = scmp.eq.s32.totalorder %s14, 0
    %p49 = por %p47, %p48
    %p50 = scmp.ne.s32.totalorder %s36, %s37
    %p51 = scmp.eq.s32.totalorder %s15, 3
    %p52 = por %p50, %p51
    %p54 = scmp.ne.s32.totalorder %s37, %s53
    %p55 = scmp.eq.s32.totalorder %s15, 0
    %p56 = por %p54, %p55
    %s57 = ssub.s32 %s16, %s28
    %p58 = scmp.eq.s32.totalorder %s57, 0
    %s60 = sadd.s32 %s59, 1
    %s61 = scalar_select %p58, %s59, %s60
    %p64 = pneg %p58
    %p65 = scmp.eq.s32.totalorder %s9, 3
    %p66 = por %p64, %p65
    %p67 = scmp.ne.s32.totalorder %s59, %s62
    %p68 = scmp.eq.s32.totalorder %s9, 0
    %p69 = por %p67, %p68
    %p70 = scmp.ne.s32.totalorder %s59, %s62
    %p71 = scmp.eq.s32.totalorder %s14, 3
    %p72 = por %p70, %p71
    %p73 = scmp.ne.s32.totalorder %s62, %s63
    %p74 = scmp.eq.s32.totalorder %s14, 0
    %p75 = por %p73, %p74
    %p76 = scmp.ne.s32.totalorder %s62, %s63
    %p77 = scmp.eq.s32.totalorder %s15, 3
    %p78 = por %p76, %p77
    %p80 = scmp.ne.s32.totalorder %s63, %s79
    %p81 = scmp.eq.s32.totalorder %s15, 0
    %p82 = por %p80, %p81
    %s83 = ssub.s32 %s16, %s28
    %p84 = scmp.eq.s32.totalorder %s83, 0
    %s86 = sadd.s32 %s85, 1
    %s87 = scalar_select %p84, %s85, %s86
    %p90 = pneg %p84
    %p91 = scmp.eq.s32.totalorder %s9, 3
    %p92 = por %p90, %p91
    %p93 = scmp.ne.s32.totalorder %s85, %s88
    %p94 = scmp.eq.s32.totalorder %s9, 0
    %p95 = por %p93, %p94
    %p96 = scmp.ne.s32.totalorder %s85, %s88
    %p97 = scmp.eq.s32.totalorder %s14, 3
    %p98 = por %p96, %p97
    %p99 = scmp.ne.s32.totalorder %s88, %s89
    %p100 = scmp.eq.s32.totalorder %s14, 0
    %p101 = por %p99, %p100
    %p102 = scmp.ne.s32.totalorder %s88, %s89
    %p103 = scmp.eq.s32.totalorder %s15, 3
    %p104 = por %p102, %p103
    %p106 = scmp.ne.s32.totalorder %s89, %s105
    %p107 = scmp.eq.s32.totalorder %s15, 0
    %p108 = por %p106, %p107
    %s109 = ssub.s32 %s16, %s28
    %s110 = ssub.s32 %s17, %s24
    %s111 = sor.u32 %s109, %s110
    %p112 = scmp.eq.s32.totalorder %s111, 0
    %s114 = sadd.s32 %s113, 1
    %s115 = scalar_select %p112, %s113, %s114
    %p118 = pneg %p112
    %p119 = scmp.eq.s32.totalorder %s9, 3
    %p120 = por %p118, %p119
    %p121 = scmp.ne.s32.totalorder %s113, %s116
    %p122 = scmp.eq.s32.totalorder %s9, 0
    %p123 = por %p121, %p122
    %p124 = scmp.ne.s32.totalorder %s113, %s116
    %p125 = scmp.eq.s32.totalorder %s14, 3
    %p126 = por %p124, %p125
    %p127 = scmp.ne.s32.totalorder %s116, %s117
    %p128 = scmp.eq.s32.totalorder %s14, 0
    %p129 = por %p127, %p128
    %p130 = scmp.ne.s32.totalorder %s116, %s117
    %p131 = scmp.eq.s32.totalorder %s15, 3
    %p132 = por %p130, %p131
    %p134 = scmp.ne.s32.totalorder %s117, %s133
    %p135 = scmp.eq.s32.totalorder %s15, 0
    %p136 = por %p134, %p135
    %p137 = scmp.le.s32.totalorder 1, %s9
    %p138 = scmp.lt.s32.totalorder %s9, 5
    %p139 = pnand %p137, %p138
    %p140 = pneg %p139
    // Predicated region
    $region9: #{mwt_transform_cross_forward.8} parent=5 // pred_check
      _
    $region10: #{mwt_transform_cross_forward.8} parent=5 // pred_check_branch
      %142 = sbr.rel (%p139) target = $region12
    $region11: #{mwt_transform_cross_forward.8} parent=5 // pred_region
      %s143 = ssub.s32 %s9, 1
    $region12: #{mwt_transform_cross_forward.8} parent=5 // pred_fallthru
      _
    %p144 = scmp.lt.s32.totalorder %s9, 4
    // Predicated region
    $region13: #{mwt_transform_cross_forward.8} parent=5 // pred_check
      %p145 = pneg %p144
    $region14: #{mwt_transform_cross_forward.8} parent=5 // pred_check_branch
      %147 = sbr.rel (%p145) target = $region16
    $region15: #{mwt_transform_cross_forward.8} parent=5 // pred_region
      // Predicated region
      $region17: #{mwt_transform_cross_forward.8} parent=15 // pred_check
        %p148 = pneg %p43
      $region18: #{mwt_transform_cross_forward.8} parent=15 // pred_check_branch
        %150 = sbr.rel (%p148) target = $region20
      $region19: #{mwt_transform_cross_forward.8} parent=15 // pred_region
        %s151 = smul.u32 2, %s17
        %p152 = scmp.lt.s32.totalorder %s16, 1
        %s153 = scalar_select %p152, %s16, 1
        %p154 = scmp.lt.s32.totalorder %s151, 3
        %s155 = scalar_select %p154, %s151, 3
        %s156 = smul.addr %s153, 4
        %s157 = sadd.s32 %s155, %s156
        %s158 = smul.addr %s157, 8
        %s159 = scalar_lea.vmem %s0, %s158
        %s160 = smul.u32 2, %s17
      $region20: #{mwt_transform_cross_forward.8} parent=15 // pred_fallthru
        _
      // Predicated region
      $region21: #{mwt_transform_cross_forward.8} parent=15 // pred_check
        %p161 = pneg %p69
      $region22: #{mwt_transform_cross_forward.8} parent=15 // pred_check_branch
        %163 = sbr.rel (%p161) target = $region24
      $region23: #{mwt_transform_cross_forward.8} parent=15 // pred_region
        %p164 = scmp.lt.s32.totalorder %s16, 1
        %s165 = scalar_select %p164, %s16, 1
        %s166 = smul.addr %s165, 4
        %s167 = smul.addr %s166, 8
        %s168 = scalar_lea.vmem %s1, %s167
      $region24: #{mwt_transform_cross_forward.8} parent=15 // pred_fallthru
        _
      // Predicated region
      $region25: #{mwt_transform_cross_forward.8} parent=15 // pred_check
        %p169 = pneg %p95
      $region26: #{mwt_transform_cross_forward.8} parent=15 // pred_check_branch
        %171 = sbr.rel (%p169) target = $region28
      $region27: #{mwt_transform_cross_forward.8} parent=15 // pred_region
        %p172 = scmp.lt.s32.totalorder %s16, 1
        %s173 = scalar_select %p172, %s16, 1
        %s174 = scalar_lea.vmem %s2, %s173
      $region28: #{mwt_transform_cross_forward.8} parent=15 // pred_fallthru
        _
    $region16: #{mwt_transform_cross_forward.8} parent=5 // pred_fallthru
      _
    %p175 = scmp.le.s32.totalorder 1, %s9
    %p176 = scmp.lt.s32.totalorder %s9, 5
    %p177 = pnand %p175, %p176
    %p178 = pneg %p177
    // Predicated region
    $region29: #{mwt_transform_cross_forward.8} parent=5 // pred_check
      _
    $region30: #{mwt_transform_cross_forward.8} parent=5 // pred_check_branch
      %180 = sbr.rel (%p177) target = $region32
    $region31: #{mwt_transform_cross_forward.8} parent=5 // pred_region
      %s181 = ssub.s32 %s9, 1
      %s182 = smul.u32 2, %s19
      %p183 = scmp.lt.s32.totalorder %s18, 1
      %s184 = scalar_select %p183, %s18, 1
      %p185 = scmp.lt.s32.totalorder %s182, 3
      %s186 = scalar_select %p185, %s182, 3
      %s187 = smul.addr %s184, 4
      %s188 = sadd.s32 %s186, %s187
      %s189 = smul.addr %s188, 8
      %s190 = scalar_lea.vmem %s0, %s189
      %p191 = pneg %p49
      %p192 = pneg %p46
      %p193 = scmp.lt.s32.totalorder %s18, 1
      %s194 = scalar_select %p193, %s18, 1
      %s195 = smul.addr %s194, 4
      %s196 = smul.addr %s195, 8
      %s197 = scalar_lea.vmem %s1, %s196
      %p198 = pneg %p75
      %p199 = pneg %p72
      %p200 = scmp.lt.s32.totalorder %s18, 1
      %s201 = scalar_select %p200, %s18, 1
      %s202 = scalar_lea.vmem %s2, %s201
      %p203 = pneg %p101
      %p204 = pneg %p98
      %p205 = pneg %p129
      %p206 = pneg %p126
      %s207 = smul.u32 2, %s19
      %p208 = scmp.lt.s32.totalorder %s18, 1
      %s209 = scalar_select %p208, %s18, 1
      %p210 = scmp.lt.s32.totalorder %s207, 3
      %s211 = scalar_select %p210, %s207, 3
      %s212 = smul.addr %s209, 4
      %s213 = sadd.s32 %s211, %s212
      %s214 = smul.addr %s213, 8
      %s215 = scalar_lea.vmem %s3, %s214
      %s216 = smul.u32 2, %s19
      %p217 = scmp.lt.s32.totalorder %s18, 1
      %s218 = scalar_select %p217, %s18, 1
      %p219 = scmp.lt.s32.totalorder %s216, 3
      %s220 = scalar_select %p219, %s216, 3
      %s221 = smul.addr %s218, 4
      %s222 = sadd.s32 %s220, %s221
      %s223 = smul.addr %s222, 8
      %s224 = scalar_lea.vmem %s0, %s223
      %s225 = smul.u32 2, %s19
      %p226 = scmp.lt.s32.totalorder %s18, 1
      %s227 = scalar_select %p226, %s18, 1
      %s228 = smul.addr %s227, 4
      %s229 = smul.addr %s228, 8
      %s230 = scalar_lea.vmem %s1, %s229
      %p231 = scmp.lt.s32.totalorder %s18, 1
      %s232 = scalar_select %p231, %s18, 1
      %s233 = scalar_lea.vmem %s2, %s232
      %s234 = smul.u32 2, %s19
      %p235 = scmp.lt.s32.totalorder %s18, 1
      %s236 = scalar_select %p235, %s18, 1
      %p237 = scmp.lt.s32.totalorder %s234, 3
      %s238 = scalar_select %p237, %s234, 3
      %s239 = smul.addr %s236, 4
      %s240 = sadd.s32 %s238, %s239
      %s241 = smul.addr %s240, 8
      %s242 = scalar_lea.vmem %s3, %s241
      %s243 = smul.u32 2, %s19
      %v245 = vld [vmem:[%s224] sm:$0xff]
      %v246 = vld [vmem:[%s224 + $0x8] sm:$0xff]
      %v247 = vpack.c.bf16 %v246, %v245
      %v248 = vld [vmem:[%s230] sm:$0xff]
      %v249 = vld [vmem:[%s230 + $0x8] sm:$0xff]
      %v250 = vld [vmem:[%s230 + $0x10] sm:$0xff]
      %v251 = vld [vmem:[%s230 + $0x18] sm:$0xff]
      %v252 = vpack.c.bf16 %v249, %v248
      %v253 = vpack.c.bf16 %v251, %v250
      %v254 = vld [vmem:[%s233] sm:$0x1]
      %v256 = vperm.slane %v254, 0
      %vm258 = vcmask 261120
      %v260 = vsel %vm258, %v247, 0
      %262 = vmatpush.bf16.msra.mxu0 0
      %263 = vmatpush.bf16.msra.mxu0 0
      %264 = vmatpush.bf16.msra.mxu0 0
      %265 = vmatpush.bf16.msra.mxu0 0
      %266 = vmatpush.bf16.msra.mxu0 0
      %267 = vmatpush.bf16.msra.mxu0 0
      %268 = vmatpush.bf16.msra.mxu0 %v253
      %269 = vmatpush.bf16.msra.mxu0 %v252
      %270 = vmatmul.bf16.gmra.mxu0 %v260
      %v271 = vpop.f32.mrf.mxu0
      %v272 = vadd.f32 %v256, %v271
      %v273 = vpop.f32.mrf.mxu0
      %v274 = vadd.f32 %v256, %v273
      %275 = vdwg.mxu0
      %276 = vst.msk [vmem:[%s242] sm:$0xff] %vm258, %v272
      %277 = vst.msk [vmem:[%s242 + $0x8] sm:$0xff] %vm258, %v274
      %s278 = smul.u32 2, %s19
      %p279 = scmp.lt.s32.totalorder %s18, 1
      %s280 = scalar_select %p279, %s18, 1
      %p281 = scmp.lt.s32.totalorder %s278, 3
      %s282 = scalar_select %p281, %s278, 3
      %s283 = smul.addr %s280, 4
      %s284 = sadd.s32 %s282, %s283
      %s285 = smul.addr %s284, 8
      %s286 = scalar_lea.vmem %s3, %s285
      // Predicated region
      $region33: #{mwt_transform_cross_forward.8} parent=31 // pred_check
        %p287 = pneg %p126
      $region34: #{mwt_transform_cross_forward.8} parent=31 // pred_check_branch
        %289 = sbr.rel (%p287) target = $region36
      $region35: #{mwt_transform_cross_forward.8} parent=31 // pred_region
        %s290 = smul.u32 2, %s19
      $region36: #{mwt_transform_cross_forward.8} parent=31 // pred_fallthru
        _
    $region32: #{mwt_transform_cross_forward.8} parent=5 // pred_fallthru
      _
    %p291 = scmp.le.s32.totalorder 2, %s9
    // Predicated region
    $region37: #{mwt_transform_cross_forward.8} parent=5 // pred_check
      %p292 = pneg %p291
    $region38: #{mwt_transform_cross_forward.8} parent=5 // pred_check_branch
      %294 = sbr.rel (%p292) target = $region40
    $region39: #{mwt_transform_cross_forward.8} parent=5 // pred_region
      %s295 = ssub.s32 %s9, 2
      // Predicated region
      $region41: #{mwt_transform_cross_forward.8} parent=39 // pred_check
        %p296 = pneg %p132
      $region42: #{mwt_transform_cross_forward.8} parent=39 // pred_check_branch
        %298 = sbr.rel (%p296) target = $region44
      $region43: #{mwt_transform_cross_forward.8} parent=39 // pred_region
        %s299 = smul.u32 2, %s21
        %p300 = scmp.lt.s32.totalorder %s20, 1
        %s301 = scalar_select %p300, %s20, 1
        %p302 = scmp.lt.s32.totalorder %s299, 3
        %s303 = scalar_select %p302, %s299, 3
        %s304 = smul.addr %s301, 4
        %s305 = sadd.s32 %s303, %s304
        %s306 = smul.addr %s305, 8
        %s307 = scalar_lea.vmem %s3, %s306
      $region44: #{mwt_transform_cross_forward.8} parent=39 // pred_fallthru
        _
    $region40: #{mwt_transform_cross_forward.8} parent=5 // pred_fallthru
      _
  $region6: #{mwt_transform_cross_forward.8} parent=0 // loop_footer
    %s13 = sadd.s32 1, %s9
  $region7: #{mwt_transform_cross_forward.8} parent=0 // loop_footer_branch
    %8 = sbr.rel target = $region3
  $region8: #{mwt_transform_cross_forward.8} parent=0 // loop_exit
    _

// kernel: mwt_transform_cross_forward.12
$region0: #{mwt_transform_cross_forward.12}
  #allocation0 [shape = 'u32[]', space=smem, size = 0x4, offset = 0x4, fixed_abs, tag = 'smem constant byte address 0x4 - core index']
  #allocation1 [shape = 'u32[72,128]{1,0:T(1,128)}', space=vmem, size = 0x9000, scoped, tag = 'internal scratch']
  %s0 = inlined_call_operand.vmem [shape: f32[32,2,4], index: 0, kind: input, shape index: {}]
  %s1 = inlined_call_operand.vmem [shape: f32[32,2,4], index: 1, kind: input, shape index: {}]
  %s2 = inlined_call_operand.vmem [shape: f32[32,4,2], index: 2, kind: input, shape index: {}]
  %s3 = inlined_call_operand.vmem [shape: f32[32,4,2], index: 3, kind: input, shape index: {}]
  %s4 = inlined_call_operand.vmem [shape: f32[32,2,4], index: 4, kind: output, shape index: {}]
  %s5 = sld [smem:[#allocation0]]
  $region49: #{mwt_transform_cross_forward.12} parent=0
    _
  %s7 = ssub.s32 1, %s5
  %s8 = scalar_select 0, %s7, %s5
  loop: start=0, step=1, limit=4
  $region2: #{mwt_transform_cross_forward.12} parent=0 // loop_pre_header
    _
  $region3: #{mwt_transform_cross_forward.12} parent=0 // loop_header
    %s10 = sphi 0, %s14
    %p11 = scmp.ge.s32.totalorder %s10, 4
    %s20 = sphi 0, %s22
    %s23 = sphi 0, %s20
    %s24 = sphi 0, %s23
    %s40 = sphi 0, %s24
    %s46 = sphi 0, %s48
    %s49 = sphi 0, %s46
    %s50 = sphi 0, %s49
    %s66 = sphi 0, %s50
    %s72 = sphi 0, %s74
    %s75 = sphi 0, %s72
    %s76 = sphi 0, %s75
    %s92 = sphi 0, %s76
    %s98 = sphi 0, %s100
    %s101 = sphi 0, %s98
    %s102 = sphi 0, %s101
    %s118 = sphi 0, %s102
    %s124 = sphi 0, %s126
    %s127 = sphi 0, %s124
    %s128 = sphi 0, %s127
    %s144 = sphi 0, %s128
  $region4: #{mwt_transform_cross_forward.12} parent=0 // loop_header_branch
    %13 = sbr.rel (%p11) target = $region8
  $region5: #{mwt_transform_cross_forward.12} parent=0 // loop_body
    %s15 = ssub.s32 %s10, 1
    %s16 = ssub.s32 %s10, 2
    %s17 = sadd.s32 %s10, 1
    %s18 = ssub.s32 %s10, %s17
    %p19 = scmp.eq.s32.totalorder %s18, 0
    %s21 = sadd.s32 %s20, 1
    %s22 = scalar_select %p19, %s20, %s21
    %p25 = pneg %p19
    %p26 = scmp.eq.s32.totalorder %s10, 1
    %p27 = por %p25, %p26
    %p28 = scmp.ne.s32.totalorder %s20, %s23
    %p29 = scmp.eq.s32.totalorder %s10, 0
    %p30 = por %p28, %p29
    %p31 = scmp.ne.s32.totalorder %s20, %s23
    %p32 = scmp.eq.s32.totalorder %s15, 1
    %p33 = por %p31, %p32
    %p34 = scmp.ne.s32.totalorder %s23, %s24
    %p35 = scmp.eq.s32.totalorder %s15, 0
    %p36 = por %p34, %p35
    %p37 = scmp.ne.s32.totalorder %s23, %s24
    %p38 = scmp.eq.s32.totalorder %s16, 1
    %p39 = por %p37, %p38
    %p41 = scmp.ne.s32.totalorder %s24, %s40
    %p42 = scmp.eq.s32.totalorder %s16, 0
    %p43 = por %p41, %p42
    %s44 = ssub.s32 %s10, %s17
    %p45 = scmp.eq.s32.totalorder %s44, 0
    %s47 = sadd.s32 %s46, 1
    %s48 = scalar_select %p45, %s46, %s47
    %p51 = pneg %p45
    %p52 = scmp.eq.s32.totalorder %s10, 1
    %p53 = por %p51, %p52
    %p54 = scmp.ne.s32.totalorder %s46, %s49
    %p55 = scmp.eq.s32.totalorder %s10, 0
    %p56 = por %p54, %p55
    %p57 = scmp.ne.s32.totalorder %s46, %s49
    %p58 = scmp.eq.s32.totalorder %s15, 1
    %p59 = por %p57, %p58
    %p60 = scmp.ne.s32.totalorder %s49, %s50
    %p61 = scmp.eq.s32.totalorder %s15, 0
    %p62 = por %p60, %p61
    %p63 = scmp.ne.s32.totalorder %s49, %s50
    %p64 = scmp.eq.s32.totalorder %s16, 1
    %p65 = por %p63, %p64
    %p67 = scmp.ne.s32.totalorder %s50, %s66
    %p68 = scmp.eq.s32.totalorder %s16, 0
    %p69 = por %p67, %p68
    %s70 = ssub.s32 %s10, %s17
    %p71 = scmp.eq.s32.totalorder %s70, 0
    %s73 = sadd.s32 %s72, 1
    %s74 = scalar_select %p71, %s72, %s73
    %p77 = pneg %p71
    %p78 = scmp.eq.s32.totalorder %s10, 1
    %p79 = por %p77, %p78
    %p80 = scmp.ne.s32.totalorder %s72, %s75
    %p81 = scmp.eq.s32.totalorder %s10, 0
    %p82 = por %p80, %p81
    %p83 = scmp.ne.s32.totalorder %s72, %s75
    %p84 = scmp.eq.s32.totalorder %s15, 1
    %p85 = por %p83, %p84
    %p86 = scmp.ne.s32.totalorder %s75, %s76
    %p87 = scmp.eq.s32.totalorder %s15, 0
    %p88 = por %p86, %p87
    %p89 = scmp.ne.s32.totalorder %s75, %s76
    %p90 = scmp.eq.s32.totalorder %s16, 1
    %p91 = por %p89, %p90
    %p93 = scmp.ne.s32.totalorder %s76, %s92
    %p94 = scmp.eq.s32.totalorder %s16, 0
    %p95 = por %p93, %p94
    %s96 = ssub.s32 %s10, %s17
    %p97 = scmp.eq.s32.totalorder %s96, 0
    %s99 = sadd.s32 %s98, 1
    %s100 = scalar_select %p97, %s98, %s99
    %p103 = pneg %p97
    %p104 = scmp.eq.s32.totalorder %s10, 1
    %p105 = por %p103, %p104
    %p106 = scmp.ne.s32.totalorder %s98, %s101
    %p107 = scmp.eq.s32.totalorder %s10, 0
    %p108 = por %p106, %p107
    %p109 = scmp.ne.s32.totalorder %s98, %s101
    %p110 = scmp.eq.s32.totalorder %s15, 1
    %p111 = por %p109, %p110
    %p112 = scmp.ne.s32.totalorder %s101, %s102
    %p113 = scmp.eq.s32.totalorder %s15, 0
    %p114 = por %p112, %p113
    %p115 = scmp.ne.s32.totalorder %s101, %s102
    %p116 = scmp.eq.s32.totalorder %s16, 1
    %p117 = por %p115, %p116
    %p119 = scmp.ne.s32.totalorder %s102, %s118
    %p120 = scmp.eq.s32.totalorder %s16, 0
    %p121 = por %p119, %p120
    %s122 = ssub.s32 %s10, %s17
    %p123 = scmp.eq.s32.totalorder %s122, 0
    %s125 = sadd.s32 %s124, 1
    %s126 = scalar_select %p123, %s124, %s125
    %p129 = pneg %p123
    %p130 = scmp.eq.s32.totalorder %s10, 1
    %p131 = por %p129, %p130
    %p132 = scmp.ne.s32.totalorder %s124, %s127
    %p133 = scmp.eq.s32.totalorder %s10, 0
    %p134 = por %p132, %p133
    %p135 = scmp.ne.s32.totalorder %s124, %s127
    %p136 = scmp.eq.s32.totalorder %s15, 1
    %p137 = por %p135, %p136
    %p138 = scmp.ne.s32.totalorder %s127, %s128
    %p139 = scmp.eq.s32.totalorder %s15, 0
    %p140 = por %p138, %p139
    %p141 = scmp.ne.s32.totalorder %s127, %s128
    %p142 = scmp.eq.s32.totalorder %s16, 1
    %p143 = por %p141, %p142
    %p145 = scmp.ne.s32.totalorder %s128, %s144
    %p146 = scmp.eq.s32.totalorder %s16, 0
    %p147 = por %p145, %p146
    %p148 = scmp.le.s32.totalorder 1, %s10
    %p149 = scmp.lt.s32.totalorder %s10, 3
    %p150 = pnand %p148, %p149
    %p151 = pneg %p150
    // Predicated region
    $region9: #{mwt_transform_cross_forward.12} parent=5 // pred_check
      _
    $region10: #{mwt_transform_cross_forward.12} parent=5 // pred_check_branch
      %153 = sbr.rel (%p150) target = $region12
    $region11: #{mwt_transform_cross_forward.12} parent=5 // pred_region
      %s154 = ssub.s32 %s10, 1
    $region12: #{mwt_transform_cross_forward.12} parent=5 // pred_fallthru
      _
    %p155 = scmp.lt.s32.totalorder %s10, 2
    // Predicated region
    $region13: #{mwt_transform_cross_forward.12} parent=5 // pred_check
      %p156 = pneg %p155
    $region14: #{mwt_transform_cross_forward.12} parent=5 // pred_check_branch
      %158 = sbr.rel (%p156) target = $region16
    $region15: #{mwt_transform_cross_forward.12} parent=5 // pred_region
      // Predicated region
      $region17: #{mwt_transform_cross_forward.12} parent=15 // pred_check
        %p159 = pneg %p30
      $region18: #{mwt_transform_cross_forward.12} parent=15 // pred_check_branch
        %161 = sbr.rel (%p159) target = $region20
      $region19: #{mwt_transform_cross_forward.12} parent=15 // pred_region
        %s162 = smul.u32 16, %s10
        %p163 = scmp.lt.s32.totalorder %s162, 31
        %s164 = scalar_select %p163, %s162, 31
        %s165 = smul.addr %s164, 2
        %s166 = scalar_lea.vmem %s0, %s165
        %s167 = smul.u32 16, %s10
      $region20: #{mwt_transform_cross_forward.12} parent=15 // pred_fallthru
        _
      // Predicated region
      $region21: #{mwt_transform_cross_forward.12} parent=15 // pred_check
        %p168 = pneg %p56
      $region22: #{mwt_transform_cross_forward.12} parent=15 // pred_check_branch
        %170 = sbr.rel (%p168) target = $region24
      $region23: #{mwt_transform_cross_forward.12} parent=15 // pred_region
        %s171 = smul.u32 16, %s10
        %p172 = scmp.lt.s32.totalorder %s171, 31
        %s173 = scalar_select %p172, %s171, 31
        %s174 = smul.addr %s173, 2
        %s175 = scalar_lea.vmem %s1, %s174
        %s176 = smul.u32 16, %s10
      $region24: #{mwt_transform_cross_forward.12} parent=15 // pred_fallthru
        _
      // Predicated region
      $region25: #{mwt_transform_cross_forward.12} parent=15 // pred_check
        %p177 = pneg %p82
      $region26: #{mwt_transform_cross_forward.12} parent=15 // pred_check_branch
        %179 = sbr.rel (%p177) target = $region28
      $region27: #{mwt_transform_cross_forward.12} parent=15 // pred_region
        %s180 = smul.u32 16, %s10
        %p181 = scmp.lt.s32.totalorder %s180, 31
        %s182 = scalar_select %p181, %s180, 31
        %s183 = smul.addr %s182, 4
        %s184 = scalar_lea.vmem %s2, %s183
        %s185 = smul.u32 16, %s10
      $region28: #{mwt_transform_cross_forward.12} parent=15 // pred_fallthru
        _
      // Predicated region
      $region29: #{mwt_transform_cross_forward.12} parent=15 // pred_check
        %p186 = pneg %p108
      $region30: #{mwt_transform_cross_forward.12} parent=15 // pred_check_branch
        %188 = sbr.rel (%p186) target = $region32
      $region31: #{mwt_transform_cross_forward.12} parent=15 // pred_region
        %s189 = smul.u32 16, %s10
        %p190 = scmp.lt.s32.totalorder %s189, 31
        %s191 = scalar_select %p190, %s189, 31
        %s192 = smul.addr %s191, 4
        %s193 = scalar_lea.vmem %s3, %s192
        %s194 = smul.u32 16, %s10
      $region32: #{mwt_transform_cross_forward.12} parent=15 // pred_fallthru
        _
    $region16: #{mwt_transform_cross_forward.12} parent=5 // pred_fallthru
      _
    %p195 = scmp.le.s32.totalorder 1, %s10
    %p196 = scmp.lt.s32.totalorder %s10, 3
    %p197 = pnand %p195, %p196
    %p198 = pneg %p197
    // Predicated region
    $region33: #{mwt_transform_cross_forward.12} parent=5 // pred_check
      _
    $region34: #{mwt_transform_cross_forward.12} parent=5 // pred_check_branch
      %200 = sbr.rel (%p197) target = $region36
    $region35: #{mwt_transform_cross_forward.12} parent=5 // pred_region
      %s201 = ssub.s32 %s10, 1
      %s202 = smul.u32 16, %s15
      %p203 = scmp.lt.s32.totalorder %s202, 31
      %s204 = scalar_select %p203, %s202, 31
      %s205 = smul.addr %s204, 2
      %s206 = scalar_lea.vmem %s0, %s205
      %p207 = pneg %p36
      %p208 = pneg %p33
      %s209 = smul.u32 16, %s15
      %p210 = scmp.lt.s32.totalorder %s209, 31
      %s211 = scalar_select %p210, %s209, 31
      %s212 = smul.addr %s211, 2
      %s213 = scalar_lea.vmem %s1, %s212
      %p214 = pneg %p62
      %p215 = pneg %p59
      %s216 = smul.u32 16, %s15
      %p217 = scmp.lt.s32.totalorder %s216, 31
      %s218 = scalar_select %p217, %s216, 31
      %s219 = smul.addr %s218, 4
      %s220 = scalar_lea.vmem %s2, %s219
      %p221 = pneg %p88
      %p222 = pneg %p85
      %s223 = smul.u32 16, %s15
      %p224 = scmp.lt.s32.totalorder %s223, 31
      %s225 = scalar_select %p224, %s223, 31
      %s226 = smul.addr %s225, 4
      %s227 = scalar_lea.vmem %s3, %s226
      %p228 = pneg %p114
      %p229 = pneg %p111
      %p230 = pneg %p140
      %p231 = pneg %p137
      %s232 = smul.u32 16, %s15
      %p233 = scmp.lt.s32.totalorder %s232, 31
      %s234 = scalar_select %p233, %s232, 31
      %s235 = smul.addr %s234, 2
      %s236 = scalar_lea.vmem %s4, %s235
      %s237 = smul.u32 16, %s15
      %p238 = scmp.lt.s32.totalorder %s237, 31
      %s239 = scalar_select %p238, %s237, 31
      %s240 = smul.addr %s239, 2
      %s241 = scalar_lea.vmem %s0, %s240
      %s242 = smul.u32 16, %s15
      %s243 = smul.u32 16, %s15
      %p244 = scmp.lt.s32.totalorder %s243, 31
      %s245 = scalar_select %p244, %s243, 31
      %s246 = smul.addr %s245, 2
      %s247 = scalar_lea.vmem %s1, %s246
      %s248 = smul.u32 16, %s15
      %s249 = smul.u32 16, %s15
      %p250 = scmp.lt.s32.totalorder %s249, 31
      %s251 = scalar_select %p250, %s249, 31
      %s252 = smul.addr %s251, 4
      %s253 = scalar_lea.vmem %s2, %s252
      %s254 = smul.u32 16, %s15
      %s255 = smul.u32 16, %s15
      %p256 = scmp.lt.s32.totalorder %s255, 31
      %s257 = scalar_select %p256, %s255, 31
      %s258 = smul.addr %s257, 4
      %s259 = scalar_lea.vmem %s3, %s258
      %s260 = smul.u32 16, %s15
      %s261 = smul.u32 16, %s15
      %p262 = scmp.lt.s32.totalorder %s261, 31
      %s263 = scalar_select %p262, %s261, 31
      %s264 = smul.addr %s263, 2
      %s265 = scalar_lea.vmem %s4, %s264
      %s266 = smul.u32 16, %s15
      %v268 = vld [vmem:[%s241] sm:$0x3]
      %v269 = vld [vmem:[%s241 + $0x2] sm:$0x3]
      %v270 = vld [vmem:[%s241 + $0x4] sm:$0x3]
      %v271 = vld [vmem:[%s241 + $0x6] sm:$0x3]
      %v272 = vld [vmem:[%s241 + $0x8] sm:$0x3]
      %v273 = vld [vmem:[%s241 + $0xa] sm:$0x3]
      %v274 = vld [vmem:[%s241 + $0xc] sm:$0x3]
      %v275 = vld [vmem:[%s241 + $0xe] sm:$0x3]
      %v276 = vld [vmem:[%s241 + $0x10] sm:$0x3]
      %v277 = vld [vmem:[%s241 + $0x12] sm:$0x3]
      %v278 = vld [vmem:[%s241 + $0x14] sm:$0x3]
      %v279 = vld [vmem:[%s241 + $0x16] sm:$0x3]
      %v280 = vld [vmem:[%s241 + $0x18] sm:$0x3]
      %v281 = vld [vmem:[%s241 + $0x1a] sm:$0x3]
      %v282 = vld [vmem:[%s241 + $0x1c] sm:$0x3]
      %v283 = vld [vmem:[%s241 + $0x1e] sm:$0x3]
      %v284 = vpack.c.bf16 %v268, %v268
      %v285 = vpack.c.bf16 %v269, %v269
      %v286 = vpack.c.bf16 %v270, %v270
      %v287 = vpack.c.bf16 %v271, %v271
      %v288 = vpack.c.bf16 %v272, %v272
      %v289 = vpack.c.bf16 %v273, %v273
      %v290 = vpack.c.bf16 %v274, %v274
      %v291 = vpack.c.bf16 %v275, %v275
      %v292 = vpack.c.bf16 %v276, %v276
      %v293 = vpack.c.bf16 %v277, %v277
      %v294 = vpack.c.bf16 %v278, %v278
      %v295 = vpack.c.bf16 %v279, %v279
      %v296 = vpack.c.bf16 %v280, %v280
      %v297 = vpack.c.bf16 %v281, %v281
      %v298 = vpack.c.bf16 %v282, %v282
      %v299 = vpack.c.bf16 %v283, %v283
      %v300 = vld [vmem:[%s247] sm:$0x3]
      %v301 = vld [vmem:[%s247 + $0x2] sm:$0x3]
      %v302 = vld [vmem:[%s247 + $0x4] sm:$0x3]
      %v303 = vld [vmem:[%s247 + $0x6] sm:$0x3]
      %v304 = vld [vmem:[%s247 + $0x8] sm:$0x3]
      %v305 = vld [vmem:[%s247 + $0xa] sm:$0x3]
      %v306 = vld [vmem:[%s247 + $0xc] sm:$0x3]
      %v307 = vld [vmem:[%s247 + $0xe] sm:$0x3]
      %v308 = vld [vmem:[%s247 + $0x10] sm:$0x3]
      %v309 = vld [vmem:[%s247 + $0x12] sm:$0x3]
      %v310 = vld [vmem:[%s247 + $0x14] sm:$0x3]
      %v311 = vld [vmem:[%s247 + $0x16] sm:$0x3]
      %v312 = vld [vmem:[%s247 + $0x18] sm:$0x3]
      %v313 = vld [vmem:[%s247 + $0x1a] sm:$0x3]
      %v314 = vld [vmem:[%s247 + $0x1c] sm:$0x3]
      %v315 = vld [vmem:[%s247 + $0x1e] sm:$0x3]
      %v316 = vpack.c.bf16 %v300, %v300
      %v317 = vpack.c.bf16 %v301, %v301
      %v318 = vpack.c.bf16 %v302, %v302
      %v319 = vpack.c.bf16 %v303, %v303
      %v320 = vpack.c.bf16 %v304, %v304
      %v321 = vpack.c.bf16 %v305, %v305
      %v322 = vpack.c.bf16 %v306, %v306
      %v323 = vpack.c.bf16 %v307, %v307
      %v324 = vpack.c.bf16 %v308, %v308
      %v325 = vpack.c.bf16 %v309, %v309
      %v326 = vpack.c.bf16 %v310, %v310
      %v327 = vpack.c.bf16 %v311, %v311
      %v328 = vpack.c.bf16 %v312, %v312
      %v329 = vpack.c.bf16 %v313, %v313
      %v330 = vpack.c.bf16 %v314, %v314
      %v331 = vpack.c.bf16 %v315, %v315
      %v332 = vld [vmem:[%s253] sm:$0xf]
      %v333 = vld [vmem:[%s253 + $0x4] sm:$0xf]
      %v334 = vld [vmem:[%s253 + $0x8] sm:$0xf]
      %v335 = vld [vmem:[%s253 + $0xc] sm:$0xf]
      %v336 = vld [vmem:[%s253 + $0x10] sm:$0xf]
      %v337 = vld [vmem:[%s253 + $0x14] sm:$0xf]
      %v338 = vld [vmem:[%s253 + $0x18] sm:$0xf]
      %v339 = vld [vmem:[%s253 + $0x1c] sm:$0xf]
      %v340 = vld [vmem:[%s253 + $0x20] sm:$0xf]
      %v341 = vld [vmem:[%s253 + $0x24] sm:$0xf]
      %v342 = vld [vmem:[%s253 + $0x28] sm:$0xf]
      %v343 = vld [vmem:[%s253 + $0x2c] sm:$0xf]
      %v344 = vld [vmem:[%s253 + $0x30] sm:$0xf]
      %v345 = vld [vmem:[%s253 + $0x34] sm:$0xf]
      %v346 = vld [vmem:[%s253 + $0x38] sm:$0xf]
      %v347 = vld [vmem:[%s253 + $0x3c] sm:$0xf]
      %v348 = vld [vmem:[%s259] sm:$0xf]
      %v349 = vld [vmem:[%s259 + $0x4] sm:$0xf]
      %v350 = vld [vmem:[%s259 + $0x8] sm:$0xf]
      %v351 = vld [vmem:[%s259 + $0xc] sm:$0xf]
      %v352 = vld [vmem:[%s259 + $0x10] sm:$0xf]
      %v353 = vld [vmem:[%s259 + $0x14] sm:$0xf]
      %v354 = vld [vmem:[%s259 + $0x18] sm:$0xf]
      %v355 = vld [vmem:[%s259 + $0x1c] sm:$0xf]
      %v356 = vld [vmem:[%s259 + $0x20] sm:$0xf]
      %v357 = vld [vmem:[%s259 + $0x24] sm:$0xf]
      %v358 = vld [vmem:[%s259 + $0x28] sm:$0xf]
      %v359 = vld [vmem:[%s259 + $0x2c] sm:$0xf]
      %v360 = vld [vmem:[%s259 + $0x30] sm:$0xf]
      %v361 = vld [vmem:[%s259 + $0x34] sm:$0xf]
      %v362 = vld [vmem:[%s259 + $0x38] sm:$0xf]
      %v363 = vld [vmem:[%s259 + $0x3c] sm:$0xf]
      %380 = vrot.lane.b32.xlu0 %v348, 2
      %v381 = vpop.permute.xlu0 %380
      %382 = vrot.lane.b32.xlu0 %v349, 2
      %v383 = vpop.permute.xlu0 %382
      %384 = vrot.lane.b32.xlu0 %v350, 2
      %v385 = vpop.permute.xlu0 %384
      %386 = vrot.lane.b32.xlu0 %v351, 2
      %v387 = vpop.permute.xlu0 %386
      %388 = vrot.lane.b32.xlu0 %v352, 2
      %v389 = vpop.permute.xlu0 %388
      %390 = vrot.lane.b32.xlu0 %v353, 2
      %v391 = vpop.permute.xlu0 %390
      %392 = vrot.lane.b32.xlu0 %v354, 2
      %v393 = vpop.permute.xlu0 %392
      %394 = vrot.lane.b32.xlu0 %v355, 2
      %v395 = vpop.permute.xlu0 %394
      %396 = vrot.lane.b32.xlu0 %v356, 2
      %v397 = vpop.permute.xlu0 %396
      %398 = vrot.lane.b32.xlu0 %v357, 2
      %v399 = vpop.permute.xlu0 %398
      %400 = vrot.lane.b32.xlu0 %v358, 2
      %v401 = vpop.permute.xlu0 %400
      %402 = vrot.lane.b32.xlu0 %v359, 2
      %v403 = vpop.permute.xlu0 %402
      %404 = vrot.lane.b32.xlu0 %v360, 2
      %v405 = vpop.permute.xlu0 %404
      %406 = vrot.lane.b32.xlu0 %v361, 2
      %v407 = vpop.permute.xlu0 %406
      %408 = vrot.lane.b32.xlu0 %v362, 2
      %v409 = vpop.permute.xlu0 %408
      %410 = vrot.lane.b32.xlu0 %v363, 2
      %v411 = vpop.permute.xlu0 %410
      %vm428 = vcmask 15360
      %v429 = vsel %vm428, %v332, %v381
      %v430 = vsel %vm428, %v333, %v383
      %v431 = vsel %vm428, %v334, %v385
      %v432 = vsel %vm428, %v335, %v387
      %v433 = vsel %vm428, %v336, %v389
      %v434 = vsel %vm428, %v337, %v391
      %v435 = vsel %vm428, %v338, %v393
      %v436 = vsel %vm428, %v339, %v395
      %v437 = vsel %vm428, %v340, %v397
      %v438 = vsel %vm428, %v341, %v399
      %v439 = vsel %vm428, %v342, %v401
      %v440 = vsel %vm428, %v343, %v403
      %v441 = vsel %vm428, %v344, %v405
      %v442 = vsel %vm428, %v345, %v407
      %v443 = vsel %vm428, %v346, %v409
      %v444 = vsel %vm428, %v347, %v411
      %v445 = vpack.c.bf16 %v429, %v429
      %v446 = vpack.c.bf16 %v430, %v430
      %v447 = vpack.c.bf16 %v431, %v431
      %v448 = vpack.c.bf16 %v432, %v432
      %v449 = vpack.c.bf16 %v433, %v433
      %v450 = vpack.c.bf16 %v434, %v434
      %v451 = vpack.c.bf16 %v435, %v435
      %v452 = vpack.c.bf16 %v436, %v436
      %v453 = vpack.c.bf16 %v437, %v437
      %v454 = vpack.c.bf16 %v438, %v438
      %v455 = vpack.c.bf16 %v439, %v439
      %v456 = vpack.c.bf16 %v440, %v440
      %v457 = vpack.c.bf16 %v441, %v441
      %v458 = vpack.c.bf16 %v442, %v442
      %v459 = vpack.c.bf16 %v443, %v443
      %v460 = vpack.c.bf16 %v444, %v444
      %v461 = vsub.f32 0.0, %v348
      %v462 = vsub.f32 0.0, %v349
      %v463 = vsub.f32 0.0, %v350
      %v464 = vsub.f32 0.0, %v351
      %v465 = vsub.f32 0.0, %v352
      %v466 = vsub.f32 0.0, %v353
      %v467 = vsub.f32 0.0, %v354
      %v468 = vsub.f32 0.0, %v355
      %v469 = vsub.f32 0.0, %v356
      %v470 = vsub.f32 0.0, %v357
      %v471 = vsub.f32 0.0, %v358
      %v472 = vsub.f32 0.0, %v359
      %v473 = vsub.f32 0.0, %v360
      %v474 = vsub.f32 0.0, %v361
      %v475 = vsub.f32 0.0, %v362
      %v476 = vsub.f32 0.0, %v363
      %493 = vrot.lane.b32.xlu0 %v332, 2
      %v494 = vpop.permute.xlu0 %493
      %495 = vrot.lane.b32.xlu0 %v333, 2
      %v496 = vpop.permute.xlu0 %495
      %497 = vrot.lane.b32.xlu0 %v334, 2
      %v498 = vpop.permute.xlu0 %497
      %499 = vrot.lane.b32.xlu0 %v335, 2
      %v500 = vpop.permute.xlu0 %499
      %501 = vrot.lane.b32.xlu0 %v336, 2
      %v502 = vpop.permute.xlu0 %501
      %503 = vrot.lane.b32.xlu0 %v337, 2
      %v504 = vpop.permute.xlu0 %503
      %505 = vrot.lane.b32.xlu0 %v338, 2
      %v506 = vpop.permute.xlu0 %505
      %507 = vrot.lane.b32.xlu0 %v339, 2
      %v508 = vpop.permute.xlu0 %507
      %509 = vrot.lane.b32.xlu0 %v340, 2
      %v510 = vpop.permute.xlu0 %509
      %511 = vrot.lane.b32.xlu0 %v341, 2
      %v512 = vpop.permute.xlu0 %511
      %513 = vrot.lane.b32.xlu0 %v342, 2
      %v514 = vpop.permute.xlu0 %513
      %515 = vrot.lane.b32.xlu0 %v343, 2
      %v516 = vpop.permute.xlu0 %515
      %517 = vrot.lane.b32.xlu0 %v344, 2
      %v518 = vpop.permute.xlu0 %517
      %519 = vrot.lane.b32.xlu0 %v345, 2
      %v520 = vpop.permute.xlu0 %519
      %521 = vrot.lane.b32.xlu0 %v346, 2
      %v522 = vpop.permute.xlu0 %521
      %523 = vrot.lane.b32.xlu0 %v347, 2
      %v524 = vpop.permute.xlu0 %523
      %v541 = vsel %vm428, %v461, %v494
      %v542 = vsel %vm428, %v462, %v496
      %v543 = vsel %vm428, %v463, %v498
      %v544 = vsel %vm428, %v464, %v500
      %v545 = vsel %vm428, %v465, %v502
      %v546 = vsel %vm428, %v466, %v504
      %v547 = vsel %vm428, %v467, %v506
      %v548 = vsel %vm428, %v468, %v508
      %v549 = vsel %vm428, %v469, %v510
      %v550 = vsel %vm428, %v470, %v512
      %v551 = vsel %vm428, %v471, %v514
      %v552 = vsel %vm428, %v472, %v516
      %v553 = vsel %vm428, %v473, %v518
      %v554 = vsel %vm428, %v474, %v520
      %v555 = vsel %vm428, %v475, %v522
      %v556 = vsel %vm428, %v476, %v524
      %v557 = vpack.c.bf16 %v541, %v541
      %v558 = vpack.c.bf16 %v542, %v542
      %v559 = vpack.c.bf16 %v543, %v543
      %v560 = vpack.c.bf16 %v544, %v544
      %v561 = vpack.c.bf16 %v545, %v545
      %v562 = vpack.c.bf16 %v546, %v546
      %v563 = vpack.c.bf16 %v547, %v547
      %v564 = vpack.c.bf16 %v548, %v548
      %v565 = vpack.c.bf16 %v549, %v549
      %v566 = vpack.c.bf16 %v550, %v550
      %v567 = vpack.c.bf16 %v551, %v551
      %v568 = vpack.c.bf16 %v552, %v552
      %v569 = vpack.c.bf16 %v553, %v553
      %v570 = vpack.c.bf16 %v554, %v554
      %v571 = vpack.c.bf16 %v555, %v555
      %v572 = vpack.c.bf16 %v556, %v556
      %vm573 = vcmask 31744
      %v575 = vsel %vm573, %v316, 0
      %vm577 = vcmask 1041408
      %v579 = vsel %vm577, %v557, 0
      %581 = vmatpush.bf16.msra.mxu0 0
      %582 = vmatpush.bf16.msra.mxu0 0
      %583 = vmatpush.bf16.msra.mxu0 0
      %584 = vmatpush.bf16.msra.mxu0 0
      %585 = vmatpush.bf16.msra.mxu0 0
      %586 = vmatpush.bf16.msra.mxu0 0
      %587 = vmatpush.bf16.msra.mxu0 0
      %588 = vmatpush.bf16.msra.mxu0 %v579
      %589 = vmatmul.bf16.gmra.mxu0 %v575
      %v590 = vpop.f32.mrf.mxu0
      %v591 = vadd.f32 0.0, %v590
      %v592 = vpop.f32.mrf.mxu0
      %593 = vdwg.mxu0
      %v595 = vsel %vm573, %v317, 0
      %v598 = vsel %vm577, %v558, 0
      %600 = vmatpush.bf16.msra.mxu0 0
      %601 = vmatpush.bf16.msra.mxu0 0
      %602 = vmatpush.bf16.msra.mxu0 0
      %603 = vmatpush.bf16.msra.mxu0 0
      %604 = vmatpush.bf16.msra.mxu0 0
      %605 = vmatpush.bf16.msra.mxu0 0
      %606 = vmatpush.bf16.msra.mxu0 0
      %607 = vmatpush.bf16.msra.mxu0 %v598
      %608 = vmatmul.bf16.gmra.mxu0 %v595
      %v609 = vpop.f32.mrf.mxu0
      %v610 = vadd.f32 0.0, %v609
      %v611 = vpop.f32.mrf.mxu0
      %612 = vdwg.mxu0
      %v614 = vsel %vm573, %v318, 0
      %v617 = vsel %vm577, %v559, 0
      %619 = vmatpush.bf16.msra.mxu0 0
      %620 = vmatpush.bf16.msra.mxu0 0
      %621 = vmatpush.bf16.msra.mxu0 0
      %622 = vmatpush.bf16.msra.mxu0 0
      %623 = vmatpush.bf16.msra.mxu0 0
      %624 = vmatpush.bf16.msra.mxu0 0
      %625 = vmatpush.bf16.msra.mxu0 0
      %626 = vmatpush.bf16.msra.mxu0 %v617
      %627 = vmatmul.bf16.gmra.mxu0 %v614
      %v628 = vpop.f32.mrf.mxu0
      %v629 = vadd.f32 0.0, %v628
      %v630 = vpop.f32.mrf.mxu0
      %631 = vdwg.mxu0
      %v633 = vsel %vm573, %v319, 0
      %v636 = vsel %vm577, %v560, 0
      %638 = vmatpush.bf16.msra.mxu0 0
      %639 = vmatpush.bf16.msra.mxu0 0
      %640 = vmatpush.bf16.msra.mxu0 0
      %641 = vmatpush.bf16.msra.mxu0 0
      %642 = vmatpush.bf16.msra.mxu0 0
      %643 = vmatpush.bf16.msra.mxu0 0
      %644 = vmatpush.bf16.msra.mxu0 0
      %645 = vmatpush.bf16.msra.mxu0 %v636
      %646 = vmatmul.bf16.gmra.mxu0 %v633
      %v647 = vpop.f32.mrf.mxu0
      %v648 = vadd.f32 0.0, %v647
      %v649 = vpop.f32.mrf.mxu0
      %650 = vdwg.mxu0
      %v652 = vsel %vm573, %v320, 0
      %v655 = vsel %vm577, %v561, 0
      %657 = vmatpush.bf16.msra.mxu0 0
      %658 = vmatpush.bf16.msra.mxu0 0
      %659 = vmatpush.bf16.msra.mxu0 0
      %660 = vmatpush.bf16.msra.mxu0 0
      %661 = vmatpush.bf16.msra.mxu0 0
      %662 = vmatpush.bf16.msra.mxu0 0
      %663 = vmatpush.bf16.msra.mxu0 0
      %664 = vmatpush.bf16.msra.mxu0 %v655
      %665 = vmatmul.bf16.gmra.mxu0 %v652
      %v666 = vpop.f32.mrf.mxu0
      %v667 = vadd.f32 0.0, %v666
      %v668 = vpop.f32.mrf.mxu0
      %669 = vdwg.mxu0
      %v671 = vsel %vm573, %v321, 0
      %v674 = vsel %vm577, %v562, 0
      %676 = vmatpush.bf16.msra.mxu0 0
      %677 = vmatpush.bf16.msra.mxu0 0
      %678 = vmatpush.bf16.msra.mxu0 0
      %679 = vmatpush.bf16.msra.mxu0 0
      %680 = vmatpush.bf16.msra.mxu0 0
      %681 = vmatpush.bf16.msra.mxu0 0
      %682 = vmatpush.bf16.msra.mxu0 0
      %683 = vmatpush.bf16.msra.mxu0 %v674
      %684 = vmatmul.bf16.gmra.mxu0 %v671
      %v685 = vpop.f32.mrf.mxu0
      %v686 = vadd.f32 0.0, %v685
      %v687 = vpop.f32.mrf.mxu0
      %688 = vdwg.mxu0
      %v690 = vsel %vm573, %v322, 0
      %v693 = vsel %vm577, %v563, 0
      %695 = vmatpush.bf16.msra.mxu0 0
      %696 = vmatpush.bf16.msra.mxu0 0
      %697 = vmatpush.bf16.msra.mxu0 0
      %698 = vmatpush.bf16.msra.mxu0 0
      %699 = vmatpush.bf16.msra.mxu0 0
      %700 = vmatpush.bf16.msra.mxu0 0
      %701 = vmatpush.bf16.msra.mxu0 0
      %702 = vmatpush.bf16.msra.mxu0 %v693
      %703 = vmatmul.bf16.gmra.mxu0 %v690
      %v704 = vpop.f32.mrf.mxu0
      %v705 = vadd.f32 0.0, %v704
      %v706 = vpop.f32.mrf.mxu0
      %707 = vdwg.mxu0
      %v709 = vsel %vm573, %v323, 0
      %v712 = vsel %vm577, %v564, 0
      %714 = vmatpush.bf16.msra.mxu0 0
      %715 = vmatpush.bf16.msra.mxu0 0
      %716 = vmatpush.bf16.msra.mxu0 0
      %717 = vmatpush.bf16.msra.mxu0 0
      %718 = vmatpush.bf16.msra.mxu0 0
      %719 = vmatpush.bf16.msra.mxu0 0
      %720 = vmatpush.bf16.msra.mxu0 0
      %721 = vmatpush.bf16.msra.mxu0 %v712
      %722 = vmatmul.bf16.gmra.mxu0 %v709
      %v723 = vpop.f32.mrf.mxu0
      %v724 = vadd.f32 0.0, %v723
      %v725 = vpop.f32.mrf.mxu0
      %726 = vdwg.mxu0
      %v728 = vsel %vm573, %v324, 0
      %v731 = vsel %vm577, %v565, 0
      %733 = vmatpush.bf16.msra.mxu0 0
      %734 = vmatpush.bf16.msra.mxu0 0
      %735 = vmatpush.bf16.msra.mxu0 0
      %736 = vmatpush.bf16.msra.mxu0 0
      %737 = vmatpush.bf16.msra.mxu0 0
      %738 = vmatpush.bf16.msra.mxu0 0
      %739 = vmatpush.bf16.msra.mxu0 0
      %740 = vmatpush.bf16.msra.mxu0 %v731
      %741 = vmatmul.bf16.gmra.mxu0 %v728
      %v742 = vpop.f32.mrf.mxu0
      %v743 = vadd.f32 0.0, %v742
      %v744 = vpop.f32.mrf.mxu0
      %745 = vdwg.mxu0
      %v747 = vsel %vm573, %v325, 0
      %v750 = vsel %vm577, %v566, 0
      %752 = vmatpush.bf16.msra.mxu0 0
      %753 = vmatpush.bf16.msra.mxu0 0
      %754 = vmatpush.bf16.msra.mxu0 0
      %755 = vmatpush.bf16.msra.mxu0 0
      %756 = vmatpush.bf16.msra.mxu0 0
      %757 = vmatpush.bf16.msra.mxu0 0
      %758 = vmatpush.bf16.msra.mxu0 0
      %759 = vmatpush.bf16.msra.mxu0 %v750
      %760 = vmatmul.bf16.gmra.mxu0 %v747
      %v761 = vpop.f32.mrf.mxu0
      %v762 = vadd.f32 0.0, %v761
      %v763 = vpop.f32.mrf.mxu0
      %764 = vdwg.mxu0
      %v766 = vsel %vm573, %v326, 0
      %v769 = vsel %vm577, %v567, 0
      %771 = vmatpush.bf16.msra.mxu0 0
      %772 = vmatpush.bf16.msra.mxu0 0
      %773 = vmatpush.bf16.msra.mxu0 0
      %774 = vmatpush.bf16.msra.mxu0 0
      %775 = vmatpush.bf16.msra.mxu0 0
      %776 = vmatpush.bf16.msra.mxu0 0
      %777 = vmatpush.bf16.msra.mxu0 0
      %778 = vmatpush.bf16.msra.mxu0 %v769
      %779 = vmatmul.bf16.gmra.mxu0 %v766
      %v780 = vpop.f32.mrf.mxu0
      %v781 = vadd.f32 0.0, %v780
      %v782 = vpop.f32.mrf.mxu0
      %783 = vdwg.mxu0
      %v785 = vsel %vm573, %v327, 0
      %v788 = vsel %vm577, %v568, 0
      %790 = vmatpush.bf16.msra.mxu0 0
      %791 = vmatpush.bf16.msra.mxu0 0
      %792 = vmatpush.bf16.msra.mxu0 0
      %793 = vmatpush.bf16.msra.mxu0 0
      %794 = vmatpush.bf16.msra.mxu0 0
      %795 = vmatpush.bf16.msra.mxu0 0
      %796 = vmatpush.bf16.msra.mxu0 0
      %797 = vmatpush.bf16.msra.mxu0 %v788
      %798 = vmatmul.bf16.gmra.mxu0 %v785
      %v799 = vpop.f32.mrf.mxu0
      %v800 = vadd.f32 0.0, %v799
      %v801 = vpop.f32.mrf.mxu0
      %802 = vdwg.mxu0
      %v804 = vsel %vm573, %v328, 0
      %v807 = vsel %vm577, %v569, 0
      %809 = vmatpush.bf16.msra.mxu0 0
      %810 = vmatpush.bf16.msra.mxu0 0
      %811 = vmatpush.bf16.msra.mxu0 0
      %812 = vmatpush.bf16.msra.mxu0 0
      %813 = vmatpush.bf16.msra.mxu0 0
      %814 = vmatpush.bf16.msra.mxu0 0
      %815 = vmatpush.bf16.msra.mxu0 0
      %816 = vmatpush.bf16.msra.mxu0 %v807
      %817 = vmatmul.bf16.gmra.mxu0 %v804
      %v818 = vpop.f32.mrf.mxu0
      %v819 = vadd.f32 0.0, %v818
      %v820 = vpop.f32.mrf.mxu0
      %821 = vdwg.mxu0
      %v823 = vsel %vm573, %v329, 0
      %v826 = vsel %vm577, %v570, 0
      %828 = vmatpush.bf16.msra.mxu0 0
      %829 = vmatpush.bf16.msra.mxu0 0
      %830 = vmatpush.bf16.msra.mxu0 0
      %831 = vmatpush.bf16.msra.mxu0 0
      %832 = vmatpush.bf16.msra.mxu0 0
      %833 = vmatpush.bf16.msra.mxu0 0
      %834 = vmatpush.bf16.msra.mxu0 0
      %835 = vmatpush.bf16.msra.mxu0 %v826
      %836 = vmatmul.bf16.gmra.mxu0 %v823
      %v837 = vpop.f32.mrf.mxu0
      %v838 = vadd.f32 0.0, %v837
      %v839 = vpop.f32.mrf.mxu0
      %840 = vdwg.mxu0
      %v842 = vsel %vm573, %v330, 0
      %v845 = vsel %vm577, %v571, 0
      %847 = vmatpush.bf16.msra.mxu0 0
      %848 = vmatpush.bf16.msra.mxu0 0
      %849 = vmatpush.bf16.msra.mxu0 0
      %850 = vmatpush.bf16.msra.mxu0 0
      %851 = vmatpush.bf16.msra.mxu0 0
      %852 = vmatpush.bf16.msra.mxu0 0
      %853 = vmatpush.bf16.msra.mxu0 0
      %854 = vmatpush.bf16.msra.mxu0 %v845
      %855 = vmatmul.bf16.gmra.mxu0 %v842
      %v856 = vpop.f32.mrf.mxu0
      %v857 = vadd.f32 0.0, %v856
      %v858 = vpop.f32.mrf.mxu0
      %859 = vdwg.mxu0
      %v861 = vsel %vm573, %v331, 0
      %v864 = vsel %vm577, %v572, 0
      %866 = vmatpush.bf16.msra.mxu0 0
      %867 = vmatpush.bf16.msra.mxu0 0
      %868 = vmatpush.bf16.msra.mxu0 0
      %869 = vmatpush.bf16.msra.mxu0 0
      %870 = vmatpush.bf16.msra.mxu0 0
      %871 = vmatpush.bf16.msra.mxu0 0
      %872 = vmatpush.bf16.msra.mxu0 0
      %873 = vmatpush.bf16.msra.mxu0 %v864
      %874 = vmatmul.bf16.gmra.mxu0 %v861
      %v875 = vpop.f32.mrf.mxu0
      %v876 = vadd.f32 0.0, %v875
      %v877 = vpop.f32.mrf.mxu0
      %878 = vdwg.mxu0
      %v880 = vsel %vm573, %v284, 0
      %v883 = vsel %vm577, %v445, 0
      %885 = vmatpush.bf16.msra.mxu0 0
      %886 = vmatpush.bf16.msra.mxu0 0
      %887 = vmatpush.bf16.msra.mxu0 0
      %888 = vmatpush.bf16.msra.mxu0 0
      %889 = vmatpush.bf16.msra.mxu0 0
      %890 = vmatpush.bf16.msra.mxu0 0
      %891 = vmatpush.bf16.msra.mxu0 0
      %892 = vmatpush.bf16.msra.mxu0 %v883
      %893 = vmatmul.bf16.gmra.mxu0 %v880
      %v894 = vpop.f32.mrf.mxu0
      %v895 = vadd.f32 %v591, %v894
      %v896 = vpop.f32.mrf.mxu0
      %897 = vdwg.mxu0
      %v899 = vsel %vm573, %v285, 0
      %v902 = vsel %vm577, %v446, 0
      %904 = vmatpush.bf16.msra.mxu0 0
      %905 = vmatpush.bf16.msra.mxu0 0
      %906 = vmatpush.bf16.msra.mxu0 0
      %907 = vmatpush.bf16.msra.mxu0 0
      %908 = vmatpush.bf16.msra.mxu0 0
      %909 = vmatpush.bf16.msra.mxu0 0
      %910 = vmatpush.bf16.msra.mxu0 0
      %911 = vmatpush.bf16.msra.mxu0 %v902
      %912 = vmatmul.bf16.gmra.mxu0 %v899
      %v913 = vpop.f32.mrf.mxu0
      %v914 = vadd.f32 %v610, %v913
      %v915 = vpop.f32.mrf.mxu0
      %916 = vdwg.mxu0
      %v918 = vsel %vm573, %v286, 0
      %v921 = vsel %vm577, %v447, 0
      %923 = vmatpush.bf16.msra.mxu0 0
      %924 = vmatpush.bf16.msra.mxu0 0
      %925 = vmatpush.bf16.msra.mxu0 0
      %926 = vmatpush.bf16.msra.mxu0 0
      %927 = vmatpush.bf16.msra.mxu0 0
      %928 = vmatpush.bf16.msra.mxu0 0
      %929 = vmatpush.bf16.msra.mxu0 0
      %930 = vmatpush.bf16.msra.mxu0 %v921
      %931 = vmatmul.bf16.gmra.mxu0 %v918
      %v932 = vpop.f32.mrf.mxu0
      %v933 = vadd.f32 %v629, %v932
      %v934 = vpop.f32.mrf.mxu0
      %935 = vdwg.mxu0
      %v937 = vsel %vm573, %v287, 0
      %v940 = vsel %vm577, %v448, 0
      %942 = vmatpush.bf16.msra.mxu0 0
      %943 = vmatpush.bf16.msra.mxu0 0
      %944 = vmatpush.bf16.msra.mxu0 0
      %945 = vmatpush.bf16.msra.mxu0 0
      %946 = vmatpush.bf16.msra.mxu0 0
      %947 = vmatpush.bf16.msra.mxu0 0
      %948 = vmatpush.bf16.msra.mxu0 0
      %949 = vmatpush.bf16.msra.mxu0 %v940
      %950 = vmatmul.bf16.gmra.mxu0 %v937
      %v951 = vpop.f32.mrf.mxu0
      %v952 = vadd.f32 %v648, %v951
      %v953 = vpop.f32.mrf.mxu0
      %954 = vdwg.mxu0
      %v956 = vsel %vm573, %v288, 0
      %v959 = vsel %vm577, %v449, 0
      %961 = vmatpush.bf16.msra.mxu0 0
      %962 = vmatpush.bf16.msra.mxu0 0
      %963 = vmatpush.bf16.msra.mxu0 0
      %964 = vmatpush.bf16.msra.mxu0 0
      %965 = vmatpush.bf16.msra.mxu0 0
      %966 = vmatpush.bf16.msra.mxu0 0
      %967 = vmatpush.bf16.msra.mxu0 0
      %968 = vmatpush.bf16.msra.mxu0 %v959
      %969 = vmatmul.bf16.gmra.mxu0 %v956
      %v970 = vpop.f32.mrf.mxu0
      %v971 = vadd.f32 %v667, %v970
      %v972 = vpop.f32.mrf.mxu0
      %973 = vdwg.mxu0
      %v975 = vsel %vm573, %v289, 0
      %v978 = vsel %vm577, %v450, 0
      %980 = vmatpush.bf16.msra.mxu0 0
      %981 = vmatpush.bf16.msra.mxu0 0
      %982 = vmatpush.bf16.msra.mxu0 0
      %983 = vmatpush.bf16.msra.mxu0 0
      %984 = vmatpush.bf16.msra.mxu0 0
      %985 = vmatpush.bf16.msra.mxu0 0
      %986 = vmatpush.bf16.msra.mxu0 0
      %987 = vmatpush.bf16.msra.mxu0 %v978
      %988 = vmatmul.bf16.gmra.mxu0 %v975
      %v989 = vpop.f32.mrf.mxu0
      %v990 = vadd.f32 %v686, %v989
      %v991 = vpop.f32.mrf.mxu0
      %992 = vdwg.mxu0
      %v994 = vsel %vm573, %v290, 0
      %v997 = vsel %vm577, %v451, 0
      %999 = vmatpush.bf16.msra.mxu0 0
      %1000 = vmatpush.bf16.msra.mxu0 0
      %1001 = vmatpush.bf16.msra.mxu0 0
      %1002 = vmatpush.bf16.msra.mxu0 0
      %1003 = vmatpush.bf16.msra.mxu0 0
      %1004 = vmatpush.bf16.msra.mxu0 0
      %1005 = vmatpush.bf16.msra.mxu0 0
      %1006 = vmatpush.bf16.msra.mxu0 %v997
      %1007 = vmatmul.bf16.gmra.mxu0 %v994
      %v1008 = vpop.f32.mrf.mxu0
      %v1009 = vadd.f32 %v705, %v1008
      %v1010 = vpop.f32.mrf.mxu0
      %1011 = vdwg.mxu0
      %v1013 = vsel %vm573, %v291, 0
      %v1016 = vsel %vm577, %v452, 0
      %1018 = vmatpush.bf16.msra.mxu0 0
      %1019 = vmatpush.bf16.msra.mxu0 0
      %1020 = vmatpush.bf16.msra.mxu0 0
      %1021 = vmatpush.bf16.msra.mxu0 0
      %1022 = vmatpush.bf16.msra.mxu0 0
      %1023 = vmatpush.bf16.msra.mxu0 0
      %1024 = vmatpush.bf16.msra.mxu0 0
      %1025 = vmatpush.bf16.msra.mxu0 %v1016
      %1026 = vmatmul.bf16.gmra.mxu0 %v1013
      %v1027 = vpop.f32.mrf.mxu0
      %v1028 = vadd.f32 %v724, %v1027
      %v1029 = vpop.f32.mrf.mxu0
      %1030 = vdwg.mxu0
      %v1032 = vsel %vm573, %v292, 0
      %v1035 = vsel %vm577, %v453, 0
      %1037 = vmatpush.bf16.msra.mxu0 0
      %1038 = vmatpush.bf16.msra.mxu0 0
      %1039 = vmatpush.bf16.msra.mxu0 0
      %1040 = vmatpush.bf16.msra.mxu0 0
      %1041 = vmatpush.bf16.msra.mxu0 0
      %1042 = vmatpush.bf16.msra.mxu0 0
      %1043 = vmatpush.bf16.msra.mxu0 0
      %1044 = vmatpush.bf16.msra.mxu0 %v1035
      %1045 = vmatmul.bf16.gmra.mxu0 %v1032
      %v1046 = vpop.f32.mrf.mxu0
      %v1047 = vadd.f32 %v743, %v1046
      %v1048 = vpop.f32.mrf.mxu0
      %1049 = vdwg.mxu0
      %v1051 = vsel %vm573, %v293, 0
      %v1054 = vsel %vm577, %v454, 0
      %1056 = vmatpush.bf16.msra.mxu0 0
      %1057 = vmatpush.bf16.msra.mxu0 0
      %1058 = vmatpush.bf16.msra.mxu0 0
      %1059 = vmatpush.bf16.msra.mxu0 0
      %1060 = vmatpush.bf16.msra.mxu0 0
      %1061 = vmatpush.bf16.msra.mxu0 0
      %1062 = vmatpush.bf16.msra.mxu0 0
      %1063 = vmatpush.bf16.msra.mxu0 %v1054
      %1064 = vmatmul.bf16.gmra.mxu0 %v1051
      %v1065 = vpop.f32.mrf.mxu0
      %v1066 = vadd.f32 %v762, %v1065
      %v1067 = vpop.f32.mrf.mxu0
      %1068 = vdwg.mxu0
      %v1070 = vsel %vm573, %v294, 0
      %v1073 = vsel %vm577, %v455, 0
      %1075 = vmatpush.bf16.msra.mxu0 0
      %1076 = vmatpush.bf16.msra.mxu0 0
      %1077 = vmatpush.bf16.msra.mxu0 0
      %1078 = vmatpush.bf16.msra.mxu0 0
      %1079 = vmatpush.bf16.msra.mxu0 0
      %1080 = vmatpush.bf16.msra.mxu0 0
      %1081 = vmatpush.bf16.msra.mxu0 0
      %1082 = vmatpush.bf16.msra.mxu0 %v1073
      %1083 = vmatmul.bf16.gmra.mxu0 %v1070
      %v1084 = vpop.f32.mrf.mxu0
      %v1085 = vadd.f32 %v781, %v1084
      %v1086 = vpop.f32.mrf.mxu0
      %1087 = vdwg.mxu0
      %v1089 = vsel %vm573, %v295, 0
      %v1092 = vsel %vm577, %v456, 0
      %1094 = vmatpush.bf16.msra.mxu0 0
      %1095 = vmatpush.bf16.msra.mxu0 0
      %1096 = vmatpush.bf16.msra.mxu0 0
      %1097 = vmatpush.bf16.msra.mxu0 0
      %1098 = vmatpush.bf16.msra.mxu0 0
      %1099 = vmatpush.bf16.msra.mxu0 0
      %1100 = vmatpush.bf16.msra.mxu0 0
      %1101 = vmatpush.bf16.msra.mxu0 %v1092
      %1102 = vmatmul.bf16.gmra.mxu0 %v1089
      %v1103 = vpop.f32.mrf.mxu0
      %v1104 = vadd.f32 %v800, %v1103
      %v1105 = vpop.f32.mrf.mxu0
      %1106 = vdwg.mxu0
      %v1108 = vsel %vm573, %v296, 0
      %v1111 = vsel %vm577, %v457, 0
      %1113 = vmatpush.bf16.msra.mxu0 0
      %1114 = vmatpush.bf16.msra.mxu0 0
      %1115 = vmatpush.bf16.msra.mxu0 0
      %1116 = vmatpush.bf16.msra.mxu0 0
      %1117 = vmatpush.bf16.msra.mxu0 0
      %1118 = vmatpush.bf16.msra.mxu0 0
      %1119 = vmatpush.bf16.msra.mxu0 0
      %1120 = vmatpush.bf16.msra.mxu0 %v1111
      %1121 = vmatmul.bf16.gmra.mxu0 %v1108
      %v1122 = vpop.f32.mrf.mxu0
      %v1123 = vadd.f32 %v819, %v1122
      %v1124 = vpop.f32.mrf.mxu0
      %1125 = vdwg.mxu0
      %v1127 = vsel %vm573, %v297, 0
      %v1130 = vsel %vm577, %v458, 0
      %1132 = vmatpush.bf16.msra.mxu0 0
      %1133 = vmatpush.bf16.msra.mxu0 0
      %1134 = vmatpush.bf16.msra.mxu0 0
      %1135 = vmatpush.bf16.msra.mxu0 0
      %1136 = vmatpush.bf16.msra.mxu0 0
      %1137 = vmatpush.bf16.msra.mxu0 0
      %1138 = vmatpush.bf16.msra.mxu0 0
      %1139 = vmatpush.bf16.msra.mxu0 %v1130
      %1140 = vmatmul.bf16.gmra.mxu0 %v1127
      %v1141 = vpop.f32.mrf.mxu0
      %v1142 = vadd.f32 %v838, %v1141
      %v1143 = vpop.f32.mrf.mxu0
      %1144 = vdwg.mxu0
      %v1146 = vsel %vm573, %v298, 0
      %v1149 = vsel %vm577, %v459, 0
      %1151 = vmatpush.bf16.msra.mxu0 0
      %1152 = vmatpush.bf16.msra.mxu0 0
      %1153 = vmatpush.bf16.msra.mxu0 0
      %1154 = vmatpush.bf16.msra.mxu0 0
      %1155 = vmatpush.bf16.msra.mxu0 0
      %1156 = vmatpush.bf16.msra.mxu0 0
      %1157 = vmatpush.bf16.msra.mxu0 0
      %1158 = vmatpush.bf16.msra.mxu0 %v1149
      %1159 = vmatmul.bf16.gmra.mxu0 %v1146
      %v1160 = vpop.f32.mrf.mxu0
      %v1161 = vadd.f32 %v857, %v1160
      %v1162 = vpop.f32.mrf.mxu0
      %1163 = vdwg.mxu0
      %v1165 = vsel %vm573, %v299, 0
      %v1168 = vsel %vm577, %v460, 0
      %1170 = vmatpush.bf16.msra.mxu0 0
      %1171 = vmatpush.bf16.msra.mxu0 0
      %1172 = vmatpush.bf16.msra.mxu0 0
      %1173 = vmatpush.bf16.msra.mxu0 0
      %1174 = vmatpush.bf16.msra.mxu0 0
      %1175 = vmatpush.bf16.msra.mxu0 0
      %1176 = vmatpush.bf16.msra.mxu0 0
      %1177 = vmatpush.bf16.msra.mxu0 %v1168
      %1178 = vmatmul.bf16.gmra.mxu0 %v1165
      %v1179 = vpop.f32.mrf.mxu0
      %v1180 = vadd.f32 %v876, %v1179
      %v1181 = vpop.f32.mrf.mxu0
      %1182 = vdwg.mxu0
      %vm1183 = vcmask 25600
      %1184 = vst.msk [vmem:[%s265] sm:$0x3] %vm1183, %v895
      %1185 = vst.msk [vmem:[%s265 + $0x2] sm:$0x3] %vm1183, %v914
      %1186 = vst.msk [vmem:[%s265 + $0x4] sm:$0x3] %vm1183, %v933
      %1187 = vst.msk [vmem:[%s265 + $0x6] sm:$0x3] %vm1183, %v952
      %1188 = vst.msk [vmem:[%s265 + $0x8] sm:$0x3] %vm1183, %v971
      %1189 = vst.msk [vmem:[%s265 + $0xa] sm:$0x3] %vm1183, %v990
      %1190 = vst.msk [vmem:[%s265 + $0xc] sm:$0x3] %vm1183, %v1009
      %1191 = vst.msk [vmem:[%s265 + $0xe] sm:$0x3] %vm1183, %v1028
      %1192 = vst.msk [vmem:[%s265 + $0x10] sm:$0x3] %vm1183, %v1047
      %1193 = vst.msk [vmem:[%s265 + $0x12] sm:$0x3] %vm1183, %v1066
      %1194 = vst.msk [vmem:[%s265 + $0x14] sm:$0x3] %vm1183, %v1085
      %1195 = vst.msk [vmem:[%s265 + $0x16] sm:$0x3] %vm1183, %v1104
      %1196 = vst.msk [vmem:[%s265 + $0x18] sm:$0x3] %vm1183, %v1123
      %1197 = vst.msk [vmem:[%s265 + $0x1a] sm:$0x3] %vm1183, %v1142
      %1198 = vst.msk [vmem:[%s265 + $0x1c] sm:$0x3] %vm1183, %v1161
      %1199 = vst.msk [vmem:[%s265 + $0x1e] sm:$0x3] %vm1183, %v1180
      %s1200 = smul.u32 16, %s15
      %p1201 = scmp.lt.s32.totalorder %s1200, 31
      %s1202 = scalar_select %p1201, %s1200, 31
      %s1203 = smul.addr %s1202, 2
      %s1204 = scalar_lea.vmem %s4, %s1203
      // Predicated region
      $region37: #{mwt_transform_cross_forward.12} parent=35 // pred_check
        %p1205 = pneg %p137
      $region38: #{mwt_transform_cross_forward.12} parent=35 // pred_check_branch
        %1207 = sbr.rel (%p1205) target = $region40
      $region39: #{mwt_transform_cross_forward.12} parent=35 // pred_region
        %s1208 = smul.u32 16, %s15
      $region40: #{mwt_transform_cross_forward.12} parent=35 // pred_fallthru
        _
    $region36: #{mwt_transform_cross_forward.12} parent=5 // pred_fallthru
      _
    %p1209 = scmp.le.s32.totalorder 2, %s10
    // Predicated region
    $region41: #{mwt_transform_cross_forward.12} parent=5 // pred_check
      %p1210 = pneg %p1209
    $region42: #{mwt_transform_cross_forward.12} parent=5 // pred_check_branch
      %1212 = sbr.rel (%p1210) target = $region44
    $region43: #{mwt_transform_cross_forward.12} parent=5 // pred_region
      %s1213 = ssub.s32 %s10, 2
      // Predicated region
      $region45: #{mwt_transform_cross_forward.12} parent=43 // pred_check
        %p1214 = pneg %p143
      $region46: #{mwt_transform_cross_forward.12} parent=43 // pred_check_branch
        %1216 = sbr.rel (%p1214) target = $region48
      $region47: #{mwt_transform_cross_forward.12} parent=43 // pred_region
        %s1217 = smul.u32 16, %s16
        %p1218 = scmp.lt.s32.totalorder %s1217, 31
        %s1219 = scalar_select %p1218, %s1217, 31
        %s1220 = smul.addr %s1219, 2
        %s1221 = scalar_lea.vmem %s4, %s1220
      $region48: #{mwt_transform_cross_forward.12} parent=43 // pred_fallthru
        _
    $region44: #{mwt_transform_cross_forward.12} parent=5 // pred_fallthru
      _
  $region6: #{mwt_transform_cross_forward.12} parent=0 // loop_footer
    %s14 = sadd.s32 1, %s10
  $region7: #{mwt_transform_cross_forward.12} parent=0 // loop_footer_branch
    %9 = sbr.rel target = $region3
  $region8: #{mwt_transform_cross_forward.12} parent=0 // loop_exit
    _

// kernel: mwt_transform_cross_forward.13
$region0: #{mwt_transform_cross_forward.13}
  #allocation0 [shape = 'u32[]', space=smem, size = 0x4, offset = 0x4, fixed_abs, tag = 'smem constant byte address 0x4 - core index']
  #allocation1 [shape = 'u32[72,128]{1,0:T(1,128)}', space=vmem, size = 0x9000, scoped, tag = 'internal scratch']
  %s0 = inlined_call_operand.vmem [shape: f32[32,4,2], index: 0, kind: input, shape index: {}]
  %s1 = inlined_call_operand.vmem [shape: f32[32,4,2], index: 1, kind: input, shape index: {}]
  %s2 = inlined_call_operand.vmem [shape: f32[32,2,2], index: 2, kind: input, shape index: {}]
  %s3 = inlined_call_operand.vmem [shape: f32[32,2,2], index: 3, kind: input, shape index: {}]
  %s4 = inlined_call_operand.vmem [shape: f32[32,4,4], index: 4, kind: output, shape index: {}]
  %s5 = sld [smem:[#allocation0]]
  $region49: #{mwt_transform_cross_forward.13} parent=0
    _
  %s7 = ssub.s32 1, %s5
  %s8 = scalar_select 0, %s7, %s5
  loop: start=0, step=1, limit=4
  $region2: #{mwt_transform_cross_forward.13} parent=0 // loop_pre_header
    _
  $region3: #{mwt_transform_cross_forward.13} parent=0 // loop_header
    %s10 = sphi 0, %s14
    %p11 = scmp.ge.s32.totalorder %s10, 4
    %s20 = sphi 0, %s22
    %s23 = sphi 0, %s20
    %s24 = sphi 0, %s23
    %s40 = sphi 0, %s24
    %s46 = sphi 0, %s48
    %s49 = sphi 0, %s46
    %s50 = sphi 0, %s49
    %s66 = sphi 0, %s50
    %s72 = sphi 0, %s74
    %s75 = sphi 0, %s72
    %s76 = sphi 0, %s75
    %s92 = sphi 0, %s76
    %s98 = sphi 0, %s100
    %s101 = sphi 0, %s98
    %s102 = sphi 0, %s101
    %s118 = sphi 0, %s102
    %s124 = sphi 0, %s126
    %s127 = sphi 0, %s124
    %s128 = sphi 0, %s127
    %s144 = sphi 0, %s128
  $region4: #{mwt_transform_cross_forward.13} parent=0 // loop_header_branch
    %13 = sbr.rel (%p11) target = $region8
  $region5: #{mwt_transform_cross_forward.13} parent=0 // loop_body
    %s15 = ssub.s32 %s10, 1
    %s16 = ssub.s32 %s10, 2
    %s17 = sadd.s32 %s10, 1
    %s18 = ssub.s32 %s10, %s17
    %p19 = scmp.eq.s32.totalorder %s18, 0
    %s21 = sadd.s32 %s20, 1
    %s22 = scalar_select %p19, %s20, %s21
    %p25 = pneg %p19
    %p26 = scmp.eq.s32.totalorder %s10, 1
    %p27 = por %p25, %p26
    %p28 = scmp.ne.s32.totalorder %s20, %s23
    %p29 = scmp.eq.s32.totalorder %s10, 0
    %p30 = por %p28, %p29
    %p31 = scmp.ne.s32.totalorder %s20, %s23
    %p32 = scmp.eq.s32.totalorder %s15, 1
    %p33 = por %p31, %p32
    %p34 = scmp.ne.s32.totalorder %s23, %s24
    %p35 = scmp.eq.s32.totalorder %s15, 0
    %p36 = por %p34, %p35
    %p37 = scmp.ne.s32.totalorder %s23, %s24
    %p38 = scmp.eq.s32.totalorder %s16, 1
    %p39 = por %p37, %p38
    %p41 = scmp.ne.s32.totalorder %s24, %s40
    %p42 = scmp.eq.s32.totalorder %s16, 0
    %p43 = por %p41, %p42
    %s44 = ssub.s32 %s10, %s17
    %p45 = scmp.eq.s32.totalorder %s44, 0
    %s47 = sadd.s32 %s46, 1
    %s48 = scalar_select %p45, %s46, %s47
    %p51 = pneg %p45
    %p52 = scmp.eq.s32.totalorder %s10, 1
    %p53 = por %p51, %p52
    %p54 = scmp.ne.s32.totalorder %s46, %s49
    %p55 = scmp.eq.s32.totalorder %s10, 0
    %p56 = por %p54, %p55
    %p57 = scmp.ne.s32.totalorder %s46, %s49
    %p58 = scmp.eq.s32.totalorder %s15, 1
    %p59 = por %p57, %p58
    %p60 = scmp.ne.s32.totalorder %s49, %s50
    %p61 = scmp.eq.s32.totalorder %s15, 0
    %p62 = por %p60, %p61
    %p63 = scmp.ne.s32.totalorder %s49, %s50
    %p64 = scmp.eq.s32.totalorder %s16, 1
    %p65 = por %p63, %p64
    %p67 = scmp.ne.s32.totalorder %s50, %s66
    %p68 = scmp.eq.s32.totalorder %s16, 0
    %p69 = por %p67, %p68
    %s70 = ssub.s32 %s10, %s17
    %p71 = scmp.eq.s32.totalorder %s70, 0
    %s73 = sadd.s32 %s72, 1
    %s74 = scalar_select %p71, %s72, %s73
    %p77 = pneg %p71
    %p78 = scmp.eq.s32.totalorder %s10, 1
    %p79 = por %p77, %p78
    %p80 = scmp.ne.s32.totalorder %s72, %s75
    %p81 = scmp.eq.s32.totalorder %s10, 0
    %p82 = por %p80, %p81
    %p83 = scmp.ne.s32.totalorder %s72, %s75
    %p84 = scmp.eq.s32.totalorder %s15, 1
    %p85 = por %p83, %p84
    %p86 = scmp.ne.s32.totalorder %s75, %s76
    %p87 = scmp.eq.s32.totalorder %s15, 0
    %p88 = por %p86, %p87
    %p89 = scmp.ne.s32.totalorder %s75, %s76
    %p90 = scmp.eq.s32.totalorder %s16, 1
    %p91 = por %p89, %p90
    %p93 = scmp.ne.s32.totalorder %s76, %s92
    %p94 = scmp.eq.s32.totalorder %s16, 0
    %p95 = por %p93, %p94
    %s96 = ssub.s32 %s10, %s17
    %p97 = scmp.eq.s32.totalorder %s96, 0
    %s99 = sadd.s32 %s98, 1
    %s100 = scalar_select %p97, %s98, %s99
    %p103 = pneg %p97
    %p104 = scmp.eq.s32.totalorder %s10, 1
    %p105 = por %p103, %p104
    %p106 = scmp.ne.s32.totalorder %s98, %s101
    %p107 = scmp.eq.s32.totalorder %s10, 0
    %p108 = por %p106, %p107
    %p109 = scmp.ne.s32.totalorder %s98, %s101
    %p110 = scmp.eq.s32.totalorder %s15, 1
    %p111 = por %p109, %p110
    %p112 = scmp.ne.s32.totalorder %s101, %s102
    %p113 = scmp.eq.s32.totalorder %s15, 0
    %p114 = por %p112, %p113
    %p115 = scmp.ne.s32.totalorder %s101, %s102
    %p116 = scmp.eq.s32.totalorder %s16, 1
    %p117 = por %p115, %p116
    %p119 = scmp.ne.s32.totalorder %s102, %s118
    %p120 = scmp.eq.s32.totalorder %s16, 0
    %p121 = por %p119, %p120
    %s122 = ssub.s32 %s10, %s17
    %p123 = scmp.eq.s32.totalorder %s122, 0
    %s125 = sadd.s32 %s124, 1
    %s126 = scalar_select %p123, %s124, %s125
    %p129 = pneg %p123
    %p130 = scmp.eq.s32.totalorder %s10, 1
    %p131 = por %p129, %p130
    %p132 = scmp.ne.s32.totalorder %s124, %s127
    %p133 = scmp.eq.s32.totalorder %s10, 0
    %p134 = por %p132, %p133
    %p135 = scmp.ne.s32.totalorder %s124, %s127
    %p136 = scmp.eq.s32.totalorder %s15, 1
    %p137 = por %p135, %p136
    %p138 = scmp.ne.s32.totalorder %s127, %s128
    %p139 = scmp.eq.s32.totalorder %s15, 0
    %p140 = por %p138, %p139
    %p141 = scmp.ne.s32.totalorder %s127, %s128
    %p142 = scmp.eq.s32.totalorder %s16, 1
    %p143 = por %p141, %p142
    %p145 = scmp.ne.s32.totalorder %s128, %s144
    %p146 = scmp.eq.s32.totalorder %s16, 0
    %p147 = por %p145, %p146
    %p148 = scmp.le.s32.totalorder 1, %s10
    %p149 = scmp.lt.s32.totalorder %s10, 3
    %p150 = pnand %p148, %p149
    %p151 = pneg %p150
    // Predicated region
    $region9: #{mwt_transform_cross_forward.13} parent=5 // pred_check
      _
    $region10: #{mwt_transform_cross_forward.13} parent=5 // pred_check_branch
      %153 = sbr.rel (%p150) target = $region12
    $region11: #{mwt_transform_cross_forward.13} parent=5 // pred_region
      %s154 = ssub.s32 %s10, 1
    $region12: #{mwt_transform_cross_forward.13} parent=5 // pred_fallthru
      _
    %p155 = scmp.lt.s32.totalorder %s10, 2
    // Predicated region
    $region13: #{mwt_transform_cross_forward.13} parent=5 // pred_check
      %p156 = pneg %p155
    $region14: #{mwt_transform_cross_forward.13} parent=5 // pred_check_branch
      %158 = sbr.rel (%p156) target = $region16
    $region15: #{mwt_transform_cross_forward.13} parent=5 // pred_region
      // Predicated region
      $region17: #{mwt_transform_cross_forward.13} parent=15 // pred_check
        %p159 = pneg %p30
      $region18: #{mwt_transform_cross_forward.13} parent=15 // pred_check_branch
        %161 = sbr.rel (%p159) target = $region20
      $region19: #{mwt_transform_cross_forward.13} parent=15 // pred_region
        %s162 = smul.u32 16, %s10
        %p163 = scmp.lt.s32.totalorder %s162, 31
        %s164 = scalar_select %p163, %s162, 31
        %s165 = smul.addr %s164, 4
        %s166 = scalar_lea.vmem %s0, %s165
        %s167 = smul.u32 16, %s10
      $region20: #{mwt_transform_cross_forward.13} parent=15 // pred_fallthru
        _
      // Predicated region
      $region21: #{mwt_transform_cross_forward.13} parent=15 // pred_check
        %p168 = pneg %p56
      $region22: #{mwt_transform_cross_forward.13} parent=15 // pred_check_branch
        %170 = sbr.rel (%p168) target = $region24
      $region23: #{mwt_transform_cross_forward.13} parent=15 // pred_region
        %s171 = smul.u32 16, %s10
        %p172 = scmp.lt.s32.totalorder %s171, 31
        %s173 = scalar_select %p172, %s171, 31
        %s174 = smul.addr %s173, 4
        %s175 = scalar_lea.vmem %s1, %s174
        %s176 = smul.u32 16, %s10
      $region24: #{mwt_transform_cross_forward.13} parent=15 // pred_fallthru
        _
      // Predicated region
      $region25: #{mwt_transform_cross_forward.13} parent=15 // pred_check
        %p177 = pneg %p82
      $region26: #{mwt_transform_cross_forward.13} parent=15 // pred_check_branch
        %179 = sbr.rel (%p177) target = $region28
      $region27: #{mwt_transform_cross_forward.13} parent=15 // pred_region
        %s180 = smul.u32 16, %s10
        %p181 = scmp.lt.s32.totalorder %s180, 31
        %s182 = scalar_select %p181, %s180, 31
        %s183 = smul.addr %s182, 2
        %s184 = scalar_lea.vmem %s2, %s183
        %s185 = smul.u32 16, %s10
      $region28: #{mwt_transform_cross_forward.13} parent=15 // pred_fallthru
        _
      // Predicated region
      $region29: #{mwt_transform_cross_forward.13} parent=15 // pred_check
        %p186 = pneg %p108
      $region30: #{mwt_transform_cross_forward.13} parent=15 // pred_check_branch
        %188 = sbr.rel (%p186) target = $region32
      $region31: #{mwt_transform_cross_forward.13} parent=15 // pred_region
        %s189 = smul.u32 16, %s10
        %p190 = scmp.lt.s32.totalorder %s189, 31
        %s191 = scalar_select %p190, %s189, 31
        %s192 = smul.addr %s191, 2
        %s193 = scalar_lea.vmem %s3, %s192
        %s194 = smul.u32 16, %s10
      $region32: #{mwt_transform_cross_forward.13} parent=15 // pred_fallthru
        _
    $region16: #{mwt_transform_cross_forward.13} parent=5 // pred_fallthru
      _
    %p195 = scmp.le.s32.totalorder 1, %s10
    %p196 = scmp.lt.s32.totalorder %s10, 3
    %p197 = pnand %p195, %p196
    %p198 = pneg %p197
    // Predicated region
    $region33: #{mwt_transform_cross_forward.13} parent=5 // pred_check
      _
    $region34: #{mwt_transform_cross_forward.13} parent=5 // pred_check_branch
      %200 = sbr.rel (%p197) target = $region36
    $region35: #{mwt_transform_cross_forward.13} parent=5 // pred_region
      %s201 = ssub.s32 %s10, 1
      %s202 = smul.u32 16, %s15
      %p203 = scmp.lt.s32.totalorder %s202, 31
      %s204 = scalar_select %p203, %s202, 31
      %s205 = smul.addr %s204, 4
      %s206 = scalar_lea.vmem %s0, %s205
      %p207 = pneg %p36
      %p208 = pneg %p33
      %s209 = smul.u32 16, %s15
      %p210 = scmp.lt.s32.totalorder %s209, 31
      %s211 = scalar_select %p210, %s209, 31
      %s212 = smul.addr %s211, 4
      %s213 = scalar_lea.vmem %s1, %s212
      %p214 = pneg %p62
      %p215 = pneg %p59
      %s216 = smul.u32 16, %s15
      %p217 = scmp.lt.s32.totalorder %s216, 31
      %s218 = scalar_select %p217, %s216, 31
      %s219 = smul.addr %s218, 2
      %s220 = scalar_lea.vmem %s2, %s219
      %p221 = pneg %p88
      %p222 = pneg %p85
      %s223 = smul.u32 16, %s15
      %p224 = scmp.lt.s32.totalorder %s223, 31
      %s225 = scalar_select %p224, %s223, 31
      %s226 = smul.addr %s225, 2
      %s227 = scalar_lea.vmem %s3, %s226
      %p228 = pneg %p114
      %p229 = pneg %p111
      %p230 = pneg %p140
      %p231 = pneg %p137
      %s232 = smul.u32 16, %s15
      %p233 = scmp.lt.s32.totalorder %s232, 31
      %s234 = scalar_select %p233, %s232, 31
      %s235 = smul.addr %s234, 4
      %s236 = scalar_lea.vmem %s4, %s235
      %s237 = smul.u32 16, %s15
      %p238 = scmp.lt.s32.totalorder %s237, 31
      %s239 = scalar_select %p238, %s237, 31
      %s240 = smul.addr %s239, 4
      %s241 = scalar_lea.vmem %s0, %s240
      %s242 = smul.u32 16, %s15
      %s243 = smul.u32 16, %s15
      %p244 = scmp.lt.s32.totalorder %s243, 31
      %s245 = scalar_select %p244, %s243, 31
      %s246 = smul.addr %s245, 4
      %s247 = scalar_lea.vmem %s1, %s246
      %s248 = smul.u32 16, %s15
      %s249 = smul.u32 16, %s15
      %p250 = scmp.lt.s32.totalorder %s249, 31
      %s251 = scalar_select %p250, %s249, 31
      %s252 = smul.addr %s251, 2
      %s253 = scalar_lea.vmem %s2, %s252
      %s254 = smul.u32 16, %s15
      %s255 = smul.u32 16, %s15
      %p256 = scmp.lt.s32.totalorder %s255, 31
      %s257 = scalar_select %p256, %s255, 31
      %s258 = smul.addr %s257, 2
      %s259 = scalar_lea.vmem %s3, %s258
      %s260 = smul.u32 16, %s15
      %s261 = smul.u32 16, %s15
      %p262 = scmp.lt.s32.totalorder %s261, 31
      %s263 = scalar_select %p262, %s261, 31
      %s264 = smul.addr %s263, 4
      %s265 = scalar_lea.vmem %s4, %s264
      %s266 = smul.u32 16, %s15
      %v268 = vld [vmem:[%s241] sm:$0xf]
      %v269 = vld [vmem:[%s241 + $0x4] sm:$0xf]
      %v270 = vld [vmem:[%s241 + $0x8] sm:$0xf]
      %v271 = vld [vmem:[%s241 + $0xc] sm:$0xf]
      %v272 = vld [vmem:[%s241 + $0x10] sm:$0xf]
      %v273 = vld [vmem:[%s241 + $0x14] sm:$0xf]
      %v274 = vld [vmem:[%s241 + $0x18] sm:$0xf]
      %v275 = vld [vmem:[%s241 + $0x1c] sm:$0xf]
      %v276 = vld [vmem:[%s241 + $0x20] sm:$0xf]
      %v277 = vld [vmem:[%s241 + $0x24] sm:$0xf]
      %v278 = vld [vmem:[%s241 + $0x28] sm:$0xf]
      %v279 = vld [vmem:[%s241 + $0x2c] sm:$0xf]
      %v280 = vld [vmem:[%s241 + $0x30] sm:$0xf]
      %v281 = vld [vmem:[%s241 + $0x34] sm:$0xf]
      %v282 = vld [vmem:[%s241 + $0x38] sm:$0xf]
      %v283 = vld [vmem:[%s241 + $0x3c] sm:$0xf]
      %v284 = vld [vmem:[%s247] sm:$0xf]
      %v285 = vld [vmem:[%s247 + $0x4] sm:$0xf]
      %v286 = vld [vmem:[%s247 + $0x8] sm:$0xf]
      %v287 = vld [vmem:[%s247 + $0xc] sm:$0xf]
      %v288 = vld [vmem:[%s247 + $0x10] sm:$0xf]
      %v289 = vld [vmem:[%s247 + $0x14] sm:$0xf]
      %v290 = vld [vmem:[%s247 + $0x18] sm:$0xf]
      %v291 = vld [vmem:[%s247 + $0x1c] sm:$0xf]
      %v292 = vld [vmem:[%s247 + $0x20] sm:$0xf]
      %v293 = vld [vmem:[%s247 + $0x24] sm:$0xf]
      %v294 = vld [vmem:[%s247 + $0x28] sm:$0xf]
      %v295 = vld [vmem:[%s247 + $0x2c] sm:$0xf]
      %v296 = vld [vmem:[%s247 + $0x30] sm:$0xf]
      %v297 = vld [vmem:[%s247 + $0x34] sm:$0xf]
      %v298 = vld [vmem:[%s247 + $0x38] sm:$0xf]
      %v299 = vld [vmem:[%s247 + $0x3c] sm:$0xf]
      %v300 = vld [vmem:[%s253] sm:$0x3]
      %v301 = vld [vmem:[%s253 + $0x2] sm:$0x3]
      %v302 = vld [vmem:[%s253 + $0x4] sm:$0x3]
      %v303 = vld [vmem:[%s253 + $0x6] sm:$0x3]
      %v304 = vld [vmem:[%s253 + $0x8] sm:$0x3]
      %v305 = vld [vmem:[%s253 + $0xa] sm:$0x3]
      %v306 = vld [vmem:[%s253 + $0xc] sm:$0x3]
      %v307 = vld [vmem:[%s253 + $0xe] sm:$0x3]
      %v308 = vld [vmem:[%s253 + $0x10] sm:$0x3]
      %v309 = vld [vmem:[%s253 + $0x12] sm:$0x3]
      %v310 = vld [vmem:[%s253 + $0x14] sm:$0x3]
      %v311 = vld [vmem:[%s253 + $0x16] sm:$0x3]
      %v312 = vld [vmem:[%s253 + $0x18] sm:$0x3]
      %v313 = vld [vmem:[%s253 + $0x1a] sm:$0x3]
      %v314 = vld [vmem:[%s253 + $0x1c] sm:$0x3]
      %v315 = vld [vmem:[%s253 + $0x1e] sm:$0x3]
      %v316 = vld [vmem:[%s259] sm:$0x3]
      %v317 = vld [vmem:[%s259 + $0x2] sm:$0x3]
      %v318 = vld [vmem:[%s259 + $0x4] sm:$0x3]
      %v319 = vld [vmem:[%s259 + $0x6] sm:$0x3]
      %v320 = vld [vmem:[%s259 + $0x8] sm:$0x3]
      %v321 = vld [vmem:[%s259 + $0xa] sm:$0x3]
      %v322 = vld [vmem:[%s259 + $0xc] sm:$0x3]
      %v323 = vld [vmem:[%s259 + $0xe] sm:$0x3]
      %v324 = vld [vmem:[%s259 + $0x10] sm:$0x3]
      %v325 = vld [vmem:[%s259 + $0x12] sm:$0x3]
      %v326 = vld [vmem:[%s259 + $0x14] sm:$0x3]
      %v327 = vld [vmem:[%s259 + $0x16] sm:$0x3]
      %v328 = vld [vmem:[%s259 + $0x18] sm:$0x3]
      %v329 = vld [vmem:[%s259 + $0x1a] sm:$0x3]
      %v330 = vld [vmem:[%s259 + $0x1c] sm:$0x3]
      %v331 = vld [vmem:[%s259 + $0x1e] sm:$0x3]
      %348 = vrot.lane.b32.xlu0 %v284, 2
      %v349 = vpop.permute.xlu0 %348
      %350 = vrot.lane.b32.xlu0 %v285, 2
      %v351 = vpop.permute.xlu0 %350
      %352 = vrot.lane.b32.xlu0 %v286, 2
      %v353 = vpop.permute.xlu0 %352
      %354 = vrot.lane.b32.xlu0 %v287, 2
      %v355 = vpop.permute.xlu0 %354
      %356 = vrot.lane.b32.xlu0 %v288, 2
      %v357 = vpop.permute.xlu0 %356
      %358 = vrot.lane.b32.xlu0 %v289, 2
      %v359 = vpop.permute.xlu0 %358
      %360 = vrot.lane.b32.xlu0 %v290, 2
      %v361 = vpop.permute.xlu0 %360
      %362 = vrot.lane.b32.xlu0 %v291, 2
      %v363 = vpop.permute.xlu0 %362
      %364 = vrot.lane.b32.xlu0 %v292, 2
      %v365 = vpop.permute.xlu0 %364
      %366 = vrot.lane.b32.xlu0 %v293, 2
      %v367 = vpop.permute.xlu0 %366
      %368 = vrot.lane.b32.xlu0 %v294, 2
      %v369 = vpop.permute.xlu0 %368
      %370 = vrot.lane.b32.xlu0 %v295, 2
      %v371 = vpop.permute.xlu0 %370
      %372 = vrot.lane.b32.xlu0 %v296, 2
      %v373 = vpop.permute.xlu0 %372
      %374 = vrot.lane.b32.xlu0 %v297, 2
      %v375 = vpop.permute.xlu0 %374
      %376 = vrot.lane.b32.xlu0 %v298, 2
      %v377 = vpop.permute.xlu0 %376
      %378 = vrot.lane.b32.xlu0 %v299, 2
      %v379 = vpop.permute.xlu0 %378
      %vm396 = vcmask 15360
      %v397 = vsel %vm396, %v268, %v349
      %v398 = vsel %vm396, %v269, %v351
      %v399 = vsel %vm396, %v270, %v353
      %v400 = vsel %vm396, %v271, %v355
      %v401 = vsel %vm396, %v272, %v357
      %v402 = vsel %vm396, %v273, %v359
      %v403 = vsel %vm396, %v274, %v361
      %v404 = vsel %vm396, %v275, %v363
      %v405 = vsel %vm396, %v276, %v365
      %v406 = vsel %vm396, %v277, %v367
      %v407 = vsel %vm396, %v278, %v369
      %v408 = vsel %vm396, %v279, %v371
      %v409 = vsel %vm396, %v280, %v373
      %v410 = vsel %vm396, %v281, %v375
      %v411 = vsel %vm396, %v282, %v377
      %v412 = vsel %vm396, %v283, %v379
      %v413 = vpack.c.bf16 %v397, %v397
      %v414 = vpack.c.bf16 %v398, %v398
      %v415 = vpack.c.bf16 %v399, %v399
      %v416 = vpack.c.bf16 %v400, %v400
      %v417 = vpack.c.bf16 %v401, %v401
      %v418 = vpack.c.bf16 %v402, %v402
      %v419 = vpack.c.bf16 %v403, %v403
      %v420 = vpack.c.bf16 %v404, %v404
      %v421 = vpack.c.bf16 %v405, %v405
      %v422 = vpack.c.bf16 %v406, %v406
      %v423 = vpack.c.bf16 %v407, %v407
      %v424 = vpack.c.bf16 %v408, %v408
      %v425 = vpack.c.bf16 %v409, %v409
      %v426 = vpack.c.bf16 %v410, %v410
      %v427 = vpack.c.bf16 %v411, %v411
      %v428 = vpack.c.bf16 %v412, %v412
      %v429 = vsub.f32 0.0, %v316
      %v430 = vsub.f32 0.0, %v317
      %v431 = vsub.f32 0.0, %v318
      %v432 = vsub.f32 0.0, %v319
      %v433 = vsub.f32 0.0, %v320
      %v434 = vsub.f32 0.0, %v321
      %v435 = vsub.f32 0.0, %v322
      %v436 = vsub.f32 0.0, %v323
      %v437 = vsub.f32 0.0, %v324
      %v438 = vsub.f32 0.0, %v325
      %v439 = vsub.f32 0.0, %v326
      %v440 = vsub.f32 0.0, %v327
      %v441 = vsub.f32 0.0, %v328
      %v442 = vsub.f32 0.0, %v329
      %v443 = vsub.f32 0.0, %v330
      %v444 = vsub.f32 0.0, %v331
      %461 = vrot.lane.b32.xlu0 %v429, 2
      %v462 = vpop.permute.xlu0 %461
      %463 = vrot.lane.b32.xlu0 %v430, 2
      %v464 = vpop.permute.xlu0 %463
      %465 = vrot.lane.b32.xlu0 %v431, 2
      %v466 = vpop.permute.xlu0 %465
      %467 = vrot.lane.b32.xlu0 %v432, 2
      %v468 = vpop.permute.xlu0 %467
      %469 = vrot.lane.b32.xlu0 %v433, 2
      %v470 = vpop.permute.xlu0 %469
      %471 = vrot.lane.b32.xlu0 %v434, 2
      %v472 = vpop.permute.xlu0 %471
      %473 = vrot.lane.b32.xlu0 %v435, 2
      %v474 = vpop.permute.xlu0 %473
      %475 = vrot.lane.b32.xlu0 %v436, 2
      %v476 = vpop.permute.xlu0 %475
      %477 = vrot.lane.b32.xlu0 %v437, 2
      %v478 = vpop.permute.xlu0 %477
      %479 = vrot.lane.b32.xlu0 %v438, 2
      %v480 = vpop.permute.xlu0 %479
      %481 = vrot.lane.b32.xlu0 %v439, 2
      %v482 = vpop.permute.xlu0 %481
      %483 = vrot.lane.b32.xlu0 %v440, 2
      %v484 = vpop.permute.xlu0 %483
      %485 = vrot.lane.b32.xlu0 %v441, 2
      %v486 = vpop.permute.xlu0 %485
      %487 = vrot.lane.b32.xlu0 %v442, 2
      %v488 = vpop.permute.xlu0 %487
      %489 = vrot.lane.b32.xlu0 %v443, 2
      %v490 = vpop.permute.xlu0 %489
      %491 = vrot.lane.b32.xlu0 %v444, 2
      %v492 = vpop.permute.xlu0 %491
      %v509 = vsel %vm396, %v300, %v462
      %v510 = vsel %vm396, %v301, %v464
      %v511 = vsel %vm396, %v302, %v466
      %v512 = vsel %vm396, %v303, %v468
      %v513 = vsel %vm396, %v304, %v470
      %v514 = vsel %vm396, %v305, %v472
      %v515 = vsel %vm396, %v306, %v474
      %v516 = vsel %vm396, %v307, %v476
      %v517 = vsel %vm396, %v308, %v478
      %v518 = vsel %vm396, %v309, %v480
      %v519 = vsel %vm396, %v310, %v482
      %v520 = vsel %vm396, %v311, %v484
      %v521 = vsel %vm396, %v312, %v486
      %v522 = vsel %vm396, %v313, %v488
      %v523 = vsel %vm396, %v314, %v490
      %v524 = vsel %vm396, %v315, %v492
      %v525 = vpack.c.bf16 %v509, %v509
      %v526 = vpack.c.bf16 %v510, %v510
      %v527 = vpack.c.bf16 %v511, %v511
      %v528 = vpack.c.bf16 %v512, %v512
      %v529 = vpack.c.bf16 %v513, %v513
      %v530 = vpack.c.bf16 %v514, %v514
      %v531 = vpack.c.bf16 %v515, %v515
      %v532 = vpack.c.bf16 %v516, %v516
      %v533 = vpack.c.bf16 %v517, %v517
      %v534 = vpack.c.bf16 %v518, %v518
      %v535 = vpack.c.bf16 %v519, %v519
      %v536 = vpack.c.bf16 %v520, %v520
      %v537 = vpack.c.bf16 %v521, %v521
      %v538 = vpack.c.bf16 %v522, %v522
      %v539 = vpack.c.bf16 %v523, %v523
      %v540 = vpack.c.bf16 %v524, %v524
      %557 = vrot.lane.b32.xlu0 %v300, 2
      %v558 = vpop.permute.xlu0 %557
      %559 = vrot.lane.b32.xlu0 %v301, 2
      %v560 = vpop.permute.xlu0 %559
      %561 = vrot.lane.b32.xlu0 %v302, 2
      %v562 = vpop.permute.xlu0 %561
      %563 = vrot.lane.b32.xlu0 %v303, 2
      %v564 = vpop.permute.xlu0 %563
      %565 = vrot.lane.b32.xlu0 %v304, 2
      %v566 = vpop.permute.xlu0 %565
      %567 = vrot.lane.b32.xlu0 %v305, 2
      %v568 = vpop.permute.xlu0 %567
      %569 = vrot.lane.b32.xlu0 %v306, 2
      %v570 = vpop.permute.xlu0 %569
      %571 = vrot.lane.b32.xlu0 %v307, 2
      %v572 = vpop.permute.xlu0 %571
      %573 = vrot.lane.b32.xlu0 %v308, 2
      %v574 = vpop.permute.xlu0 %573
      %575 = vrot.lane.b32.xlu0 %v309, 2
      %v576 = vpop.permute.xlu0 %575
      %577 = vrot.lane.b32.xlu0 %v310, 2
      %v578 = vpop.permute.xlu0 %577
      %579 = vrot.lane.b32.xlu0 %v311, 2
      %v580 = vpop.permute.xlu0 %579
      %581 = vrot.lane.b32.xlu0 %v312, 2
      %v582 = vpop.permute.xlu0 %581
      %583 = vrot.lane.b32.xlu0 %v313, 2
      %v584 = vpop.permute.xlu0 %583
      %585 = vrot.lane.b32.xlu0 %v314, 2
      %v586 = vpop.permute.xlu0 %585
      %587 = vrot.lane.b32.xlu0 %v315, 2
      %v588 = vpop.permute.xlu0 %587
      %v605 = vsel %vm396, %v316, %v558
      %v606 = vsel %vm396, %v317, %v560
      %v607 = vsel %vm396, %v318, %v562
      %v608 = vsel %vm396, %v319, %v564
      %v609 = vsel %vm396, %v320, %v566
      %v610 = vsel %vm396, %v321, %v568
      %v611 = vsel %vm396, %v322, %v570
      %v612 = vsel %vm396, %v323, %v572
      %v613 = vsel %vm396, %v324, %v574
      %v614 = vsel %vm396, %v325, %v576
      %v615 = vsel %vm396, %v326, %v578
      %v616 = vsel %vm396, %v327, %v580
      %v617 = vsel %vm396, %v328, %v582
      %v618 = vsel %vm396, %v329, %v584
      %v619 = vsel %vm396, %v330, %v586
      %v620 = vsel %vm396, %v331, %v588
      %v621 = vpack.c.bf16 %v605, %v605
      %v622 = vpack.c.bf16 %v606, %v606
      %v623 = vpack.c.bf16 %v607, %v607
      %v624 = vpack.c.bf16 %v608, %v608
      %v625 = vpack.c.bf16 %v609, %v609
      %v626 = vpack.c.bf16 %v610, %v610
      %v627 = vpack.c.bf16 %v611, %v611
      %v628 = vpack.c.bf16 %v612, %v612
      %v629 = vpack.c.bf16 %v613, %v613
      %v630 = vpack.c.bf16 %v614, %v614
      %v631 = vpack.c.bf16 %v615, %v615
      %v632 = vpack.c.bf16 %v616, %v616
      %v633 = vpack.c.bf16 %v617, %v617
      %v634 = vpack.c.bf16 %v618, %v618
      %v635 = vpack.c.bf16 %v619, %v619
      %v636 = vpack.c.bf16 %v620, %v620
      %vm637 = vcmask 31744
      %v639 = vsel %vm637, %v413, 0
      %v642 = vsel %vm637, %v525, 0
      %644 = vmatpush.bf16.xpose.msra.mxu0 0
      %645 = vmatpush.bf16.xpose.msra.mxu0 0
      %646 = vmatpush.bf16.xpose.msra.mxu0 0
      %647 = vmatpush.bf16.xpose.msra.mxu0 0
      %648 = vmatpush.bf16.xpose.msra.mxu0 0
      %649 = vmatpush.bf16.xpose.msra.mxu0 0
      %650 = vmatpush.bf16.xpose.msra.mxu0 0
      %651 = vmatpush.bf16.xpose.msra.mxu0 %v642
      %652 = vmatmul.bf16.gmra.mxu0 %v639
      %v653 = vpop.f32.mrf.mxu0
      %v654 = vadd.f32 0.0, %v653
      %v655 = vpop.f32.mrf.mxu0
      %656 = vdwg.mxu0
      %v658 = vsel %vm637, %v414, 0
      %v661 = vsel %vm637, %v526, 0
      %663 = vmatpush.bf16.xpose.msra.mxu0 0
      %664 = vmatpush.bf16.xpose.msra.mxu0 0
      %665 = vmatpush.bf16.xpose.msra.mxu0 0
      %666 = vmatpush.bf16.xpose.msra.mxu0 0
      %667 = vmatpush.bf16.xpose.msra.mxu0 0
      %668 = vmatpush.bf16.xpose.msra.mxu0 0
      %669 = vmatpush.bf16.xpose.msra.mxu0 0
      %670 = vmatpush.bf16.xpose.msra.mxu0 %v661
      %671 = vmatmul.bf16.gmra.mxu0 %v658
      %v672 = vpop.f32.mrf.mxu0
      %v673 = vadd.f32 0.0, %v672
      %v674 = vpop.f32.mrf.mxu0
      %675 = vdwg.mxu0
      %v677 = vsel %vm637, %v415, 0
      %v680 = vsel %vm637, %v527, 0
      %682 = vmatpush.bf16.xpose.msra.mxu0 0
      %683 = vmatpush.bf16.xpose.msra.mxu0 0
      %684 = vmatpush.bf16.xpose.msra.mxu0 0
      %685 = vmatpush.bf16.xpose.msra.mxu0 0
      %686 = vmatpush.bf16.xpose.msra.mxu0 0
      %687 = vmatpush.bf16.xpose.msra.mxu0 0
      %688 = vmatpush.bf16.xpose.msra.mxu0 0
      %689 = vmatpush.bf16.xpose.msra.mxu0 %v680
      %690 = vmatmul.bf16.gmra.mxu0 %v677
      %v691 = vpop.f32.mrf.mxu0
      %v692 = vadd.f32 0.0, %v691
      %v693 = vpop.f32.mrf.mxu0
      %694 = vdwg.mxu0
      %v696 = vsel %vm637, %v416, 0
      %v699 = vsel %vm637, %v528, 0
      %701 = vmatpush.bf16.xpose.msra.mxu0 0
      %702 = vmatpush.bf16.xpose.msra.mxu0 0
      %703 = vmatpush.bf16.xpose.msra.mxu0 0
      %704 = vmatpush.bf16.xpose.msra.mxu0 0
      %705 = vmatpush.bf16.xpose.msra.mxu0 0
      %706 = vmatpush.bf16.xpose.msra.mxu0 0
      %707 = vmatpush.bf16.xpose.msra.mxu0 0
      %708 = vmatpush.bf16.xpose.msra.mxu0 %v699
      %709 = vmatmul.bf16.gmra.mxu0 %v696
      %v710 = vpop.f32.mrf.mxu0
      %v711 = vadd.f32 0.0, %v710
      %v712 = vpop.f32.mrf.mxu0
      %713 = vdwg.mxu0
      %v715 = vsel %vm637, %v417, 0
      %v718 = vsel %vm637, %v529, 0
      %720 = vmatpush.bf16.xpose.msra.mxu0 0
      %721 = vmatpush.bf16.xpose.msra.mxu0 0
      %722 = vmatpush.bf16.xpose.msra.mxu0 0
      %723 = vmatpush.bf16.xpose.msra.mxu0 0
      %724 = vmatpush.bf16.xpose.msra.mxu0 0
      %725 = vmatpush.bf16.xpose.msra.mxu0 0
      %726 = vmatpush.bf16.xpose.msra.mxu0 0
      %727 = vmatpush.bf16.xpose.msra.mxu0 %v718
      %728 = vmatmul.bf16.gmra.mxu0 %v715
      %v729 = vpop.f32.mrf.mxu0
      %v730 = vadd.f32 0.0, %v729
      %v731 = vpop.f32.mrf.mxu0
      %732 = vdwg.mxu0
      %v734 = vsel %vm637, %v418, 0
      %v737 = vsel %vm637, %v530, 0
      %739 = vmatpush.bf16.xpose.msra.mxu0 0
      %740 = vmatpush.bf16.xpose.msra.mxu0 0
      %741 = vmatpush.bf16.xpose.msra.mxu0 0
      %742 = vmatpush.bf16.xpose.msra.mxu0 0
      %743 = vmatpush.bf16.xpose.msra.mxu0 0
      %744 = vmatpush.bf16.xpose.msra.mxu0 0
      %745 = vmatpush.bf16.xpose.msra.mxu0 0
      %746 = vmatpush.bf16.xpose.msra.mxu0 %v737
      %747 = vmatmul.bf16.gmra.mxu0 %v734
      %v748 = vpop.f32.mrf.mxu0
      %v749 = vadd.f32 0.0, %v748
      %v750 = vpop.f32.mrf.mxu0
      %751 = vdwg.mxu0
      %v753 = vsel %vm637, %v419, 0
      %v756 = vsel %vm637, %v531, 0
      %758 = vmatpush.bf16.xpose.msra.mxu0 0
      %759 = vmatpush.bf16.xpose.msra.mxu0 0
      %760 = vmatpush.bf16.xpose.msra.mxu0 0
      %761 = vmatpush.bf16.xpose.msra.mxu0 0
      %762 = vmatpush.bf16.xpose.msra.mxu0 0
      %763 = vmatpush.bf16.xpose.msra.mxu0 0
      %764 = vmatpush.bf16.xpose.msra.mxu0 0
      %765 = vmatpush.bf16.xpose.msra.mxu0 %v756
      %766 = vmatmul.bf16.gmra.mxu0 %v753
      %v767 = vpop.f32.mrf.mxu0
      %v768 = vadd.f32 0.0, %v767
      %v769 = vpop.f32.mrf.mxu0
      %770 = vdwg.mxu0
      %v772 = vsel %vm637, %v420, 0
      %v775 = vsel %vm637, %v532, 0
      %777 = vmatpush.bf16.xpose.msra.mxu0 0
      %778 = vmatpush.bf16.xpose.msra.mxu0 0
      %779 = vmatpush.bf16.xpose.msra.mxu0 0
      %780 = vmatpush.bf16.xpose.msra.mxu0 0
      %781 = vmatpush.bf16.xpose.msra.mxu0 0
      %782 = vmatpush.bf16.xpose.msra.mxu0 0
      %783 = vmatpush.bf16.xpose.msra.mxu0 0
      %784 = vmatpush.bf16.xpose.msra.mxu0 %v775
      %785 = vmatmul.bf16.gmra.mxu0 %v772
      %v786 = vpop.f32.mrf.mxu0
      %v787 = vadd.f32 0.0, %v786
      %v788 = vpop.f32.mrf.mxu0
      %789 = vdwg.mxu0
      %v791 = vsel %vm637, %v421, 0
      %v794 = vsel %vm637, %v533, 0
      %796 = vmatpush.bf16.xpose.msra.mxu0 0
      %797 = vmatpush.bf16.xpose.msra.mxu0 0
      %798 = vmatpush.bf16.xpose.msra.mxu0 0
      %799 = vmatpush.bf16.xpose.msra.mxu0 0
      %800 = vmatpush.bf16.xpose.msra.mxu0 0
      %801 = vmatpush.bf16.xpose.msra.mxu0 0
      %802 = vmatpush.bf16.xpose.msra.mxu0 0
      %803 = vmatpush.bf16.xpose.msra.mxu0 %v794
      %804 = vmatmul.bf16.gmra.mxu0 %v791
      %v805 = vpop.f32.mrf.mxu0
      %v806 = vadd.f32 0.0, %v805
      %v807 = vpop.f32.mrf.mxu0
      %808 = vdwg.mxu0
      %v810 = vsel %vm637, %v422, 0
      %v813 = vsel %vm637, %v534, 0
      %815 = vmatpush.bf16.xpose.msra.mxu0 0
      %816 = vmatpush.bf16.xpose.msra.mxu0 0
      %817 = vmatpush.bf16.xpose.msra.mxu0 0
      %818 = vmatpush.bf16.xpose.msra.mxu0 0
      %819 = vmatpush.bf16.xpose.msra.mxu0 0
      %820 = vmatpush.bf16.xpose.msra.mxu0 0
      %821 = vmatpush.bf16.xpose.msra.mxu0 0
      %822 = vmatpush.bf16.xpose.msra.mxu0 %v813
      %823 = vmatmul.bf16.gmra.mxu0 %v810
      %v824 = vpop.f32.mrf.mxu0
      %v825 = vadd.f32 0.0, %v824
      %v826 = vpop.f32.mrf.mxu0
      %827 = vdwg.mxu0
      %v829 = vsel %vm637, %v423, 0
      %v832 = vsel %vm637, %v535, 0
      %834 = vmatpush.bf16.xpose.msra.mxu0 0
      %835 = vmatpush.bf16.xpose.msra.mxu0 0
      %836 = vmatpush.bf16.xpose.msra.mxu0 0
      %837 = vmatpush.bf16.xpose.msra.mxu0 0
      %838 = vmatpush.bf16.xpose.msra.mxu0 0
      %839 = vmatpush.bf16.xpose.msra.mxu0 0
      %840 = vmatpush.bf16.xpose.msra.mxu0 0
      %841 = vmatpush.bf16.xpose.msra.mxu0 %v832
      %842 = vmatmul.bf16.gmra.mxu0 %v829
      %v843 = vpop.f32.mrf.mxu0
      %v844 = vadd.f32 0.0, %v843
      %v845 = vpop.f32.mrf.mxu0
      %846 = vdwg.mxu0
      %v848 = vsel %vm637, %v424, 0
      %v851 = vsel %vm637, %v536, 0
      %853 = vmatpush.bf16.xpose.msra.mxu0 0
      %854 = vmatpush.bf16.xpose.msra.mxu0 0
      %855 = vmatpush.bf16.xpose.msra.mxu0 0
      %856 = vmatpush.bf16.xpose.msra.mxu0 0
      %857 = vmatpush.bf16.xpose.msra.mxu0 0
      %858 = vmatpush.bf16.xpose.msra.mxu0 0
      %859 = vmatpush.bf16.xpose.msra.mxu0 0
      %860 = vmatpush.bf16.xpose.msra.mxu0 %v851
      %861 = vmatmul.bf16.gmra.mxu0 %v848
      %v862 = vpop.f32.mrf.mxu0
      %v863 = vadd.f32 0.0, %v862
      %v864 = vpop.f32.mrf.mxu0
      %865 = vdwg.mxu0
      %v867 = vsel %vm637, %v425, 0
      %v870 = vsel %vm637, %v537, 0
      %872 = vmatpush.bf16.xpose.msra.mxu0 0
      %873 = vmatpush.bf16.xpose.msra.mxu0 0
      %874 = vmatpush.bf16.xpose.msra.mxu0 0
      %875 = vmatpush.bf16.xpose.msra.mxu0 0
      %876 = vmatpush.bf16.xpose.msra.mxu0 0
      %877 = vmatpush.bf16.xpose.msra.mxu0 0
      %878 = vmatpush.bf16.xpose.msra.mxu0 0
      %879 = vmatpush.bf16.xpose.msra.mxu0 %v870
      %880 = vmatmul.bf16.gmra.mxu0 %v867
      %v881 = vpop.f32.mrf.mxu0
      %v882 = vadd.f32 0.0, %v881
      %v883 = vpop.f32.mrf.mxu0
      %884 = vdwg.mxu0
      %v886 = vsel %vm637, %v426, 0
      %v889 = vsel %vm637, %v538, 0
      %891 = vmatpush.bf16.xpose.msra.mxu0 0
      %892 = vmatpush.bf16.xpose.msra.mxu0 0
      %893 = vmatpush.bf16.xpose.msra.mxu0 0
      %894 = vmatpush.bf16.xpose.msra.mxu0 0
      %895 = vmatpush.bf16.xpose.msra.mxu0 0
      %896 = vmatpush.bf16.xpose.msra.mxu0 0
      %897 = vmatpush.bf16.xpose.msra.mxu0 0
      %898 = vmatpush.bf16.xpose.msra.mxu0 %v889
      %899 = vmatmul.bf16.gmra.mxu0 %v886
      %v900 = vpop.f32.mrf.mxu0
      %v901 = vadd.f32 0.0, %v900
      %v902 = vpop.f32.mrf.mxu0
      %903 = vdwg.mxu0
      %v905 = vsel %vm637, %v427, 0
      %v908 = vsel %vm637, %v539, 0
      %910 = vmatpush.bf16.xpose.msra.mxu0 0
      %911 = vmatpush.bf16.xpose.msra.mxu0 0
      %912 = vmatpush.bf16.xpose.msra.mxu0 0
      %913 = vmatpush.bf16.xpose.msra.mxu0 0
      %914 = vmatpush.bf16.xpose.msra.mxu0 0
      %915 = vmatpush.bf16.xpose.msra.mxu0 0
      %916 = vmatpush.bf16.xpose.msra.mxu0 0
      %917 = vmatpush.bf16.xpose.msra.mxu0 %v908
      %918 = vmatmul.bf16.gmra.mxu0 %v905
      %v919 = vpop.f32.mrf.mxu0
      %v920 = vadd.f32 0.0, %v919
      %v921 = vpop.f32.mrf.mxu0
      %922 = vdwg.mxu0
      %v924 = vsel %vm637, %v428, 0
      %v927 = vsel %vm637, %v540, 0
      %929 = vmatpush.bf16.xpose.msra.mxu0 0
      %930 = vmatpush.bf16.xpose.msra.mxu0 0
      %931 = vmatpush.bf16.xpose.msra.mxu0 0
      %932 = vmatpush.bf16.xpose.msra.mxu0 0
      %933 = vmatpush.bf16.xpose.msra.mxu0 0
      %934 = vmatpush.bf16.xpose.msra.mxu0 0
      %935 = vmatpush.bf16.xpose.msra.mxu0 0
      %936 = vmatpush.bf16.xpose.msra.mxu0 %v927
      %937 = vmatmul.bf16.gmra.mxu0 %v924
      %v938 = vpop.f32.mrf.mxu0
      %v939 = vadd.f32 0.0, %v938
      %v940 = vpop.f32.mrf.mxu0
      %941 = vdwg.mxu0
      %v943 = vsel %vm637, %v621, 0
      %945 = vmatpush.bf16.xpose.msra.mxu0 0
      %946 = vmatpush.bf16.xpose.msra.mxu0 0
      %947 = vmatpush.bf16.xpose.msra.mxu0 0
      %948 = vmatpush.bf16.xpose.msra.mxu0 0
      %949 = vmatpush.bf16.xpose.msra.mxu0 0
      %950 = vmatpush.bf16.xpose.msra.mxu0 0
      %951 = vmatpush.bf16.xpose.msra.mxu0 0
      %952 = vmatpush.bf16.xpose.msra.mxu0 %v943
      %953 = vmatmul.bf16.gmra.mxu0 %v639
      %v954 = vpop.f32.mrf.mxu0
      %v955 = vadd.f32 0.0, %v954
      %v956 = vpop.f32.mrf.mxu0
      %957 = vdwg.mxu0
      %v959 = vsel %vm637, %v622, 0
      %961 = vmatpush.bf16.xpose.msra.mxu0 0
      %962 = vmatpush.bf16.xpose.msra.mxu0 0
      %963 = vmatpush.bf16.xpose.msra.mxu0 0
      %964 = vmatpush.bf16.xpose.msra.mxu0 0
      %965 = vmatpush.bf16.xpose.msra.mxu0 0
      %966 = vmatpush.bf16.xpose.msra.mxu0 0
      %967 = vmatpush.bf16.xpose.msra.mxu0 0
      %968 = vmatpush.bf16.xpose.msra.mxu0 %v959
      %969 = vmatmul.bf16.gmra.mxu0 %v658
      %v970 = vpop.f32.mrf.mxu0
      %v971 = vadd.f32 0.0, %v970
      %v972 = vpop.f32.mrf.mxu0
      %973 = vdwg.mxu0
      %v975 = vsel %vm637, %v623, 0
      %977 = vmatpush.bf16.xpose.msra.mxu0 0
      %978 = vmatpush.bf16.xpose.msra.mxu0 0
      %979 = vmatpush.bf16.xpose.msra.mxu0 0
      %980 = vmatpush.bf16.xpose.msra.mxu0 0
      %981 = vmatpush.bf16.xpose.msra.mxu0 0
      %982 = vmatpush.bf16.xpose.msra.mxu0 0
      %983 = vmatpush.bf16.xpose.msra.mxu0 0
      %984 = vmatpush.bf16.xpose.msra.mxu0 %v975
      %985 = vmatmul.bf16.gmra.mxu0 %v677
      %v986 = vpop.f32.mrf.mxu0
      %v987 = vadd.f32 0.0, %v986
      %v988 = vpop.f32.mrf.mxu0
      %989 = vdwg.mxu0
      %v991 = vsel %vm637, %v624, 0
      %993 = vmatpush.bf16.xpose.msra.mxu0 0
      %994 = vmatpush.bf16.xpose.msra.mxu0 0
      %995 = vmatpush.bf16.xpose.msra.mxu0 0
      %996 = vmatpush.bf16.xpose.msra.mxu0 0
      %997 = vmatpush.bf16.xpose.msra.mxu0 0
      %998 = vmatpush.bf16.xpose.msra.mxu0 0
      %999 = vmatpush.bf16.xpose.msra.mxu0 0
      %1000 = vmatpush.bf16.xpose.msra.mxu0 %v991
      %1001 = vmatmul.bf16.gmra.mxu0 %v696
      %v1002 = vpop.f32.mrf.mxu0
      %v1003 = vadd.f32 0.0, %v1002
      %v1004 = vpop.f32.mrf.mxu0
      %1005 = vdwg.mxu0
      %v1007 = vsel %vm637, %v625, 0
      %1009 = vmatpush.bf16.xpose.msra.mxu0 0
      %1010 = vmatpush.bf16.xpose.msra.mxu0 0
      %1011 = vmatpush.bf16.xpose.msra.mxu0 0
      %1012 = vmatpush.bf16.xpose.msra.mxu0 0
      %1013 = vmatpush.bf16.xpose.msra.mxu0 0
      %1014 = vmatpush.bf16.xpose.msra.mxu0 0
      %1015 = vmatpush.bf16.xpose.msra.mxu0 0
      %1016 = vmatpush.bf16.xpose.msra.mxu0 %v1007
      %1017 = vmatmul.bf16.gmra.mxu0 %v715
      %v1018 = vpop.f32.mrf.mxu0
      %v1019 = vadd.f32 0.0, %v1018
      %v1020 = vpop.f32.mrf.mxu0
      %1021 = vdwg.mxu0
      %v1023 = vsel %vm637, %v626, 0
      %1025 = vmatpush.bf16.xpose.msra.mxu0 0
      %1026 = vmatpush.bf16.xpose.msra.mxu0 0
      %1027 = vmatpush.bf16.xpose.msra.mxu0 0
      %1028 = vmatpush.bf16.xpose.msra.mxu0 0
      %1029 = vmatpush.bf16.xpose.msra.mxu0 0
      %1030 = vmatpush.bf16.xpose.msra.mxu0 0
      %1031 = vmatpush.bf16.xpose.msra.mxu0 0
      %1032 = vmatpush.bf16.xpose.msra.mxu0 %v1023
      %1033 = vmatmul.bf16.gmra.mxu0 %v734
      %v1034 = vpop.f32.mrf.mxu0
      %v1035 = vadd.f32 0.0, %v1034
      %v1036 = vpop.f32.mrf.mxu0
      %1037 = vdwg.mxu0
      %v1039 = vsel %vm637, %v627, 0
      %1041 = vmatpush.bf16.xpose.msra.mxu0 0
      %1042 = vmatpush.bf16.xpose.msra.mxu0 0
      %1043 = vmatpush.bf16.xpose.msra.mxu0 0
      %1044 = vmatpush.bf16.xpose.msra.mxu0 0
      %1045 = vmatpush.bf16.xpose.msra.mxu0 0
      %1046 = vmatpush.bf16.xpose.msra.mxu0 0
      %1047 = vmatpush.bf16.xpose.msra.mxu0 0
      %1048 = vmatpush.bf16.xpose.msra.mxu0 %v1039
      %1049 = vmatmul.bf16.gmra.mxu0 %v753
      %v1050 = vpop.f32.mrf.mxu0
      %v1051 = vadd.f32 0.0, %v1050
      %v1052 = vpop.f32.mrf.mxu0
      %1053 = vdwg.mxu0
      %v1055 = vsel %vm637, %v628, 0
      %1057 = vmatpush.bf16.xpose.msra.mxu0 0
      %1058 = vmatpush.bf16.xpose.msra.mxu0 0
      %1059 = vmatpush.bf16.xpose.msra.mxu0 0
      %1060 = vmatpush.bf16.xpose.msra.mxu0 0
      %1061 = vmatpush.bf16.xpose.msra.mxu0 0
      %1062 = vmatpush.bf16.xpose.msra.mxu0 0
      %1063 = vmatpush.bf16.xpose.msra.mxu0 0
      %1064 = vmatpush.bf16.xpose.msra.mxu0 %v1055
      %1065 = vmatmul.bf16.gmra.mxu0 %v772
      %v1066 = vpop.f32.mrf.mxu0
      %v1067 = vadd.f32 0.0, %v1066
      %v1068 = vpop.f32.mrf.mxu0
      %1069 = vdwg.mxu0
      %v1071 = vsel %vm637, %v629, 0
      %1073 = vmatpush.bf16.xpose.msra.mxu0 0
      %1074 = vmatpush.bf16.xpose.msra.mxu0 0
      %1075 = vmatpush.bf16.xpose.msra.mxu0 0
      %1076 = vmatpush.bf16.xpose.msra.mxu0 0
      %1077 = vmatpush.bf16.xpose.msra.mxu0 0
      %1078 = vmatpush.bf16.xpose.msra.mxu0 0
      %1079 = vmatpush.bf16.xpose.msra.mxu0 0
      %1080 = vmatpush.bf16.xpose.msra.mxu0 %v1071
      %1081 = vmatmul.bf16.gmra.mxu0 %v791
      %v1082 = vpop.f32.mrf.mxu0
      %v1083 = vadd.f32 0.0, %v1082
      %v1084 = vpop.f32.mrf.mxu0
      %1085 = vdwg.mxu0
      %v1087 = vsel %vm637, %v630, 0
      %1089 = vmatpush.bf16.xpose.msra.mxu0 0
      %1090 = vmatpush.bf16.xpose.msra.mxu0 0
      %1091 = vmatpush.bf16.xpose.msra.mxu0 0
      %1092 = vmatpush.bf16.xpose.msra.mxu0 0
      %1093 = vmatpush.bf16.xpose.msra.mxu0 0
      %1094 = vmatpush.bf16.xpose.msra.mxu0 0
      %1095 = vmatpush.bf16.xpose.msra.mxu0 0
      %1096 = vmatpush.bf16.xpose.msra.mxu0 %v1087
      %1097 = vmatmul.bf16.gmra.mxu0 %v810
      %v1098 = vpop.f32.mrf.mxu0
      %v1099 = vadd.f32 0.0, %v1098
      %v1100 = vpop.f32.mrf.mxu0
      %1101 = vdwg.mxu0
      %v1103 = vsel %vm637, %v631, 0
      %1105 = vmatpush.bf16.xpose.msra.mxu0 0
      %1106 = vmatpush.bf16.xpose.msra.mxu0 0
      %1107 = vmatpush.bf16.xpose.msra.mxu0 0
      %1108 = vmatpush.bf16.xpose.msra.mxu0 0
      %1109 = vmatpush.bf16.xpose.msra.mxu0 0
      %1110 = vmatpush.bf16.xpose.msra.mxu0 0
      %1111 = vmatpush.bf16.xpose.msra.mxu0 0
      %1112 = vmatpush.bf16.xpose.msra.mxu0 %v1103
      %1113 = vmatmul.bf16.gmra.mxu0 %v829
      %v1114 = vpop.f32.mrf.mxu0
      %v1115 = vadd.f32 0.0, %v1114
      %v1116 = vpop.f32.mrf.mxu0
      %1117 = vdwg.mxu0
      %v1119 = vsel %vm637, %v632, 0
      %1121 = vmatpush.bf16.xpose.msra.mxu0 0
      %1122 = vmatpush.bf16.xpose.msra.mxu0 0
      %1123 = vmatpush.bf16.xpose.msra.mxu0 0
      %1124 = vmatpush.bf16.xpose.msra.mxu0 0
      %1125 = vmatpush.bf16.xpose.msra.mxu0 0
      %1126 = vmatpush.bf16.xpose.msra.mxu0 0
      %1127 = vmatpush.bf16.xpose.msra.mxu0 0
      %1128 = vmatpush.bf16.xpose.msra.mxu0 %v1119
      %1129 = vmatmul.bf16.gmra.mxu0 %v848
      %v1130 = vpop.f32.mrf.mxu0
      %v1131 = vadd.f32 0.0, %v1130
      %v1132 = vpop.f32.mrf.mxu0
      %1133 = vdwg.mxu0
      %v1135 = vsel %vm637, %v633, 0
      %1137 = vmatpush.bf16.xpose.msra.mxu0 0
      %1138 = vmatpush.bf16.xpose.msra.mxu0 0
      %1139 = vmatpush.bf16.xpose.msra.mxu0 0
      %1140 = vmatpush.bf16.xpose.msra.mxu0 0
      %1141 = vmatpush.bf16.xpose.msra.mxu0 0
      %1142 = vmatpush.bf16.xpose.msra.mxu0 0
      %1143 = vmatpush.bf16.xpose.msra.mxu0 0
      %1144 = vmatpush.bf16.xpose.msra.mxu0 %v1135
      %1145 = vmatmul.bf16.gmra.mxu0 %v867
      %v1146 = vpop.f32.mrf.mxu0
      %v1147 = vadd.f32 0.0, %v1146
      %v1148 = vpop.f32.mrf.mxu0
      %1149 = vdwg.mxu0
      %v1151 = vsel %vm637, %v634, 0
      %1153 = vmatpush.bf16.xpose.msra.mxu0 0
      %1154 = vmatpush.bf16.xpose.msra.mxu0 0
      %1155 = vmatpush.bf16.xpose.msra.mxu0 0
      %1156 = vmatpush.bf16.xpose.msra.mxu0 0
      %1157 = vmatpush.bf16.xpose.msra.mxu0 0
      %1158 = vmatpush.bf16.xpose.msra.mxu0 0
      %1159 = vmatpush.bf16.xpose.msra.mxu0 0
      %1160 = vmatpush.bf16.xpose.msra.mxu0 %v1151
      %1161 = vmatmul.bf16.gmra.mxu0 %v886
      %v1162 = vpop.f32.mrf.mxu0
      %v1163 = vadd.f32 0.0, %v1162
      %v1164 = vpop.f32.mrf.mxu0
      %1165 = vdwg.mxu0
      %v1167 = vsel %vm637, %v635, 0
      %1169 = vmatpush.bf16.xpose.msra.mxu0 0
      %1170 = vmatpush.bf16.xpose.msra.mxu0 0
      %1171 = vmatpush.bf16.xpose.msra.mxu0 0
      %1172 = vmatpush.bf16.xpose.msra.mxu0 0
      %1173 = vmatpush.bf16.xpose.msra.mxu0 0
      %1174 = vmatpush.bf16.xpose.msra.mxu0 0
      %1175 = vmatpush.bf16.xpose.msra.mxu0 0
      %1176 = vmatpush.bf16.xpose.msra.mxu0 %v1167
      %1177 = vmatmul.bf16.gmra.mxu0 %v905
      %v1178 = vpop.f32.mrf.mxu0
      %v1179 = vadd.f32 0.0, %v1178
      %v1180 = vpop.f32.mrf.mxu0
      %1181 = vdwg.mxu0
      %v1183 = vsel %vm637, %v636, 0
      %1185 = vmatpush.bf16.xpose.msra.mxu0 0
      %1186 = vmatpush.bf16.xpose.msra.mxu0 0
      %1187 = vmatpush.bf16.xpose.msra.mxu0 0
      %1188 = vmatpush.bf16.xpose.msra.mxu0 0
      %1189 = vmatpush.bf16.xpose.msra.mxu0 0
      %1190 = vmatpush.bf16.xpose.msra.mxu0 0
      %1191 = vmatpush.bf16.xpose.msra.mxu0 0
      %1192 = vmatpush.bf16.xpose.msra.mxu0 %v1183
      %1193 = vmatmul.bf16.gmra.mxu0 %v924
      %v1194 = vpop.f32.mrf.mxu0
      %v1195 = vadd.f32 0.0, %v1194
      %v1196 = vpop.f32.mrf.mxu0
      %1197 = vdwg.mxu0
      %1214 = vrot.lane.b32.xlu0 %v955, 2
      %v1215 = vpop.permute.xlu0 %1214
      %1216 = vrot.lane.b32.xlu0 %v971, 2
      %v1217 = vpop.permute.xlu0 %1216
      %1218 = vrot.lane.b32.xlu0 %v987, 2
      %v1219 = vpop.permute.xlu0 %1218
      %1220 = vrot.lane.b32.xlu0 %v1003, 2
      %v1221 = vpop.permute.xlu0 %1220
      %1222 = vrot.lane.b32.xlu0 %v1019, 2
      %v1223 = vpop.permute.xlu0 %1222
      %1224 = vrot.lane.b32.xlu0 %v1035, 2
      %v1225 = vpop.permute.xlu0 %1224
      %1226 = vrot.lane.b32.xlu0 %v1051, 2
      %v1227 = vpop.permute.xlu0 %1226
      %1228 = vrot.lane.b32.xlu0 %v1067, 2
      %v1229 = vpop.permute.xlu0 %1228
      %1230 = vrot.lane.b32.xlu0 %v1083, 2
      %v1231 = vpop.permute.xlu0 %1230
      %1232 = vrot.lane.b32.xlu0 %v1099, 2
      %v1233 = vpop.permute.xlu0 %1232
      %1234 = vrot.lane.b32.xlu0 %v1115, 2
      %v1235 = vpop.permute.xlu0 %1234
      %1236 = vrot.lane.b32.xlu0 %v1131, 2
      %v1237 = vpop.permute.xlu0 %1236
      %1238 = vrot.lane.b32.xlu0 %v1147, 2
      %v1239 = vpop.permute.xlu0 %1238
      %1240 = vrot.lane.b32.xlu0 %v1163, 2
      %v1241 = vpop.permute.xlu0 %1240
      %1242 = vrot.lane.b32.xlu0 %v1179, 2
      %v1243 = vpop.permute.xlu0 %1242
      %1244 = vrot.lane.b32.xlu0 %v1195, 2
      %v1245 = vpop.permute.xlu0 %1244
      %v1262 = vsel %vm396, %v654, %v1215
      %v1263 = vsel %vm396, %v673, %v1217
      %v1264 = vsel %vm396, %v692, %v1219
      %v1265 = vsel %vm396, %v711, %v1221
      %v1266 = vsel %vm396, %v730, %v1223
      %v1267 = vsel %vm396, %v749, %v1225
      %v1268 = vsel %vm396, %v768, %v1227
      %v1269 = vsel %vm396, %v787, %v1229
      %v1270 = vsel %vm396, %v806, %v1231
      %v1271 = vsel %vm396, %v825, %v1233
      %v1272 = vsel %vm396, %v844, %v1235
      %v1273 = vsel %vm396, %v863, %v1237
      %v1274 = vsel %vm396, %v882, %v1239
      %v1275 = vsel %vm396, %v901, %v1241
      %v1276 = vsel %vm396, %v920, %v1243
      %v1277 = vsel %vm396, %v939, %v1245
      %v1278 = vmul.f32 %v1262, 0.0009765625
      %v1279 = vmul.f32 %v1263, 0.0009765625
      %v1280 = vmul.f32 %v1264, 0.0009765625
      %v1281 = vmul.f32 %v1265, 0.0009765625
      %v1282 = vmul.f32 %v1266, 0.0009765625
      %v1283 = vmul.f32 %v1267, 0.0009765625
      %v1284 = vmul.f32 %v1268, 0.0009765625
      %v1285 = vmul.f32 %v1269, 0.0009765625
      %v1286 = vmul.f32 %v1270, 0.0009765625
      %v1287 = vmul.f32 %v1271, 0.0009765625
      %v1288 = vmul.f32 %v1272, 0.0009765625
      %v1289 = vmul.f32 %v1273, 0.0009765625
      %v1290 = vmul.f32 %v1274, 0.0009765625
      %v1291 = vmul.f32 %v1275, 0.0009765625
      %v1292 = vmul.f32 %v1276, 0.0009765625
      %v1293 = vmul.f32 %v1277, 0.0009765625
      %vm1294 = vcmask 27648
      %1295 = vst.msk [vmem:[%s265] sm:$0xf] %vm1294, %v1278
      %1296 = vst.msk [vmem:[%s265 + $0x4] sm:$0xf] %vm1294, %v1279
      %1297 = vst.msk [vmem:[%s265 + $0x8] sm:$0xf] %vm1294, %v1280
      %1298 = vst.msk [vmem:[%s265 + $0xc] sm:$0xf] %vm1294, %v1281
      %1299 = vst.msk [vmem:[%s265 + $0x10] sm:$0xf] %vm1294, %v1282
      %1300 = vst.msk [vmem:[%s265 + $0x14] sm:$0xf] %vm1294, %v1283
      %1301 = vst.msk [vmem:[%s265 + $0x18] sm:$0xf] %vm1294, %v1284
      %1302 = vst.msk [vmem:[%s265 + $0x1c] sm:$0xf] %vm1294, %v1285
      %1303 = vst.msk [vmem:[%s265 + $0x20] sm:$0xf] %vm1294, %v1286
      %1304 = vst.msk [vmem:[%s265 + $0x24] sm:$0xf] %vm1294, %v1287
      %1305 = vst.msk [vmem:[%s265 + $0x28] sm:$0xf] %vm1294, %v1288
      %1306 = vst.msk [vmem:[%s265 + $0x2c] sm:$0xf] %vm1294, %v1289
      %1307 = vst.msk [vmem:[%s265 + $0x30] sm:$0xf] %vm1294, %v1290
      %1308 = vst.msk [vmem:[%s265 + $0x34] sm:$0xf] %vm1294, %v1291
      %1309 = vst.msk [vmem:[%s265 + $0x38] sm:$0xf] %vm1294, %v1292
      %1310 = vst.msk [vmem:[%s265 + $0x3c] sm:$0xf] %vm1294, %v1293
      %s1311 = smul.u32 16, %s15
      %p1312 = scmp.lt.s32.totalorder %s1311, 31
      %s1313 = scalar_select %p1312, %s1311, 31
      %s1314 = smul.addr %s1313, 4
      %s1315 = scalar_lea.vmem %s4, %s1314
      // Predicated region
      $region37: #{mwt_transform_cross_forward.13} parent=35 // pred_check
        %p1316 = pneg %p137
      $region38: #{mwt_transform_cross_forward.13} parent=35 // pred_check_branch
        %1318 = sbr.rel (%p1316) target = $region40
      $region39: #{mwt_transform_cross_forward.13} parent=35 // pred_region
        %s1319 = smul.u32 16, %s15
      $region40: #{mwt_transform_cross_forward.13} parent=35 // pred_fallthru
        _
    $region36: #{mwt_transform_cross_forward.13} parent=5 // pred_fallthru
      _
    %p1320 = scmp.le.s32.totalorder 2, %s10
    // Predicated region
    $region41: #{mwt_transform_cross_forward.13} parent=5 // pred_check
      %p1321 = pneg %p1320
    $region42: #{mwt_transform_cross_forward.13} parent=5 // pred_check_branch
      %1323 = sbr.rel (%p1321) target = $region44
    $region43: #{mwt_transform_cross_forward.13} parent=5 // pred_region
      %s1324 = ssub.s32 %s10, 2
      // Predicated region
      $region45: #{mwt_transform_cross_forward.13} parent=43 // pred_check
        %p1325 = pneg %p143
      $region46: #{mwt_transform_cross_forward.13} parent=43 // pred_check_branch
        %1327 = sbr.rel (%p1325) target = $region48
      $region47: #{mwt_transform_cross_forward.13} parent=43 // pred_region
        %s1328 = smul.u32 16, %s16
        %p1329 = scmp.lt.s32.totalorder %s1328, 31
        %s1330 = scalar_select %p1329, %s1328, 31
        %s1331 = smul.addr %s1330, 4
        %s1332 = scalar_lea.vmem %s4, %s1331
      $region48: #{mwt_transform_cross_forward.13} parent=43 // pred_fallthru
        _
    $region44: #{mwt_transform_cross_forward.13} parent=5 // pred_fallthru
      _
  $region6: #{mwt_transform_cross_forward.13} parent=0 // loop_footer
    %s14 = sadd.s32 1, %s10
  $region7: #{mwt_transform_cross_forward.13} parent=0 // loop_footer_branch
    %9 = sbr.rel target = $region3
  $region8: #{mwt_transform_cross_forward.13} parent=0 // loop_exit
    _

// kernel: mwt_transform_cross_forward.10
$region0: #{mwt_transform_cross_forward.10}
  #allocation0 [shape = 'u32[]', space=smem, size = 0x4, offset = 0x4, fixed_abs, tag = 'smem constant byte address 0x4 - core index']
  #allocation1 [shape = 'u32[72,128]{1,0:T(1,128)}', space=vmem, size = 0x9000, scoped, tag = 'internal scratch']
  %s0 = inlined_call_operand.vmem [shape: f32[32,4,4], index: 0, kind: input, shape index: {}]
  %s1 = inlined_call_operand.vmem [shape: f32[32,4,4], index: 1, kind: input, shape index: {}]
  %s2 = inlined_call_operand.vmem [shape: f32[32,4,4], index: 2, kind: input, shape index: {}]
  %s3 = inlined_call_operand.vmem [shape: f32[32,4,4], index: 3, kind: input, shape index: {}]
  %s4 = inlined_call_operand.vmem [shape: f32[32,4,8], index: 4, kind: output, shape index: {}]
  %s5 = sld [smem:[#allocation0]]
  $region49: #{mwt_transform_cross_forward.10} parent=0
    _
  %s7 = ssub.s32 1, %s5
  %s8 = scalar_select 0, %s7, %s5
  loop: start=0, step=1, limit=4
  $region2: #{mwt_transform_cross_forward.10} parent=0 // loop_pre_header
    _
  $region3: #{mwt_transform_cross_forward.10} parent=0 // loop_header
    %s10 = sphi 0, %s14
    %p11 = scmp.ge.s32.totalorder %s10, 4
    %s20 = sphi 0, %s22
    %s23 = sphi 0, %s20
    %s24 = sphi 0, %s23
    %s40 = sphi 0, %s24
    %s46 = sphi 0, %s48
    %s49 = sphi 0, %s46
    %s50 = sphi 0, %s49
    %s66 = sphi 0, %s50
    %s72 = sphi 0, %s74
    %s75 = sphi 0, %s72
    %s76 = sphi 0, %s75
    %s92 = sphi 0, %s76
    %s98 = sphi 0, %s100
    %s101 = sphi 0, %s98
    %s102 = sphi 0, %s101
    %s118 = sphi 0, %s102
    %s124 = sphi 0, %s126
    %s127 = sphi 0, %s124
    %s128 = sphi 0, %s127
    %s144 = sphi 0, %s128
  $region4: #{mwt_transform_cross_forward.10} parent=0 // loop_header_branch
    %13 = sbr.rel (%p11) target = $region8
  $region5: #{mwt_transform_cross_forward.10} parent=0 // loop_body
    %s15 = ssub.s32 %s10, 1
    %s16 = ssub.s32 %s10, 2
    %s17 = sadd.s32 %s10, 1
    %s18 = ssub.s32 %s10, %s17
    %p19 = scmp.eq.s32.totalorder %s18, 0
    %s21 = sadd.s32 %s20, 1
    %s22 = scalar_select %p19, %s20, %s21
    %p25 = pneg %p19
    %p26 = scmp.eq.s32.totalorder %s10, 1
    %p27 = por %p25, %p26
    %p28 = scmp.ne.s32.totalorder %s20, %s23
    %p29 = scmp.eq.s32.totalorder %s10, 0
    %p30 = por %p28, %p29
    %p31 = scmp.ne.s32.totalorder %s20, %s23
    %p32 = scmp.eq.s32.totalorder %s15, 1
    %p33 = por %p31, %p32
    %p34 = scmp.ne.s32.totalorder %s23, %s24
    %p35 = scmp.eq.s32.totalorder %s15, 0
    %p36 = por %p34, %p35
    %p37 = scmp.ne.s32.totalorder %s23, %s24
    %p38 = scmp.eq.s32.totalorder %s16, 1
    %p39 = por %p37, %p38
    %p41 = scmp.ne.s32.totalorder %s24, %s40
    %p42 = scmp.eq.s32.totalorder %s16, 0
    %p43 = por %p41, %p42
    %s44 = ssub.s32 %s10, %s17
    %p45 = scmp.eq.s32.totalorder %s44, 0
    %s47 = sadd.s32 %s46, 1
    %s48 = scalar_select %p45, %s46, %s47
    %p51 = pneg %p45
    %p52 = scmp.eq.s32.totalorder %s10, 1
    %p53 = por %p51, %p52
    %p54 = scmp.ne.s32.totalorder %s46, %s49
    %p55 = scmp.eq.s32.totalorder %s10, 0
    %p56 = por %p54, %p55
    %p57 = scmp.ne.s32.totalorder %s46, %s49
    %p58 = scmp.eq.s32.totalorder %s15, 1
    %p59 = por %p57, %p58
    %p60 = scmp.ne.s32.totalorder %s49, %s50
    %p61 = scmp.eq.s32.totalorder %s15, 0
    %p62 = por %p60, %p61
    %p63 = scmp.ne.s32.totalorder %s49, %s50
    %p64 = scmp.eq.s32.totalorder %s16, 1
    %p65 = por %p63, %p64
    %p67 = scmp.ne.s32.totalorder %s50, %s66
    %p68 = scmp.eq.s32.totalorder %s16, 0
    %p69 = por %p67, %p68
    %s70 = ssub.s32 %s10, %s17
    %p71 = scmp.eq.s32.totalorder %s70, 0
    %s73 = sadd.s32 %s72, 1
    %s74 = scalar_select %p71, %s72, %s73
    %p77 = pneg %p71
    %p78 = scmp.eq.s32.totalorder %s10, 1
    %p79 = por %p77, %p78
    %p80 = scmp.ne.s32.totalorder %s72, %s75
    %p81 = scmp.eq.s32.totalorder %s10, 0
    %p82 = por %p80, %p81
    %p83 = scmp.ne.s32.totalorder %s72, %s75
    %p84 = scmp.eq.s32.totalorder %s15, 1
    %p85 = por %p83, %p84
    %p86 = scmp.ne.s32.totalorder %s75, %s76
    %p87 = scmp.eq.s32.totalorder %s15, 0
    %p88 = por %p86, %p87
    %p89 = scmp.ne.s32.totalorder %s75, %s76
    %p90 = scmp.eq.s32.totalorder %s16, 1
    %p91 = por %p89, %p90
    %p93 = scmp.ne.s32.totalorder %s76, %s92
    %p94 = scmp.eq.s32.totalorder %s16, 0
    %p95 = por %p93, %p94
    %s96 = ssub.s32 %s10, %s17
    %p97 = scmp.eq.s32.totalorder %s96, 0
    %s99 = sadd.s32 %s98, 1
    %s100 = scalar_select %p97, %s98, %s99
    %p103 = pneg %p97
    %p104 = scmp.eq.s32.totalorder %s10, 1
    %p105 = por %p103, %p104
    %p106 = scmp.ne.s32.totalorder %s98, %s101
    %p107 = scmp.eq.s32.totalorder %s10, 0
    %p108 = por %p106, %p107
    %p109 = scmp.ne.s32.totalorder %s98, %s101
    %p110 = scmp.eq.s32.totalorder %s15, 1
    %p111 = por %p109, %p110
    %p112 = scmp.ne.s32.totalorder %s101, %s102
    %p113 = scmp.eq.s32.totalorder %s15, 0
    %p114 = por %p112, %p113
    %p115 = scmp.ne.s32.totalorder %s101, %s102
    %p116 = scmp.eq.s32.totalorder %s16, 1
    %p117 = por %p115, %p116
    %p119 = scmp.ne.s32.totalorder %s102, %s118
    %p120 = scmp.eq.s32.totalorder %s16, 0
    %p121 = por %p119, %p120
    %s122 = ssub.s32 %s10, %s17
    %p123 = scmp.eq.s32.totalorder %s122, 0
    %s125 = sadd.s32 %s124, 1
    %s126 = scalar_select %p123, %s124, %s125
    %p129 = pneg %p123
    %p130 = scmp.eq.s32.totalorder %s10, 1
    %p131 = por %p129, %p130
    %p132 = scmp.ne.s32.totalorder %s124, %s127
    %p133 = scmp.eq.s32.totalorder %s10, 0
    %p134 = por %p132, %p133
    %p135 = scmp.ne.s32.totalorder %s124, %s127
    %p136 = scmp.eq.s32.totalorder %s15, 1
    %p137 = por %p135, %p136
    %p138 = scmp.ne.s32.totalorder %s127, %s128
    %p139 = scmp.eq.s32.totalorder %s15, 0
    %p140 = por %p138, %p139
    %p141 = scmp.ne.s32.totalorder %s127, %s128
    %p142 = scmp.eq.s32.totalorder %s16, 1
    %p143 = por %p141, %p142
    %p145 = scmp.ne.s32.totalorder %s128, %s144
    %p146 = scmp.eq.s32.totalorder %s16, 0
    %p147 = por %p145, %p146
    %p148 = scmp.le.s32.totalorder 1, %s10
    %p149 = scmp.lt.s32.totalorder %s10, 3
    %p150 = pnand %p148, %p149
    %p151 = pneg %p150
    // Predicated region
    $region9: #{mwt_transform_cross_forward.10} parent=5 // pred_check
      _
    $region10: #{mwt_transform_cross_forward.10} parent=5 // pred_check_branch
      %153 = sbr.rel (%p150) target = $region12
    $region11: #{mwt_transform_cross_forward.10} parent=5 // pred_region
      %s154 = ssub.s32 %s10, 1
    $region12: #{mwt_transform_cross_forward.10} parent=5 // pred_fallthru
      _
    %p155 = scmp.lt.s32.totalorder %s10, 2
    // Predicated region
    $region13: #{mwt_transform_cross_forward.10} parent=5 // pred_check
      %p156 = pneg %p155
    $region14: #{mwt_transform_cross_forward.10} parent=5 // pred_check_branch
      %158 = sbr.rel (%p156) target = $region16
    $region15: #{mwt_transform_cross_forward.10} parent=5 // pred_region
      // Predicated region
      $region17: #{mwt_transform_cross_forward.10} parent=15 // pred_check
        %p159 = pneg %p30
      $region18: #{mwt_transform_cross_forward.10} parent=15 // pred_check_branch
        %161 = sbr.rel (%p159) target = $region20
      $region19: #{mwt_transform_cross_forward.10} parent=15 // pred_region
        %s162 = smul.u32 16, %s10
        %p163 = scmp.lt.s32.totalorder %s162, 31
        %s164 = scalar_select %p163, %s162, 31
        %s165 = smul.addr %s164, 4
        %s166 = scalar_lea.vmem %s0, %s165
        %s167 = smul.u32 16, %s10
      $region20: #{mwt_transform_cross_forward.10} parent=15 // pred_fallthru
        _
      // Predicated region
      $region21: #{mwt_transform_cross_forward.10} parent=15 // pred_check
        %p168 = pneg %p56
      $region22: #{mwt_transform_cross_forward.10} parent=15 // pred_check_branch
        %170 = sbr.rel (%p168) target = $region24
      $region23: #{mwt_transform_cross_forward.10} parent=15 // pred_region
        %s171 = smul.u32 16, %s10
        %p172 = scmp.lt.s32.totalorder %s171, 31
        %s173 = scalar_select %p172, %s171, 31
        %s174 = smul.addr %s173, 4
        %s175 = scalar_lea.vmem %s1, %s174
        %s176 = smul.u32 16, %s10
      $region24: #{mwt_transform_cross_forward.10} parent=15 // pred_fallthru
        _
      // Predicated region
      $region25: #{mwt_transform_cross_forward.10} parent=15 // pred_check
        %p177 = pneg %p82
      $region26: #{mwt_transform_cross_forward.10} parent=15 // pred_check_branch
        %179 = sbr.rel (%p177) target = $region28
      $region27: #{mwt_transform_cross_forward.10} parent=15 // pred_region
        %s180 = smul.u32 16, %s10
        %p181 = scmp.lt.s32.totalorder %s180, 31
        %s182 = scalar_select %p181, %s180, 31
        %s183 = smul.addr %s182, 4
        %s184 = scalar_lea.vmem %s2, %s183
        %s185 = smul.u32 16, %s10
      $region28: #{mwt_transform_cross_forward.10} parent=15 // pred_fallthru
        _
      // Predicated region
      $region29: #{mwt_transform_cross_forward.10} parent=15 // pred_check
        %p186 = pneg %p108
      $region30: #{mwt_transform_cross_forward.10} parent=15 // pred_check_branch
        %188 = sbr.rel (%p186) target = $region32
      $region31: #{mwt_transform_cross_forward.10} parent=15 // pred_region
        %s189 = smul.u32 16, %s10
        %p190 = scmp.lt.s32.totalorder %s189, 31
        %s191 = scalar_select %p190, %s189, 31
        %s192 = smul.addr %s191, 4
        %s193 = scalar_lea.vmem %s3, %s192
        %s194 = smul.u32 16, %s10
      $region32: #{mwt_transform_cross_forward.10} parent=15 // pred_fallthru
        _
    $region16: #{mwt_transform_cross_forward.10} parent=5 // pred_fallthru
      _
    %p195 = scmp.le.s32.totalorder 1, %s10
    %p196 = scmp.lt.s32.totalorder %s10, 3
    %p197 = pnand %p195, %p196
    %p198 = pneg %p197
    // Predicated region
    $region33: #{mwt_transform_cross_forward.10} parent=5 // pred_check
      _
    $region34: #{mwt_transform_cross_forward.10} parent=5 // pred_check_branch
      %200 = sbr.rel (%p197) target = $region36
    $region35: #{mwt_transform_cross_forward.10} parent=5 // pred_region
      %s201 = ssub.s32 %s10, 1
      %s202 = smul.u32 16, %s15
      %p203 = scmp.lt.s32.totalorder %s202, 31
      %s204 = scalar_select %p203, %s202, 31
      %s205 = smul.addr %s204, 4
      %s206 = scalar_lea.vmem %s0, %s205
      %p207 = pneg %p36
      %p208 = pneg %p33
      %s209 = smul.u32 16, %s15
      %p210 = scmp.lt.s32.totalorder %s209, 31
      %s211 = scalar_select %p210, %s209, 31
      %s212 = smul.addr %s211, 4
      %s213 = scalar_lea.vmem %s1, %s212
      %p214 = pneg %p62
      %p215 = pneg %p59
      %s216 = smul.u32 16, %s15
      %p217 = scmp.lt.s32.totalorder %s216, 31
      %s218 = scalar_select %p217, %s216, 31
      %s219 = smul.addr %s218, 4
      %s220 = scalar_lea.vmem %s2, %s219
      %p221 = pneg %p88
      %p222 = pneg %p85
      %s223 = smul.u32 16, %s15
      %p224 = scmp.lt.s32.totalorder %s223, 31
      %s225 = scalar_select %p224, %s223, 31
      %s226 = smul.addr %s225, 4
      %s227 = scalar_lea.vmem %s3, %s226
      %p228 = pneg %p114
      %p229 = pneg %p111
      %p230 = pneg %p140
      %p231 = pneg %p137
      %s232 = smul.u32 16, %s15
      %p233 = scmp.lt.s32.totalorder %s232, 31
      %s234 = scalar_select %p233, %s232, 31
      %s235 = smul.addr %s234, 4
      %s236 = scalar_lea.vmem %s4, %s235
      %s237 = smul.u32 16, %s15
      %p238 = scmp.lt.s32.totalorder %s237, 31
      %s239 = scalar_select %p238, %s237, 31
      %s240 = smul.addr %s239, 4
      %s241 = scalar_lea.vmem %s0, %s240
      %s242 = smul.u32 16, %s15
      %s243 = smul.u32 16, %s15
      %p244 = scmp.lt.s32.totalorder %s243, 31
      %s245 = scalar_select %p244, %s243, 31
      %s246 = smul.addr %s245, 4
      %s247 = scalar_lea.vmem %s1, %s246
      %s248 = smul.u32 16, %s15
      %s249 = smul.u32 16, %s15
      %p250 = scmp.lt.s32.totalorder %s249, 31
      %s251 = scalar_select %p250, %s249, 31
      %s252 = smul.addr %s251, 4
      %s253 = scalar_lea.vmem %s2, %s252
      %s254 = smul.u32 16, %s15
      %s255 = smul.u32 16, %s15
      %p256 = scmp.lt.s32.totalorder %s255, 31
      %s257 = scalar_select %p256, %s255, 31
      %s258 = smul.addr %s257, 4
      %s259 = scalar_lea.vmem %s3, %s258
      %s260 = smul.u32 16, %s15
      %s261 = smul.u32 16, %s15
      %p262 = scmp.lt.s32.totalorder %s261, 31
      %s263 = scalar_select %p262, %s261, 31
      %s264 = smul.addr %s263, 4
      %s265 = scalar_lea.vmem %s4, %s264
      %s266 = smul.u32 16, %s15
      %v268 = vld [vmem:[%s241] sm:$0xf]
      %v269 = vld [vmem:[%s241 + $0x4] sm:$0xf]
      %v270 = vld [vmem:[%s241 + $0x8] sm:$0xf]
      %v271 = vld [vmem:[%s241 + $0xc] sm:$0xf]
      %v272 = vld [vmem:[%s241 + $0x10] sm:$0xf]
      %v273 = vld [vmem:[%s241 + $0x14] sm:$0xf]
      %v274 = vld [vmem:[%s241 + $0x18] sm:$0xf]
      %v275 = vld [vmem:[%s241 + $0x1c] sm:$0xf]
      %v276 = vld [vmem:[%s241 + $0x20] sm:$0xf]
      %v277 = vld [vmem:[%s241 + $0x24] sm:$0xf]
      %v278 = vld [vmem:[%s241 + $0x28] sm:$0xf]
      %v279 = vld [vmem:[%s241 + $0x2c] sm:$0xf]
      %v280 = vld [vmem:[%s241 + $0x30] sm:$0xf]
      %v281 = vld [vmem:[%s241 + $0x34] sm:$0xf]
      %v282 = vld [vmem:[%s241 + $0x38] sm:$0xf]
      %v283 = vld [vmem:[%s241 + $0x3c] sm:$0xf]
      %v284 = vpack.c.bf16 %v268, %v268
      %v285 = vpack.c.bf16 %v269, %v269
      %v286 = vpack.c.bf16 %v270, %v270
      %v287 = vpack.c.bf16 %v271, %v271
      %v288 = vpack.c.bf16 %v272, %v272
      %v289 = vpack.c.bf16 %v273, %v273
      %v290 = vpack.c.bf16 %v274, %v274
      %v291 = vpack.c.bf16 %v275, %v275
      %v292 = vpack.c.bf16 %v276, %v276
      %v293 = vpack.c.bf16 %v277, %v277
      %v294 = vpack.c.bf16 %v278, %v278
      %v295 = vpack.c.bf16 %v279, %v279
      %v296 = vpack.c.bf16 %v280, %v280
      %v297 = vpack.c.bf16 %v281, %v281
      %v298 = vpack.c.bf16 %v282, %v282
      %v299 = vpack.c.bf16 %v283, %v283
      %v300 = vld [vmem:[%s247] sm:$0xf]
      %v301 = vld [vmem:[%s247 + $0x4] sm:$0xf]
      %v302 = vld [vmem:[%s247 + $0x8] sm:$0xf]
      %v303 = vld [vmem:[%s247 + $0xc] sm:$0xf]
      %v304 = vld [vmem:[%s247 + $0x10] sm:$0xf]
      %v305 = vld [vmem:[%s247 + $0x14] sm:$0xf]
      %v306 = vld [vmem:[%s247 + $0x18] sm:$0xf]
      %v307 = vld [vmem:[%s247 + $0x1c] sm:$0xf]
      %v308 = vld [vmem:[%s247 + $0x20] sm:$0xf]
      %v309 = vld [vmem:[%s247 + $0x24] sm:$0xf]
      %v310 = vld [vmem:[%s247 + $0x28] sm:$0xf]
      %v311 = vld [vmem:[%s247 + $0x2c] sm:$0xf]
      %v312 = vld [vmem:[%s247 + $0x30] sm:$0xf]
      %v313 = vld [vmem:[%s247 + $0x34] sm:$0xf]
      %v314 = vld [vmem:[%s247 + $0x38] sm:$0xf]
      %v315 = vld [vmem:[%s247 + $0x3c] sm:$0xf]
      %v316 = vpack.c.bf16 %v300, %v300
      %v317 = vpack.c.bf16 %v301, %v301
      %v318 = vpack.c.bf16 %v302, %v302
      %v319 = vpack.c.bf16 %v303, %v303
      %v320 = vpack.c.bf16 %v304, %v304
      %v321 = vpack.c.bf16 %v305, %v305
      %v322 = vpack.c.bf16 %v306, %v306
      %v323 = vpack.c.bf16 %v307, %v307
      %v324 = vpack.c.bf16 %v308, %v308
      %v325 = vpack.c.bf16 %v309, %v309
      %v326 = vpack.c.bf16 %v310, %v310
      %v327 = vpack.c.bf16 %v311, %v311
      %v328 = vpack.c.bf16 %v312, %v312
      %v329 = vpack.c.bf16 %v313, %v313
      %v330 = vpack.c.bf16 %v314, %v314
      %v331 = vpack.c.bf16 %v315, %v315
      %v332 = vld [vmem:[%s253] sm:$0xf]
      %v333 = vld [vmem:[%s253 + $0x4] sm:$0xf]
      %v334 = vld [vmem:[%s253 + $0x8] sm:$0xf]
      %v335 = vld [vmem:[%s253 + $0xc] sm:$0xf]
      %v336 = vld [vmem:[%s253 + $0x10] sm:$0xf]
      %v337 = vld [vmem:[%s253 + $0x14] sm:$0xf]
      %v338 = vld [vmem:[%s253 + $0x18] sm:$0xf]
      %v339 = vld [vmem:[%s253 + $0x1c] sm:$0xf]
      %v340 = vld [vmem:[%s253 + $0x20] sm:$0xf]
      %v341 = vld [vmem:[%s253 + $0x24] sm:$0xf]
      %v342 = vld [vmem:[%s253 + $0x28] sm:$0xf]
      %v343 = vld [vmem:[%s253 + $0x2c] sm:$0xf]
      %v344 = vld [vmem:[%s253 + $0x30] sm:$0xf]
      %v345 = vld [vmem:[%s253 + $0x34] sm:$0xf]
      %v346 = vld [vmem:[%s253 + $0x38] sm:$0xf]
      %v347 = vld [vmem:[%s253 + $0x3c] sm:$0xf]
      %v348 = vld [vmem:[%s259] sm:$0xf]
      %v349 = vld [vmem:[%s259 + $0x4] sm:$0xf]
      %v350 = vld [vmem:[%s259 + $0x8] sm:$0xf]
      %v351 = vld [vmem:[%s259 + $0xc] sm:$0xf]
      %v352 = vld [vmem:[%s259 + $0x10] sm:$0xf]
      %v353 = vld [vmem:[%s259 + $0x14] sm:$0xf]
      %v354 = vld [vmem:[%s259 + $0x18] sm:$0xf]
      %v355 = vld [vmem:[%s259 + $0x1c] sm:$0xf]
      %v356 = vld [vmem:[%s259 + $0x20] sm:$0xf]
      %v357 = vld [vmem:[%s259 + $0x24] sm:$0xf]
      %v358 = vld [vmem:[%s259 + $0x28] sm:$0xf]
      %v359 = vld [vmem:[%s259 + $0x2c] sm:$0xf]
      %v360 = vld [vmem:[%s259 + $0x30] sm:$0xf]
      %v361 = vld [vmem:[%s259 + $0x34] sm:$0xf]
      %v362 = vld [vmem:[%s259 + $0x38] sm:$0xf]
      %v363 = vld [vmem:[%s259 + $0x3c] sm:$0xf]
      %380 = vrot.lane.b32.xlu0 %v348, 4
      %v381 = vpop.permute.xlu0 %380
      %382 = vrot.lane.b32.xlu0 %v349, 4
      %v383 = vpop.permute.xlu0 %382
      %384 = vrot.lane.b32.xlu0 %v350, 4
      %v385 = vpop.permute.xlu0 %384
      %386 = vrot.lane.b32.xlu0 %v351, 4
      %v387 = vpop.permute.xlu0 %386
      %388 = vrot.lane.b32.xlu0 %v352, 4
      %v389 = vpop.permute.xlu0 %388
      %390 = vrot.lane.b32.xlu0 %v353, 4
      %v391 = vpop.permute.xlu0 %390
      %392 = vrot.lane.b32.xlu0 %v354, 4
      %v393 = vpop.permute.xlu0 %392
      %394 = vrot.lane.b32.xlu0 %v355, 4
      %v395 = vpop.permute.xlu0 %394
      %396 = vrot.lane.b32.xlu0 %v356, 4
      %v397 = vpop.permute.xlu0 %396
      %398 = vrot.lane.b32.xlu0 %v357, 4
      %v399 = vpop.permute.xlu0 %398
      %400 = vrot.lane.b32.xlu0 %v358, 4
      %v401 = vpop.permute.xlu0 %400
      %402 = vrot.lane.b32.xlu0 %v359, 4
      %v403 = vpop.permute.xlu0 %402
      %404 = vrot.lane.b32.xlu0 %v360, 4
      %v405 = vpop.permute.xlu0 %404
      %406 = vrot.lane.b32.xlu0 %v361, 4
      %v407 = vpop.permute.xlu0 %406
      %408 = vrot.lane.b32.xlu0 %v362, 4
      %v409 = vpop.permute.xlu0 %408
      %410 = vrot.lane.b32.xlu0 %v363, 4
      %v411 = vpop.permute.xlu0 %410
      %vm428 = vcmask 31744
      %v429 = vsel %vm428, %v332, %v381
      %v430 = vsel %vm428, %v333, %v383
      %v431 = vsel %vm428, %v334, %v385
      %v432 = vsel %vm428, %v335, %v387
      %v433 = vsel %vm428, %v336, %v389
      %v434 = vsel %vm428, %v337, %v391
      %v435 = vsel %vm428, %v338, %v393
      %v436 = vsel %vm428, %v339, %v395
      %v437 = vsel %vm428, %v340, %v397
      %v438 = vsel %vm428, %v341, %v399
      %v439 = vsel %vm428, %v342, %v401
      %v440 = vsel %vm428, %v343, %v403
      %v441 = vsel %vm428, %v344, %v405
      %v442 = vsel %vm428, %v345, %v407
      %v443 = vsel %vm428, %v346, %v409
      %v444 = vsel %vm428, %v347, %v411
      %v445 = vpack.c.bf16 %v429, %v429
      %v446 = vpack.c.bf16 %v430, %v430
      %v447 = vpack.c.bf16 %v431, %v431
      %v448 = vpack.c.bf16 %v432, %v432
      %v449 = vpack.c.bf16 %v433, %v433
      %v450 = vpack.c.bf16 %v434, %v434
      %v451 = vpack.c.bf16 %v435, %v435
      %v452 = vpack.c.bf16 %v436, %v436
      %v453 = vpack.c.bf16 %v437, %v437
      %v454 = vpack.c.bf16 %v438, %v438
      %v455 = vpack.c.bf16 %v439, %v439
      %v456 = vpack.c.bf16 %v440, %v440
      %v457 = vpack.c.bf16 %v441, %v441
      %v458 = vpack.c.bf16 %v442, %v442
      %v459 = vpack.c.bf16 %v443, %v443
      %v460 = vpack.c.bf16 %v444, %v444
      %v461 = vsub.f32 0.0, %v348
      %v462 = vsub.f32 0.0, %v349
      %v463 = vsub.f32 0.0, %v350
      %v464 = vsub.f32 0.0, %v351
      %v465 = vsub.f32 0.0, %v352
      %v466 = vsub.f32 0.0, %v353
      %v467 = vsub.f32 0.0, %v354
      %v468 = vsub.f32 0.0, %v355
      %v469 = vsub.f32 0.0, %v356
      %v470 = vsub.f32 0.0, %v357
      %v471 = vsub.f32 0.0, %v358
      %v472 = vsub.f32 0.0, %v359
      %v473 = vsub.f32 0.0, %v360
      %v474 = vsub.f32 0.0, %v361
      %v475 = vsub.f32 0.0, %v362
      %v476 = vsub.f32 0.0, %v363
      %493 = vrot.lane.b32.xlu0 %v332, 4
      %v494 = vpop.permute.xlu0 %493
      %495 = vrot.lane.b32.xlu0 %v333, 4
      %v496 = vpop.permute.xlu0 %495
      %497 = vrot.lane.b32.xlu0 %v334, 4
      %v498 = vpop.permute.xlu0 %497
      %499 = vrot.lane.b32.xlu0 %v335, 4
      %v500 = vpop.permute.xlu0 %499
      %501 = vrot.lane.b32.xlu0 %v336, 4
      %v502 = vpop.permute.xlu0 %501
      %503 = vrot.lane.b32.xlu0 %v337, 4
      %v504 = vpop.permute.xlu0 %503
      %505 = vrot.lane.b32.xlu0 %v338, 4
      %v506 = vpop.permute.xlu0 %505
      %507 = vrot.lane.b32.xlu0 %v339, 4
      %v508 = vpop.permute.xlu0 %507
      %509 = vrot.lane.b32.xlu0 %v340, 4
      %v510 = vpop.permute.xlu0 %509
      %511 = vrot.lane.b32.xlu0 %v341, 4
      %v512 = vpop.permute.xlu0 %511
      %513 = vrot.lane.b32.xlu0 %v342, 4
      %v514 = vpop.permute.xlu0 %513
      %515 = vrot.lane.b32.xlu0 %v343, 4
      %v516 = vpop.permute.xlu0 %515
      %517 = vrot.lane.b32.xlu0 %v344, 4
      %v518 = vpop.permute.xlu0 %517
      %519 = vrot.lane.b32.xlu0 %v345, 4
      %v520 = vpop.permute.xlu0 %519
      %521 = vrot.lane.b32.xlu0 %v346, 4
      %v522 = vpop.permute.xlu0 %521
      %523 = vrot.lane.b32.xlu0 %v347, 4
      %v524 = vpop.permute.xlu0 %523
      %v541 = vsel %vm428, %v461, %v494
      %v542 = vsel %vm428, %v462, %v496
      %v543 = vsel %vm428, %v463, %v498
      %v544 = vsel %vm428, %v464, %v500
      %v545 = vsel %vm428, %v465, %v502
      %v546 = vsel %vm428, %v466, %v504
      %v547 = vsel %vm428, %v467, %v506
      %v548 = vsel %vm428, %v468, %v508
      %v549 = vsel %vm428, %v469, %v510
      %v550 = vsel %vm428, %v470, %v512
      %v551 = vsel %vm428, %v471, %v514
      %v552 = vsel %vm428, %v472, %v516
      %v553 = vsel %vm428, %v473, %v518
      %v554 = vsel %vm428, %v474, %v520
      %v555 = vsel %vm428, %v475, %v522
      %v556 = vsel %vm428, %v476, %v524
      %v557 = vpack.c.bf16 %v541, %v541
      %v558 = vpack.c.bf16 %v542, %v542
      %v559 = vpack.c.bf16 %v543, %v543
      %v560 = vpack.c.bf16 %v544, %v544
      %v561 = vpack.c.bf16 %v545, %v545
      %v562 = vpack.c.bf16 %v546, %v546
      %v563 = vpack.c.bf16 %v547, %v547
      %v564 = vpack.c.bf16 %v548, %v548
      %v565 = vpack.c.bf16 %v549, %v549
      %v566 = vpack.c.bf16 %v550, %v550
      %v567 = vpack.c.bf16 %v551, %v551
      %v568 = vpack.c.bf16 %v552, %v552
      %v569 = vpack.c.bf16 %v553, %v553
      %v570 = vpack.c.bf16 %v554, %v554
      %v571 = vpack.c.bf16 %v555, %v555
      %v572 = vpack.c.bf16 %v556, %v556
      %v574 = vsel %vm428, %v316, 0
      %vm576 = vcmask 1041408
      %v578 = vsel %vm576, %v557, 0
      %580 = vmatpush.bf16.msra.mxu0 0
      %581 = vmatpush.bf16.msra.mxu0 0
      %582 = vmatpush.bf16.msra.mxu0 0
      %583 = vmatpush.bf16.msra.mxu0 0
      %584 = vmatpush.bf16.msra.mxu0 0
      %585 = vmatpush.bf16.msra.mxu0 0
      %586 = vmatpush.bf16.msra.mxu0 0
      %587 = vmatpush.bf16.msra.mxu0 %v578
      %588 = vmatmul.bf16.gmra.mxu0 %v574
      %v589 = vpop.f32.mrf.mxu0
      %v590 = vadd.f32 0.0, %v589
      %v591 = vpop.f32.mrf.mxu0
      %592 = vdwg.mxu0
      %v594 = vsel %vm428, %v317, 0
      %v597 = vsel %vm576, %v558, 0
      %599 = vmatpush.bf16.msra.mxu0 0
      %600 = vmatpush.bf16.msra.mxu0 0
      %601 = vmatpush.bf16.msra.mxu0 0
      %602 = vmatpush.bf16.msra.mxu0 0
      %603 = vmatpush.bf16.msra.mxu0 0
      %604 = vmatpush.bf16.msra.mxu0 0
      %605 = vmatpush.bf16.msra.mxu0 0
      %606 = vmatpush.bf16.msra.mxu0 %v597
      %607 = vmatmul.bf16.gmra.mxu0 %v594
      %v608 = vpop.f32.mrf.mxu0
      %v609 = vadd.f32 0.0, %v608
      %v610 = vpop.f32.mrf.mxu0
      %611 = vdwg.mxu0
      %v613 = vsel %vm428, %v318, 0
      %v616 = vsel %vm576, %v559, 0
      %618 = vmatpush.bf16.msra.mxu0 0
      %619 = vmatpush.bf16.msra.mxu0 0
      %620 = vmatpush.bf16.msra.mxu0 0
      %621 = vmatpush.bf16.msra.mxu0 0
      %622 = vmatpush.bf16.msra.mxu0 0
      %623 = vmatpush.bf16.msra.mxu0 0
      %624 = vmatpush.bf16.msra.mxu0 0
      %625 = vmatpush.bf16.msra.mxu0 %v616
      %626 = vmatmul.bf16.gmra.mxu0 %v613
      %v627 = vpop.f32.mrf.mxu0
      %v628 = vadd.f32 0.0, %v627
      %v629 = vpop.f32.mrf.mxu0
      %630 = vdwg.mxu0
      %v632 = vsel %vm428, %v319, 0
      %v635 = vsel %vm576, %v560, 0
      %637 = vmatpush.bf16.msra.mxu0 0
      %638 = vmatpush.bf16.msra.mxu0 0
      %639 = vmatpush.bf16.msra.mxu0 0
      %640 = vmatpush.bf16.msra.mxu0 0
      %641 = vmatpush.bf16.msra.mxu0 0
      %642 = vmatpush.bf16.msra.mxu0 0
      %643 = vmatpush.bf16.msra.mxu0 0
      %644 = vmatpush.bf16.msra.mxu0 %v635
      %645 = vmatmul.bf16.gmra.mxu0 %v632
      %v646 = vpop.f32.mrf.mxu0
      %v647 = vadd.f32 0.0, %v646
      %v648 = vpop.f32.mrf.mxu0
      %649 = vdwg.mxu0
      %v651 = vsel %vm428, %v320, 0
      %v654 = vsel %vm576, %v561, 0
      %656 = vmatpush.bf16.msra.mxu0 0
      %657 = vmatpush.bf16.msra.mxu0 0
      %658 = vmatpush.bf16.msra.mxu0 0
      %659 = vmatpush.bf16.msra.mxu0 0
      %660 = vmatpush.bf16.msra.mxu0 0
      %661 = vmatpush.bf16.msra.mxu0 0
      %662 = vmatpush.bf16.msra.mxu0 0
      %663 = vmatpush.bf16.msra.mxu0 %v654
      %664 = vmatmul.bf16.gmra.mxu0 %v651
      %v665 = vpop.f32.mrf.mxu0
      %v666 = vadd.f32 0.0, %v665
      %v667 = vpop.f32.mrf.mxu0
      %668 = vdwg.mxu0
      %v670 = vsel %vm428, %v321, 0
      %v673 = vsel %vm576, %v562, 0
      %675 = vmatpush.bf16.msra.mxu0 0
      %676 = vmatpush.bf16.msra.mxu0 0
      %677 = vmatpush.bf16.msra.mxu0 0
      %678 = vmatpush.bf16.msra.mxu0 0
      %679 = vmatpush.bf16.msra.mxu0 0
      %680 = vmatpush.bf16.msra.mxu0 0
      %681 = vmatpush.bf16.msra.mxu0 0
      %682 = vmatpush.bf16.msra.mxu0 %v673
      %683 = vmatmul.bf16.gmra.mxu0 %v670
      %v684 = vpop.f32.mrf.mxu0
      %v685 = vadd.f32 0.0, %v684
      %v686 = vpop.f32.mrf.mxu0
      %687 = vdwg.mxu0
      %v689 = vsel %vm428, %v322, 0
      %v692 = vsel %vm576, %v563, 0
      %694 = vmatpush.bf16.msra.mxu0 0
      %695 = vmatpush.bf16.msra.mxu0 0
      %696 = vmatpush.bf16.msra.mxu0 0
      %697 = vmatpush.bf16.msra.mxu0 0
      %698 = vmatpush.bf16.msra.mxu0 0
      %699 = vmatpush.bf16.msra.mxu0 0
      %700 = vmatpush.bf16.msra.mxu0 0
      %701 = vmatpush.bf16.msra.mxu0 %v692
      %702 = vmatmul.bf16.gmra.mxu0 %v689
      %v703 = vpop.f32.mrf.mxu0
      %v704 = vadd.f32 0.0, %v703
      %v705 = vpop.f32.mrf.mxu0
      %706 = vdwg.mxu0
      %v708 = vsel %vm428, %v323, 0
      %v711 = vsel %vm576, %v564, 0
      %713 = vmatpush.bf16.msra.mxu0 0
      %714 = vmatpush.bf16.msra.mxu0 0
      %715 = vmatpush.bf16.msra.mxu0 0
      %716 = vmatpush.bf16.msra.mxu0 0
      %717 = vmatpush.bf16.msra.mxu0 0
      %718 = vmatpush.bf16.msra.mxu0 0
      %719 = vmatpush.bf16.msra.mxu0 0
      %720 = vmatpush.bf16.msra.mxu0 %v711
      %721 = vmatmul.bf16.gmra.mxu0 %v708
      %v722 = vpop.f32.mrf.mxu0
      %v723 = vadd.f32 0.0, %v722
      %v724 = vpop.f32.mrf.mxu0
      %725 = vdwg.mxu0
      %v727 = vsel %vm428, %v324, 0
      %v730 = vsel %vm576, %v565, 0
      %732 = vmatpush.bf16.msra.mxu0 0
      %733 = vmatpush.bf16.msra.mxu0 0
      %734 = vmatpush.bf16.msra.mxu0 0
      %735 = vmatpush.bf16.msra.mxu0 0
      %736 = vmatpush.bf16.msra.mxu0 0
      %737 = vmatpush.bf16.msra.mxu0 0
      %738 = vmatpush.bf16.msra.mxu0 0
      %739 = vmatpush.bf16.msra.mxu0 %v730
      %740 = vmatmul.bf16.gmra.mxu0 %v727
      %v741 = vpop.f32.mrf.mxu0
      %v742 = vadd.f32 0.0, %v741
      %v743 = vpop.f32.mrf.mxu0
      %744 = vdwg.mxu0
      %v746 = vsel %vm428, %v325, 0
      %v749 = vsel %vm576, %v566, 0
      %751 = vmatpush.bf16.msra.mxu0 0
      %752 = vmatpush.bf16.msra.mxu0 0
      %753 = vmatpush.bf16.msra.mxu0 0
      %754 = vmatpush.bf16.msra.mxu0 0
      %755 = vmatpush.bf16.msra.mxu0 0
      %756 = vmatpush.bf16.msra.mxu0 0
      %757 = vmatpush.bf16.msra.mxu0 0
      %758 = vmatpush.bf16.msra.mxu0 %v749
      %759 = vmatmul.bf16.gmra.mxu0 %v746
      %v760 = vpop.f32.mrf.mxu0
      %v761 = vadd.f32 0.0, %v760
      %v762 = vpop.f32.mrf.mxu0
      %763 = vdwg.mxu0
      %v765 = vsel %vm428, %v326, 0
      %v768 = vsel %vm576, %v567, 0
      %770 = vmatpush.bf16.msra.mxu0 0
      %771 = vmatpush.bf16.msra.mxu0 0
      %772 = vmatpush.bf16.msra.mxu0 0
      %773 = vmatpush.bf16.msra.mxu0 0
      %774 = vmatpush.bf16.msra.mxu0 0
      %775 = vmatpush.bf16.msra.mxu0 0
      %776 = vmatpush.bf16.msra.mxu0 0
      %777 = vmatpush.bf16.msra.mxu0 %v768
      %778 = vmatmul.bf16.gmra.mxu0 %v765
      %v779 = vpop.f32.mrf.mxu0
      %v780 = vadd.f32 0.0, %v779
      %v781 = vpop.f32.mrf.mxu0
      %782 = vdwg.mxu0
      %v784 = vsel %vm428, %v327, 0
      %v787 = vsel %vm576, %v568, 0
      %789 = vmatpush.bf16.msra.mxu0 0
      %790 = vmatpush.bf16.msra.mxu0 0
      %791 = vmatpush.bf16.msra.mxu0 0
      %792 = vmatpush.bf16.msra.mxu0 0
      %793 = vmatpush.bf16.msra.mxu0 0
      %794 = vmatpush.bf16.msra.mxu0 0
      %795 = vmatpush.bf16.msra.mxu0 0
      %796 = vmatpush.bf16.msra.mxu0 %v787
      %797 = vmatmul.bf16.gmra.mxu0 %v784
      %v798 = vpop.f32.mrf.mxu0
      %v799 = vadd.f32 0.0, %v798
      %v800 = vpop.f32.mrf.mxu0
      %801 = vdwg.mxu0
      %v803 = vsel %vm428, %v328, 0
      %v806 = vsel %vm576, %v569, 0
      %808 = vmatpush.bf16.msra.mxu0 0
      %809 = vmatpush.bf16.msra.mxu0 0
      %810 = vmatpush.bf16.msra.mxu0 0
      %811 = vmatpush.bf16.msra.mxu0 0
      %812 = vmatpush.bf16.msra.mxu0 0
      %813 = vmatpush.bf16.msra.mxu0 0
      %814 = vmatpush.bf16.msra.mxu0 0
      %815 = vmatpush.bf16.msra.mxu0 %v806
      %816 = vmatmul.bf16.gmra.mxu0 %v803
      %v817 = vpop.f32.mrf.mxu0
      %v818 = vadd.f32 0.0, %v817
      %v819 = vpop.f32.mrf.mxu0
      %820 = vdwg.mxu0
      %v822 = vsel %vm428, %v329, 0
      %v825 = vsel %vm576, %v570, 0
      %827 = vmatpush.bf16.msra.mxu0 0
      %828 = vmatpush.bf16.msra.mxu0 0
      %829 = vmatpush.bf16.msra.mxu0 0
      %830 = vmatpush.bf16.msra.mxu0 0
      %831 = vmatpush.bf16.msra.mxu0 0
      %832 = vmatpush.bf16.msra.mxu0 0
      %833 = vmatpush.bf16.msra.mxu0 0
      %834 = vmatpush.bf16.msra.mxu0 %v825
      %835 = vmatmul.bf16.gmra.mxu0 %v822
      %v836 = vpop.f32.mrf.mxu0
      %v837 = vadd.f32 0.0, %v836
      %v838 = vpop.f32.mrf.mxu0
      %839 = vdwg.mxu0
      %v841 = vsel %vm428, %v330, 0
      %v844 = vsel %vm576, %v571, 0
      %846 = vmatpush.bf16.msra.mxu0 0
      %847 = vmatpush.bf16.msra.mxu0 0
      %848 = vmatpush.bf16.msra.mxu0 0
      %849 = vmatpush.bf16.msra.mxu0 0
      %850 = vmatpush.bf16.msra.mxu0 0
      %851 = vmatpush.bf16.msra.mxu0 0
      %852 = vmatpush.bf16.msra.mxu0 0
      %853 = vmatpush.bf16.msra.mxu0 %v844
      %854 = vmatmul.bf16.gmra.mxu0 %v841
      %v855 = vpop.f32.mrf.mxu0
      %v856 = vadd.f32 0.0, %v855
      %v857 = vpop.f32.mrf.mxu0
      %858 = vdwg.mxu0
      %v860 = vsel %vm428, %v331, 0
      %v863 = vsel %vm576, %v572, 0
      %865 = vmatpush.bf16.msra.mxu0 0
      %866 = vmatpush.bf16.msra.mxu0 0
      %867 = vmatpush.bf16.msra.mxu0 0
      %868 = vmatpush.bf16.msra.mxu0 0
      %869 = vmatpush.bf16.msra.mxu0 0
      %870 = vmatpush.bf16.msra.mxu0 0
      %871 = vmatpush.bf16.msra.mxu0 0
      %872 = vmatpush.bf16.msra.mxu0 %v863
      %873 = vmatmul.bf16.gmra.mxu0 %v860
      %v874 = vpop.f32.mrf.mxu0
      %v875 = vadd.f32 0.0, %v874
      %v876 = vpop.f32.mrf.mxu0
      %877 = vdwg.mxu0
      %v879 = vsel %vm428, %v284, 0
      %v882 = vsel %vm576, %v445, 0
      %884 = vmatpush.bf16.msra.mxu0 0
      %885 = vmatpush.bf16.msra.mxu0 0
      %886 = vmatpush.bf16.msra.mxu0 0
      %887 = vmatpush.bf16.msra.mxu0 0
      %888 = vmatpush.bf16.msra.mxu0 0
      %889 = vmatpush.bf16.msra.mxu0 0
      %890 = vmatpush.bf16.msra.mxu0 0
      %891 = vmatpush.bf16.msra.mxu0 %v882
      %892 = vmatmul.bf16.gmra.mxu0 %v879
      %v893 = vpop.f32.mrf.mxu0
      %v894 = vadd.f32 %v590, %v893
      %v895 = vpop.f32.mrf.mxu0
      %896 = vdwg.mxu0
      %v898 = vsel %vm428, %v285, 0
      %v901 = vsel %vm576, %v446, 0
      %903 = vmatpush.bf16.msra.mxu0 0
      %904 = vmatpush.bf16.msra.mxu0 0
      %905 = vmatpush.bf16.msra.mxu0 0
      %906 = vmatpush.bf16.msra.mxu0 0
      %907 = vmatpush.bf16.msra.mxu0 0
      %908 = vmatpush.bf16.msra.mxu0 0
      %909 = vmatpush.bf16.msra.mxu0 0
      %910 = vmatpush.bf16.msra.mxu0 %v901
      %911 = vmatmul.bf16.gmra.mxu0 %v898
      %v912 = vpop.f32.mrf.mxu0
      %v913 = vadd.f32 %v609, %v912
      %v914 = vpop.f32.mrf.mxu0
      %915 = vdwg.mxu0
      %v917 = vsel %vm428, %v286, 0
      %v920 = vsel %vm576, %v447, 0
      %922 = vmatpush.bf16.msra.mxu0 0
      %923 = vmatpush.bf16.msra.mxu0 0
      %924 = vmatpush.bf16.msra.mxu0 0
      %925 = vmatpush.bf16.msra.mxu0 0
      %926 = vmatpush.bf16.msra.mxu0 0
      %927 = vmatpush.bf16.msra.mxu0 0
      %928 = vmatpush.bf16.msra.mxu0 0
      %929 = vmatpush.bf16.msra.mxu0 %v920
      %930 = vmatmul.bf16.gmra.mxu0 %v917
      %v931 = vpop.f32.mrf.mxu0
      %v932 = vadd.f32 %v628, %v931
      %v933 = vpop.f32.mrf.mxu0
      %934 = vdwg.mxu0
      %v936 = vsel %vm428, %v287, 0
      %v939 = vsel %vm576, %v448, 0
      %941 = vmatpush.bf16.msra.mxu0 0
      %942 = vmatpush.bf16.msra.mxu0 0
      %943 = vmatpush.bf16.msra.mxu0 0
      %944 = vmatpush.bf16.msra.mxu0 0
      %945 = vmatpush.bf16.msra.mxu0 0
      %946 = vmatpush.bf16.msra.mxu0 0
      %947 = vmatpush.bf16.msra.mxu0 0
      %948 = vmatpush.bf16.msra.mxu0 %v939
      %949 = vmatmul.bf16.gmra.mxu0 %v936
      %v950 = vpop.f32.mrf.mxu0
      %v951 = vadd.f32 %v647, %v950
      %v952 = vpop.f32.mrf.mxu0
      %953 = vdwg.mxu0
      %v955 = vsel %vm428, %v288, 0
      %v958 = vsel %vm576, %v449, 0
      %960 = vmatpush.bf16.msra.mxu0 0
      %961 = vmatpush.bf16.msra.mxu0 0
      %962 = vmatpush.bf16.msra.mxu0 0
      %963 = vmatpush.bf16.msra.mxu0 0
      %964 = vmatpush.bf16.msra.mxu0 0
      %965 = vmatpush.bf16.msra.mxu0 0
      %966 = vmatpush.bf16.msra.mxu0 0
      %967 = vmatpush.bf16.msra.mxu0 %v958
      %968 = vmatmul.bf16.gmra.mxu0 %v955
      %v969 = vpop.f32.mrf.mxu0
      %v970 = vadd.f32 %v666, %v969
      %v971 = vpop.f32.mrf.mxu0
      %972 = vdwg.mxu0
      %v974 = vsel %vm428, %v289, 0
      %v977 = vsel %vm576, %v450, 0
      %979 = vmatpush.bf16.msra.mxu0 0
      %980 = vmatpush.bf16.msra.mxu0 0
      %981 = vmatpush.bf16.msra.mxu0 0
      %982 = vmatpush.bf16.msra.mxu0 0
      %983 = vmatpush.bf16.msra.mxu0 0
      %984 = vmatpush.bf16.msra.mxu0 0
      %985 = vmatpush.bf16.msra.mxu0 0
      %986 = vmatpush.bf16.msra.mxu0 %v977
      %987 = vmatmul.bf16.gmra.mxu0 %v974
      %v988 = vpop.f32.mrf.mxu0
      %v989 = vadd.f32 %v685, %v988
      %v990 = vpop.f32.mrf.mxu0
      %991 = vdwg.mxu0
      %v993 = vsel %vm428, %v290, 0
      %v996 = vsel %vm576, %v451, 0
      %998 = vmatpush.bf16.msra.mxu0 0
      %999 = vmatpush.bf16.msra.mxu0 0
      %1000 = vmatpush.bf16.msra.mxu0 0
      %1001 = vmatpush.bf16.msra.mxu0 0
      %1002 = vmatpush.bf16.msra.mxu0 0
      %1003 = vmatpush.bf16.msra.mxu0 0
      %1004 = vmatpush.bf16.msra.mxu0 0
      %1005 = vmatpush.bf16.msra.mxu0 %v996
      %1006 = vmatmul.bf16.gmra.mxu0 %v993
      %v1007 = vpop.f32.mrf.mxu0
      %v1008 = vadd.f32 %v704, %v1007
      %v1009 = vpop.f32.mrf.mxu0
      %1010 = vdwg.mxu0
      %v1012 = vsel %vm428, %v291, 0
      %v1015 = vsel %vm576, %v452, 0
      %1017 = vmatpush.bf16.msra.mxu0 0
      %1018 = vmatpush.bf16.msra.mxu0 0
      %1019 = vmatpush.bf16.msra.mxu0 0
      %1020 = vmatpush.bf16.msra.mxu0 0
      %1021 = vmatpush.bf16.msra.mxu0 0
      %1022 = vmatpush.bf16.msra.mxu0 0
      %1023 = vmatpush.bf16.msra.mxu0 0
      %1024 = vmatpush.bf16.msra.mxu0 %v1015
      %1025 = vmatmul.bf16.gmra.mxu0 %v1012
      %v1026 = vpop.f32.mrf.mxu0
      %v1027 = vadd.f32 %v723, %v1026
      %v1028 = vpop.f32.mrf.mxu0
      %1029 = vdwg.mxu0
      %v1031 = vsel %vm428, %v292, 0
      %v1034 = vsel %vm576, %v453, 0
      %1036 = vmatpush.bf16.msra.mxu0 0
      %1037 = vmatpush.bf16.msra.mxu0 0
      %1038 = vmatpush.bf16.msra.mxu0 0
      %1039 = vmatpush.bf16.msra.mxu0 0
      %1040 = vmatpush.bf16.msra.mxu0 0
      %1041 = vmatpush.bf16.msra.mxu0 0
      %1042 = vmatpush.bf16.msra.mxu0 0
      %1043 = vmatpush.bf16.msra.mxu0 %v1034
      %1044 = vmatmul.bf16.gmra.mxu0 %v1031
      %v1045 = vpop.f32.mrf.mxu0
      %v1046 = vadd.f32 %v742, %v1045
      %v1047 = vpop.f32.mrf.mxu0
      %1048 = vdwg.mxu0
      %v1050 = vsel %vm428, %v293, 0
      %v1053 = vsel %vm576, %v454, 0
      %1055 = vmatpush.bf16.msra.mxu0 0
      %1056 = vmatpush.bf16.msra.mxu0 0
      %1057 = vmatpush.bf16.msra.mxu0 0
      %1058 = vmatpush.bf16.msra.mxu0 0
      %1059 = vmatpush.bf16.msra.mxu0 0
      %1060 = vmatpush.bf16.msra.mxu0 0
      %1061 = vmatpush.bf16.msra.mxu0 0
      %1062 = vmatpush.bf16.msra.mxu0 %v1053
      %1063 = vmatmul.bf16.gmra.mxu0 %v1050
      %v1064 = vpop.f32.mrf.mxu0
      %v1065 = vadd.f32 %v761, %v1064
      %v1066 = vpop.f32.mrf.mxu0
      %1067 = vdwg.mxu0
      %v1069 = vsel %vm428, %v294, 0
      %v1072 = vsel %vm576, %v455, 0
      %1074 = vmatpush.bf16.msra.mxu0 0
      %1075 = vmatpush.bf16.msra.mxu0 0
      %1076 = vmatpush.bf16.msra.mxu0 0
      %1077 = vmatpush.bf16.msra.mxu0 0
      %1078 = vmatpush.bf16.msra.mxu0 0
      %1079 = vmatpush.bf16.msra.mxu0 0
      %1080 = vmatpush.bf16.msra.mxu0 0
      %1081 = vmatpush.bf16.msra.mxu0 %v1072
      %1082 = vmatmul.bf16.gmra.mxu0 %v1069
      %v1083 = vpop.f32.mrf.mxu0
      %v1084 = vadd.f32 %v780, %v1083
      %v1085 = vpop.f32.mrf.mxu0
      %1086 = vdwg.mxu0
      %v1088 = vsel %vm428, %v295, 0
      %v1091 = vsel %vm576, %v456, 0
      %1093 = vmatpush.bf16.msra.mxu0 0
      %1094 = vmatpush.bf16.msra.mxu0 0
      %1095 = vmatpush.bf16.msra.mxu0 0
      %1096 = vmatpush.bf16.msra.mxu0 0
      %1097 = vmatpush.bf16.msra.mxu0 0
      %1098 = vmatpush.bf16.msra.mxu0 0
      %1099 = vmatpush.bf16.msra.mxu0 0
      %1100 = vmatpush.bf16.msra.mxu0 %v1091
      %1101 = vmatmul.bf16.gmra.mxu0 %v1088
      %v1102 = vpop.f32.mrf.mxu0
      %v1103 = vadd.f32 %v799, %v1102
      %v1104 = vpop.f32.mrf.mxu0
      %1105 = vdwg.mxu0
      %v1107 = vsel %vm428, %v296, 0
      %v1110 = vsel %vm576, %v457, 0
      %1112 = vmatpush.bf16.msra.mxu0 0
      %1113 = vmatpush.bf16.msra.mxu0 0
      %1114 = vmatpush.bf16.msra.mxu0 0
      %1115 = vmatpush.bf16.msra.mxu0 0
      %1116 = vmatpush.bf16.msra.mxu0 0
      %1117 = vmatpush.bf16.msra.mxu0 0
      %1118 = vmatpush.bf16.msra.mxu0 0
      %1119 = vmatpush.bf16.msra.mxu0 %v1110
      %1120 = vmatmul.bf16.gmra.mxu0 %v1107
      %v1121 = vpop.f32.mrf.mxu0
      %v1122 = vadd.f32 %v818, %v1121
      %v1123 = vpop.f32.mrf.mxu0
      %1124 = vdwg.mxu0
      %v1126 = vsel %vm428, %v297, 0
      %v1129 = vsel %vm576, %v458, 0
      %1131 = vmatpush.bf16.msra.mxu0 0
      %1132 = vmatpush.bf16.msra.mxu0 0
      %1133 = vmatpush.bf16.msra.mxu0 0
      %1134 = vmatpush.bf16.msra.mxu0 0
      %1135 = vmatpush.bf16.msra.mxu0 0
      %1136 = vmatpush.bf16.msra.mxu0 0
      %1137 = vmatpush.bf16.msra.mxu0 0
      %1138 = vmatpush.bf16.msra.mxu0 %v1129
      %1139 = vmatmul.bf16.gmra.mxu0 %v1126
      %v1140 = vpop.f32.mrf.mxu0
      %v1141 = vadd.f32 %v837, %v1140
      %v1142 = vpop.f32.mrf.mxu0
      %1143 = vdwg.mxu0
      %v1145 = vsel %vm428, %v298, 0
      %v1148 = vsel %vm576, %v459, 0
      %1150 = vmatpush.bf16.msra.mxu0 0
      %1151 = vmatpush.bf16.msra.mxu0 0
      %1152 = vmatpush.bf16.msra.mxu0 0
      %1153 = vmatpush.bf16.msra.mxu0 0
      %1154 = vmatpush.bf16.msra.mxu0 0
      %1155 = vmatpush.bf16.msra.mxu0 0
      %1156 = vmatpush.bf16.msra.mxu0 0
      %1157 = vmatpush.bf16.msra.mxu0 %v1148
      %1158 = vmatmul.bf16.gmra.mxu0 %v1145
      %v1159 = vpop.f32.mrf.mxu0
      %v1160 = vadd.f32 %v856, %v1159
      %v1161 = vpop.f32.mrf.mxu0
      %1162 = vdwg.mxu0
      %v1164 = vsel %vm428, %v299, 0
      %v1167 = vsel %vm576, %v460, 0
      %1169 = vmatpush.bf16.msra.mxu0 0
      %1170 = vmatpush.bf16.msra.mxu0 0
      %1171 = vmatpush.bf16.msra.mxu0 0
      %1172 = vmatpush.bf16.msra.mxu0 0
      %1173 = vmatpush.bf16.msra.mxu0 0
      %1174 = vmatpush.bf16.msra.mxu0 0
      %1175 = vmatpush.bf16.msra.mxu0 0
      %1176 = vmatpush.bf16.msra.mxu0 %v1167
      %1177 = vmatmul.bf16.gmra.mxu0 %v1164
      %v1178 = vpop.f32.mrf.mxu0
      %v1179 = vadd.f32 %v875, %v1178
      %v1180 = vpop.f32.mrf.mxu0
      %1181 = vdwg.mxu0
      %vm1182 = vcmask 60416
      %1183 = vst.msk [vmem:[%s265] sm:$0xf] %vm1182, %v894
      %1184 = vst.msk [vmem:[%s265 + $0x4] sm:$0xf] %vm1182, %v913
      %1185 = vst.msk [vmem:[%s265 + $0x8] sm:$0xf] %vm1182, %v932
      %1186 = vst.msk [vmem:[%s265 + $0xc] sm:$0xf] %vm1182, %v951
      %1187 = vst.msk [vmem:[%s265 + $0x10] sm:$0xf] %vm1182, %v970
      %1188 = vst.msk [vmem:[%s265 + $0x14] sm:$0xf] %vm1182, %v989
      %1189 = vst.msk [vmem:[%s265 + $0x18] sm:$0xf] %vm1182, %v1008
      %1190 = vst.msk [vmem:[%s265 + $0x1c] sm:$0xf] %vm1182, %v1027
      %1191 = vst.msk [vmem:[%s265 + $0x20] sm:$0xf] %vm1182, %v1046
      %1192 = vst.msk [vmem:[%s265 + $0x24] sm:$0xf] %vm1182, %v1065
      %1193 = vst.msk [vmem:[%s265 + $0x28] sm:$0xf] %vm1182, %v1084
      %1194 = vst.msk [vmem:[%s265 + $0x2c] sm:$0xf] %vm1182, %v1103
      %1195 = vst.msk [vmem:[%s265 + $0x30] sm:$0xf] %vm1182, %v1122
      %1196 = vst.msk [vmem:[%s265 + $0x34] sm:$0xf] %vm1182, %v1141
      %1197 = vst.msk [vmem:[%s265 + $0x38] sm:$0xf] %vm1182, %v1160
      %1198 = vst.msk [vmem:[%s265 + $0x3c] sm:$0xf] %vm1182, %v1179
      %s1199 = smul.u32 16, %s15
      %p1200 = scmp.lt.s32.totalorder %s1199, 31
      %s1201 = scalar_select %p1200, %s1199, 31
      %s1202 = smul.addr %s1201, 4
      %s1203 = scalar_lea.vmem %s4, %s1202
      // Predicated region
      $region37: #{mwt_transform_cross_forward.10} parent=35 // pred_check
        %p1204 = pneg %p137
      $region38: #{mwt_transform_cross_forward.10} parent=35 // pred_check_branch
        %1206 = sbr.rel (%p1204) target = $region40
      $region39: #{mwt_transform_cross_forward.10} parent=35 // pred_region
        %s1207 = smul.u32 16, %s15
      $region40: #{mwt_transform_cross_forward.10} parent=35 // pred_fallthru
        _
    $region36: #{mwt_transform_cross_forward.10} parent=5 // pred_fallthru
      _
    %p1208 = scmp.le.s32.totalorder 2, %s10
    // Predicated region
    $region41: #{mwt_transform_cross_forward.10} parent=5 // pred_check
      %p1209 = pneg %p1208
    $region42: #{mwt_transform_cross_forward.10} parent=5 // pred_check_branch
      %1211 = sbr.rel (%p1209) target = $region44
    $region43: #{mwt_transform_cross_forward.10} parent=5 // pred_region
      %s1212 = ssub.s32 %s10, 2
      // Predicated region
      $region45: #{mwt_transform_cross_forward.10} parent=43 // pred_check
        %p1213 = pneg %p143
      $region46: #{mwt_transform_cross_forward.10} parent=43 // pred_check_branch
        %1215 = sbr.rel (%p1213) target = $region48
      $region47: #{mwt_transform_cross_forward.10} parent=43 // pred_region
        %s1216 = smul.u32 16, %s16
        %p1217 = scmp.lt.s32.totalorder %s1216, 31
        %s1218 = scalar_select %p1217, %s1216, 31
        %s1219 = smul.addr %s1218, 4
        %s1220 = scalar_lea.vmem %s4, %s1219
      $region48: #{mwt_transform_cross_forward.10} parent=43 // pred_fallthru
        _
    $region44: #{mwt_transform_cross_forward.10} parent=5 // pred_fallthru
      _
  $region6: #{mwt_transform_cross_forward.10} parent=0 // loop_footer
    %s14 = sadd.s32 1, %s10
  $region7: #{mwt_transform_cross_forward.10} parent=0 // loop_footer_branch
    %9 = sbr.rel target = $region3
  $region8: #{mwt_transform_cross_forward.10} parent=0 // loop_exit
    _

// kernel: mwt_transform_cross_forward.11
$region0: #{mwt_transform_cross_forward.11}
  #allocation0 [shape = 'u32[]', space=smem, size = 0x4, offset = 0x4, fixed_abs, tag = 'smem constant byte address 0x4 - core index']
  #allocation1 [shape = 'u32[72,128]{1,0:T(1,128)}', space=vmem, size = 0x9000, scoped, tag = 'internal scratch']
  %s0 = inlined_call_operand.vmem [shape: f32[32,4,4], index: 0, kind: input, shape index: {}]
  %s1 = inlined_call_operand.vmem [shape: f32[32,4,4], index: 1, kind: input, shape index: {}]
  %s2 = inlined_call_operand.vmem [shape: f32[32,4,4], index: 2, kind: input, shape index: {}]
  %s3 = inlined_call_operand.vmem [shape: f32[32,4,4], index: 3, kind: input, shape index: {}]
  %s4 = inlined_call_operand.vmem [shape: f32[32,4,8], index: 4, kind: output, shape index: {}]
  %s5 = sld [smem:[#allocation0]]
  $region49: #{mwt_transform_cross_forward.11} parent=0
    _
  %s7 = ssub.s32 1, %s5
  %s8 = scalar_select 0, %s7, %s5
  loop: start=0, step=1, limit=4
  $region2: #{mwt_transform_cross_forward.11} parent=0 // loop_pre_header
    _
  $region3: #{mwt_transform_cross_forward.11} parent=0 // loop_header
    %s10 = sphi 0, %s14
    %p11 = scmp.ge.s32.totalorder %s10, 4
    %s20 = sphi 0, %s22
    %s23 = sphi 0, %s20
    %s24 = sphi 0, %s23
    %s40 = sphi 0, %s24
    %s46 = sphi 0, %s48
    %s49 = sphi 0, %s46
    %s50 = sphi 0, %s49
    %s66 = sphi 0, %s50
    %s72 = sphi 0, %s74
    %s75 = sphi 0, %s72
    %s76 = sphi 0, %s75
    %s92 = sphi 0, %s76
    %s98 = sphi 0, %s100
    %s101 = sphi 0, %s98
    %s102 = sphi 0, %s101
    %s118 = sphi 0, %s102
    %s124 = sphi 0, %s126
    %s127 = sphi 0, %s124
    %s128 = sphi 0, %s127
    %s144 = sphi 0, %s128
  $region4: #{mwt_transform_cross_forward.11} parent=0 // loop_header_branch
    %13 = sbr.rel (%p11) target = $region8
  $region5: #{mwt_transform_cross_forward.11} parent=0 // loop_body
    %s15 = ssub.s32 %s10, 1
    %s16 = ssub.s32 %s10, 2
    %s17 = sadd.s32 %s10, 1
    %s18 = ssub.s32 %s10, %s17
    %p19 = scmp.eq.s32.totalorder %s18, 0
    %s21 = sadd.s32 %s20, 1
    %s22 = scalar_select %p19, %s20, %s21
    %p25 = pneg %p19
    %p26 = scmp.eq.s32.totalorder %s10, 1
    %p27 = por %p25, %p26
    %p28 = scmp.ne.s32.totalorder %s20, %s23
    %p29 = scmp.eq.s32.totalorder %s10, 0
    %p30 = por %p28, %p29
    %p31 = scmp.ne.s32.totalorder %s20, %s23
    %p32 = scmp.eq.s32.totalorder %s15, 1
    %p33 = por %p31, %p32
    %p34 = scmp.ne.s32.totalorder %s23, %s24
    %p35 = scmp.eq.s32.totalorder %s15, 0
    %p36 = por %p34, %p35
    %p37 = scmp.ne.s32.totalorder %s23, %s24
    %p38 = scmp.eq.s32.totalorder %s16, 1
    %p39 = por %p37, %p38
    %p41 = scmp.ne.s32.totalorder %s24, %s40
    %p42 = scmp.eq.s32.totalorder %s16, 0
    %p43 = por %p41, %p42
    %s44 = ssub.s32 %s10, %s17
    %p45 = scmp.eq.s32.totalorder %s44, 0
    %s47 = sadd.s32 %s46, 1
    %s48 = scalar_select %p45, %s46, %s47
    %p51 = pneg %p45
    %p52 = scmp.eq.s32.totalorder %s10, 1
    %p53 = por %p51, %p52
    %p54 = scmp.ne.s32.totalorder %s46, %s49
    %p55 = scmp.eq.s32.totalorder %s10, 0
    %p56 = por %p54, %p55
    %p57 = scmp.ne.s32.totalorder %s46, %s49
    %p58 = scmp.eq.s32.totalorder %s15, 1
    %p59 = por %p57, %p58
    %p60 = scmp.ne.s32.totalorder %s49, %s50
    %p61 = scmp.eq.s32.totalorder %s15, 0
    %p62 = por %p60, %p61
    %p63 = scmp.ne.s32.totalorder %s49, %s50
    %p64 = scmp.eq.s32.totalorder %s16, 1
    %p65 = por %p63, %p64
    %p67 = scmp.ne.s32.totalorder %s50, %s66
    %p68 = scmp.eq.s32.totalorder %s16, 0
    %p69 = por %p67, %p68
    %s70 = ssub.s32 %s10, %s17
    %p71 = scmp.eq.s32.totalorder %s70, 0
    %s73 = sadd.s32 %s72, 1
    %s74 = scalar_select %p71, %s72, %s73
    %p77 = pneg %p71
    %p78 = scmp.eq.s32.totalorder %s10, 1
    %p79 = por %p77, %p78
    %p80 = scmp.ne.s32.totalorder %s72, %s75
    %p81 = scmp.eq.s32.totalorder %s10, 0
    %p82 = por %p80, %p81
    %p83 = scmp.ne.s32.totalorder %s72, %s75
    %p84 = scmp.eq.s32.totalorder %s15, 1
    %p85 = por %p83, %p84
    %p86 = scmp.ne.s32.totalorder %s75, %s76
    %p87 = scmp.eq.s32.totalorder %s15, 0
    %p88 = por %p86, %p87
    %p89 = scmp.ne.s32.totalorder %s75, %s76
    %p90 = scmp.eq.s32.totalorder %s16, 1
    %p91 = por %p89, %p90
    %p93 = scmp.ne.s32.totalorder %s76, %s92
    %p94 = scmp.eq.s32.totalorder %s16, 0
    %p95 = por %p93, %p94
    %s96 = ssub.s32 %s10, %s17
    %p97 = scmp.eq.s32.totalorder %s96, 0
    %s99 = sadd.s32 %s98, 1
    %s100 = scalar_select %p97, %s98, %s99
    %p103 = pneg %p97
    %p104 = scmp.eq.s32.totalorder %s10, 1
    %p105 = por %p103, %p104
    %p106 = scmp.ne.s32.totalorder %s98, %s101
    %p107 = scmp.eq.s32.totalorder %s10, 0
    %p108 = por %p106, %p107
    %p109 = scmp.ne.s32.totalorder %s98, %s101
    %p110 = scmp.eq.s32.totalorder %s15, 1
    %p111 = por %p109, %p110
    %p112 = scmp.ne.s32.totalorder %s101, %s102
    %p113 = scmp.eq.s32.totalorder %s15, 0
    %p114 = por %p112, %p113
    %p115 = scmp.ne.s32.totalorder %s101, %s102
    %p116 = scmp.eq.s32.totalorder %s16, 1
    %p117 = por %p115, %p116
    %p119 = scmp.ne.s32.totalorder %s102, %s118
    %p120 = scmp.eq.s32.totalorder %s16, 0
    %p121 = por %p119, %p120
    %s122 = ssub.s32 %s10, %s17
    %p123 = scmp.eq.s32.totalorder %s122, 0
    %s125 = sadd.s32 %s124, 1
    %s126 = scalar_select %p123, %s124, %s125
    %p129 = pneg %p123
    %p130 = scmp.eq.s32.totalorder %s10, 1
    %p131 = por %p129, %p130
    %p132 = scmp.ne.s32.totalorder %s124, %s127
    %p133 = scmp.eq.s32.totalorder %s10, 0
    %p134 = por %p132, %p133
    %p135 = scmp.ne.s32.totalorder %s124, %s127
    %p136 = scmp.eq.s32.totalorder %s15, 1
    %p137 = por %p135, %p136
    %p138 = scmp.ne.s32.totalorder %s127, %s128
    %p139 = scmp.eq.s32.totalorder %s15, 0
    %p140 = por %p138, %p139
    %p141 = scmp.ne.s32.totalorder %s127, %s128
    %p142 = scmp.eq.s32.totalorder %s16, 1
    %p143 = por %p141, %p142
    %p145 = scmp.ne.s32.totalorder %s128, %s144
    %p146 = scmp.eq.s32.totalorder %s16, 0
    %p147 = por %p145, %p146
    %p148 = scmp.le.s32.totalorder 1, %s10
    %p149 = scmp.lt.s32.totalorder %s10, 3
    %p150 = pnand %p148, %p149
    %p151 = pneg %p150
    // Predicated region
    $region9: #{mwt_transform_cross_forward.11} parent=5 // pred_check
      _
    $region10: #{mwt_transform_cross_forward.11} parent=5 // pred_check_branch
      %153 = sbr.rel (%p150) target = $region12
    $region11: #{mwt_transform_cross_forward.11} parent=5 // pred_region
      %s154 = ssub.s32 %s10, 1
    $region12: #{mwt_transform_cross_forward.11} parent=5 // pred_fallthru
      _
    %p155 = scmp.lt.s32.totalorder %s10, 2
    // Predicated region
    $region13: #{mwt_transform_cross_forward.11} parent=5 // pred_check
      %p156 = pneg %p155
    $region14: #{mwt_transform_cross_forward.11} parent=5 // pred_check_branch
      %158 = sbr.rel (%p156) target = $region16
    $region15: #{mwt_transform_cross_forward.11} parent=5 // pred_region
      // Predicated region
      $region17: #{mwt_transform_cross_forward.11} parent=15 // pred_check
        %p159 = pneg %p30
      $region18: #{mwt_transform_cross_forward.11} parent=15 // pred_check_branch
        %161 = sbr.rel (%p159) target = $region20
      $region19: #{mwt_transform_cross_forward.11} parent=15 // pred_region
        %s162 = smul.u32 16, %s10
        %p163 = scmp.lt.s32.totalorder %s162, 31
        %s164 = scalar_select %p163, %s162, 31
        %s165 = smul.addr %s164, 4
        %s166 = scalar_lea.vmem %s0, %s165
        %s167 = smul.u32 16, %s10
      $region20: #{mwt_transform_cross_forward.11} parent=15 // pred_fallthru
        _
      // Predicated region
      $region21: #{mwt_transform_cross_forward.11} parent=15 // pred_check
        %p168 = pneg %p56
      $region22: #{mwt_transform_cross_forward.11} parent=15 // pred_check_branch
        %170 = sbr.rel (%p168) target = $region24
      $region23: #{mwt_transform_cross_forward.11} parent=15 // pred_region
        %s171 = smul.u32 16, %s10
        %p172 = scmp.lt.s32.totalorder %s171, 31
        %s173 = scalar_select %p172, %s171, 31
        %s174 = smul.addr %s173, 4
        %s175 = scalar_lea.vmem %s1, %s174
        %s176 = smul.u32 16, %s10
      $region24: #{mwt_transform_cross_forward.11} parent=15 // pred_fallthru
        _
      // Predicated region
      $region25: #{mwt_transform_cross_forward.11} parent=15 // pred_check
        %p177 = pneg %p82
      $region26: #{mwt_transform_cross_forward.11} parent=15 // pred_check_branch
        %179 = sbr.rel (%p177) target = $region28
      $region27: #{mwt_transform_cross_forward.11} parent=15 // pred_region
        %s180 = smul.u32 16, %s10
        %p181 = scmp.lt.s32.totalorder %s180, 31
        %s182 = scalar_select %p181, %s180, 31
        %s183 = smul.addr %s182, 4
        %s184 = scalar_lea.vmem %s2, %s183
        %s185 = smul.u32 16, %s10
      $region28: #{mwt_transform_cross_forward.11} parent=15 // pred_fallthru
        _
      // Predicated region
      $region29: #{mwt_transform_cross_forward.11} parent=15 // pred_check
        %p186 = pneg %p108
      $region30: #{mwt_transform_cross_forward.11} parent=15 // pred_check_branch
        %188 = sbr.rel (%p186) target = $region32
      $region31: #{mwt_transform_cross_forward.11} parent=15 // pred_region
        %s189 = smul.u32 16, %s10
        %p190 = scmp.lt.s32.totalorder %s189, 31
        %s191 = scalar_select %p190, %s189, 31
        %s192 = smul.addr %s191, 4
        %s193 = scalar_lea.vmem %s3, %s192
        %s194 = smul.u32 16, %s10
      $region32: #{mwt_transform_cross_forward.11} parent=15 // pred_fallthru
        _
    $region16: #{mwt_transform_cross_forward.11} parent=5 // pred_fallthru
      _
    %p195 = scmp.le.s32.totalorder 1, %s10
    %p196 = scmp.lt.s32.totalorder %s10, 3
    %p197 = pnand %p195, %p196
    %p198 = pneg %p197
    // Predicated region
    $region33: #{mwt_transform_cross_forward.11} parent=5 // pred_check
      _
    $region34: #{mwt_transform_cross_forward.11} parent=5 // pred_check_branch
      %200 = sbr.rel (%p197) target = $region36
    $region35: #{mwt_transform_cross_forward.11} parent=5 // pred_region
      %s201 = ssub.s32 %s10, 1
      %s202 = smul.u32 16, %s15
      %p203 = scmp.lt.s32.totalorder %s202, 31
      %s204 = scalar_select %p203, %s202, 31
      %s205 = smul.addr %s204, 4
      %s206 = scalar_lea.vmem %s0, %s205
      %p207 = pneg %p36
      %p208 = pneg %p33
      %s209 = smul.u32 16, %s15
      %p210 = scmp.lt.s32.totalorder %s209, 31
      %s211 = scalar_select %p210, %s209, 31
      %s212 = smul.addr %s211, 4
      %s213 = scalar_lea.vmem %s1, %s212
      %p214 = pneg %p62
      %p215 = pneg %p59
      %s216 = smul.u32 16, %s15
      %p217 = scmp.lt.s32.totalorder %s216, 31
      %s218 = scalar_select %p217, %s216, 31
      %s219 = smul.addr %s218, 4
      %s220 = scalar_lea.vmem %s2, %s219
      %p221 = pneg %p88
      %p222 = pneg %p85
      %s223 = smul.u32 16, %s15
      %p224 = scmp.lt.s32.totalorder %s223, 31
      %s225 = scalar_select %p224, %s223, 31
      %s226 = smul.addr %s225, 4
      %s227 = scalar_lea.vmem %s3, %s226
      %p228 = pneg %p114
      %p229 = pneg %p111
      %p230 = pneg %p140
      %p231 = pneg %p137
      %s232 = smul.u32 16, %s15
      %p233 = scmp.lt.s32.totalorder %s232, 31
      %s234 = scalar_select %p233, %s232, 31
      %s235 = smul.addr %s234, 4
      %s236 = scalar_lea.vmem %s4, %s235
      %s237 = smul.u32 16, %s15
      %p238 = scmp.lt.s32.totalorder %s237, 31
      %s239 = scalar_select %p238, %s237, 31
      %s240 = smul.addr %s239, 4
      %s241 = scalar_lea.vmem %s0, %s240
      %s242 = smul.u32 16, %s15
      %s243 = smul.u32 16, %s15
      %p244 = scmp.lt.s32.totalorder %s243, 31
      %s245 = scalar_select %p244, %s243, 31
      %s246 = smul.addr %s245, 4
      %s247 = scalar_lea.vmem %s1, %s246
      %s248 = smul.u32 16, %s15
      %s249 = smul.u32 16, %s15
      %p250 = scmp.lt.s32.totalorder %s249, 31
      %s251 = scalar_select %p250, %s249, 31
      %s252 = smul.addr %s251, 4
      %s253 = scalar_lea.vmem %s2, %s252
      %s254 = smul.u32 16, %s15
      %s255 = smul.u32 16, %s15
      %p256 = scmp.lt.s32.totalorder %s255, 31
      %s257 = scalar_select %p256, %s255, 31
      %s258 = smul.addr %s257, 4
      %s259 = scalar_lea.vmem %s3, %s258
      %s260 = smul.u32 16, %s15
      %s261 = smul.u32 16, %s15
      %p262 = scmp.lt.s32.totalorder %s261, 31
      %s263 = scalar_select %p262, %s261, 31
      %s264 = smul.addr %s263, 4
      %s265 = scalar_lea.vmem %s4, %s264
      %s266 = smul.u32 16, %s15
      %v268 = vld [vmem:[%s241] sm:$0xf]
      %v269 = vld [vmem:[%s241 + $0x4] sm:$0xf]
      %v270 = vld [vmem:[%s241 + $0x8] sm:$0xf]
      %v271 = vld [vmem:[%s241 + $0xc] sm:$0xf]
      %v272 = vld [vmem:[%s241 + $0x10] sm:$0xf]
      %v273 = vld [vmem:[%s241 + $0x14] sm:$0xf]
      %v274 = vld [vmem:[%s241 + $0x18] sm:$0xf]
      %v275 = vld [vmem:[%s241 + $0x1c] sm:$0xf]
      %v276 = vld [vmem:[%s241 + $0x20] sm:$0xf]
      %v277 = vld [vmem:[%s241 + $0x24] sm:$0xf]
      %v278 = vld [vmem:[%s241 + $0x28] sm:$0xf]
      %v279 = vld [vmem:[%s241 + $0x2c] sm:$0xf]
      %v280 = vld [vmem:[%s241 + $0x30] sm:$0xf]
      %v281 = vld [vmem:[%s241 + $0x34] sm:$0xf]
      %v282 = vld [vmem:[%s241 + $0x38] sm:$0xf]
      %v283 = vld [vmem:[%s241 + $0x3c] sm:$0xf]
      %v284 = vld [vmem:[%s247] sm:$0xf]
      %v285 = vld [vmem:[%s247 + $0x4] sm:$0xf]
      %v286 = vld [vmem:[%s247 + $0x8] sm:$0xf]
      %v287 = vld [vmem:[%s247 + $0xc] sm:$0xf]
      %v288 = vld [vmem:[%s247 + $0x10] sm:$0xf]
      %v289 = vld [vmem:[%s247 + $0x14] sm:$0xf]
      %v290 = vld [vmem:[%s247 + $0x18] sm:$0xf]
      %v291 = vld [vmem:[%s247 + $0x1c] sm:$0xf]
      %v292 = vld [vmem:[%s247 + $0x20] sm:$0xf]
      %v293 = vld [vmem:[%s247 + $0x24] sm:$0xf]
      %v294 = vld [vmem:[%s247 + $0x28] sm:$0xf]
      %v295 = vld [vmem:[%s247 + $0x2c] sm:$0xf]
      %v296 = vld [vmem:[%s247 + $0x30] sm:$0xf]
      %v297 = vld [vmem:[%s247 + $0x34] sm:$0xf]
      %v298 = vld [vmem:[%s247 + $0x38] sm:$0xf]
      %v299 = vld [vmem:[%s247 + $0x3c] sm:$0xf]
      %v300 = vld [vmem:[%s253] sm:$0xf]
      %v301 = vld [vmem:[%s253 + $0x4] sm:$0xf]
      %v302 = vld [vmem:[%s253 + $0x8] sm:$0xf]
      %v303 = vld [vmem:[%s253 + $0xc] sm:$0xf]
      %v304 = vld [vmem:[%s253 + $0x10] sm:$0xf]
      %v305 = vld [vmem:[%s253 + $0x14] sm:$0xf]
      %v306 = vld [vmem:[%s253 + $0x18] sm:$0xf]
      %v307 = vld [vmem:[%s253 + $0x1c] sm:$0xf]
      %v308 = vld [vmem:[%s253 + $0x20] sm:$0xf]
      %v309 = vld [vmem:[%s253 + $0x24] sm:$0xf]
      %v310 = vld [vmem:[%s253 + $0x28] sm:$0xf]
      %v311 = vld [vmem:[%s253 + $0x2c] sm:$0xf]
      %v312 = vld [vmem:[%s253 + $0x30] sm:$0xf]
      %v313 = vld [vmem:[%s253 + $0x34] sm:$0xf]
      %v314 = vld [vmem:[%s253 + $0x38] sm:$0xf]
      %v315 = vld [vmem:[%s253 + $0x3c] sm:$0xf]
      %v316 = vld [vmem:[%s259] sm:$0xf]
      %v317 = vld [vmem:[%s259 + $0x4] sm:$0xf]
      %v318 = vld [vmem:[%s259 + $0x8] sm:$0xf]
      %v319 = vld [vmem:[%s259 + $0xc] sm:$0xf]
      %v320 = vld [vmem:[%s259 + $0x10] sm:$0xf]
      %v321 = vld [vmem:[%s259 + $0x14] sm:$0xf]
      %v322 = vld [vmem:[%s259 + $0x18] sm:$0xf]
      %v323 = vld [vmem:[%s259 + $0x1c] sm:$0xf]
      %v324 = vld [vmem:[%s259 + $0x20] sm:$0xf]
      %v325 = vld [vmem:[%s259 + $0x24] sm:$0xf]
      %v326 = vld [vmem:[%s259 + $0x28] sm:$0xf]
      %v327 = vld [vmem:[%s259 + $0x2c] sm:$0xf]
      %v328 = vld [vmem:[%s259 + $0x30] sm:$0xf]
      %v329 = vld [vmem:[%s259 + $0x34] sm:$0xf]
      %v330 = vld [vmem:[%s259 + $0x38] sm:$0xf]
      %v331 = vld [vmem:[%s259 + $0x3c] sm:$0xf]
      %348 = vrot.lane.b32.xlu0 %v284, 4
      %v349 = vpop.permute.xlu0 %348
      %350 = vrot.lane.b32.xlu0 %v285, 4
      %v351 = vpop.permute.xlu0 %350
      %352 = vrot.lane.b32.xlu0 %v286, 4
      %v353 = vpop.permute.xlu0 %352
      %354 = vrot.lane.b32.xlu0 %v287, 4
      %v355 = vpop.permute.xlu0 %354
      %356 = vrot.lane.b32.xlu0 %v288, 4
      %v357 = vpop.permute.xlu0 %356
      %358 = vrot.lane.b32.xlu0 %v289, 4
      %v359 = vpop.permute.xlu0 %358
      %360 = vrot.lane.b32.xlu0 %v290, 4
      %v361 = vpop.permute.xlu0 %360
      %362 = vrot.lane.b32.xlu0 %v291, 4
      %v363 = vpop.permute.xlu0 %362
      %364 = vrot.lane.b32.xlu0 %v292, 4
      %v365 = vpop.permute.xlu0 %364
      %366 = vrot.lane.b32.xlu0 %v293, 4
      %v367 = vpop.permute.xlu0 %366
      %368 = vrot.lane.b32.xlu0 %v294, 4
      %v369 = vpop.permute.xlu0 %368
      %370 = vrot.lane.b32.xlu0 %v295, 4
      %v371 = vpop.permute.xlu0 %370
      %372 = vrot.lane.b32.xlu0 %v296, 4
      %v373 = vpop.permute.xlu0 %372
      %374 = vrot.lane.b32.xlu0 %v297, 4
      %v375 = vpop.permute.xlu0 %374
      %376 = vrot.lane.b32.xlu0 %v298, 4
      %v377 = vpop.permute.xlu0 %376
      %378 = vrot.lane.b32.xlu0 %v299, 4
      %v379 = vpop.permute.xlu0 %378
      %vm396 = vcmask 31744
      %v397 = vsel %vm396, %v268, %v349
      %v398 = vsel %vm396, %v269, %v351
      %v399 = vsel %vm396, %v270, %v353
      %v400 = vsel %vm396, %v271, %v355
      %v401 = vsel %vm396, %v272, %v357
      %v402 = vsel %vm396, %v273, %v359
      %v403 = vsel %vm396, %v274, %v361
      %v404 = vsel %vm396, %v275, %v363
      %v405 = vsel %vm396, %v276, %v365
      %v406 = vsel %vm396, %v277, %v367
      %v407 = vsel %vm396, %v278, %v369
      %v408 = vsel %vm396, %v279, %v371
      %v409 = vsel %vm396, %v280, %v373
      %v410 = vsel %vm396, %v281, %v375
      %v411 = vsel %vm396, %v282, %v377
      %v412 = vsel %vm396, %v283, %v379
      %v413 = vpack.c.bf16 %v397, %v397
      %v414 = vpack.c.bf16 %v398, %v398
      %v415 = vpack.c.bf16 %v399, %v399
      %v416 = vpack.c.bf16 %v400, %v400
      %v417 = vpack.c.bf16 %v401, %v401
      %v418 = vpack.c.bf16 %v402, %v402
      %v419 = vpack.c.bf16 %v403, %v403
      %v420 = vpack.c.bf16 %v404, %v404
      %v421 = vpack.c.bf16 %v405, %v405
      %v422 = vpack.c.bf16 %v406, %v406
      %v423 = vpack.c.bf16 %v407, %v407
      %v424 = vpack.c.bf16 %v408, %v408
      %v425 = vpack.c.bf16 %v409, %v409
      %v426 = vpack.c.bf16 %v410, %v410
      %v427 = vpack.c.bf16 %v411, %v411
      %v428 = vpack.c.bf16 %v412, %v412
      %v429 = vsub.f32 0.0, %v316
      %v430 = vsub.f32 0.0, %v317
      %v431 = vsub.f32 0.0, %v318
      %v432 = vsub.f32 0.0, %v319
      %v433 = vsub.f32 0.0, %v320
      %v434 = vsub.f32 0.0, %v321
      %v435 = vsub.f32 0.0, %v322
      %v436 = vsub.f32 0.0, %v323
      %v437 = vsub.f32 0.0, %v324
      %v438 = vsub.f32 0.0, %v325
      %v439 = vsub.f32 0.0, %v326
      %v440 = vsub.f32 0.0, %v327
      %v441 = vsub.f32 0.0, %v328
      %v442 = vsub.f32 0.0, %v329
      %v443 = vsub.f32 0.0, %v330
      %v444 = vsub.f32 0.0, %v331
      %461 = vrot.lane.b32.xlu0 %v429, 4
      %v462 = vpop.permute.xlu0 %461
      %463 = vrot.lane.b32.xlu0 %v430, 4
      %v464 = vpop.permute.xlu0 %463
      %465 = vrot.lane.b32.xlu0 %v431, 4
      %v466 = vpop.permute.xlu0 %465
      %467 = vrot.lane.b32.xlu0 %v432, 4
      %v468 = vpop.permute.xlu0 %467
      %469 = vrot.lane.b32.xlu0 %v433, 4
      %v470 = vpop.permute.xlu0 %469
      %471 = vrot.lane.b32.xlu0 %v434, 4
      %v472 = vpop.permute.xlu0 %471
      %473 = vrot.lane.b32.xlu0 %v435, 4
      %v474 = vpop.permute.xlu0 %473
      %475 = vrot.lane.b32.xlu0 %v436, 4
      %v476 = vpop.permute.xlu0 %475
      %477 = vrot.lane.b32.xlu0 %v437, 4
      %v478 = vpop.permute.xlu0 %477
      %479 = vrot.lane.b32.xlu0 %v438, 4
      %v480 = vpop.permute.xlu0 %479
      %481 = vrot.lane.b32.xlu0 %v439, 4
      %v482 = vpop.permute.xlu0 %481
      %483 = vrot.lane.b32.xlu0 %v440, 4
      %v484 = vpop.permute.xlu0 %483
      %485 = vrot.lane.b32.xlu0 %v441, 4
      %v486 = vpop.permute.xlu0 %485
      %487 = vrot.lane.b32.xlu0 %v442, 4
      %v488 = vpop.permute.xlu0 %487
      %489 = vrot.lane.b32.xlu0 %v443, 4
      %v490 = vpop.permute.xlu0 %489
      %491 = vrot.lane.b32.xlu0 %v444, 4
      %v492 = vpop.permute.xlu0 %491
      %v509 = vsel %vm396, %v300, %v462
      %v510 = vsel %vm396, %v301, %v464
      %v511 = vsel %vm396, %v302, %v466
      %v512 = vsel %vm396, %v303, %v468
      %v513 = vsel %vm396, %v304, %v470
      %v514 = vsel %vm396, %v305, %v472
      %v515 = vsel %vm396, %v306, %v474
      %v516 = vsel %vm396, %v307, %v476
      %v517 = vsel %vm396, %v308, %v478
      %v518 = vsel %vm396, %v309, %v480
      %v519 = vsel %vm396, %v310, %v482
      %v520 = vsel %vm396, %v311, %v484
      %v521 = vsel %vm396, %v312, %v486
      %v522 = vsel %vm396, %v313, %v488
      %v523 = vsel %vm396, %v314, %v490
      %v524 = vsel %vm396, %v315, %v492
      %v525 = vpack.c.bf16 %v509, %v509
      %v526 = vpack.c.bf16 %v510, %v510
      %v527 = vpack.c.bf16 %v511, %v511
      %v528 = vpack.c.bf16 %v512, %v512
      %v529 = vpack.c.bf16 %v513, %v513
      %v530 = vpack.c.bf16 %v514, %v514
      %v531 = vpack.c.bf16 %v515, %v515
      %v532 = vpack.c.bf16 %v516, %v516
      %v533 = vpack.c.bf16 %v517, %v517
      %v534 = vpack.c.bf16 %v518, %v518
      %v535 = vpack.c.bf16 %v519, %v519
      %v536 = vpack.c.bf16 %v520, %v520
      %v537 = vpack.c.bf16 %v521, %v521
      %v538 = vpack.c.bf16 %v522, %v522
      %v539 = vpack.c.bf16 %v523, %v523
      %v540 = vpack.c.bf16 %v524, %v524
      %557 = vrot.lane.b32.xlu0 %v300, 4
      %v558 = vpop.permute.xlu0 %557
      %559 = vrot.lane.b32.xlu0 %v301, 4
      %v560 = vpop.permute.xlu0 %559
      %561 = vrot.lane.b32.xlu0 %v302, 4
      %v562 = vpop.permute.xlu0 %561
      %563 = vrot.lane.b32.xlu0 %v303, 4
      %v564 = vpop.permute.xlu0 %563
      %565 = vrot.lane.b32.xlu0 %v304, 4
      %v566 = vpop.permute.xlu0 %565
      %567 = vrot.lane.b32.xlu0 %v305, 4
      %v568 = vpop.permute.xlu0 %567
      %569 = vrot.lane.b32.xlu0 %v306, 4
      %v570 = vpop.permute.xlu0 %569
      %571 = vrot.lane.b32.xlu0 %v307, 4
      %v572 = vpop.permute.xlu0 %571
      %573 = vrot.lane.b32.xlu0 %v308, 4
      %v574 = vpop.permute.xlu0 %573
      %575 = vrot.lane.b32.xlu0 %v309, 4
      %v576 = vpop.permute.xlu0 %575
      %577 = vrot.lane.b32.xlu0 %v310, 4
      %v578 = vpop.permute.xlu0 %577
      %579 = vrot.lane.b32.xlu0 %v311, 4
      %v580 = vpop.permute.xlu0 %579
      %581 = vrot.lane.b32.xlu0 %v312, 4
      %v582 = vpop.permute.xlu0 %581
      %583 = vrot.lane.b32.xlu0 %v313, 4
      %v584 = vpop.permute.xlu0 %583
      %585 = vrot.lane.b32.xlu0 %v314, 4
      %v586 = vpop.permute.xlu0 %585
      %587 = vrot.lane.b32.xlu0 %v315, 4
      %v588 = vpop.permute.xlu0 %587
      %v605 = vsel %vm396, %v316, %v558
      %v606 = vsel %vm396, %v317, %v560
      %v607 = vsel %vm396, %v318, %v562
      %v608 = vsel %vm396, %v319, %v564
      %v609 = vsel %vm396, %v320, %v566
      %v610 = vsel %vm396, %v321, %v568
      %v611 = vsel %vm396, %v322, %v570
      %v612 = vsel %vm396, %v323, %v572
      %v613 = vsel %vm396, %v324, %v574
      %v614 = vsel %vm396, %v325, %v576
      %v615 = vsel %vm396, %v326, %v578
      %v616 = vsel %vm396, %v327, %v580
      %v617 = vsel %vm396, %v328, %v582
      %v618 = vsel %vm396, %v329, %v584
      %v619 = vsel %vm396, %v330, %v586
      %v620 = vsel %vm396, %v331, %v588
      %v621 = vpack.c.bf16 %v605, %v605
      %v622 = vpack.c.bf16 %v606, %v606
      %v623 = vpack.c.bf16 %v607, %v607
      %v624 = vpack.c.bf16 %v608, %v608
      %v625 = vpack.c.bf16 %v609, %v609
      %v626 = vpack.c.bf16 %v610, %v610
      %v627 = vpack.c.bf16 %v611, %v611
      %v628 = vpack.c.bf16 %v612, %v612
      %v629 = vpack.c.bf16 %v613, %v613
      %v630 = vpack.c.bf16 %v614, %v614
      %v631 = vpack.c.bf16 %v615, %v615
      %v632 = vpack.c.bf16 %v616, %v616
      %v633 = vpack.c.bf16 %v617, %v617
      %v634 = vpack.c.bf16 %v618, %v618
      %v635 = vpack.c.bf16 %v619, %v619
      %v636 = vpack.c.bf16 %v620, %v620
      %vm637 = vcmask 64512
      %v639 = vsel %vm637, %v413, 0
      %v642 = vsel %vm637, %v525, 0
      %644 = vmatpush.bf16.xpose.msra.mxu0 0
      %645 = vmatpush.bf16.xpose.msra.mxu0 0
      %646 = vmatpush.bf16.xpose.msra.mxu0 0
      %647 = vmatpush.bf16.xpose.msra.mxu0 0
      %648 = vmatpush.bf16.xpose.msra.mxu0 0
      %649 = vmatpush.bf16.xpose.msra.mxu0 0
      %650 = vmatpush.bf16.xpose.msra.mxu0 0
      %651 = vmatpush.bf16.xpose.msra.mxu0 %v642
      %652 = vmatmul.bf16.gmra.mxu0 %v639
      %v653 = vpop.f32.mrf.mxu0
      %v654 = vadd.f32 0.0, %v653
      %v655 = vpop.f32.mrf.mxu0
      %656 = vdwg.mxu0
      %v658 = vsel %vm637, %v414, 0
      %v661 = vsel %vm637, %v526, 0
      %663 = vmatpush.bf16.xpose.msra.mxu0 0
      %664 = vmatpush.bf16.xpose.msra.mxu0 0
      %665 = vmatpush.bf16.xpose.msra.mxu0 0
      %666 = vmatpush.bf16.xpose.msra.mxu0 0
      %667 = vmatpush.bf16.xpose.msra.mxu0 0
      %668 = vmatpush.bf16.xpose.msra.mxu0 0
      %669 = vmatpush.bf16.xpose.msra.mxu0 0
      %670 = vmatpush.bf16.xpose.msra.mxu0 %v661
      %671 = vmatmul.bf16.gmra.mxu0 %v658
      %v672 = vpop.f32.mrf.mxu0
      %v673 = vadd.f32 0.0, %v672
      %v674 = vpop.f32.mrf.mxu0
      %675 = vdwg.mxu0
      %v677 = vsel %vm637, %v415, 0
      %v680 = vsel %vm637, %v527, 0
      %682 = vmatpush.bf16.xpose.msra.mxu0 0
      %683 = vmatpush.bf16.xpose.msra.mxu0 0
      %684 = vmatpush.bf16.xpose.msra.mxu0 0
      %685 = vmatpush.bf16.xpose.msra.mxu0 0
      %686 = vmatpush.bf16.xpose.msra.mxu0 0
      %687 = vmatpush.bf16.xpose.msra.mxu0 0
      %688 = vmatpush.bf16.xpose.msra.mxu0 0
      %689 = vmatpush.bf16.xpose.msra.mxu0 %v680
      %690 = vmatmul.bf16.gmra.mxu0 %v677
      %v691 = vpop.f32.mrf.mxu0
      %v692 = vadd.f32 0.0, %v691
      %v693 = vpop.f32.mrf.mxu0
      %694 = vdwg.mxu0
      %v696 = vsel %vm637, %v416, 0
      %v699 = vsel %vm637, %v528, 0
      %701 = vmatpush.bf16.xpose.msra.mxu0 0
      %702 = vmatpush.bf16.xpose.msra.mxu0 0
      %703 = vmatpush.bf16.xpose.msra.mxu0 0
      %704 = vmatpush.bf16.xpose.msra.mxu0 0
      %705 = vmatpush.bf16.xpose.msra.mxu0 0
      %706 = vmatpush.bf16.xpose.msra.mxu0 0
      %707 = vmatpush.bf16.xpose.msra.mxu0 0
      %708 = vmatpush.bf16.xpose.msra.mxu0 %v699
      %709 = vmatmul.bf16.gmra.mxu0 %v696
      %v710 = vpop.f32.mrf.mxu0
      %v711 = vadd.f32 0.0, %v710
      %v712 = vpop.f32.mrf.mxu0
      %713 = vdwg.mxu0
      %v715 = vsel %vm637, %v417, 0
      %v718 = vsel %vm637, %v529, 0
      %720 = vmatpush.bf16.xpose.msra.mxu0 0
      %721 = vmatpush.bf16.xpose.msra.mxu0 0
      %722 = vmatpush.bf16.xpose.msra.mxu0 0
      %723 = vmatpush.bf16.xpose.msra.mxu0 0
      %724 = vmatpush.bf16.xpose.msra.mxu0 0
      %725 = vmatpush.bf16.xpose.msra.mxu0 0
      %726 = vmatpush.bf16.xpose.msra.mxu0 0
      %727 = vmatpush.bf16.xpose.msra.mxu0 %v718
      %728 = vmatmul.bf16.gmra.mxu0 %v715
      %v729 = vpop.f32.mrf.mxu0
      %v730 = vadd.f32 0.0, %v729
      %v731 = vpop.f32.mrf.mxu0
      %732 = vdwg.mxu0
      %v734 = vsel %vm637, %v418, 0
      %v737 = vsel %vm637, %v530, 0
      %739 = vmatpush.bf16.xpose.msra.mxu0 0
      %740 = vmatpush.bf16.xpose.msra.mxu0 0
      %741 = vmatpush.bf16.xpose.msra.mxu0 0
      %742 = vmatpush.bf16.xpose.msra.mxu0 0
      %743 = vmatpush.bf16.xpose.msra.mxu0 0
      %744 = vmatpush.bf16.xpose.msra.mxu0 0
      %745 = vmatpush.bf16.xpose.msra.mxu0 0
      %746 = vmatpush.bf16.xpose.msra.mxu0 %v737
      %747 = vmatmul.bf16.gmra.mxu0 %v734
      %v748 = vpop.f32.mrf.mxu0
      %v749 = vadd.f32 0.0, %v748
      %v750 = vpop.f32.mrf.mxu0
      %751 = vdwg.mxu0
      %v753 = vsel %vm637, %v419, 0
      %v756 = vsel %vm637, %v531, 0
      %758 = vmatpush.bf16.xpose.msra.mxu0 0
      %759 = vmatpush.bf16.xpose.msra.mxu0 0
      %760 = vmatpush.bf16.xpose.msra.mxu0 0
      %761 = vmatpush.bf16.xpose.msra.mxu0 0
      %762 = vmatpush.bf16.xpose.msra.mxu0 0
      %763 = vmatpush.bf16.xpose.msra.mxu0 0
      %764 = vmatpush.bf16.xpose.msra.mxu0 0
      %765 = vmatpush.bf16.xpose.msra.mxu0 %v756
      %766 = vmatmul.bf16.gmra.mxu0 %v753
      %v767 = vpop.f32.mrf.mxu0
      %v768 = vadd.f32 0.0, %v767
      %v769 = vpop.f32.mrf.mxu0
      %770 = vdwg.mxu0
      %v772 = vsel %vm637, %v420, 0
      %v775 = vsel %vm637, %v532, 0
      %777 = vmatpush.bf16.xpose.msra.mxu0 0
      %778 = vmatpush.bf16.xpose.msra.mxu0 0
      %779 = vmatpush.bf16.xpose.msra.mxu0 0
      %780 = vmatpush.bf16.xpose.msra.mxu0 0
      %781 = vmatpush.bf16.xpose.msra.mxu0 0
      %782 = vmatpush.bf16.xpose.msra.mxu0 0
      %783 = vmatpush.bf16.xpose.msra.mxu0 0
      %784 = vmatpush.bf16.xpose.msra.mxu0 %v775
      %785 = vmatmul.bf16.gmra.mxu0 %v772
      %v786 = vpop.f32.mrf.mxu0
      %v787 = vadd.f32 0.0, %v786
      %v788 = vpop.f32.mrf.mxu0
      %789 = vdwg.mxu0
      %v791 = vsel %vm637, %v421, 0
      %v794 = vsel %vm637, %v533, 0
      %796 = vmatpush.bf16.xpose.msra.mxu0 0
      %797 = vmatpush.bf16.xpose.msra.mxu0 0
      %798 = vmatpush.bf16.xpose.msra.mxu0 0
      %799 = vmatpush.bf16.xpose.msra.mxu0 0
      %800 = vmatpush.bf16.xpose.msra.mxu0 0
      %801 = vmatpush.bf16.xpose.msra.mxu0 0
      %802 = vmatpush.bf16.xpose.msra.mxu0 0
      %803 = vmatpush.bf16.xpose.msra.mxu0 %v794
      %804 = vmatmul.bf16.gmra.mxu0 %v791
      %v805 = vpop.f32.mrf.mxu0
      %v806 = vadd.f32 0.0, %v805
      %v807 = vpop.f32.mrf.mxu0
      %808 = vdwg.mxu0
      %v810 = vsel %vm637, %v422, 0
      %v813 = vsel %vm637, %v534, 0
      %815 = vmatpush.bf16.xpose.msra.mxu0 0
      %816 = vmatpush.bf16.xpose.msra.mxu0 0
      %817 = vmatpush.bf16.xpose.msra.mxu0 0
      %818 = vmatpush.bf16.xpose.msra.mxu0 0
      %819 = vmatpush.bf16.xpose.msra.mxu0 0
      %820 = vmatpush.bf16.xpose.msra.mxu0 0
      %821 = vmatpush.bf16.xpose.msra.mxu0 0
      %822 = vmatpush.bf16.xpose.msra.mxu0 %v813
      %823 = vmatmul.bf16.gmra.mxu0 %v810
      %v824 = vpop.f32.mrf.mxu0
      %v825 = vadd.f32 0.0, %v824
      %v826 = vpop.f32.mrf.mxu0
      %827 = vdwg.mxu0
      %v829 = vsel %vm637, %v423, 0
      %v832 = vsel %vm637, %v535, 0
      %834 = vmatpush.bf16.xpose.msra.mxu0 0
      %835 = vmatpush.bf16.xpose.msra.mxu0 0
      %836 = vmatpush.bf16.xpose.msra.mxu0 0
      %837 = vmatpush.bf16.xpose.msra.mxu0 0
      %838 = vmatpush.bf16.xpose.msra.mxu0 0
      %839 = vmatpush.bf16.xpose.msra.mxu0 0
      %840 = vmatpush.bf16.xpose.msra.mxu0 0
      %841 = vmatpush.bf16.xpose.msra.mxu0 %v832
      %842 = vmatmul.bf16.gmra.mxu0 %v829
      %v843 = vpop.f32.mrf.mxu0
      %v844 = vadd.f32 0.0, %v843
      %v845 = vpop.f32.mrf.mxu0
      %846 = vdwg.mxu0
      %v848 = vsel %vm637, %v424, 0
      %v851 = vsel %vm637, %v536, 0
      %853 = vmatpush.bf16.xpose.msra.mxu0 0
      %854 = vmatpush.bf16.xpose.msra.mxu0 0
      %855 = vmatpush.bf16.xpose.msra.mxu0 0
      %856 = vmatpush.bf16.xpose.msra.mxu0 0
      %857 = vmatpush.bf16.xpose.msra.mxu0 0
      %858 = vmatpush.bf16.xpose.msra.mxu0 0
      %859 = vmatpush.bf16.xpose.msra.mxu0 0
      %860 = vmatpush.bf16.xpose.msra.mxu0 %v851
      %861 = vmatmul.bf16.gmra.mxu0 %v848
      %v862 = vpop.f32.mrf.mxu0
      %v863 = vadd.f32 0.0, %v862
      %v864 = vpop.f32.mrf.mxu0
      %865 = vdwg.mxu0
      %v867 = vsel %vm637, %v425, 0
      %v870 = vsel %vm637, %v537, 0
      %872 = vmatpush.bf16.xpose.msra.mxu0 0
      %873 = vmatpush.bf16.xpose.msra.mxu0 0
      %874 = vmatpush.bf16.xpose.msra.mxu0 0
      %875 = vmatpush.bf16.xpose.msra.mxu0 0
      %876 = vmatpush.bf16.xpose.msra.mxu0 0
      %877 = vmatpush.bf16.xpose.msra.mxu0 0
      %878 = vmatpush.bf16.xpose.msra.mxu0 0
      %879 = vmatpush.bf16.xpose.msra.mxu0 %v870
      %880 = vmatmul.bf16.gmra.mxu0 %v867
      %v881 = vpop.f32.mrf.mxu0
      %v882 = vadd.f32 0.0, %v881
      %v883 = vpop.f32.mrf.mxu0
      %884 = vdwg.mxu0
      %v886 = vsel %vm637, %v426, 0
      %v889 = vsel %vm637, %v538, 0
      %891 = vmatpush.bf16.xpose.msra.mxu0 0
      %892 = vmatpush.bf16.xpose.msra.mxu0 0
      %893 = vmatpush.bf16.xpose.msra.mxu0 0
      %894 = vmatpush.bf16.xpose.msra.mxu0 0
      %895 = vmatpush.bf16.xpose.msra.mxu0 0
      %896 = vmatpush.bf16.xpose.msra.mxu0 0
      %897 = vmatpush.bf16.xpose.msra.mxu0 0
      %898 = vmatpush.bf16.xpose.msra.mxu0 %v889
      %899 = vmatmul.bf16.gmra.mxu0 %v886
      %v900 = vpop.f32.mrf.mxu0
      %v901 = vadd.f32 0.0, %v900
      %v902 = vpop.f32.mrf.mxu0
      %903 = vdwg.mxu0
      %v905 = vsel %vm637, %v427, 0
      %v908 = vsel %vm637, %v539, 0
      %910 = vmatpush.bf16.xpose.msra.mxu0 0
      %911 = vmatpush.bf16.xpose.msra.mxu0 0
      %912 = vmatpush.bf16.xpose.msra.mxu0 0
      %913 = vmatpush.bf16.xpose.msra.mxu0 0
      %914 = vmatpush.bf16.xpose.msra.mxu0 0
      %915 = vmatpush.bf16.xpose.msra.mxu0 0
      %916 = vmatpush.bf16.xpose.msra.mxu0 0
      %917 = vmatpush.bf16.xpose.msra.mxu0 %v908
      %918 = vmatmul.bf16.gmra.mxu0 %v905
      %v919 = vpop.f32.mrf.mxu0
      %v920 = vadd.f32 0.0, %v919
      %v921 = vpop.f32.mrf.mxu0
      %922 = vdwg.mxu0
      %v924 = vsel %vm637, %v428, 0
      %v927 = vsel %vm637, %v540, 0
      %929 = vmatpush.bf16.xpose.msra.mxu0 0
      %930 = vmatpush.bf16.xpose.msra.mxu0 0
      %931 = vmatpush.bf16.xpose.msra.mxu0 0
      %932 = vmatpush.bf16.xpose.msra.mxu0 0
      %933 = vmatpush.bf16.xpose.msra.mxu0 0
      %934 = vmatpush.bf16.xpose.msra.mxu0 0
      %935 = vmatpush.bf16.xpose.msra.mxu0 0
      %936 = vmatpush.bf16.xpose.msra.mxu0 %v927
      %937 = vmatmul.bf16.gmra.mxu0 %v924
      %v938 = vpop.f32.mrf.mxu0
      %v939 = vadd.f32 0.0, %v938
      %v940 = vpop.f32.mrf.mxu0
      %941 = vdwg.mxu0
      %v943 = vsel %vm637, %v621, 0
      %945 = vmatpush.bf16.xpose.msra.mxu0 0
      %946 = vmatpush.bf16.xpose.msra.mxu0 0
      %947 = vmatpush.bf16.xpose.msra.mxu0 0
      %948 = vmatpush.bf16.xpose.msra.mxu0 0
      %949 = vmatpush.bf16.xpose.msra.mxu0 0
      %950 = vmatpush.bf16.xpose.msra.mxu0 0
      %951 = vmatpush.bf16.xpose.msra.mxu0 0
      %952 = vmatpush.bf16.xpose.msra.mxu0 %v943
      %953 = vmatmul.bf16.gmra.mxu0 %v639
      %v954 = vpop.f32.mrf.mxu0
      %v955 = vadd.f32 0.0, %v954
      %v956 = vpop.f32.mrf.mxu0
      %957 = vdwg.mxu0
      %v959 = vsel %vm637, %v622, 0
      %961 = vmatpush.bf16.xpose.msra.mxu0 0
      %962 = vmatpush.bf16.xpose.msra.mxu0 0
      %963 = vmatpush.bf16.xpose.msra.mxu0 0
      %964 = vmatpush.bf16.xpose.msra.mxu0 0
      %965 = vmatpush.bf16.xpose.msra.mxu0 0
      %966 = vmatpush.bf16.xpose.msra.mxu0 0
      %967 = vmatpush.bf16.xpose.msra.mxu0 0
      %968 = vmatpush.bf16.xpose.msra.mxu0 %v959
      %969 = vmatmul.bf16.gmra.mxu0 %v658
      %v970 = vpop.f32.mrf.mxu0
      %v971 = vadd.f32 0.0, %v970
      %v972 = vpop.f32.mrf.mxu0
      %973 = vdwg.mxu0
      %v975 = vsel %vm637, %v623, 0
      %977 = vmatpush.bf16.xpose.msra.mxu0 0
      %978 = vmatpush.bf16.xpose.msra.mxu0 0
      %979 = vmatpush.bf16.xpose.msra.mxu0 0
      %980 = vmatpush.bf16.xpose.msra.mxu0 0
      %981 = vmatpush.bf16.xpose.msra.mxu0 0
      %982 = vmatpush.bf16.xpose.msra.mxu0 0
      %983 = vmatpush.bf16.xpose.msra.mxu0 0
      %984 = vmatpush.bf16.xpose.msra.mxu0 %v975
      %985 = vmatmul.bf16.gmra.mxu0 %v677
      %v986 = vpop.f32.mrf.mxu0
      %v987 = vadd.f32 0.0, %v986
      %v988 = vpop.f32.mrf.mxu0
      %989 = vdwg.mxu0
      %v991 = vsel %vm637, %v624, 0
      %993 = vmatpush.bf16.xpose.msra.mxu0 0
      %994 = vmatpush.bf16.xpose.msra.mxu0 0
      %995 = vmatpush.bf16.xpose.msra.mxu0 0
      %996 = vmatpush.bf16.xpose.msra.mxu0 0
      %997 = vmatpush.bf16.xpose.msra.mxu0 0
      %998 = vmatpush.bf16.xpose.msra.mxu0 0
      %999 = vmatpush.bf16.xpose.msra.mxu0 0
      %1000 = vmatpush.bf16.xpose.msra.mxu0 %v991
      %1001 = vmatmul.bf16.gmra.mxu0 %v696
      %v1002 = vpop.f32.mrf.mxu0
      %v1003 = vadd.f32 0.0, %v1002
      %v1004 = vpop.f32.mrf.mxu0
      %1005 = vdwg.mxu0
      %v1007 = vsel %vm637, %v625, 0
      %1009 = vmatpush.bf16.xpose.msra.mxu0 0
      %1010 = vmatpush.bf16.xpose.msra.mxu0 0
      %1011 = vmatpush.bf16.xpose.msra.mxu0 0
      %1012 = vmatpush.bf16.xpose.msra.mxu0 0
      %1013 = vmatpush.bf16.xpose.msra.mxu0 0
      %1014 = vmatpush.bf16.xpose.msra.mxu0 0
      %1015 = vmatpush.bf16.xpose.msra.mxu0 0
      %1016 = vmatpush.bf16.xpose.msra.mxu0 %v1007
      %1017 = vmatmul.bf16.gmra.mxu0 %v715
      %v1018 = vpop.f32.mrf.mxu0
      %v1019 = vadd.f32 0.0, %v1018
      %v1020 = vpop.f32.mrf.mxu0
      %1021 = vdwg.mxu0
      %v1023 = vsel %vm637, %v626, 0
      %1025 = vmatpush.bf16.xpose.msra.mxu0 0
      %1026 = vmatpush.bf16.xpose.msra.mxu0 0
      %1027 = vmatpush.bf16.xpose.msra.mxu0 0
      %1028 = vmatpush.bf16.xpose.msra.mxu0 0
      %1029 = vmatpush.bf16.xpose.msra.mxu0 0
      %1030 = vmatpush.bf16.xpose.msra.mxu0 0
      %1031 = vmatpush.bf16.xpose.msra.mxu0 0
      %1032 = vmatpush.bf16.xpose.msra.mxu0 %v1023
      %1033 = vmatmul.bf16.gmra.mxu0 %v734
      %v1034 = vpop.f32.mrf.mxu0
      %v1035 = vadd.f32 0.0, %v1034
      %v1036 = vpop.f32.mrf.mxu0
      %1037 = vdwg.mxu0
      %v1039 = vsel %vm637, %v627, 0
      %1041 = vmatpush.bf16.xpose.msra.mxu0 0
      %1042 = vmatpush.bf16.xpose.msra.mxu0 0
      %1043 = vmatpush.bf16.xpose.msra.mxu0 0
      %1044 = vmatpush.bf16.xpose.msra.mxu0 0
      %1045 = vmatpush.bf16.xpose.msra.mxu0 0
      %1046 = vmatpush.bf16.xpose.msra.mxu0 0
      %1047 = vmatpush.bf16.xpose.msra.mxu0 0
      %1048 = vmatpush.bf16.xpose.msra.mxu0 %v1039
      %1049 = vmatmul.bf16.gmra.mxu0 %v753
      %v1050 = vpop.f32.mrf.mxu0
      %v1051 = vadd.f32 0.0, %v1050
      %v1052 = vpop.f32.mrf.mxu0
      %1053 = vdwg.mxu0
      %v1055 = vsel %vm637, %v628, 0
      %1057 = vmatpush.bf16.xpose.msra.mxu0 0
      %1058 = vmatpush.bf16.xpose.msra.mxu0 0
      %1059 = vmatpush.bf16.xpose.msra.mxu0 0
      %1060 = vmatpush.bf16.xpose.msra.mxu0 0
      %1061 = vmatpush.bf16.xpose.msra.mxu0 0
      %1062 = vmatpush.bf16.xpose.msra.mxu0 0
      %1063 = vmatpush.bf16.xpose.msra.mxu0 0
      %1064 = vmatpush.bf16.xpose.msra.mxu0 %v1055
      %1065 = vmatmul.bf16.gmra.mxu0 %v772
      %v1066 = vpop.f32.mrf.mxu0
      %v1067 = vadd.f32 0.0, %v1066
      %v1068 = vpop.f32.mrf.mxu0
      %1069 = vdwg.mxu0
      %v1071 = vsel %vm637, %v629, 0
      %1073 = vmatpush.bf16.xpose.msra.mxu0 0
      %1074 = vmatpush.bf16.xpose.msra.mxu0 0
      %1075 = vmatpush.bf16.xpose.msra.mxu0 0
      %1076 = vmatpush.bf16.xpose.msra.mxu0 0
      %1077 = vmatpush.bf16.xpose.msra.mxu0 0
      %1078 = vmatpush.bf16.xpose.msra.mxu0 0
      %1079 = vmatpush.bf16.xpose.msra.mxu0 0
      %1080 = vmatpush.bf16.xpose.msra.mxu0 %v1071
      %1081 = vmatmul.bf16.gmra.mxu0 %v791
      %v1082 = vpop.f32.mrf.mxu0
      %v1083 = vadd.f32 0.0, %v1082
      %v1084 = vpop.f32.mrf.mxu0
      %1085 = vdwg.mxu0
      %v1087 = vsel %vm637, %v630, 0
      %1089 = vmatpush.bf16.xpose.msra.mxu0 0
      %1090 = vmatpush.bf16.xpose.msra.mxu0 0
      %1091 = vmatpush.bf16.xpose.msra.mxu0 0
      %1092 = vmatpush.bf16.xpose.msra.mxu0 0
      %1093 = vmatpush.bf16.xpose.msra.mxu0 0
      %1094 = vmatpush.bf16.xpose.msra.mxu0 0
      %1095 = vmatpush.bf16.xpose.msra.mxu0 0
      %1096 = vmatpush.bf16.xpose.msra.mxu0 %v1087
      %1097 = vmatmul.bf16.gmra.mxu0 %v810
      %v1098 = vpop.f32.mrf.mxu0
      %v1099 = vadd.f32 0.0, %v1098
      %v1100 = vpop.f32.mrf.mxu0
      %1101 = vdwg.mxu0
      %v1103 = vsel %vm637, %v631, 0
      %1105 = vmatpush.bf16.xpose.msra.mxu0 0
      %1106 = vmatpush.bf16.xpose.msra.mxu0 0
      %1107 = vmatpush.bf16.xpose.msra.mxu0 0
      %1108 = vmatpush.bf16.xpose.msra.mxu0 0
      %1109 = vmatpush.bf16.xpose.msra.mxu0 0
      %1110 = vmatpush.bf16.xpose.msra.mxu0 0
      %1111 = vmatpush.bf16.xpose.msra.mxu0 0
      %1112 = vmatpush.bf16.xpose.msra.mxu0 %v1103
      %1113 = vmatmul.bf16.gmra.mxu0 %v829
      %v1114 = vpop.f32.mrf.mxu0
      %v1115 = vadd.f32 0.0, %v1114
      %v1116 = vpop.f32.mrf.mxu0
      %1117 = vdwg.mxu0
      %v1119 = vsel %vm637, %v632, 0
      %1121 = vmatpush.bf16.xpose.msra.mxu0 0
      %1122 = vmatpush.bf16.xpose.msra.mxu0 0
      %1123 = vmatpush.bf16.xpose.msra.mxu0 0
      %1124 = vmatpush.bf16.xpose.msra.mxu0 0
      %1125 = vmatpush.bf16.xpose.msra.mxu0 0
      %1126 = vmatpush.bf16.xpose.msra.mxu0 0
      %1127 = vmatpush.bf16.xpose.msra.mxu0 0
      %1128 = vmatpush.bf16.xpose.msra.mxu0 %v1119
      %1129 = vmatmul.bf16.gmra.mxu0 %v848
      %v1130 = vpop.f32.mrf.mxu0
      %v1131 = vadd.f32 0.0, %v1130
      %v1132 = vpop.f32.mrf.mxu0
      %1133 = vdwg.mxu0
      %v1135 = vsel %vm637, %v633, 0
      %1137 = vmatpush.bf16.xpose.msra.mxu0 0
      %1138 = vmatpush.bf16.xpose.msra.mxu0 0
      %1139 = vmatpush.bf16.xpose.msra.mxu0 0
      %1140 = vmatpush.bf16.xpose.msra.mxu0 0
      %1141 = vmatpush.bf16.xpose.msra.mxu0 0
      %1142 = vmatpush.bf16.xpose.msra.mxu0 0
      %1143 = vmatpush.bf16.xpose.msra.mxu0 0
      %1144 = vmatpush.bf16.xpose.msra.mxu0 %v1135
      %1145 = vmatmul.bf16.gmra.mxu0 %v867
      %v1146 = vpop.f32.mrf.mxu0
      %v1147 = vadd.f32 0.0, %v1146
      %v1148 = vpop.f32.mrf.mxu0
      %1149 = vdwg.mxu0
      %v1151 = vsel %vm637, %v634, 0
      %1153 = vmatpush.bf16.xpose.msra.mxu0 0
      %1154 = vmatpush.bf16.xpose.msra.mxu0 0
      %1155 = vmatpush.bf16.xpose.msra.mxu0 0
      %1156 = vmatpush.bf16.xpose.msra.mxu0 0
      %1157 = vmatpush.bf16.xpose.msra.mxu0 0
      %1158 = vmatpush.bf16.xpose.msra.mxu0 0
      %1159 = vmatpush.bf16.xpose.msra.mxu0 0
      %1160 = vmatpush.bf16.xpose.msra.mxu0 %v1151
      %1161 = vmatmul.bf16.gmra.mxu0 %v886
      %v1162 = vpop.f32.mrf.mxu0
      %v1163 = vadd.f32 0.0, %v1162
      %v1164 = vpop.f32.mrf.mxu0
      %1165 = vdwg.mxu0
      %v1167 = vsel %vm637, %v635, 0
      %1169 = vmatpush.bf16.xpose.msra.mxu0 0
      %1170 = vmatpush.bf16.xpose.msra.mxu0 0
      %1171 = vmatpush.bf16.xpose.msra.mxu0 0
      %1172 = vmatpush.bf16.xpose.msra.mxu0 0
      %1173 = vmatpush.bf16.xpose.msra.mxu0 0
      %1174 = vmatpush.bf16.xpose.msra.mxu0 0
      %1175 = vmatpush.bf16.xpose.msra.mxu0 0
      %1176 = vmatpush.bf16.xpose.msra.mxu0 %v1167
      %1177 = vmatmul.bf16.gmra.mxu0 %v905
      %v1178 = vpop.f32.mrf.mxu0
      %v1179 = vadd.f32 0.0, %v1178
      %v1180 = vpop.f32.mrf.mxu0
      %1181 = vdwg.mxu0
      %v1183 = vsel %vm637, %v636, 0
      %1185 = vmatpush.bf16.xpose.msra.mxu0 0
      %1186 = vmatpush.bf16.xpose.msra.mxu0 0
      %1187 = vmatpush.bf16.xpose.msra.mxu0 0
      %1188 = vmatpush.bf16.xpose.msra.mxu0 0
      %1189 = vmatpush.bf16.xpose.msra.mxu0 0
      %1190 = vmatpush.bf16.xpose.msra.mxu0 0
      %1191 = vmatpush.bf16.xpose.msra.mxu0 0
      %1192 = vmatpush.bf16.xpose.msra.mxu0 %v1183
      %1193 = vmatmul.bf16.gmra.mxu0 %v924
      %v1194 = vpop.f32.mrf.mxu0
      %v1195 = vadd.f32 0.0, %v1194
      %v1196 = vpop.f32.mrf.mxu0
      %1197 = vdwg.mxu0
      %1214 = vrot.lane.b32.xlu0 %v955, 4
      %v1215 = vpop.permute.xlu0 %1214
      %1216 = vrot.lane.b32.xlu0 %v971, 4
      %v1217 = vpop.permute.xlu0 %1216
      %1218 = vrot.lane.b32.xlu0 %v987, 4
      %v1219 = vpop.permute.xlu0 %1218
      %1220 = vrot.lane.b32.xlu0 %v1003, 4
      %v1221 = vpop.permute.xlu0 %1220
      %1222 = vrot.lane.b32.xlu0 %v1019, 4
      %v1223 = vpop.permute.xlu0 %1222
      %1224 = vrot.lane.b32.xlu0 %v1035, 4
      %v1225 = vpop.permute.xlu0 %1224
      %1226 = vrot.lane.b32.xlu0 %v1051, 4
      %v1227 = vpop.permute.xlu0 %1226
      %1228 = vrot.lane.b32.xlu0 %v1067, 4
      %v1229 = vpop.permute.xlu0 %1228
      %1230 = vrot.lane.b32.xlu0 %v1083, 4
      %v1231 = vpop.permute.xlu0 %1230
      %1232 = vrot.lane.b32.xlu0 %v1099, 4
      %v1233 = vpop.permute.xlu0 %1232
      %1234 = vrot.lane.b32.xlu0 %v1115, 4
      %v1235 = vpop.permute.xlu0 %1234
      %1236 = vrot.lane.b32.xlu0 %v1131, 4
      %v1237 = vpop.permute.xlu0 %1236
      %1238 = vrot.lane.b32.xlu0 %v1147, 4
      %v1239 = vpop.permute.xlu0 %1238
      %1240 = vrot.lane.b32.xlu0 %v1163, 4
      %v1241 = vpop.permute.xlu0 %1240
      %1242 = vrot.lane.b32.xlu0 %v1179, 4
      %v1243 = vpop.permute.xlu0 %1242
      %1244 = vrot.lane.b32.xlu0 %v1195, 4
      %v1245 = vpop.permute.xlu0 %1244
      %v1262 = vsel %vm396, %v654, %v1215
      %v1263 = vsel %vm396, %v673, %v1217
      %v1264 = vsel %vm396, %v692, %v1219
      %v1265 = vsel %vm396, %v711, %v1221
      %v1266 = vsel %vm396, %v730, %v1223
      %v1267 = vsel %vm396, %v749, %v1225
      %v1268 = vsel %vm396, %v768, %v1227
      %v1269 = vsel %vm396, %v787, %v1229
      %v1270 = vsel %vm396, %v806, %v1231
      %v1271 = vsel %vm396, %v825, %v1233
      %v1272 = vsel %vm396, %v844, %v1235
      %v1273 = vsel %vm396, %v863, %v1237
      %v1274 = vsel %vm396, %v882, %v1239
      %v1275 = vsel %vm396, %v901, %v1241
      %v1276 = vsel %vm396, %v920, %v1243
      %v1277 = vsel %vm396, %v939, %v1245
      %v1278 = vmul.f32 %v1262, 0.0009765625
      %v1279 = vmul.f32 %v1263, 0.0009765625
      %v1280 = vmul.f32 %v1264, 0.0009765625
      %v1281 = vmul.f32 %v1265, 0.0009765625
      %v1282 = vmul.f32 %v1266, 0.0009765625
      %v1283 = vmul.f32 %v1267, 0.0009765625
      %v1284 = vmul.f32 %v1268, 0.0009765625
      %v1285 = vmul.f32 %v1269, 0.0009765625
      %v1286 = vmul.f32 %v1270, 0.0009765625
      %v1287 = vmul.f32 %v1271, 0.0009765625
      %v1288 = vmul.f32 %v1272, 0.0009765625
      %v1289 = vmul.f32 %v1273, 0.0009765625
      %v1290 = vmul.f32 %v1274, 0.0009765625
      %v1291 = vmul.f32 %v1275, 0.0009765625
      %v1292 = vmul.f32 %v1276, 0.0009765625
      %v1293 = vmul.f32 %v1277, 0.0009765625
      %vm1294 = vcmask 60416
      %1295 = vst.msk [vmem:[%s265] sm:$0xf] %vm1294, %v1278
      %1296 = vst.msk [vmem:[%s265 + $0x4] sm:$0xf] %vm1294, %v1279
      %1297 = vst.msk [vmem:[%s265 + $0x8] sm:$0xf] %vm1294, %v1280
      %1298 = vst.msk [vmem:[%s265 + $0xc] sm:$0xf] %vm1294, %v1281
      %1299 = vst.msk [vmem:[%s265 + $0x10] sm:$0xf] %vm1294, %v1282
      %1300 = vst.msk [vmem:[%s265 + $0x14] sm:$0xf] %vm1294, %v1283
      %1301 = vst.msk [vmem:[%s265 + $0x18] sm:$0xf] %vm1294, %v1284
      %1302 = vst.msk [vmem:[%s265 + $0x1c] sm:$0xf] %vm1294, %v1285
      %1303 = vst.msk [vmem:[%s265 + $0x20] sm:$0xf] %vm1294, %v1286
      %1304 = vst.msk [vmem:[%s265 + $0x24] sm:$0xf] %vm1294, %v1287
      %1305 = vst.msk [vmem:[%s265 + $0x28] sm:$0xf] %vm1294, %v1288
      %1306 = vst.msk [vmem:[%s265 + $0x2c] sm:$0xf] %vm1294, %v1289
      %1307 = vst.msk [vmem:[%s265 + $0x30] sm:$0xf] %vm1294, %v1290
      %1308 = vst.msk [vmem:[%s265 + $0x34] sm:$0xf] %vm1294, %v1291
      %1309 = vst.msk [vmem:[%s265 + $0x38] sm:$0xf] %vm1294, %v1292
      %1310 = vst.msk [vmem:[%s265 + $0x3c] sm:$0xf] %vm1294, %v1293
      %s1311 = smul.u32 16, %s15
      %p1312 = scmp.lt.s32.totalorder %s1311, 31
      %s1313 = scalar_select %p1312, %s1311, 31
      %s1314 = smul.addr %s1313, 4
      %s1315 = scalar_lea.vmem %s4, %s1314
      // Predicated region
      $region37: #{mwt_transform_cross_forward.11} parent=35 // pred_check
        %p1316 = pneg %p137
      $region38: #{mwt_transform_cross_forward.11} parent=35 // pred_check_branch
        %1318 = sbr.rel (%p1316) target = $region40
      $region39: #{mwt_transform_cross_forward.11} parent=35 // pred_region
        %s1319 = smul.u32 16, %s15
      $region40: #{mwt_transform_cross_forward.11} parent=35 // pred_fallthru
        _
    $region36: #{mwt_transform_cross_forward.11} parent=5 // pred_fallthru
      _
    %p1320 = scmp.le.s32.totalorder 2, %s10
    // Predicated region
    $region41: #{mwt_transform_cross_forward.11} parent=5 // pred_check
      %p1321 = pneg %p1320
    $region42: #{mwt_transform_cross_forward.11} parent=5 // pred_check_branch
      %1323 = sbr.rel (%p1321) target = $region44
    $region43: #{mwt_transform_cross_forward.11} parent=5 // pred_region
      %s1324 = ssub.s32 %s10, 2
      // Predicated region
      $region45: #{mwt_transform_cross_forward.11} parent=43 // pred_check
        %p1325 = pneg %p143
      $region46: #{mwt_transform_cross_forward.11} parent=43 // pred_check_branch
        %1327 = sbr.rel (%p1325) target = $region48
      $region47: #{mwt_transform_cross_forward.11} parent=43 // pred_region
        %s1328 = smul.u32 16, %s16
        %p1329 = scmp.lt.s32.totalorder %s1328, 31
        %s1330 = scalar_select %p1329, %s1328, 31
        %s1331 = smul.addr %s1330, 4
        %s1332 = scalar_lea.vmem %s4, %s1331
      $region48: #{mwt_transform_cross_forward.11} parent=43 // pred_fallthru
        _
    $region44: #{mwt_transform_cross_forward.11} parent=5 // pred_fallthru
      _
  $region6: #{mwt_transform_cross_forward.11} parent=0 // loop_footer
    %s14 = sadd.s32 1, %s10
  $region7: #{mwt_transform_cross_forward.11} parent=0 // loop_footer_branch
    %9 = sbr.rel target = $region3
  $region8: #{mwt_transform_cross_forward.11} parent=0 // loop_exit
    _

// kernel: reverse.0
$region0: #{reverse.0}
  %s0 = inlined_call_operand.vmem [shape: f32[4,8,4,3], index: 0, kind: input, shape index: {}]
  %s1 = inlined_call_operand.vmem [shape: f32[4,8,4,3], index: 1, kind: output, shape index: {}]
  %v2 = vlaneseq
  %v3 = vsub.s32 2, %v2
  %4 = vset.pattern.permute.xlu0 %v3
  $region1: #{reverse.0} parent=0
    #allocation0 [shape = 'u8[65536]{0}', space=vmem, size = 0x10000, scoped, tag = 'operand span for operand 0']
    #allocation1 [shape = 'u8[65536]{0}', space=vmem, size = 0x10000, scoped, tag = 'operand span for operand 1']
    // Predicated region
    $region2: #{reverse.0} parent=1 // pred_check
      _
    $region3: #{reverse.0} parent=1 // pred_check_branch
      %6 = sbr.rel (0) target = $region5
    $region4: #{reverse.0} parent=1 // pred_region
      // Predicated region
      $region6: #{reverse.0} parent=4 // pred_check
        _
      $region7: #{reverse.0} parent=4 // pred_check_branch
        %8 = sbr.rel (0) target = $region9
      $region8: #{reverse.0} parent=4 // pred_region
        // Predicated region
        $region21: #{reverse.0} parent=8 // pred_check
          _
        $region22: #{reverse.0} parent=8 // pred_check_branch
          %54 = sbr.rel (0) target = $region24
        $region23: #{reverse.0} parent=8 // pred_region
          loop: start=0, step=1, limit=1
          $region25: #{reverse.0} parent=23 // loop_pre_header
            _
          $region26: #{reverse.0} parent=23 // loop_header
            %s56 = sphi 0, %s60
            %p57 = scmp.ge.s32.totalorder %s56, 1
            %s61 = sphi %s0, %s0
            %s62 = sphi [#allocation0], [#allocation0]
          $region27: #{reverse.0} parent=23 // loop_header_branch
            %59 = sbr.rel (%p57) target = $region31
          $region28: #{reverse.0} parent=23 // loop_body
            %v63 = vld [vmem:[%s61] sm:$0xff]
            %64 = vst [vmem:[%s62] sm:$0xff] %v63
            %v65 = vld [vmem:[%s61 + $0x8] sm:$0xff]
            %66 = vst [vmem:[%s62 + $0x8] sm:$0xff] %v65
            %v67 = vld [vmem:[%s61 + $0x10] sm:$0xff]
            %68 = vst [vmem:[%s62 + $0x10] sm:$0xff] %v67
            %v69 = vld [vmem:[%s61 + $0x18] sm:$0xff]
            %70 = vst [vmem:[%s62 + $0x18] sm:$0xff] %v69
            %v71 = vld [vmem:[%s61 + $0x20] sm:$0xff]
            %72 = vst [vmem:[%s62 + $0x20] sm:$0xff] %v71
            %v73 = vld [vmem:[%s61 + $0x28] sm:$0xff]
            %74 = vst [vmem:[%s62 + $0x28] sm:$0xff] %v73
            %v75 = vld [vmem:[%s61 + $0x30] sm:$0xff]
            %76 = vst [vmem:[%s62 + $0x30] sm:$0xff] %v75
            %v77 = vld [vmem:[%s61 + $0x38] sm:$0xff]
            %78 = vst [vmem:[%s62 + $0x38] sm:$0xff] %v77
            %v79 = vld [vmem:[%s61 + $0x40] sm:$0xff]
            %80 = vst [vmem:[%s62 + $0x40] sm:$0xff] %v79
            %v81 = vld [vmem:[%s61 + $0x48] sm:$0xff]
            %82 = vst [vmem:[%s62 + $0x48] sm:$0xff] %v81
            %v83 = vld [vmem:[%s61 + $0x50] sm:$0xff]
            %84 = vst [vmem:[%s62 + $0x50] sm:$0xff] %v83
            %v85 = vld [vmem:[%s61 + $0x58] sm:$0xff]
            %86 = vst [vmem:[%s62 + $0x58] sm:$0xff] %v85
            %v87 = vld [vmem:[%s61 + $0x60] sm:$0xff]
            %88 = vst [vmem:[%s62 + $0x60] sm:$0xff] %v87
            %v89 = vld [vmem:[%s61 + $0x68] sm:$0xff]
            %90 = vst [vmem:[%s62 + $0x68] sm:$0xff] %v89
            %v91 = vld [vmem:[%s61 + $0x70] sm:$0xff]
            %92 = vst [vmem:[%s62 + $0x70] sm:$0xff] %v91
            %v93 = vld [vmem:[%s61 + $0x78] sm:$0xff]
            %94 = vst [vmem:[%s62 + $0x78] sm:$0xff] %v93
          $region29: #{reverse.0} parent=23 // loop_footer
            %s60 = sadd.s32 1, %s56
          $region30: #{reverse.0} parent=23 // loop_footer_branch
            %55 = sbr.rel target = $region26
          $region31: #{reverse.0} parent=23 // loop_exit
            _
        $region24: #{reverse.0} parent=8 // pred_fallthru
          _
        // Predicated region
        $region32: #{reverse.0} parent=8 // pred_check
          _
        $region33: #{reverse.0} parent=8 // pred_check_branch
          %96 = sbr.rel target = $region35
        $region34: #{reverse.0} parent=8 // pred_region
          _
        $region35: #{reverse.0} parent=8 // pred_fallthru
          _
      $region9: #{reverse.0} parent=4 // pred_fallthru
        _
      // Predicated region
      $region10: #{reverse.0} parent=4 // pred_check
        _
      $region11: #{reverse.0} parent=4 // pred_check_branch
        %10 = sbr.rel target = $region13
      $region12: #{reverse.0} parent=4 // pred_region
        %s12 = ssub.s32 256, 1
        loop: start=0, step=1, limit=1
        $region14: #{reverse.0} parent=12 // loop_pre_header
          _
        $region15: #{reverse.0} parent=12 // loop_header
          %s14 = sphi 0, %s18
          %p15 = scmp.ge.s32.totalorder %s14, 1
          %s19 = sphi %s0, %s0
          %s20 = sphi [#allocation0], [#allocation0]
        $region16: #{reverse.0} parent=12 // loop_header_branch
          %17 = sbr.rel (%p15) target = $region20
        $region17: #{reverse.0} parent=12 // loop_body
          %v21 = vld [vmem:[%s19] sm:%s12]
          %22 = vst [vmem:[%s20] sm:%s12] %v21
          %v23 = vld [vmem:[%s19 + $0x8] sm:%s12]
          %24 = vst [vmem:[%s20 + $0x8] sm:%s12] %v23
          %v25 = vld [vmem:[%s19 + $0x10] sm:%s12]
          %26 = vst [vmem:[%s20 + $0x10] sm:%s12] %v25
          %v27 = vld [vmem:[%s19 + $0x18] sm:%s12]
          %28 = vst [vmem:[%s20 + $0x18] sm:%s12] %v27
          %v29 = vld [vmem:[%s19 + $0x20] sm:%s12]
          %30 = vst [vmem:[%s20 + $0x20] sm:%s12] %v29
          %v31 = vld [vmem:[%s19 + $0x28] sm:%s12]
          %32 = vst [vmem:[%s20 + $0x28] sm:%s12] %v31
          %v33 = vld [vmem:[%s19 + $0x30] sm:%s12]
          %34 = vst [vmem:[%s20 + $0x30] sm:%s12] %v33
          %v35 = vld [vmem:[%s19 + $0x38] sm:%s12]
          %36 = vst [vmem:[%s20 + $0x38] sm:%s12] %v35
          %v37 = vld [vmem:[%s19 + $0x40] sm:%s12]
          %38 = vst [vmem:[%s20 + $0x40] sm:%s12] %v37
          %v39 = vld [vmem:[%s19 + $0x48] sm:%s12]
          %40 = vst [vmem:[%s20 + $0x48] sm:%s12] %v39
          %v41 = vld [vmem:[%s19 + $0x50] sm:%s12]
          %42 = vst [vmem:[%s20 + $0x50] sm:%s12] %v41
          %v43 = vld [vmem:[%s19 + $0x58] sm:%s12]
          %44 = vst [vmem:[%s20 + $0x58] sm:%s12] %v43
          %v45 = vld [vmem:[%s19 + $0x60] sm:%s12]
          %46 = vst [vmem:[%s20 + $0x60] sm:%s12] %v45
          %v47 = vld [vmem:[%s19 + $0x68] sm:%s12]
          %48 = vst [vmem:[%s20 + $0x68] sm:%s12] %v47
          %v49 = vld [vmem:[%s19 + $0x70] sm:%s12]
          %50 = vst [vmem:[%s20 + $0x70] sm:%s12] %v49
          %v51 = vld [vmem:[%s19 + $0x78] sm:%s12]
          %52 = vst [vmem:[%s20 + $0x78] sm:%s12] %v51
        $region18: #{reverse.0} parent=12 // loop_footer
          %s18 = sadd.s32 1, %s14
        $region19: #{reverse.0} parent=12 // loop_footer_branch
          %13 = sbr.rel target = $region15
        $region20: #{reverse.0} parent=12 // loop_exit
          _
      $region13: #{reverse.0} parent=4 // pred_fallthru
        _
    $region5: #{reverse.0} parent=1 // pred_fallthru
      _
    %97 = vnop
    %v98 = vld [vmem:[#allocation0] sm:$0xff]
    %99 = vperm.xlu0 %4, %v98
    %v100 = vpop.permute.xlu0 %99
    %101 = vst [vmem:[#allocation1] sm:$0xff] %v100
    %s102 = scalar_lea.vmem [#allocation1], 8
    %s103 = scalar_lea.vmem [#allocation0], 8
    %v104 = vld [vmem:[%s103] sm:$0xff]
    %105 = vperm.xlu0 %4, %v104
    %v106 = vpop.permute.xlu0 %105
    %107 = vst [vmem:[%s102] sm:$0xff] %v106
    %s108 = scalar_lea.vmem [#allocation1], 16
    %s109 = scalar_lea.vmem [#allocation0], 16
    %v110 = vld [vmem:[%s109] sm:$0xff]
    %111 = vperm.xlu0 %4, %v110
    %v112 = vpop.permute.xlu0 %111
    %113 = vst [vmem:[%s108] sm:$0xff] %v112
    %s114 = scalar_lea.vmem [#allocation1], 24
    %s115 = scalar_lea.vmem [#allocation0], 24
    %v116 = vld [vmem:[%s115] sm:$0xff]
    %117 = vperm.xlu0 %4, %v116
    %v118 = vpop.permute.xlu0 %117
    %119 = vst [vmem:[%s114] sm:$0xff] %v118
    %s120 = scalar_lea.vmem [#allocation1], 32
    %s121 = scalar_lea.vmem [#allocation0], 32
    %v122 = vld [vmem:[%s121] sm:$0xff]
    %123 = vperm.xlu0 %4, %v122
    %v124 = vpop.permute.xlu0 %123
    %125 = vst [vmem:[%s120] sm:$0xff] %v124
    %s126 = scalar_lea.vmem [#allocation1], 40
    %s127 = scalar_lea.vmem [#allocation0], 40
    %v128 = vld [vmem:[%s127] sm:$0xff]
    %129 = vperm.xlu0 %4, %v128
    %v130 = vpop.permute.xlu0 %129
    %131 = vst [vmem:[%s126] sm:$0xff] %v130
    %s132 = scalar_lea.vmem [#allocation1], 48
    %s133 = scalar_lea.vmem [#allocation0], 48
    %v134 = vld [vmem:[%s133] sm:$0xff]
    %135 = vperm.xlu0 %4, %v134
    %v136 = vpop.permute.xlu0 %135
    %137 = vst [vmem:[%s132] sm:$0xff] %v136
    %s138 = scalar_lea.vmem [#allocation1], 56
    %s139 = scalar_lea.vmem [#allocation0], 56
    %v140 = vld [vmem:[%s139] sm:$0xff]
    %141 = vperm.xlu0 %4, %v140
    %v142 = vpop.permute.xlu0 %141
    %143 = vst [vmem:[%s138] sm:$0xff] %v142
    %s144 = scalar_lea.vmem [#allocation1], 64
    %s145 = scalar_lea.vmem [#allocation0], 64
    %v146 = vld [vmem:[%s145] sm:$0xff]
    %147 = vperm.xlu0 %4, %v146
    %v148 = vpop.permute.xlu0 %147
    %149 = vst [vmem:[%s144] sm:$0xff] %v148
    %s150 = scalar_lea.vmem [#allocation1], 72
    %s151 = scalar_lea.vmem [#allocation0], 72
    %v152 = vld [vmem:[%s151] sm:$0xff]
    %153 = vperm.xlu0 %4, %v152
    %v154 = vpop.permute.xlu0 %153
    %155 = vst [vmem:[%s150] sm:$0xff] %v154
    %s156 = scalar_lea.vmem [#allocation1], 80
    %s157 = scalar_lea.vmem [#allocation0], 80
    %v158 = vld [vmem:[%s157] sm:$0xff]
    %159 = vperm.xlu0 %4, %v158
    %v160 = vpop.permute.xlu0 %159
    %161 = vst [vmem:[%s156] sm:$0xff] %v160
    %s162 = scalar_lea.vmem [#allocation1], 88
    %s163 = scalar_lea.vmem [#allocation0], 88
    %v164 = vld [vmem:[%s163] sm:$0xff]
    %165 = vperm.xlu0 %4, %v164
    %v166 = vpop.permute.xlu0 %165
    %167 = vst [vmem:[%s162] sm:$0xff] %v166
    %s168 = scalar_lea.vmem [#allocation1], 96
    %s169 = scalar_lea.vmem [#allocation0], 96
    %v170 = vld [vmem:[%s169] sm:$0xff]
    %171 = vperm.xlu0 %4, %v170
    %v172 = vpop.permute.xlu0 %171
    %173 = vst [vmem:[%s168] sm:$0xff] %v172
    %s174 = scalar_lea.vmem [#allocation1], 104
    %s175 = scalar_lea.vmem [#allocation0], 104
    %v176 = vld [vmem:[%s175] sm:$0xff]
    %177 = vperm.xlu0 %4, %v176
    %v178 = vpop.permute.xlu0 %177
    %179 = vst [vmem:[%s174] sm:$0xff] %v178
    %s180 = scalar_lea.vmem [#allocation1], 112
    %s181 = scalar_lea.vmem [#allocation0], 112
    %v182 = vld [vmem:[%s181] sm:$0xff]
    %183 = vperm.xlu0 %4, %v182
    %v184 = vpop.permute.xlu0 %183
    %185 = vst [vmem:[%s180] sm:$0xff] %v184
    %s186 = scalar_lea.vmem [#allocation1], 120
    %s187 = scalar_lea.vmem [#allocation0], 120
    %v188 = vld [vmem:[%s187] sm:$0xff]
    %189 = vperm.xlu0 %4, %v188
    %v190 = vpop.permute.xlu0 %189
    %191 = vst [vmem:[%s186] sm:$0xff] %v190
    // Predicated region
    $region36: #{reverse.0} parent=1 // pred_check
      _
    $region37: #{reverse.0} parent=1 // pred_check_branch
      %193 = sbr.rel (0) target = $region39
    $region38: #{reverse.0} parent=1 // pred_region
      // Predicated region
      $region40: #{reverse.0} parent=38 // pred_check
        _
      $region41: #{reverse.0} parent=38 // pred_check_branch
        %195 = sbr.rel (0) target = $region43
      $region42: #{reverse.0} parent=38 // pred_region
        // Predicated region
        $region55: #{reverse.0} parent=42 // pred_check
          _
        $region56: #{reverse.0} parent=42 // pred_check_branch
          %241 = sbr.rel (0) target = $region58
        $region57: #{reverse.0} parent=42 // pred_region
          loop: start=0, step=1, limit=1
          $region59: #{reverse.0} parent=57 // loop_pre_header
            _
          $region60: #{reverse.0} parent=57 // loop_header
            %s243 = sphi 0, %s247
            %p244 = scmp.ge.s32.totalorder %s243, 1
            %s248 = sphi [#allocation1], [#allocation1]
            %s249 = sphi %s1, %s1
          $region61: #{reverse.0} parent=57 // loop_header_branch
            %246 = sbr.rel (%p244) target = $region65
          $region62: #{reverse.0} parent=57 // loop_body
            %v250 = vld [vmem:[%s248] sm:$0xff]
            %251 = vst [vmem:[%s249] sm:$0xff] %v250
            %v252 = vld [vmem:[%s248 + $0x8] sm:$0xff]
            %253 = vst [vmem:[%s249 + $0x8] sm:$0xff] %v252
            %v254 = vld [vmem:[%s248 + $0x10] sm:$0xff]
            %255 = vst [vmem:[%s249 + $0x10] sm:$0xff] %v254
            %v256 = vld [vmem:[%s248 + $0x18] sm:$0xff]
            %257 = vst [vmem:[%s249 + $0x18] sm:$0xff] %v256
            %v258 = vld [vmem:[%s248 + $0x20] sm:$0xff]
            %259 = vst [vmem:[%s249 + $0x20] sm:$0xff] %v258
            %v260 = vld [vmem:[%s248 + $0x28] sm:$0xff]
            %261 = vst [vmem:[%s249 + $0x28] sm:$0xff] %v260
            %v262 = vld [vmem:[%s248 + $0x30] sm:$0xff]
            %263 = vst [vmem:[%s249 + $0x30] sm:$0xff] %v262
            %v264 = vld [vmem:[%s248 + $0x38] sm:$0xff]
            %265 = vst [vmem:[%s249 + $0x38] sm:$0xff] %v264
            %v266 = vld [vmem:[%s248 + $0x40] sm:$0xff]
            %267 = vst [vmem:[%s249 + $0x40] sm:$0xff] %v266
            %v268 = vld [vmem:[%s248 + $0x48] sm:$0xff]
            %269 = vst [vmem:[%s249 + $0x48] sm:$0xff] %v268
            %v270 = vld [vmem:[%s248 + $0x50] sm:$0xff]
            %271 = vst [vmem:[%s249 + $0x50] sm:$0xff] %v270
            %v272 = vld [vmem:[%s248 + $0x58] sm:$0xff]
            %273 = vst [vmem:[%s249 + $0x58] sm:$0xff] %v272
            %v274 = vld [vmem:[%s248 + $0x60] sm:$0xff]
            %275 = vst [vmem:[%s249 + $0x60] sm:$0xff] %v274
            %v276 = vld [vmem:[%s248 + $0x68] sm:$0xff]
            %277 = vst [vmem:[%s249 + $0x68] sm:$0xff] %v276
            %v278 = vld [vmem:[%s248 + $0x70] sm:$0xff]
            %279 = vst [vmem:[%s249 + $0x70] sm:$0xff] %v278
            %v280 = vld [vmem:[%s248 + $0x78] sm:$0xff]
            %281 = vst [vmem:[%s249 + $0x78] sm:$0xff] %v280
          $region63: #{reverse.0} parent=57 // loop_footer
            %s247 = sadd.s32 1, %s243
          $region64: #{reverse.0} parent=57 // loop_footer_branch
            %242 = sbr.rel target = $region60
          $region65: #{reverse.0} parent=57 // loop_exit
            _
        $region58: #{reverse.0} parent=42 // pred_fallthru
          _
        // Predicated region
        $region66: #{reverse.0} parent=42 // pred_check
          _
        $region67: #{reverse.0} parent=42 // pred_check_branch
          %283 = sbr.rel target = $region69
        $region68: #{reverse.0} parent=42 // pred_region
          _
        $region69: #{reverse.0} parent=42 // pred_fallthru
          _
      $region43: #{reverse.0} parent=38 // pred_fallthru
        _
      // Predicated region
      $region44: #{reverse.0} parent=38 // pred_check
        _
      $region45: #{reverse.0} parent=38 // pred_check_branch
        %197 = sbr.rel target = $region47
      $region46: #{reverse.0} parent=38 // pred_region
        %s199 = ssub.s32 256, 1
        loop: start=0, step=1, limit=1
        $region48: #{reverse.0} parent=46 // loop_pre_header
          _
        $region49: #{reverse.0} parent=46 // loop_header
          %s201 = sphi 0, %s205
          %p202 = scmp.ge.s32.totalorder %s201, 1
          %s206 = sphi [#allocation1], [#allocation1]
          %s207 = sphi %s1, %s1
        $region50: #{reverse.0} parent=46 // loop_header_branch
          %204 = sbr.rel (%p202) target = $region54
        $region51: #{reverse.0} parent=46 // loop_body
          %v208 = vld [vmem:[%s206] sm:%s199]
          %209 = vst [vmem:[%s207] sm:%s199] %v208
          %v210 = vld [vmem:[%s206 + $0x8] sm:%s199]
          %211 = vst [vmem:[%s207 + $0x8] sm:%s199] %v210
          %v212 = vld [vmem:[%s206 + $0x10] sm:%s199]
          %213 = vst [vmem:[%s207 + $0x10] sm:%s199] %v212
          %v214 = vld [vmem:[%s206 + $0x18] sm:%s199]
          %215 = vst [vmem:[%s207 + $0x18] sm:%s199] %v214
          %v216 = vld [vmem:[%s206 + $0x20] sm:%s199]
          %217 = vst [vmem:[%s207 + $0x20] sm:%s199] %v216
          %v218 = vld [vmem:[%s206 + $0x28] sm:%s199]
          %219 = vst [vmem:[%s207 + $0x28] sm:%s199] %v218
          %v220 = vld [vmem:[%s206 + $0x30] sm:%s199]
          %221 = vst [vmem:[%s207 + $0x30] sm:%s199] %v220
          %v222 = vld [vmem:[%s206 + $0x38] sm:%s199]
          %223 = vst [vmem:[%s207 + $0x38] sm:%s199] %v222
          %v224 = vld [vmem:[%s206 + $0x40] sm:%s199]
          %225 = vst [vmem:[%s207 + $0x40] sm:%s199] %v224
          %v226 = vld [vmem:[%s206 + $0x48] sm:%s199]
          %227 = vst [vmem:[%s207 + $0x48] sm:%s199] %v226
          %v228 = vld [vmem:[%s206 + $0x50] sm:%s199]
          %229 = vst [vmem:[%s207 + $0x50] sm:%s199] %v228
          %v230 = vld [vmem:[%s206 + $0x58] sm:%s199]
          %231 = vst [vmem:[%s207 + $0x58] sm:%s199] %v230
          %v232 = vld [vmem:[%s206 + $0x60] sm:%s199]
          %233 = vst [vmem:[%s207 + $0x60] sm:%s199] %v232
          %v234 = vld [vmem:[%s206 + $0x68] sm:%s199]
          %235 = vst [vmem:[%s207 + $0x68] sm:%s199] %v234
          %v236 = vld [vmem:[%s206 + $0x70] sm:%s199]
          %237 = vst [vmem:[%s207 + $0x70] sm:%s199] %v236
          %v238 = vld [vmem:[%s206 + $0x78] sm:%s199]
          %239 = vst [vmem:[%s207 + $0x78] sm:%s199] %v238
        $region52: #{reverse.0} parent=46 // loop_footer
          %s205 = sadd.s32 1, %s201
        $region53: #{reverse.0} parent=46 // loop_footer_branch
          %200 = sbr.rel target = $region49
        $region54: #{reverse.0} parent=46 // loop_exit
          _
      $region47: #{reverse.0} parent=38 // pred_fallthru
        _
    $region39: #{reverse.0} parent=1 // pred_fallthru
      _
    %284 = vnop

// kernel: mwt_transform_cross_forward.15
$region0: #{mwt_transform_cross_forward.15}
  #allocation0 [shape = 'u32[]', space=smem, size = 0x4, offset = 0x4, fixed_abs, tag = 'smem constant byte address 0x4 - core index']
  #allocation1 [shape = 'u32[72,128]{1,0:T(1,128)}', space=vmem, size = 0x9000, scoped, tag = 'internal scratch']
  %s0 = inlined_call_operand.vmem [shape: f32[32,32], index: 0, kind: input, shape index: {}]
  %s1 = inlined_call_operand.vmem [shape: f32[32,32], index: 1, kind: input, shape index: {}]
  %s2 = inlined_call_operand.vmem [shape: f32[1,32], index: 2, kind: input, shape index: {}]
  %s3 = inlined_call_operand.vmem [shape: f32[32,32], index: 3, kind: output, shape index: {}]
  %s4 = sld [smem:[#allocation0]]
  $region45: #{mwt_transform_cross_forward.15} parent=0
    _
  %s6 = ssub.s32 1, %s4
  %s7 = scalar_select 0, %s6, %s4
  loop: start=0, step=1, limit=4
  $region2: #{mwt_transform_cross_forward.15} parent=0 // loop_pre_header
    _
  $region3: #{mwt_transform_cross_forward.15} parent=0 // loop_header
    %s9 = sphi 0, %s13
    %p10 = scmp.ge.s32.totalorder %s9, 4
    %s19 = sphi 0, %s21
    %s22 = sphi 0, %s19
    %s23 = sphi 0, %s22
    %s39 = sphi 0, %s23
    %s43 = sphi 0, %s43
    %s45 = sphi 0, %s43
    %s46 = sphi 0, %s45
    %s60 = sphi 0, %s46
    %s64 = sphi 0, %s64
    %s66 = sphi 0, %s64
    %s67 = sphi 0, %s66
    %s81 = sphi 0, %s67
    %s87 = sphi 0, %s89
    %s90 = sphi 0, %s87
    %s91 = sphi 0, %s90
    %s107 = sphi 0, %s91
  $region4: #{mwt_transform_cross_forward.15} parent=0 // loop_header_branch
    %12 = sbr.rel (%p10) target = $region8
  $region5: #{mwt_transform_cross_forward.15} parent=0 // loop_body
    %s14 = ssub.s32 %s9, 1
    %s15 = ssub.s32 %s9, 2
    %s16 = sadd.s32 %s9, 1
    %s17 = ssub.s32 %s9, %s16
    %p18 = scmp.eq.s32.totalorder %s17, 0
    %s20 = sadd.s32 %s19, 1
    %s21 = scalar_select %p18, %s19, %s20
    %p24 = pneg %p18
    %p25 = scmp.eq.s32.totalorder %s9, 1
    %p26 = por %p24, %p25
    %p27 = scmp.ne.s32.totalorder %s19, %s22
    %p28 = scmp.eq.s32.totalorder %s9, 0
    %p29 = por %p27, %p28
    %p30 = scmp.ne.s32.totalorder %s19, %s22
    %p31 = scmp.eq.s32.totalorder %s14, 1
    %p32 = por %p30, %p31
    %p33 = scmp.ne.s32.totalorder %s22, %s23
    %p34 = scmp.eq.s32.totalorder %s14, 0
    %p35 = por %p33, %p34
    %p36 = scmp.ne.s32.totalorder %s22, %s23
    %p37 = scmp.eq.s32.totalorder %s15, 1
    %p38 = por %p36, %p37
    %p40 = scmp.ne.s32.totalorder %s23, %s39
    %p41 = scmp.eq.s32.totalorder %s15, 0
    %p42 = por %p40, %p41
    %s44 = sadd.s32 %s43, 1
    %p47 = scmp.eq.s32.totalorder %s9, 1
    %p48 = scmp.ne.s32.totalorder %s43, %s45
    %p49 = scmp.eq.s32.totalorder %s9, 0
    %p50 = por %p48, %p49
    %p51 = scmp.ne.s32.totalorder %s43, %s45
    %p52 = scmp.eq.s32.totalorder %s14, 1
    %p53 = por %p51, %p52
    %p54 = scmp.ne.s32.totalorder %s45, %s46
    %p55 = scmp.eq.s32.totalorder %s14, 0
    %p56 = por %p54, %p55
    %p57 = scmp.ne.s32.totalorder %s45, %s46
    %p58 = scmp.eq.s32.totalorder %s15, 1
    %p59 = por %p57, %p58
    %p61 = scmp.ne.s32.totalorder %s46, %s60
    %p62 = scmp.eq.s32.totalorder %s15, 0
    %p63 = por %p61, %p62
    %s65 = sadd.s32 %s64, 1
    %p68 = scmp.eq.s32.totalorder %s9, 1
    %p69 = scmp.ne.s32.totalorder %s64, %s66
    %p70 = scmp.eq.s32.totalorder %s9, 0
    %p71 = por %p69, %p70
    %p72 = scmp.ne.s32.totalorder %s64, %s66
    %p73 = scmp.eq.s32.totalorder %s14, 1
    %p74 = por %p72, %p73
    %p75 = scmp.ne.s32.totalorder %s66, %s67
    %p76 = scmp.eq.s32.totalorder %s14, 0
    %p77 = por %p75, %p76
    %p78 = scmp.ne.s32.totalorder %s66, %s67
    %p79 = scmp.eq.s32.totalorder %s15, 1
    %p80 = por %p78, %p79
    %p82 = scmp.ne.s32.totalorder %s67, %s81
    %p83 = scmp.eq.s32.totalorder %s15, 0
    %p84 = por %p82, %p83
    %s85 = ssub.s32 %s9, %s16
    %p86 = scmp.eq.s32.totalorder %s85, 0
    %s88 = sadd.s32 %s87, 1
    %s89 = scalar_select %p86, %s87, %s88
    %p92 = pneg %p86
    %p93 = scmp.eq.s32.totalorder %s9, 1
    %p94 = por %p92, %p93
    %p95 = scmp.ne.s32.totalorder %s87, %s90
    %p96 = scmp.eq.s32.totalorder %s9, 0
    %p97 = por %p95, %p96
    %p98 = scmp.ne.s32.totalorder %s87, %s90
    %p99 = scmp.eq.s32.totalorder %s14, 1
    %p100 = por %p98, %p99
    %p101 = scmp.ne.s32.totalorder %s90, %s91
    %p102 = scmp.eq.s32.totalorder %s14, 0
    %p103 = por %p101, %p102
    %p104 = scmp.ne.s32.totalorder %s90, %s91
    %p105 = scmp.eq.s32.totalorder %s15, 1
    %p106 = por %p104, %p105
    %p108 = scmp.ne.s32.totalorder %s91, %s107
    %p109 = scmp.eq.s32.totalorder %s15, 0
    %p110 = por %p108, %p109
    %p111 = scmp.le.s32.totalorder 1, %s9
    %p112 = scmp.lt.s32.totalorder %s9, 3
    %p113 = pnand %p111, %p112
    %p114 = pneg %p113
    // Predicated region
    $region9: #{mwt_transform_cross_forward.15} parent=5 // pred_check
      _
    $region10: #{mwt_transform_cross_forward.15} parent=5 // pred_check_branch
      %116 = sbr.rel (%p113) target = $region12
    $region11: #{mwt_transform_cross_forward.15} parent=5 // pred_region
      %s117 = ssub.s32 %s9, 1
      // Predicated region
      $region13: #{mwt_transform_cross_forward.15} parent=11 // pred_check
        %p118 = pneg %p56
      $region14: #{mwt_transform_cross_forward.15} parent=11 // pred_check_branch
        %120 = sbr.rel (%p118) target = $region16
      $region15: #{mwt_transform_cross_forward.15} parent=11 // pred_region
        _
      $region16: #{mwt_transform_cross_forward.15} parent=11 // pred_fallthru
        _
      // Predicated region
      $region17: #{mwt_transform_cross_forward.15} parent=11 // pred_check
        %p121 = pneg %p77
      $region18: #{mwt_transform_cross_forward.15} parent=11 // pred_check_branch
        %123 = sbr.rel (%p121) target = $region20
      $region19: #{mwt_transform_cross_forward.15} parent=11 // pred_region
        _
      $region20: #{mwt_transform_cross_forward.15} parent=11 // pred_fallthru
        _
    $region12: #{mwt_transform_cross_forward.15} parent=5 // pred_fallthru
      _
    %p124 = scmp.lt.s32.totalorder %s9, 2
    // Predicated region
    $region21: #{mwt_transform_cross_forward.15} parent=5 // pred_check
      %p125 = pneg %p124
    $region22: #{mwt_transform_cross_forward.15} parent=5 // pred_check_branch
      %127 = sbr.rel (%p125) target = $region24
    $region23: #{mwt_transform_cross_forward.15} parent=5 // pred_region
      // Predicated region
      $region25: #{mwt_transform_cross_forward.15} parent=23 // pred_check
        %p128 = pneg %p29
      $region26: #{mwt_transform_cross_forward.15} parent=23 // pred_check_branch
        %130 = sbr.rel (%p128) target = $region28
      $region27: #{mwt_transform_cross_forward.15} parent=23 // pred_region
        %s131 = smul.u32 2, %s9
        %p132 = scmp.lt.s32.totalorder %s131, 3
        %s133 = scalar_select %p132, %s131, 3
        %s134 = smul.addr %s133, 8
        %s135 = scalar_lea.vmem %s0, %s134
        %s136 = smul.u32 2, %s9
      $region28: #{mwt_transform_cross_forward.15} parent=23 // pred_fallthru
        _
    $region24: #{mwt_transform_cross_forward.15} parent=5 // pred_fallthru
      _
    %p137 = scmp.le.s32.totalorder 1, %s9
    %p138 = scmp.lt.s32.totalorder %s9, 3
    %p139 = pnand %p137, %p138
    %p140 = pneg %p139
    // Predicated region
    $region29: #{mwt_transform_cross_forward.15} parent=5 // pred_check
      _
    $region30: #{mwt_transform_cross_forward.15} parent=5 // pred_check_branch
      %142 = sbr.rel (%p139) target = $region32
    $region31: #{mwt_transform_cross_forward.15} parent=5 // pred_region
      %s143 = ssub.s32 %s9, 1
      %s144 = smul.u32 2, %s14
      %p145 = scmp.lt.s32.totalorder %s144, 3
      %s146 = scalar_select %p145, %s144, 3
      %s147 = smul.addr %s146, 8
      %s148 = scalar_lea.vmem %s0, %s147
      %p149 = pneg %p35
      %p150 = pneg %p32
      %p151 = pneg %p56
      %p152 = pneg %p53
      %p153 = pneg %p77
      %p154 = pneg %p74
      %p155 = pneg %p103
      %p156 = pneg %p100
      %s157 = smul.u32 2, %s14
      %p158 = scmp.lt.s32.totalorder %s157, 3
      %s159 = scalar_select %p158, %s157, 3
      %s160 = smul.addr %s159, 8
      %s161 = scalar_lea.vmem %s3, %s160
      %s162 = smul.u32 2, %s14
      %p163 = scmp.lt.s32.totalorder %s162, 3
      %s164 = scalar_select %p163, %s162, 3
      %s165 = smul.addr %s164, 8
      %s166 = scalar_lea.vmem %s0, %s165
      %s167 = smul.u32 2, %s14
      %s168 = smul.u32 2, %s14
      %p169 = scmp.lt.s32.totalorder %s168, 3
      %s170 = scalar_select %p169, %s168, 3
      %s171 = smul.addr %s170, 8
      %s172 = scalar_lea.vmem %s3, %s171
      %s173 = smul.u32 2, %s14
      %v175 = vld [vmem:[%s166] sm:$0xff]
      %v176 = vld [vmem:[%s166 + $0x8] sm:$0xff]
      %v177 = vpack.c.bf16 %v176, %v175
      %v178 = vld [vmem:[%s1] sm:$0xff]
      %v179 = vld [vmem:[%s1 + $0x8] sm:$0xff]
      %v180 = vld [vmem:[%s1 + $0x10] sm:$0xff]
      %v181 = vld [vmem:[%s1 + $0x18] sm:$0xff]
      %v182 = vpack.c.bf16 %v179, %v178
      %v183 = vpack.c.bf16 %v181, %v180
      %v184 = vld [vmem:[%s2] sm:$0x1]
      %v186 = vperm.slane %v184, 0
      %vm188 = vcmask 261120
      %v190 = vsel %vm188, %v177, 0
      %192 = vmatpush.bf16.msra.mxu0 0
      %193 = vmatpush.bf16.msra.mxu0 0
      %194 = vmatpush.bf16.msra.mxu0 0
      %195 = vmatpush.bf16.msra.mxu0 0
      %196 = vmatpush.bf16.msra.mxu0 0
      %197 = vmatpush.bf16.msra.mxu0 0
      %198 = vmatpush.bf16.msra.mxu0 %v183
      %199 = vmatpush.bf16.msra.mxu0 %v182
      %200 = vmatmul.bf16.gmra.mxu0 %v190
      %v201 = vpop.f32.mrf.mxu0
      %v202 = vadd.f32 %v186, %v201
      %v203 = vpop.f32.mrf.mxu0
      %v204 = vadd.f32 %v186, %v203
      %205 = vdwg.mxu0
      %206 = vst.msk [vmem:[%s172] sm:$0xff] %vm188, %v202
      %207 = vst.msk [vmem:[%s172 + $0x8] sm:$0xff] %vm188, %v204
      %s208 = smul.u32 2, %s14
      %p209 = scmp.lt.s32.totalorder %s208, 3
      %s210 = scalar_select %p209, %s208, 3
      %s211 = smul.addr %s210, 8
      %s212 = scalar_lea.vmem %s3, %s211
      // Predicated region
      $region33: #{mwt_transform_cross_forward.15} parent=31 // pred_check
        %p213 = pneg %p100
      $region34: #{mwt_transform_cross_forward.15} parent=31 // pred_check_branch
        %215 = sbr.rel (%p213) target = $region36
      $region35: #{mwt_transform_cross_forward.15} parent=31 // pred_region
        %s216 = smul.u32 2, %s14
      $region36: #{mwt_transform_cross_forward.15} parent=31 // pred_fallthru
        _
    $region32: #{mwt_transform_cross_forward.15} parent=5 // pred_fallthru
      _
    %p217 = scmp.le.s32.totalorder 2, %s9
    // Predicated region
    $region37: #{mwt_transform_cross_forward.15} parent=5 // pred_check
      %p218 = pneg %p217
    $region38: #{mwt_transform_cross_forward.15} parent=5 // pred_check_branch
      %220 = sbr.rel (%p218) target = $region40
    $region39: #{mwt_transform_cross_forward.15} parent=5 // pred_region
      %s221 = ssub.s32 %s9, 2
      // Predicated region
      $region41: #{mwt_transform_cross_forward.15} parent=39 // pred_check
        %p222 = pneg %p106
      $region42: #{mwt_transform_cross_forward.15} parent=39 // pred_check_branch
        %224 = sbr.rel (%p222) target = $region44
      $region43: #{mwt_transform_cross_forward.15} parent=39 // pred_region
        %s225 = smul.u32 2, %s15
        %p226 = scmp.lt.s32.totalorder %s225, 3
        %s227 = scalar_select %p226, %s225, 3
        %s228 = smul.addr %s227, 8
        %s229 = scalar_lea.vmem %s3, %s228
      $region44: #{mwt_transform_cross_forward.15} parent=39 // pred_fallthru
        _
    $region40: #{mwt_transform_cross_forward.15} parent=5 // pred_fallthru
      _
  $region6: #{mwt_transform_cross_forward.15} parent=0 // loop_footer
    %s13 = sadd.s32 1, %s9
  $region7: #{mwt_transform_cross_forward.15} parent=0 // loop_footer_branch
    %8 = sbr.rel target = $region3
  $region8: #{mwt_transform_cross_forward.15} parent=0 // loop_exit
    _

// kernel: mwt_transform_cross_forward.14
$region0: #{mwt_transform_cross_forward.14}
  #allocation0 [shape = 'u32[]', space=smem, size = 0x4, offset = 0x4, fixed_abs, tag = 'smem constant byte address 0x4 - core index']
  #allocation1 [shape = 'u32[72,128]{1,0:T(1,128)}', space=vmem, size = 0x9000, scoped, tag = 'internal scratch']
  #allocation2 [shape = 'f32[16,32]{1,0:T(8,128)}', space=vmem, size = 0x2000, scoped, tag = 'scratch operand']
  %s0 = inlined_call_operand.vmem [shape: f32[2,8,32], index: 0, kind: input, shape index: {}]
  %s1 = inlined_call_operand.vmem [shape: f32[2,4,32], index: 1, kind: input, shape index: {}]
  %s2 = inlined_call_operand.vmem [shape: f32[2,8,32], index: 2, kind: input, shape index: {}]
  %s3 = inlined_call_operand.vmem [shape: f32[2,4,32], index: 3, kind: input, shape index: {}]
  %s4 = inlined_call_operand.vmem [shape: f32[64,64], index: 4, kind: input, shape index: {}]
  %s5 = inlined_call_operand.vmem [shape: f32[2,16,32], index: 5, kind: output, shape index: {}]
  %s6 = sld [smem:[#allocation0]]
  $region53: #{mwt_transform_cross_forward.14} parent=0
    _
  %s8 = ssub.s32 1, %s6
  %s9 = scalar_select 0, %s8, %s6
  loop: start=0, step=1, limit=4
  $region2: #{mwt_transform_cross_forward.14} parent=0 // loop_pre_header
    _
  $region3: #{mwt_transform_cross_forward.14} parent=0 // loop_header
    %s11 = sphi 0, %s15
    %p12 = scmp.ge.s32.totalorder %s11, 4
    %s21 = sphi 0, %s23
    %s24 = sphi 0, %s21
    %s25 = sphi 0, %s24
    %s41 = sphi 0, %s25
    %s47 = sphi 0, %s49
    %s50 = sphi 0, %s47
    %s51 = sphi 0, %s50
    %s67 = sphi 0, %s51
    %s73 = sphi 0, %s75
    %s76 = sphi 0, %s73
    %s77 = sphi 0, %s76
    %s93 = sphi 0, %s77
    %s99 = sphi 0, %s101
    %s102 = sphi 0, %s99
    %s103 = sphi 0, %s102
    %s119 = sphi 0, %s103
    %s123 = sphi 0, %s123
    %s125 = sphi 0, %s123
    %s126 = sphi 0, %s125
    %s140 = sphi 0, %s126
    %s146 = sphi 0, %s148
    %s149 = sphi 0, %s146
    %s150 = sphi 0, %s149
    %s166 = sphi 0, %s150
  $region4: #{mwt_transform_cross_forward.14} parent=0 // loop_header_branch
    %14 = sbr.rel (%p12) target = $region8
  $region5: #{mwt_transform_cross_forward.14} parent=0 // loop_body
    %s16 = ssub.s32 %s11, 1
    %s17 = ssub.s32 %s11, 2
    %s18 = sadd.s32 %s11, 1
    %s19 = ssub.s32 %s11, %s18
    %p20 = scmp.eq.s32.totalorder %s19, 0
    %s22 = sadd.s32 %s21, 1
    %s23 = scalar_select %p20, %s21, %s22
    %p26 = pneg %p20
    %p27 = scmp.eq.s32.totalorder %s11, 1
    %p28 = por %p26, %p27
    %p29 = scmp.ne.s32.totalorder %s21, %s24
    %p30 = scmp.eq.s32.totalorder %s11, 0
    %p31 = por %p29, %p30
    %p32 = scmp.ne.s32.totalorder %s21, %s24
    %p33 = scmp.eq.s32.totalorder %s16, 1
    %p34 = por %p32, %p33
    %p35 = scmp.ne.s32.totalorder %s24, %s25
    %p36 = scmp.eq.s32.totalorder %s16, 0
    %p37 = por %p35, %p36
    %p38 = scmp.ne.s32.totalorder %s24, %s25
    %p39 = scmp.eq.s32.totalorder %s17, 1
    %p40 = por %p38, %p39
    %p42 = scmp.ne.s32.totalorder %s25, %s41
    %p43 = scmp.eq.s32.totalorder %s17, 0
    %p44 = por %p42, %p43
    %s45 = ssub.s32 %s11, %s18
    %p46 = scmp.eq.s32.totalorder %s45, 0
    %s48 = sadd.s32 %s47, 1
    %s49 = scalar_select %p46, %s47, %s48
    %p52 = pneg %p46
    %p53 = scmp.eq.s32.totalorder %s11, 1
    %p54 = por %p52, %p53
    %p55 = scmp.ne.s32.totalorder %s47, %s50
    %p56 = scmp.eq.s32.totalorder %s11, 0
    %p57 = por %p55, %p56
    %p58 = scmp.ne.s32.totalorder %s47, %s50
    %p59 = scmp.eq.s32.totalorder %s16, 1
    %p60 = por %p58, %p59
    %p61 = scmp.ne.s32.totalorder %s50, %s51
    %p62 = scmp.eq.s32.totalorder %s16, 0
    %p63 = por %p61, %p62
    %p64 = scmp.ne.s32.totalorder %s50, %s51
    %p65 = scmp.eq.s32.totalorder %s17, 1
    %p66 = por %p64, %p65
    %p68 = scmp.ne.s32.totalorder %s51, %s67
    %p69 = scmp.eq.s32.totalorder %s17, 0
    %p70 = por %p68, %p69
    %s71 = ssub.s32 %s11, %s18
    %p72 = scmp.eq.s32.totalorder %s71, 0
    %s74 = sadd.s32 %s73, 1
    %s75 = scalar_select %p72, %s73, %s74
    %p78 = pneg %p72
    %p79 = scmp.eq.s32.totalorder %s11, 1
    %p80 = por %p78, %p79
    %p81 = scmp.ne.s32.totalorder %s73, %s76
    %p82 = scmp.eq.s32.totalorder %s11, 0
    %p83 = por %p81, %p82
    %p84 = scmp.ne.s32.totalorder %s73, %s76
    %p85 = scmp.eq.s32.totalorder %s16, 1
    %p86 = por %p84, %p85
    %p87 = scmp.ne.s32.totalorder %s76, %s77
    %p88 = scmp.eq.s32.totalorder %s16, 0
    %p89 = por %p87, %p88
    %p90 = scmp.ne.s32.totalorder %s76, %s77
    %p91 = scmp.eq.s32.totalorder %s17, 1
    %p92 = por %p90, %p91
    %p94 = scmp.ne.s32.totalorder %s77, %s93
    %p95 = scmp.eq.s32.totalorder %s17, 0
    %p96 = por %p94, %p95
    %s97 = ssub.s32 %s11, %s18
    %p98 = scmp.eq.s32.totalorder %s97, 0
    %s100 = sadd.s32 %s99, 1
    %s101 = scalar_select %p98, %s99, %s100
    %p104 = pneg %p98
    %p105 = scmp.eq.s32.totalorder %s11, 1
    %p106 = por %p104, %p105
    %p107 = scmp.ne.s32.totalorder %s99, %s102
    %p108 = scmp.eq.s32.totalorder %s11, 0
    %p109 = por %p107, %p108
    %p110 = scmp.ne.s32.totalorder %s99, %s102
    %p111 = scmp.eq.s32.totalorder %s16, 1
    %p112 = por %p110, %p111
    %p113 = scmp.ne.s32.totalorder %s102, %s103
    %p114 = scmp.eq.s32.totalorder %s16, 0
    %p115 = por %p113, %p114
    %p116 = scmp.ne.s32.totalorder %s102, %s103
    %p117 = scmp.eq.s32.totalorder %s17, 1
    %p118 = por %p116, %p117
    %p120 = scmp.ne.s32.totalorder %s103, %s119
    %p121 = scmp.eq.s32.totalorder %s17, 0
    %p122 = por %p120, %p121
    %s124 = sadd.s32 %s123, 1
    %p127 = scmp.eq.s32.totalorder %s11, 1
    %p128 = scmp.ne.s32.totalorder %s123, %s125
    %p129 = scmp.eq.s32.totalorder %s11, 0
    %p130 = por %p128, %p129
    %p131 = scmp.ne.s32.totalorder %s123, %s125
    %p132 = scmp.eq.s32.totalorder %s16, 1
    %p133 = por %p131, %p132
    %p134 = scmp.ne.s32.totalorder %s125, %s126
    %p135 = scmp.eq.s32.totalorder %s16, 0
    %p136 = por %p134, %p135
    %p137 = scmp.ne.s32.totalorder %s125, %s126
    %p138 = scmp.eq.s32.totalorder %s17, 1
    %p139 = por %p137, %p138
    %p141 = scmp.ne.s32.totalorder %s126, %s140
    %p142 = scmp.eq.s32.totalorder %s17, 0
    %p143 = por %p141, %p142
    %s144 = ssub.s32 %s11, %s18
    %p145 = scmp.eq.s32.totalorder %s144, 0
    %s147 = sadd.s32 %s146, 1
    %s148 = scalar_select %p145, %s146, %s147
    %p151 = pneg %p145
    %p152 = scmp.eq.s32.totalorder %s11, 1
    %p153 = por %p151, %p152
    %p154 = scmp.ne.s32.totalorder %s146, %s149
    %p155 = scmp.eq.s32.totalorder %s11, 0
    %p156 = por %p154, %p155
    %p157 = scmp.ne.s32.totalorder %s146, %s149
    %p158 = scmp.eq.s32.totalorder %s16, 1
    %p159 = por %p157, %p158
    %p160 = scmp.ne.s32.totalorder %s149, %s150
    %p161 = scmp.eq.s32.totalorder %s16, 0
    %p162 = por %p160, %p161
    %p163 = scmp.ne.s32.totalorder %s149, %s150
    %p164 = scmp.eq.s32.totalorder %s17, 1
    %p165 = por %p163, %p164
    %p167 = scmp.ne.s32.totalorder %s150, %s166
    %p168 = scmp.eq.s32.totalorder %s17, 0
    %p169 = por %p167, %p168
    %p170 = scmp.le.s32.totalorder 1, %s11
    %p171 = scmp.lt.s32.totalorder %s11, 3
    %p172 = pnand %p170, %p171
    %p173 = pneg %p172
    // Predicated region
    $region9: #{mwt_transform_cross_forward.14} parent=5 // pred_check
      _
    $region10: #{mwt_transform_cross_forward.14} parent=5 // pred_check_branch
      %175 = sbr.rel (%p172) target = $region12
    $region11: #{mwt_transform_cross_forward.14} parent=5 // pred_region
      %s176 = ssub.s32 %s11, 1
      // Predicated region
      $region13: #{mwt_transform_cross_forward.14} parent=11 // pred_check
        %p177 = pneg %p136
      $region14: #{mwt_transform_cross_forward.14} parent=11 // pred_check_branch
        %179 = sbr.rel (%p177) target = $region16
      $region15: #{mwt_transform_cross_forward.14} parent=11 // pred_region
        _
      $region16: #{mwt_transform_cross_forward.14} parent=11 // pred_fallthru
        _
    $region12: #{mwt_transform_cross_forward.14} parent=5 // pred_fallthru
      _
    %p180 = scmp.lt.s32.totalorder %s11, 2
    // Predicated region
    $region17: #{mwt_transform_cross_forward.14} parent=5 // pred_check
      %p181 = pneg %p180
    $region18: #{mwt_transform_cross_forward.14} parent=5 // pred_check_branch
      %183 = sbr.rel (%p181) target = $region20
    $region19: #{mwt_transform_cross_forward.14} parent=5 // pred_region
      // Predicated region
      $region21: #{mwt_transform_cross_forward.14} parent=19 // pred_check
        %p184 = pneg %p31
      $region22: #{mwt_transform_cross_forward.14} parent=19 // pred_check_branch
        %186 = sbr.rel (%p184) target = $region24
      $region23: #{mwt_transform_cross_forward.14} parent=19 // pred_region
        %p187 = scmp.lt.s32.totalorder %s11, 1
        %s188 = scalar_select %p187, %s11, 1
        %s189 = smul.addr %s188, 8
        %s190 = scalar_lea.vmem %s0, %s189
      $region24: #{mwt_transform_cross_forward.14} parent=19 // pred_fallthru
        _
      // Predicated region
      $region25: #{mwt_transform_cross_forward.14} parent=19 // pred_check
        %p191 = pneg %p57
      $region26: #{mwt_transform_cross_forward.14} parent=19 // pred_check_branch
        %193 = sbr.rel (%p191) target = $region28
      $region27: #{mwt_transform_cross_forward.14} parent=19 // pred_region
        %p194 = scmp.lt.s32.totalorder %s11, 1
        %s195 = scalar_select %p194, %s11, 1
        %s196 = smul.addr %s195, 4
        %s197 = scalar_lea.vmem %s1, %s196
      $region28: #{mwt_transform_cross_forward.14} parent=19 // pred_fallthru
        _
      // Predicated region
      $region29: #{mwt_transform_cross_forward.14} parent=19 // pred_check
        %p198 = pneg %p83
      $region30: #{mwt_transform_cross_forward.14} parent=19 // pred_check_branch
        %200 = sbr.rel (%p198) target = $region32
      $region31: #{mwt_transform_cross_forward.14} parent=19 // pred_region
        %p201 = scmp.lt.s32.totalorder %s11, 1
        %s202 = scalar_select %p201, %s11, 1
        %s203 = smul.addr %s202, 8
        %s204 = scalar_lea.vmem %s2, %s203
      $region32: #{mwt_transform_cross_forward.14} parent=19 // pred_fallthru
        _
      // Predicated region
      $region33: #{mwt_transform_cross_forward.14} parent=19 // pred_check
        %p205 = pneg %p109
      $region34: #{mwt_transform_cross_forward.14} parent=19 // pred_check_branch
        %207 = sbr.rel (%p205) target = $region36
      $region35: #{mwt_transform_cross_forward.14} parent=19 // pred_region
        %p208 = scmp.lt.s32.totalorder %s11, 1
        %s209 = scalar_select %p208, %s11, 1
        %s210 = smul.addr %s209, 4
        %s211 = scalar_lea.vmem %s3, %s210
      $region36: #{mwt_transform_cross_forward.14} parent=19 // pred_fallthru
        _
    $region20: #{mwt_transform_cross_forward.14} parent=5 // pred_fallthru
      _
    %p212 = scmp.le.s32.totalorder 1, %s11
    %p213 = scmp.lt.s32.totalorder %s11, 3
    %p214 = pnand %p212, %p213
    %p215 = pneg %p214
    // Predicated region
    $region37: #{mwt_transform_cross_forward.14} parent=5 // pred_check
      _
    $region38: #{mwt_transform_cross_forward.14} parent=5 // pred_check_branch
      %217 = sbr.rel (%p214) target = $region40
    $region39: #{mwt_transform_cross_forward.14} parent=5 // pred_region
      %s218 = ssub.s32 %s11, 1
      %p219 = scmp.lt.s32.totalorder %s16, 1
      %s220 = scalar_select %p219, %s16, 1
      %s221 = smul.addr %s220, 8
      %s222 = scalar_lea.vmem %s0, %s221
      %p223 = pneg %p37
      %p224 = pneg %p34
      %p225 = scmp.lt.s32.totalorder %s16, 1
      %s226 = scalar_select %p225, %s16, 1
      %s227 = smul.addr %s226, 4
      %s228 = scalar_lea.vmem %s1, %s227
      %p229 = pneg %p63
      %p230 = pneg %p60
      %p231 = scmp.lt.s32.totalorder %s16, 1
      %s232 = scalar_select %p231, %s16, 1
      %s233 = smul.addr %s232, 8
      %s234 = scalar_lea.vmem %s2, %s233
      %p235 = pneg %p89
      %p236 = pneg %p86
      %p237 = scmp.lt.s32.totalorder %s16, 1
      %s238 = scalar_select %p237, %s16, 1
      %s239 = smul.addr %s238, 4
      %s240 = scalar_lea.vmem %s3, %s239
      %p241 = pneg %p115
      %p242 = pneg %p112
      %p243 = pneg %p136
      %p244 = pneg %p133
      %p245 = pneg %p162
      %p246 = pneg %p159
      %p247 = scmp.lt.s32.totalorder %s16, 1
      %s248 = scalar_select %p247, %s16, 1
      %s249 = smul.addr %s248, 2
      %s250 = smul.addr %s249, 8
      %s251 = scalar_lea.vmem %s5, %s250
      %p252 = scmp.lt.s32.totalorder %s16, 1
      %s253 = scalar_select %p252, %s16, 1
      %s254 = smul.addr %s253, 8
      %s255 = scalar_lea.vmem %s0, %s254
      %p256 = scmp.lt.s32.totalorder %s16, 1
      %s257 = scalar_select %p256, %s16, 1
      %s258 = smul.addr %s257, 4
      %s259 = scalar_lea.vmem %s1, %s258
      %p260 = scmp.lt.s32.totalorder %s16, 1
      %s261 = scalar_select %p260, %s16, 1
      %s262 = smul.addr %s261, 8
      %s263 = scalar_lea.vmem %s2, %s262
      %p264 = scmp.lt.s32.totalorder %s16, 1
      %s265 = scalar_select %p264, %s16, 1
      %s266 = smul.addr %s265, 4
      %s267 = scalar_lea.vmem %s3, %s266
      %p268 = scmp.lt.s32.totalorder %s16, 1
      %s269 = scalar_select %p268, %s16, 1
      %s270 = smul.addr %s269, 2
      %s271 = smul.addr %s270, 8
      %s272 = scalar_lea.vmem %s5, %s271
      %v273 = vld [vmem:[%s4] sm:$0xff]
      %v274 = vld [vmem:[%s4 + $0x8] sm:$0xff]
      %v275 = vld [vmem:[%s4 + $0x10] sm:$0xff]
      %v276 = vld [vmem:[%s4 + $0x18] sm:$0xff]
      %v277 = vld [vmem:[%s4 + $0x20] sm:$0xff]
      %v278 = vld [vmem:[%s4 + $0x28] sm:$0xff]
      %v279 = vld [vmem:[%s4 + $0x30] sm:$0xff]
      %v280 = vld [vmem:[%s4 + $0x38] sm:$0xff]
      %v281 = vld [vmem:[%s267] sm:$0xf]
      %v282 = vld [vmem:[%s259] sm:$0xf]
      %v283 = vadd.f32 %v281, %v282
      %vm284 = vcmask 261120
      %v286 = vsel %vm284, %v283, 0
      %288 = vmatpush.msra.mxu0 0.0
      %289 = vmatpush.msra.mxu0 0.0
      %290 = vmatpush.msra.mxu0 0.0
      %291 = vmatpush.msra.mxu0 0.0
      %292 = vmatpush.msra.mxu0 0.0
      %293 = vmatpush.msra.mxu0 0.0
      %294 = vmatpush.msra.mxu0 0.0
      %295 = vmatpush.msra.mxu0 0.0
      %296 = vmatpush.msra.mxu0 0.0
      %297 = vmatpush.msra.mxu0 0.0
      %298 = vmatpush.msra.mxu0 0.0
      %299 = vmatpush.msra.mxu0 0.0
      %300 = vmatpush.msra.mxu0 %v280
      %301 = vmatpush.msra.mxu0 %v279
      %302 = vmatpush.msra.mxu0 %v278
      %303 = vmatpush.msra.mxu0 %v277
      %304 = vmatmul.f32.gmra.mxu0 %v286
      %v305 = vpop.f32.mrf.mxu0
      %v306 = vadd.f32 0.0, %v305
      %307 = vdwg.mxu0
      %308 = vmatpush.msra.mxu0 0.0
      %309 = vmatpush.msra.mxu0 0.0
      %310 = vmatpush.msra.mxu0 0.0
      %311 = vmatpush.msra.mxu0 0.0
      %312 = vmatpush.msra.mxu0 0.0
      %313 = vmatpush.msra.mxu0 0.0
      %314 = vmatpush.msra.mxu0 0.0
      %315 = vmatpush.msra.mxu0 0.0
      %316 = vmatpush.msra.mxu0 0.0
      %317 = vmatpush.msra.mxu0 0.0
      %318 = vmatpush.msra.mxu0 0.0
      %319 = vmatpush.msra.mxu0 0.0
      %320 = vmatpush.msra.mxu0 %v276
      %321 = vmatpush.msra.mxu0 %v275
      %322 = vmatpush.msra.mxu0 %v274
      %323 = vmatpush.msra.mxu0 %v273
      %324 = vmatmul.f32.gmra.mxu0 %v286
      %v325 = vpop.f32.mrf.mxu0
      %v326 = vadd.f32 %v306, %v325
      %327 = vdwg.mxu0
      %328 = vst [vmem:[#allocation2] ss:$2 sm:$0xf] %v326
      %330 = vrot.lane.b32.xlu0 %v326, 96
      %v331 = vpop.permute.xlu0 %330
      %s333 = scalar_lea.vmem [#allocation2], 1
      %334 = vst [vmem:[%s333] ss:$2 sm:$0xf] %v331
      %v335 = vld [vmem:[#allocation2] sm:$0xff]
      %v336 = vld [vmem:[%s255] sm:$0xff]
      %v337 = vadd.f32 %v335, %v336
      %v338 = vld [vmem:[%s263] sm:$0xff]
      %v339 = vadd.f32 %v336, %v338
      %v341 = vsel %vm284, %v339, 0
      %343 = vmatpush.msra.mxu0 0.0
      %344 = vmatpush.msra.mxu0 0.0
      %345 = vmatpush.msra.mxu0 0.0
      %346 = vmatpush.msra.mxu0 0.0
      %347 = vmatpush.msra.mxu0 0.0
      %348 = vmatpush.msra.mxu0 0.0
      %349 = vmatpush.msra.mxu0 0.0
      %350 = vmatpush.msra.mxu0 0.0
      %351 = vmatpush.msra.mxu0 0.0
      %352 = vmatpush.msra.mxu0 0.0
      %353 = vmatpush.msra.mxu0 0.0
      %354 = vmatpush.msra.mxu0 0.0
      %355 = vmatpush.msra.mxu0 %v280
      %356 = vmatpush.msra.mxu0 %v279
      %357 = vmatpush.msra.mxu0 %v278
      %358 = vmatpush.msra.mxu0 %v277
      %359 = vmatmul.f32.gmra.mxu0 %v341
      %v360 = vpop.f32.mrf.mxu0
      %v361 = vadd.f32 0.0, %v360
      %362 = vdwg.mxu0
      %v364 = vsel %vm284, %v337, 0
      %366 = vmatpush.msra.mxu0 0.0
      %367 = vmatpush.msra.mxu0 0.0
      %368 = vmatpush.msra.mxu0 0.0
      %369 = vmatpush.msra.mxu0 0.0
      %370 = vmatpush.msra.mxu0 0.0
      %371 = vmatpush.msra.mxu0 0.0
      %372 = vmatpush.msra.mxu0 0.0
      %373 = vmatpush.msra.mxu0 0.0
      %374 = vmatpush.msra.mxu0 0.0
      %375 = vmatpush.msra.mxu0 0.0
      %376 = vmatpush.msra.mxu0 0.0
      %377 = vmatpush.msra.mxu0 0.0
      %378 = vmatpush.msra.mxu0 %v276
      %379 = vmatpush.msra.mxu0 %v275
      %380 = vmatpush.msra.mxu0 %v274
      %381 = vmatpush.msra.mxu0 %v273
      %382 = vmatmul.f32.gmra.mxu0 %v364
      %v383 = vpop.f32.mrf.mxu0
      %v384 = vadd.f32 %v361, %v383
      %385 = vdwg.mxu0
      %386 = vst [vmem:[#allocation2] ss:$2 sm:$0xff] %v384
      %388 = vrot.lane.b32.xlu0 %v384, 96
      %v389 = vpop.permute.xlu0 %388
      %391 = vst [vmem:[%s333] ss:$2 sm:$0xff] %v389
      %v392 = vld [vmem:[#allocation2] sm:$0xff]
      %v393 = vld [vmem:[#allocation2 + $0x8] sm:$0xff]
      %394 = vst.msk [vmem:[%s272] sm:$0xff] %vm284, %v392
      %395 = vst.msk [vmem:[%s272 + $0x8] sm:$0xff] %vm284, %v393
      %p396 = scmp.lt.s32.totalorder %s16, 1
      %s397 = scalar_select %p396, %s16, 1
      %s398 = smul.addr %s397, 2
      %s399 = smul.addr %s398, 8
      %s400 = scalar_lea.vmem %s5, %s399
      // Predicated region
      $region41: #{mwt_transform_cross_forward.14} parent=39 // pred_check
        %p401 = pneg %p159
      $region42: #{mwt_transform_cross_forward.14} parent=39 // pred_check_branch
        %403 = sbr.rel (%p401) target = $region44
      $region43: #{mwt_transform_cross_forward.14} parent=39 // pred_region
        _
      $region44: #{mwt_transform_cross_forward.14} parent=39 // pred_fallthru
        _
    $region40: #{mwt_transform_cross_forward.14} parent=5 // pred_fallthru
      _
    %p404 = scmp.le.s32.totalorder 2, %s11
    // Predicated region
    $region45: #{mwt_transform_cross_forward.14} parent=5 // pred_check
      %p405 = pneg %p404
    $region46: #{mwt_transform_cross_forward.14} parent=5 // pred_check_branch
      %407 = sbr.rel (%p405) target = $region48
    $region47: #{mwt_transform_cross_forward.14} parent=5 // pred_region
      %s408 = ssub.s32 %s11, 2
      // Predicated region
      $region49: #{mwt_transform_cross_forward.14} parent=47 // pred_check
        %p409 = pneg %p165
      $region50: #{mwt_transform_cross_forward.14} parent=47 // pred_check_branch
        %411 = sbr.rel (%p409) target = $region52
      $region51: #{mwt_transform_cross_forward.14} parent=47 // pred_region
        %p412 = scmp.lt.s32.totalorder %s17, 1
        %s413 = scalar_select %p412, %s17, 1
        %s414 = smul.addr %s413, 2
        %s415 = smul.addr %s414, 8
        %s416 = scalar_lea.vmem %s5, %s415
      $region52: #{mwt_transform_cross_forward.14} parent=47 // pred_fallthru
        _
    $region48: #{mwt_transform_cross_forward.14} parent=5 // pred_fallthru
      _
  $region6: #{mwt_transform_cross_forward.14} parent=0 // loop_footer
    %s15 = sadd.s32 1, %s11
  $region7: #{mwt_transform_cross_forward.14} parent=0 // loop_footer_branch
    %10 = sbr.rel target = $region3
  $region8: #{mwt_transform_cross_forward.14} parent=0 // loop_exit
    _

</llo_original>
